<compile_context>
chip_gen: v7x
topology: tpu7x:2x2x1
jax: 0.10.0
libtpu: 0.0.40
codegen_flags: <defaults>
</compile_context>

<pallas_src>
import math
import functools

import numpy as np
import jax
import jax.numpy as jnp
from jax.experimental import pallas as pl
from jax.experimental.pallas import tpu as pltpu  # noqa: F401  (TPU backend)

LN_EPS = 1e-5      # torch.nn.LayerNorm default
QKV_PAD = 128      # lane-aligned stride for the fused QKV packing
NEG_INF = -1e9     # additive bias for cross-batch attention positions


# ----------------------------- in-kernel helpers -----------------------------

def _erf_approx(x):
    # Abramowitz & Stegun 7.1.26 polynomial erf, |abs err| < 1.5e-7 (~ f32 eps).
    a1, a2, a3, a4, a5 = 0.254829592, -0.284496736, 1.421413741, -1.453152027, 1.061405429
    p = 0.3275911
    sign = jnp.where(x >= 0.0, 1.0, -1.0)
    ax = jnp.abs(x)
    t = 1.0 / (1.0 + p * ax)
    poly = ((((a5 * t + a4) * t + a3) * t + a2) * t + a1) * t
    return sign * (1.0 - poly * jnp.exp(-ax * ax))


def _gelu_exact(x):
    return 0.5 * x * (1.0 + _erf_approx(x * (1.0 / math.sqrt(2.0))))


def _layernorm(y, gamma, beta):
    mu = jnp.mean(y, axis=-1, keepdims=True)
    var = jnp.mean((y - mu) ** 2, axis=-1, keepdims=True)
    return (y - mu) * jax.lax.rsqrt(var + LN_EPS) * gamma + beta


# ------------------------------- fused kernel --------------------------------

def decoder_kernel(x_ref, emb_w_ref, emb_b_ref, pe_ref, bias_ref,
                   wqkv_ref, bqkv_ref, wo_ref, bo_ref, hmask_ref,
                   g12_ref, b12_ref,
                   w1_ref, b1_ref, w2_ref, b2_ref,
                   gff_ref, bff_ref, g3_ref, b3_ref,
                   o_ref, *, num_layers, num_heads, N, D):
    # ---- Embedding: Linear(1 -> D) + positional encoding (dropout = identity) ----
    h = x_ref[...] * emb_w_ref[...] + emb_b_ref[...] + pe_ref[...]        # (N, D)
    bias = bias_ref[...][None, :, :]                                      # (1, N, N)

    for li in range(num_layers):
        # ---- two attention sublayers: self-attn (norm1), "cross"-attn (norm2) ----
        # (per the reference bug, the second one also only reads the running state)
        for si in range(2):
            sl = li * 2 + si

            # Fused QKV projection: one (N, D) @ (D, 384) matmul, lane-aligned slices.
            qkv = jnp.dot(h, wqkv_ref[sl], preferred_element_type=jnp.float32) + bqkv_ref[sl]
            q = qkv[:, 0:D]                                   # scale folded into Wq/bq
            k = qkv[:, QKV_PAD:QKV_PAD + D]
            v = qkv[:, 2 * QKV_PAD:2 * QKV_PAD + D]

            # Batched-over-heads attention via disjoint per-head lane masks:
            # (Q*m_h) @ K^T == Q_h @ K_h^T, and P @ (V*m_h) lands head h's context
            # in its own columns, so summing over heads == torch.cat(heads, -1).
            masks = hmask_ref[sl]                             # (H, D)
            qm = q[None, :, :] * masks[:, None, :]            # (H, N, D)
            vm = v[None, :, :] * masks[:, None, :]            # (H, N, D)
            kb = jnp.broadcast_to(k[None, :, :], (num_heads, N, D))

            s = jnp.einsum('hnd,hmd->hnm', qm, kb,
                           preferred_element_type=jnp.float32)            # (H, N, N)
            s = s + bias                                       # block-diag batch mask
            s = s - jnp.max(s, axis=-1, keepdims=True)
            e = jnp.exp(s)
            l = jnp.sum(e, axis=-1, keepdims=True)
            p = e * pl.reciprocal(l, approx=True)
            ctx = jnp.sum(jnp.einsum('hnm,hmd->hnd', p, vm,
                                     preferred_element_type=jnp.float32), axis=0)  # (N, D)

            attn = jnp.dot(ctx, wo_ref[sl], preferred_element_type=jnp.float32) + bo_ref[sl]
            h = _layernorm(h + attn, g12_ref[sl], b12_ref[sl])   # residual + norm1/norm2

        # ---- FeedForward (with its own LayerNorm) + DecoderLayer norm3 ----
        f1 = jnp.dot(h, w1_ref[li], preferred_element_type=jnp.float32) + b1_ref[li]
        f1 = _gelu_exact(f1)
        f2 = jnp.dot(f1, w2_ref[li], preferred_element_type=jnp.float32) + b2_ref[li]
        ff = _layernorm(f2 + h, gff_ref[li], bff_ref[li])
        h = _layernorm(h + ff, g3_ref[li], b3_ref[li])

    o_ref[...] = h


# ----------------------- parameter setup (plain numpy/JAX) --------------------

def head_dim_alloc(logits, d_model, num_heads, min_dim):
    """Mirrors MultiHeadAttention head-dim allocation + aux losses (parameter-only)."""
    logits = np.asarray(logits, dtype=np.float32)
    e = np.exp(logits - logits.max())
    ratios = e / e.sum()
    dims_f = min_dim + ratios * (d_model - min_dim * num_heads)
    dims_i = np.floor(dims_f).astype(np.int64)
    diff = int(d_model - dims_i.sum())
    resid = dims_f - np.floor(dims_f)
    if diff > 0:
        idx = np.argsort(-resid, kind='stable')[:diff]
        dims_i[idx] += 1
    elif diff < 0:
        idx = np.argsort(resid, kind='stable')[:(-diff)]
        dims_i[idx] -= 1
    float_loss = (dims_f.sum() - d_model) ** 2 + np.maximum(min_dim - dims_f, 0.0).mean()
    int_loss = np.mean((dims_f - dims_i.astype(np.float32)) ** 2)
    aux = float(float_loss + 0.5 * int_loss)
    return dims_i, aux


def init_params(key, features_num, D, num_layers, num_heads, d_ff, max_len, min_dim=8):
    del features_num  # unused by the decoder-style Embedding (is_encoder=False, label_num=1)
    kit = iter(jax.random.split(key, 16 + 32 * num_layers))

    def nrm(shape, scale=0.05):
        return np.asarray(scale * jax.random.normal(next(kit), shape, dtype=jnp.float32))

    params = {
        'emb_w': jnp.asarray(nrm((1, D))),
        'emb_b': jnp.asarray(nrm((1, D))),
        'num_layers': num_layers,
        'num_heads': num_heads,
    }

    # Sinusoidal positional encoding (same construction as the reference module).
    pe = np.zeros((max_len, D), np.float32)
    position = np.arange(max_len, dtype=np.float32)[:, None]
    div = np.exp(np.arange(0, D, 2, dtype=np.float32) * (-math.log(10000.0) / D))
    pe[:, 0::2] = np.sin(position * div)
    pe[:, 1::2] = np.cos(position * div)
    params['pos_enc'] = jnp.asarray(pe)

    WQKV, BQKV, WO, BO, HMASK, G12, B12 = [], [], [], [], [], [], []
    W1, B1, W2, B2, GFF, BFF, G3, B3 = [], [], [], [], [], [], [], []

    total_aux = 0.0
    for _ in range(num_layers):
        for _sub in range(2):   # self-attn, then "cross"-attn
            logits = np.asarray(jax.random.normal(next(kit), (num_heads,), dtype=jnp.float32))
            dims_i, aux = head_dim_alloc(logits, D, num_heads, min_dim)
            total_aux += aux

            wq, wk, wv = nrm((D, D)), nrm((D, D)), nrm((D, D))
            bq, bk, bv = nrm((1, D)), nrm((1, D)), nrm((1, D))
            wo, bo = nrm((D, D)), nrm((1, D))

            # Host-side repack: fold 1/sqrt(dim_h) into q-projection columns and
            # build disjoint per-head lane masks (stored 2-D: (H, D)).
            scale = np.zeros((D,), np.float32)
            masks = np.zeros((num_heads, D), np.float32)
            start = 0
            for hd, dim in enumerate(dims_i):
                dim = int(dim)
                scale[start:start + dim] = 1.0 / math.sqrt(dim)
                masks[hd, start:start + dim] = 1.0
                start += dim

            # Fused, 128-lane-aligned QKV packing (q @ 0, k @ 128, v @ 256).
            wqkv = np.zeros((D, 3 * QKV_PAD), np.float32)
            bqkv = np.zeros((1, 3 * QKV_PAD), np.float32)
            wqkv[:, 0:D] = wq * scale[None, :]
            bqkv[:, 0:D] = bq * scale[None, :]
            wqkv[:, QKV_PAD:QKV_PAD + D] = wk
            bqkv[:, QKV_PAD:QKV_PAD + D] = bk
            wqkv[:, 2 * QKV_PAD:2 * QKV_PAD + D] = wv
            bqkv[:, 2 * QKV_PAD:2 * QKV_PAD + D] = bv

            WQKV.append(wqkv); BQKV.append(bqkv)
            WO.append(wo); BO.append(bo)
            HMASK.append(masks)
            G12.append(np.ones((1, D), np.float32)); B12.append(np.zeros((1, D), np.float32))

        W1.append(nrm((D, d_ff))); B1.append(nrm((1, d_ff)))
        W2.append(nrm((d_ff, D))); B2.append(nrm((1, D)))
        GFF.append(np.ones((1, D), np.float32)); BFF.append(np.zeros((1, D), np.float32))
        G3.append(np.ones((1, D), np.float32)); B3.append(np.zeros((1, D), np.float32))

    params.update(
        WQKV=jnp.asarray(np.stack(WQKV)), BQKV=jnp.asarray(np.stack(BQKV)),
        WO=jnp.asarray(np.stack(WO)), BO=jnp.asarray(np.stack(BO)),
        HMASK=jnp.asarray(np.stack(HMASK)),                     # (2*L, H, D)
        G12=jnp.asarray(np.stack(G12)), B12=jnp.asarray(np.stack(B12)),
        W1=jnp.asarray(np.stack(W1)), B1=jnp.asarray(np.stack(B1)),
        W2=jnp.asarray(np.stack(W2)), B2=jnp.asarray(np.stack(B2)),
        GFF=jnp.asarray(np.stack(GFF)), BFF=jnp.asarray(np.stack(BFF)),
        G3=jnp.asarray(np.stack(G3)), B3=jnp.asarray(np.stack(B3)),
    )
    params['total_aux_loss'] = jnp.float32(total_aux)
    return params


# --------------------------------- forward ------------------------------------

def decoder_forward(x, enc_output, params):
    # `enc_output` is accepted for interface parity, but — exactly as in the
    # reference MultiHeadAttention.forward — qkv_proj is applied only to `query`,
    # so enc_output never influences the result.
    del enc_output
    B, T, L = x.shape
    D = params['emb_w'].shape[1]
    N = B * T

    # Host-side (cheap, tiny) prep: pre-tiled positional encoding and the
    # block-diagonal additive bias that confines attention within each batch.
    pe = jnp.tile(params['pos_enc'][:T], (B, 1))                       # (N, D)
    grp = np.arange(N) // T
    bias = jnp.asarray(
        np.where(grp[:, None] == grp[None, :], 0.0, NEG_INF).astype(np.float32))  # (N, N)

    kernel = functools.partial(
        decoder_kernel,
        num_layers=int(params['num_layers']),
        num_heads=int(params['num_heads']),
        N=N, D=D,
    )
    # Single grid-less pallas_call: everything (<1 MiB) is VMEM-resident; at this
    # problem size a grid would be pure per-step overhead.
    out_flat = pl.pallas_call(
        kernel,
        out_shape=jax.ShapeDtypeStruct((N, D), jnp.float32),
    )(x.reshape(N, L), params['emb_w'], params['emb_b'], pe, bias,
      params['WQKV'], params['BQKV'], params['WO'], params['BO'],
      params['HMASK'], params['G12'], params['B12'],
      params['W1'], params['B1'], params['W2'], params['B2'],
      params['GFF'], params['BFF'], params['G3'], params['B3'])

    return out_flat.reshape(B, T, D), params['total_aux_loss']


# ----------------------------------- main --------------------------------------

if __name__ == "__main__":
    B, T = 2, 8
    features_num = 4          # ignored (decoder embedding uses label_num=1)
    embedding_dim = 64
    num_layers = 2
    num_heads = 6
    d_ff = 128
    max_len = 64

    key = jax.random.PRNGKey(0)
    pkey, xkey, ekey = jax.random.split(key, 3)

    params = init_params(pkey, features_num, embedding_dim, num_layers,
                         num_heads, d_ff, max_len)

    x = jax.random.normal(xkey, (B, T, 1), dtype=jnp.float32)            # decoder targets
    enc_output = jax.random.normal(ekey, (B, T, embedding_dim), dtype=jnp.float32)

    out, aux = decoder_forward(x, enc_output, params)
    out = jax.block_until_ready(out)
    aux = jax.block_until_ready(aux)

    assert out.shape == (B, T, embedding_dim)
    assert bool(jnp.all(jnp.isfinite(out)))
    assert bool(jnp.isfinite(aux))
    print("KERNEL_OK")
</pallas_src>

<mosaic_0001>
module attributes {stable_mosaic.version = 11 : i64} {
  func.func @decoder_kernel(%arg0: memref<16x1xf32, #tpu.memory_space<vmem>>, %arg1: memref<1x64xf32, #tpu.memory_space<vmem>>, %arg2: memref<1x64xf32, #tpu.memory_space<vmem>>, %arg3: memref<16x64xf32, #tpu.memory_space<vmem>>, %arg4: memref<16x16xf32, #tpu.memory_space<vmem>>, %arg5: memref<4x64x384xf32, #tpu.memory_space<vmem>>, %arg6: memref<4x1x384xf32, #tpu.memory_space<vmem>>, %arg7: memref<4x64x64xf32, #tpu.memory_space<vmem>>, %arg8: memref<4x1x64xf32, #tpu.memory_space<vmem>>, %arg9: memref<4x6x64xf32, #tpu.memory_space<vmem>>, %arg10: memref<4x1x64xf32, #tpu.memory_space<vmem>>, %arg11: memref<4x1x64xf32, #tpu.memory_space<vmem>>, %arg12: memref<2x64x128xf32, #tpu.memory_space<vmem>>, %arg13: memref<2x1x128xf32, #tpu.memory_space<vmem>>, %arg14: memref<2x128x64xf32, #tpu.memory_space<vmem>>, %arg15: memref<2x1x64xf32, #tpu.memory_space<vmem>>, %arg16: memref<2x1x64xf32, #tpu.memory_space<vmem>>, %arg17: memref<2x1x64xf32, #tpu.memory_space<vmem>>, %arg18: memref<2x1x64xf32, #tpu.memory_space<vmem>>, %arg19: memref<2x1x64xf32, #tpu.memory_space<vmem>>, %arg20: memref<16x64xf32, #tpu.memory_space<vmem>>) attributes {dimension_semantics = [], scalar_prefetch = 0 : i64, scratch_operands = 0 : i64, tpu.core_type = #tpu.core_type<tc>} {
    %c0 = arith.constant 0 : index
    %c0_0 = arith.constant 0 : index
    %0 = vector.load %arg0[%c0, %c0_0] : memref<16x1xf32, #tpu.memory_space<vmem>>, vector<16x1xf32>
    %c0_1 = arith.constant 0 : index
    %c0_2 = arith.constant 0 : index
    %1 = vector.load %arg1[%c0_1, %c0_2] : memref<1x64xf32, #tpu.memory_space<vmem>>, vector<1x64xf32>
    %2 = vector.broadcast %0 : vector<16x1xf32> to vector<16x64xf32>
    %3 = vector.broadcast %1 : vector<1x64xf32> to vector<16x64xf32>
    %4 = arith.mulf %2, %3 : vector<16x64xf32>
    %c0_3 = arith.constant 0 : index
    %c0_4 = arith.constant 0 : index
    %5 = vector.load %arg2[%c0_3, %c0_4] : memref<1x64xf32, #tpu.memory_space<vmem>>, vector<1x64xf32>
    %6 = vector.broadcast %5 : vector<1x64xf32> to vector<16x64xf32>
    %7 = arith.addf %4, %6 : vector<16x64xf32>
    %c0_5 = arith.constant 0 : index
    %c0_6 = arith.constant 0 : index
    %8 = vector.load %arg3[%c0_5, %c0_6] : memref<16x64xf32, #tpu.memory_space<vmem>>, vector<16x64xf32>
    %9 = arith.addf %7, %8 : vector<16x64xf32>
    %c0_7 = arith.constant 0 : index
    %c0_8 = arith.constant 0 : index
    %10 = vector.load %arg4[%c0_7, %c0_8] : memref<16x16xf32, #tpu.memory_space<vmem>>, vector<16x16xf32>
    %11 = vector.shape_cast %10 : vector<16x16xf32> to vector<1x16x16xf32>
    %c0_9 = arith.constant 0 : index
    %c0_10 = arith.constant 0 : index
    %c0_11 = arith.constant 0 : index
    %12 = vector.load %arg5[%c0_9, %c0_10, %c0_11] : memref<4x64x384xf32, #tpu.memory_space<vmem>>, vector<1x64x384xf32>
    %13 = vector.shape_cast %12 : vector<1x64x384xf32> to vector<64x384xf32>
    %cst = arith.constant dense<0.000000e+00> : vector<16x384xf32>
    %14 = tpu.matmul %9, %13, %cst {dimension_numbers = #tpu.dot_dimension_numbers<[1], [0], [0], [1], [0, 0, 1, 1], [], []>} : vector<16x64xf32>, vector<64x384xf32>, vector<16x384xf32> -> vector<16x384xf32>
    %c0_12 = arith.constant 0 : index
    %c0_13 = arith.constant 0 : index
    %c0_14 = arith.constant 0 : index
    %15 = vector.load %arg6[%c0_12, %c0_13, %c0_14] : memref<4x1x384xf32, #tpu.memory_space<vmem>>, vector<1x1x384xf32>
    %16 = vector.shape_cast %15 : vector<1x1x384xf32> to vector<1x384xf32>
    %17 = vector.broadcast %16 : vector<1x384xf32> to vector<16x384xf32>
    %18 = arith.addf %14, %17 : vector<16x384xf32>
    %19 = vector.extract_strided_slice %18 {offsets = [0, 0], sizes = [16, 64], strides = [1, 1]} : vector<16x384xf32> to vector<16x64xf32>
    %20 = vector.extract_strided_slice %18 {offsets = [0, 128], sizes = [16, 64], strides = [1, 1]} : vector<16x384xf32> to vector<16x64xf32>
    %21 = vector.extract_strided_slice %18 {offsets = [0, 256], sizes = [16, 64], strides = [1, 1]} : vector<16x384xf32> to vector<16x64xf32>
    %c0_15 = arith.constant 0 : index
    %c0_16 = arith.constant 0 : index
    %c0_17 = arith.constant 0 : index
    %22 = vector.load %arg9[%c0_15, %c0_16, %c0_17] : memref<4x6x64xf32, #tpu.memory_space<vmem>>, vector<1x6x64xf32>
    %23 = vector.shape_cast %22 : vector<1x6x64xf32> to vector<6x64xf32>
    %24 = vector.shape_cast %19 : vector<16x64xf32> to vector<1x16x64xf32>
    %25 = vector.shape_cast %23 : vector<6x64xf32> to vector<6x1x64xf32>
    %26 = vector.broadcast %24 : vector<1x16x64xf32> to vector<6x16x64xf32>
    %27 = vector.broadcast %25 : vector<6x1x64xf32> to vector<6x16x64xf32>
    %28 = arith.mulf %26, %27 : vector<6x16x64xf32>
    %29 = vector.shape_cast %21 : vector<16x64xf32> to vector<1x16x64xf32>
    %30 = vector.shape_cast %23 : vector<6x64xf32> to vector<6x1x64xf32>
    %31 = vector.broadcast %29 : vector<1x16x64xf32> to vector<6x16x64xf32>
    %32 = vector.broadcast %30 : vector<6x1x64xf32> to vector<6x16x64xf32>
    %33 = arith.mulf %31, %32 : vector<6x16x64xf32>
    %34 = vector.shape_cast %20 : vector<16x64xf32> to vector<1x16x64xf32>
    %35 = vector.shape_cast %34 : vector<1x16x64xf32> to vector<1x16x64xf32>
    %36 = vector.broadcast %35 : vector<1x16x64xf32> to vector<6x16x64xf32>
    "tpu.trace_start"() <{level = 10 : i32, message = "hnd,hmd->hnm"}> : () -> ()
    %cst_18 = arith.constant dense<0.000000e+00> : vector<6x16x16xf32>
    %37 = tpu.matmul %28, %36, %cst_18 {dimension_numbers = #tpu.dot_dimension_numbers<[2], [2], [1], [1], [0, 0, 0, 1, 1, 1], [0], [0]>} : vector<6x16x64xf32>, vector<6x16x64xf32>, vector<6x16x16xf32> -> vector<6x16x16xf32>
    "tpu.trace_stop"() : () -> ()
    %38 = vector.broadcast %11 : vector<1x16x16xf32> to vector<6x16x16xf32>
    %39 = arith.addf %37, %38 : vector<6x16x16xf32>
    %cst_19 = arith.constant dense<0xFF800000> : vector<6x16xf32>
    %40 = vector.multi_reduction <maximumf>, %39, %cst_19 [2] : vector<6x16x16xf32> to vector<6x16xf32>
    %41 = vector.shape_cast %40 : vector<6x16xf32> to vector<6x16x1xf32>
    %42 = vector.broadcast %41 : vector<6x16x1xf32> to vector<6x16x16xf32>
    %43 = arith.subf %39, %42 : vector<6x16x16xf32>
    %44 = math.exp %43 : vector<6x16x16xf32>
    %cst_20 = arith.constant dense<0.000000e+00> : vector<6x16xf32>
    %45 = vector.multi_reduction <add>, %44, %cst_20 [2] : vector<6x16x16xf32> to vector<6x16xf32>
    %46 = vector.shape_cast %45 : vector<6x16xf32> to vector<6x16x1xf32>
    %47 = tpu.reciprocal %46 {approx = true} : vector<6x16x1xf32> -> vector<6x16x1xf32>
    %48 = vector.broadcast %47 : vector<6x16x1xf32> to vector<6x16x16xf32>
    %49 = arith.mulf %44, %48 : vector<6x16x16xf32>
    "tpu.trace_start"() <{level = 10 : i32, message = "hnm,hmd->hnd"}> : () -> ()
    %cst_21 = arith.constant dense<0.000000e+00> : vector<6x16x64xf32>
    %50 = tpu.matmul %49, %33, %cst_21 {dimension_numbers = #tpu.dot_dimension_numbers<[2], [1], [1], [2], [0, 0, 0, 1, 1, 2], [0], [0]>} : vector<6x16x16xf32>, vector<6x16x64xf32>, vector<6x16x64xf32> -> vector<6x16x64xf32>
    "tpu.trace_stop"() : () -> ()
    %cst_22 = arith.constant dense<0.000000e+00> : vector<16x64xf32>
    %51 = vector.multi_reduction <add>, %50, %cst_22 [0] : vector<6x16x64xf32> to vector<16x64xf32>
    %c0_23 = arith.constant 0 : index
    %c0_24 = arith.constant 0 : index
    %c0_25 = arith.constant 0 : index
    %52 = vector.load %arg7[%c0_23, %c0_24, %c0_25] : memref<4x64x64xf32, #tpu.memory_space<vmem>>, vector<1x64x64xf32>
    %53 = vector.shape_cast %52 : vector<1x64x64xf32> to vector<64x64xf32>
    %cst_26 = arith.constant dense<0.000000e+00> : vector<16x64xf32>
    %54 = tpu.matmul %51, %53, %cst_26 {dimension_numbers = #tpu.dot_dimension_numbers<[1], [0], [0], [1], [0, 0, 1, 1], [], []>} : vector<16x64xf32>, vector<64x64xf32>, vector<16x64xf32> -> vector<16x64xf32>
    %c0_27 = arith.constant 0 : index
    %c0_28 = arith.constant 0 : index
    %c0_29 = arith.constant 0 : index
    %55 = vector.load %arg8[%c0_27, %c0_28, %c0_29] : memref<4x1x64xf32, #tpu.memory_space<vmem>>, vector<1x1x64xf32>
    %56 = vector.shape_cast %55 : vector<1x1x64xf32> to vector<1x64xf32>
    %57 = vector.broadcast %56 : vector<1x64xf32> to vector<16x64xf32>
    %58 = arith.addf %54, %57 : vector<16x64xf32>
    %59 = arith.addf %9, %58 : vector<16x64xf32>
    %c0_30 = arith.constant 0 : index
    %c0_31 = arith.constant 0 : index
    %c0_32 = arith.constant 0 : index
    %60 = vector.load %arg10[%c0_30, %c0_31, %c0_32] : memref<4x1x64xf32, #tpu.memory_space<vmem>>, vector<1x1x64xf32>
    %61 = vector.shape_cast %60 : vector<1x1x64xf32> to vector<1x64xf32>
    %c0_33 = arith.constant 0 : index
    %c0_34 = arith.constant 0 : index
    %c0_35 = arith.constant 0 : index
    %62 = vector.load %arg11[%c0_33, %c0_34, %c0_35] : memref<4x1x64xf32, #tpu.memory_space<vmem>>, vector<1x1x64xf32>
    %63 = vector.shape_cast %62 : vector<1x1x64xf32> to vector<1x64xf32>
    %cst_36 = arith.constant dense<0.000000e+00> : vector<16xf32>
    %64 = vector.multi_reduction <add>, %59, %cst_36 [1] : vector<16x64xf32> to vector<16xf32>
    %65 = vector.shape_cast %64 : vector<16xf32> to vector<16x1xf32>
    %cst_37 = arith.constant 6.400000e+01 : f32
    %66 = vector.broadcast %cst_37 : f32 to vector<16x1xf32>
    %67 = arith.divf %65, %66 : vector<16x1xf32>
    %68 = vector.broadcast %67 : vector<16x1xf32> to vector<16x64xf32>
    %69 = arith.subf %59, %68 : vector<16x64xf32>
    %70 = arith.mulf %69, %69 : vector<16x64xf32>
    %cst_38 = arith.constant dense<0.000000e+00> : vector<16xf32>
    %71 = vector.multi_reduction <add>, %70, %cst_38 [1] : vector<16x64xf32> to vector<16xf32>
    %72 = vector.shape_cast %71 : vector<16xf32> to vector<16x1xf32>
    %cst_39 = arith.constant 6.400000e+01 : f32
    %73 = vector.broadcast %cst_39 : f32 to vector<16x1xf32>
    %74 = arith.divf %72, %73 : vector<16x1xf32>
    %75 = vector.broadcast %67 : vector<16x1xf32> to vector<16x64xf32>
    %76 = arith.subf %59, %75 : vector<16x64xf32>
    %cst_40 = arith.constant 9.99999974E-6 : f32
    %77 = vector.broadcast %cst_40 : f32 to vector<16x1xf32>
    %78 = arith.addf %74, %77 : vector<16x1xf32>
    %79 = math.rsqrt %78 : vector<16x1xf32>
    %80 = vector.broadcast %79 : vector<16x1xf32> to vector<16x64xf32>
    %81 = arith.mulf %76, %80 : vector<16x64xf32>
    %82 = vector.broadcast %61 : vector<1x64xf32> to vector<16x64xf32>
    %83 = arith.mulf %81, %82 : vector<16x64xf32>
    %84 = vector.broadcast %63 : vector<1x64xf32> to vector<16x64xf32>
    %85 = arith.addf %83, %84 : vector<16x64xf32>
    %c1 = arith.constant 1 : index
    %c0_41 = arith.constant 0 : index
    %c0_42 = arith.constant 0 : index
    %86 = vector.load %arg5[%c1, %c0_41, %c0_42] : memref<4x64x384xf32, #tpu.memory_space<vmem>>, vector<1x64x384xf32>
    %87 = vector.shape_cast %86 : vector<1x64x384xf32> to vector<64x384xf32>
    %cst_43 = arith.constant dense<0.000000e+00> : vector<16x384xf32>
    %88 = tpu.matmul %85, %87, %cst_43 {dimension_numbers = #tpu.dot_dimension_numbers<[1], [0], [0], [1], [0, 0, 1, 1], [], []>} : vector<16x64xf32>, vector<64x384xf32>, vector<16x384xf32> -> vector<16x384xf32>
    %c1_44 = arith.constant 1 : index
    %c0_45 = arith.constant 0 : index
    %c0_46 = arith.constant 0 : index
    %89 = vector.load %arg6[%c1_44, %c0_45, %c0_46] : memref<4x1x384xf32, #tpu.memory_space<vmem>>, vector<1x1x384xf32>
    %90 = vector.shape_cast %89 : vector<1x1x384xf32> to vector<1x384xf32>
    %91 = vector.broadcast %90 : vector<1x384xf32> to vector<16x384xf32>
    %92 = arith.addf %88, %91 : vector<16x384xf32>
    %93 = vector.extract_strided_slice %92 {offsets = [0, 0], sizes = [16, 64], strides = [1, 1]} : vector<16x384xf32> to vector<16x64xf32>
    %94 = vector.extract_strided_slice %92 {offsets = [0, 128], sizes = [16, 64], strides = [1, 1]} : vector<16x384xf32> to vector<16x64xf32>
    %95 = vector.extract_strided_slice %92 {offsets = [0, 256], sizes = [16, 64], strides = [1, 1]} : vector<16x384xf32> to vector<16x64xf32>
    %c1_47 = arith.constant 1 : index
    %c0_48 = arith.constant 0 : index
    %c0_49 = arith.constant 0 : index
    %96 = vector.load %arg9[%c1_47, %c0_48, %c0_49] : memref<4x6x64xf32, #tpu.memory_space<vmem>>, vector<1x6x64xf32>
    %97 = vector.shape_cast %96 : vector<1x6x64xf32> to vector<6x64xf32>
    %98 = vector.shape_cast %93 : vector<16x64xf32> to vector<1x16x64xf32>
    %99 = vector.shape_cast %97 : vector<6x64xf32> to vector<6x1x64xf32>
    %100 = vector.broadcast %98 : vector<1x16x64xf32> to vector<6x16x64xf32>
    %101 = vector.broadcast %99 : vector<6x1x64xf32> to vector<6x16x64xf32>
    %102 = arith.mulf %100, %101 : vector<6x16x64xf32>
    %103 = vector.shape_cast %95 : vector<16x64xf32> to vector<1x16x64xf32>
    %104 = vector.shape_cast %97 : vector<6x64xf32> to vector<6x1x64xf32>
    %105 = vector.broadcast %103 : vector<1x16x64xf32> to vector<6x16x64xf32>
    %106 = vector.broadcast %104 : vector<6x1x64xf32> to vector<6x16x64xf32>
    %107 = arith.mulf %105, %106 : vector<6x16x64xf32>
    %108 = vector.shape_cast %94 : vector<16x64xf32> to vector<1x16x64xf32>
    %109 = vector.shape_cast %108 : vector<1x16x64xf32> to vector<1x16x64xf32>
    %110 = vector.broadcast %109 : vector<1x16x64xf32> to vector<6x16x64xf32>
    "tpu.trace_start"() <{level = 10 : i32, message = "hnd,hmd->hnm"}> : () -> ()
    %cst_50 = arith.constant dense<0.000000e+00> : vector<6x16x16xf32>
    %111 = tpu.matmul %102, %110, %cst_50 {dimension_numbers = #tpu.dot_dimension_numbers<[2], [2], [1], [1], [0, 0, 0, 1, 1, 1], [0], [0]>} : vector<6x16x64xf32>, vector<6x16x64xf32>, vector<6x16x16xf32> -> vector<6x16x16xf32>
    "tpu.trace_stop"() : () -> ()
    %112 = vector.broadcast %11 : vector<1x16x16xf32> to vector<6x16x16xf32>
    %113 = arith.addf %111, %112 : vector<6x16x16xf32>
    %cst_51 = arith.constant dense<0xFF800000> : vector<6x16xf32>
    %114 = vector.multi_reduction <maximumf>, %113, %cst_51 [2] : vector<6x16x16xf32> to vector<6x16xf32>
    %115 = vector.shape_cast %114 : vector<6x16xf32> to vector<6x16x1xf32>
    %116 = vector.broadcast %115 : vector<6x16x1xf32> to vector<6x16x16xf32>
    %117 = arith.subf %113, %116 : vector<6x16x16xf32>
    %118 = math.exp %117 : vector<6x16x16xf32>
    %cst_52 = arith.constant dense<0.000000e+00> : vector<6x16xf32>
    %119 = vector.multi_reduction <add>, %118, %cst_52 [2] : vector<6x16x16xf32> to vector<6x16xf32>
    %120 = vector.shape_cast %119 : vector<6x16xf32> to vector<6x16x1xf32>
    %121 = tpu.reciprocal %120 {approx = true} : vector<6x16x1xf32> -> vector<6x16x1xf32>
    %122 = vector.broadcast %121 : vector<6x16x1xf32> to vector<6x16x16xf32>
    %123 = arith.mulf %118, %122 : vector<6x16x16xf32>
    "tpu.trace_start"() <{level = 10 : i32, message = "hnm,hmd->hnd"}> : () -> ()
    %cst_53 = arith.constant dense<0.000000e+00> : vector<6x16x64xf32>
    %124 = tpu.matmul %123, %107, %cst_53 {dimension_numbers = #tpu.dot_dimension_numbers<[2], [1], [1], [2], [0, 0, 0, 1, 1, 2], [0], [0]>} : vector<6x16x16xf32>, vector<6x16x64xf32>, vector<6x16x64xf32> -> vector<6x16x64xf32>
    "tpu.trace_stop"() : () -> ()
    %cst_54 = arith.constant dense<0.000000e+00> : vector<16x64xf32>
    %125 = vector.multi_reduction <add>, %124, %cst_54 [0] : vector<6x16x64xf32> to vector<16x64xf32>
    %c1_55 = arith.constant 1 : index
    %c0_56 = arith.constant 0 : index
    %c0_57 = arith.constant 0 : index
    %126 = vector.load %arg7[%c1_55, %c0_56, %c0_57] : memref<4x64x64xf32, #tpu.memory_space<vmem>>, vector<1x64x64xf32>
    %127 = vector.shape_cast %126 : vector<1x64x64xf32> to vector<64x64xf32>
    %cst_58 = arith.constant dense<0.000000e+00> : vector<16x64xf32>
    %128 = tpu.matmul %125, %127, %cst_58 {dimension_numbers = #tpu.dot_dimension_numbers<[1], [0], [0], [1], [0, 0, 1, 1], [], []>} : vector<16x64xf32>, vector<64x64xf32>, vector<16x64xf32> -> vector<16x64xf32>
    %c1_59 = arith.constant 1 : index
    %c0_60 = arith.constant 0 : index
    %c0_61 = arith.constant 0 : index
    %129 = vector.load %arg8[%c1_59, %c0_60, %c0_61] : memref<4x1x64xf32, #tpu.memory_space<vmem>>, vector<1x1x64xf32>
    %130 = vector.shape_cast %129 : vector<1x1x64xf32> to vector<1x64xf32>
    %131 = vector.broadcast %130 : vector<1x64xf32> to vector<16x64xf32>
    %132 = arith.addf %128, %131 : vector<16x64xf32>
    %133 = arith.addf %85, %132 : vector<16x64xf32>
    %c1_62 = arith.constant 1 : index
    %c0_63 = arith.constant 0 : index
    %c0_64 = arith.constant 0 : index
    %134 = vector.load %arg10[%c1_62, %c0_63, %c0_64] : memref<4x1x64xf32, #tpu.memory_space<vmem>>, vector<1x1x64xf32>
    %135 = vector.shape_cast %134 : vector<1x1x64xf32> to vector<1x64xf32>
    %c1_65 = arith.constant 1 : index
    %c0_66 = arith.constant 0 : index
    %c0_67 = arith.constant 0 : index
    %136 = vector.load %arg11[%c1_65, %c0_66, %c0_67] : memref<4x1x64xf32, #tpu.memory_space<vmem>>, vector<1x1x64xf32>
    %137 = vector.shape_cast %136 : vector<1x1x64xf32> to vector<1x64xf32>
    %cst_68 = arith.constant dense<0.000000e+00> : vector<16xf32>
    %138 = vector.multi_reduction <add>, %133, %cst_68 [1] : vector<16x64xf32> to vector<16xf32>
    %139 = vector.shape_cast %138 : vector<16xf32> to vector<16x1xf32>
    %cst_69 = arith.constant 6.400000e+01 : f32
    %140 = vector.broadcast %cst_69 : f32 to vector<16x1xf32>
    %141 = arith.divf %139, %140 : vector<16x1xf32>
    %142 = vector.broadcast %141 : vector<16x1xf32> to vector<16x64xf32>
    %143 = arith.subf %133, %142 : vector<16x64xf32>
    %144 = arith.mulf %143, %143 : vector<16x64xf32>
    %cst_70 = arith.constant dense<0.000000e+00> : vector<16xf32>
    %145 = vector.multi_reduction <add>, %144, %cst_70 [1] : vector<16x64xf32> to vector<16xf32>
    %146 = vector.shape_cast %145 : vector<16xf32> to vector<16x1xf32>
    %cst_71 = arith.constant 6.400000e+01 : f32
    %147 = vector.broadcast %cst_71 : f32 to vector<16x1xf32>
    %148 = arith.divf %146, %147 : vector<16x1xf32>
    %149 = vector.broadcast %141 : vector<16x1xf32> to vector<16x64xf32>
    %150 = arith.subf %133, %149 : vector<16x64xf32>
    %cst_72 = arith.constant 9.99999974E-6 : f32
    %151 = vector.broadcast %cst_72 : f32 to vector<16x1xf32>
    %152 = arith.addf %148, %151 : vector<16x1xf32>
    %153 = math.rsqrt %152 : vector<16x1xf32>
    %154 = vector.broadcast %153 : vector<16x1xf32> to vector<16x64xf32>
    %155 = arith.mulf %150, %154 : vector<16x64xf32>
    %156 = vector.broadcast %135 : vector<1x64xf32> to vector<16x64xf32>
    %157 = arith.mulf %155, %156 : vector<16x64xf32>
    %158 = vector.broadcast %137 : vector<1x64xf32> to vector<16x64xf32>
    %159 = arith.addf %157, %158 : vector<16x64xf32>
    %c0_73 = arith.constant 0 : index
    %c0_74 = arith.constant 0 : index
    %c0_75 = arith.constant 0 : index
    %160 = vector.load %arg12[%c0_73, %c0_74, %c0_75] : memref<2x64x128xf32, #tpu.memory_space<vmem>>, vector<1x64x128xf32>
    %161 = vector.shape_cast %160 : vector<1x64x128xf32> to vector<64x128xf32>
    %cst_76 = arith.constant dense<0.000000e+00> : vector<16x128xf32>
    %162 = tpu.matmul %159, %161, %cst_76 {dimension_numbers = #tpu.dot_dimension_numbers<[1], [0], [0], [1], [0, 0, 1, 1], [], []>} : vector<16x64xf32>, vector<64x128xf32>, vector<16x128xf32> -> vector<16x128xf32>
    %c0_77 = arith.constant 0 : index
    %c0_78 = arith.constant 0 : index
    %c0_79 = arith.constant 0 : index
    %163 = vector.load %arg13[%c0_77, %c0_78, %c0_79] : memref<2x1x128xf32, #tpu.memory_space<vmem>>, vector<1x1x128xf32>
    %164 = vector.shape_cast %163 : vector<1x1x128xf32> to vector<1x128xf32>
    %165 = vector.broadcast %164 : vector<1x128xf32> to vector<16x128xf32>
    %166 = arith.addf %162, %165 : vector<16x128xf32>
    %cst_80 = arith.constant 5.000000e-01 : f32
    %167 = vector.broadcast %cst_80 : f32 to vector<16x128xf32>
    %168 = arith.mulf %167, %166 : vector<16x128xf32>
    %cst_81 = arith.constant 0.707106769 : f32
    %169 = vector.broadcast %cst_81 : f32 to vector<16x128xf32>
    %170 = arith.mulf %166, %169 : vector<16x128xf32>
    %cst_82 = arith.constant 0.000000e+00 : f32
    %171 = vector.broadcast %cst_82 : f32 to vector<16x128xf32>
    %172 = arith.cmpf oge, %170, %171 : vector<16x128xf32>
    %cst_83 = arith.constant 1.000000e+00 : f32
    %cst_84 = arith.constant -1.000000e+00 : f32
    %173 = vector.broadcast %cst_83 : f32 to vector<16x128xf32>
    %174 = vector.broadcast %cst_84 : f32 to vector<16x128xf32>
    %175 = arith.select %172, %173, %174 : vector<16x128xi1>, vector<16x128xf32>
    %176 = math.absf %170 : vector<16x128xf32>
    %cst_85 = arith.constant 0.327591091 : f32
    %177 = vector.broadcast %cst_85 : f32 to vector<16x128xf32>
    %178 = arith.mulf %177, %176 : vector<16x128xf32>
    %cst_86 = arith.constant 1.000000e+00 : f32
    %179 = vector.broadcast %cst_86 : f32 to vector<16x128xf32>
    %180 = arith.addf %179, %178 : vector<16x128xf32>
    %cst_87 = arith.constant 1.000000e+00 : f32
    %181 = vector.broadcast %cst_87 : f32 to vector<16x128xf32>
    %182 = arith.divf %181, %180 : vector<16x128xf32>
    %cst_88 = arith.constant 1.06140542 : f32
    %183 = vector.broadcast %cst_88 : f32 to vector<16x128xf32>
    %184 = arith.mulf %183, %182 : vector<16x128xf32>
    %cst_89 = arith.constant -1.45315206 : f32
    %185 = vector.broadcast %cst_89 : f32 to vector<16x128xf32>
    %186 = arith.addf %184, %185 : vector<16x128xf32>
    %187 = arith.mulf %186, %182 : vector<16x128xf32>
    %cst_90 = arith.constant 1.42141378 : f32
    %188 = vector.broadcast %cst_90 : f32 to vector<16x128xf32>
    %189 = arith.addf %187, %188 : vector<16x128xf32>
    %190 = arith.mulf %189, %182 : vector<16x128xf32>
    %cst_91 = arith.constant -0.284496725 : f32
    %191 = vector.broadcast %cst_91 : f32 to vector<16x128xf32>
    %192 = arith.addf %190, %191 : vector<16x128xf32>
    %193 = arith.mulf %192, %182 : vector<16x128xf32>
    %cst_92 = arith.constant 0.254829586 : f32
    %194 = vector.broadcast %cst_92 : f32 to vector<16x128xf32>
    %195 = arith.addf %193, %194 : vector<16x128xf32>
    %196 = arith.mulf %195, %182 : vector<16x128xf32>
    %cst_93 = arith.constant 0.000000e+00 : f32
    %197 = vector.broadcast %cst_93 : f32 to vector<16x128xf32>
    %198 = arith.subf %197, %176 : vector<16x128xf32>
    %199 = arith.mulf %198, %176 : vector<16x128xf32>
    %200 = math.exp %199 : vector<16x128xf32>
    %201 = arith.mulf %196, %200 : vector<16x128xf32>
    %cst_94 = arith.constant 1.000000e+00 : f32
    %202 = vector.broadcast %cst_94 : f32 to vector<16x128xf32>
    %203 = arith.subf %202, %201 : vector<16x128xf32>
    %204 = arith.mulf %175, %203 : vector<16x128xf32>
    %cst_95 = arith.constant 1.000000e+00 : f32
    %205 = vector.broadcast %cst_95 : f32 to vector<16x128xf32>
    %206 = arith.addf %205, %204 : vector<16x128xf32>
    %207 = arith.mulf %168, %206 : vector<16x128xf32>
    %c0_96 = arith.constant 0 : index
    %c0_97 = arith.constant 0 : index
    %c0_98 = arith.constant 0 : index
    %208 = vector.load %arg14[%c0_96, %c0_97, %c0_98] : memref<2x128x64xf32, #tpu.memory_space<vmem>>, vector<1x128x64xf32>
    %209 = vector.shape_cast %208 : vector<1x128x64xf32> to vector<128x64xf32>
    %cst_99 = arith.constant dense<0.000000e+00> : vector<16x64xf32>
    %210 = tpu.matmul %207, %209, %cst_99 {dimension_numbers = #tpu.dot_dimension_numbers<[1], [0], [0], [1], [0, 0, 1, 1], [], []>} : vector<16x128xf32>, vector<128x64xf32>, vector<16x64xf32> -> vector<16x64xf32>
    %c0_100 = arith.constant 0 : index
    %c0_101 = arith.constant 0 : index
    %c0_102 = arith.constant 0 : index
    %211 = vector.load %arg15[%c0_100, %c0_101, %c0_102] : memref<2x1x64xf32, #tpu.memory_space<vmem>>, vector<1x1x64xf32>
    %212 = vector.shape_cast %211 : vector<1x1x64xf32> to vector<1x64xf32>
    %213 = vector.broadcast %212 : vector<1x64xf32> to vector<16x64xf32>
    %214 = arith.addf %210, %213 : vector<16x64xf32>
    %215 = arith.addf %214, %159 : vector<16x64xf32>
    %c0_103 = arith.constant 0 : index
    %c0_104 = arith.constant 0 : index
    %c0_105 = arith.constant 0 : index
    %216 = vector.load %arg16[%c0_103, %c0_104, %c0_105] : memref<2x1x64xf32, #tpu.memory_space<vmem>>, vector<1x1x64xf32>
    %217 = vector.shape_cast %216 : vector<1x1x64xf32> to vector<1x64xf32>
    %c0_106 = arith.constant 0 : index
    %c0_107 = arith.constant 0 : index
    %c0_108 = arith.constant 0 : index
    %218 = vector.load %arg17[%c0_106, %c0_107, %c0_108] : memref<2x1x64xf32, #tpu.memory_space<vmem>>, vector<1x1x64xf32>
    %219 = vector.shape_cast %218 : vector<1x1x64xf32> to vector<1x64xf32>
    %cst_109 = arith.constant dense<0.000000e+00> : vector<16xf32>
    %220 = vector.multi_reduction <add>, %215, %cst_109 [1] : vector<16x64xf32> to vector<16xf32>
    %221 = vector.shape_cast %220 : vector<16xf32> to vector<16x1xf32>
    %cst_110 = arith.constant 6.400000e+01 : f32
    %222 = vector.broadcast %cst_110 : f32 to vector<16x1xf32>
    %223 = arith.divf %221, %222 : vector<16x1xf32>
    %224 = vector.broadcast %223 : vector<16x1xf32> to vector<16x64xf32>
    %225 = arith.subf %215, %224 : vector<16x64xf32>
    %226 = arith.mulf %225, %225 : vector<16x64xf32>
    %cst_111 = arith.constant dense<0.000000e+00> : vector<16xf32>
    %227 = vector.multi_reduction <add>, %226, %cst_111 [1] : vector<16x64xf32> to vector<16xf32>
    %228 = vector.shape_cast %227 : vector<16xf32> to vector<16x1xf32>
    %cst_112 = arith.constant 6.400000e+01 : f32
    %229 = vector.broadcast %cst_112 : f32 to vector<16x1xf32>
    %230 = arith.divf %228, %229 : vector<16x1xf32>
    %231 = vector.broadcast %223 : vector<16x1xf32> to vector<16x64xf32>
    %232 = arith.subf %215, %231 : vector<16x64xf32>
    %cst_113 = arith.constant 9.99999974E-6 : f32
    %233 = vector.broadcast %cst_113 : f32 to vector<16x1xf32>
    %234 = arith.addf %230, %233 : vector<16x1xf32>
    %235 = math.rsqrt %234 : vector<16x1xf32>
    %236 = vector.broadcast %235 : vector<16x1xf32> to vector<16x64xf32>
    %237 = arith.mulf %232, %236 : vector<16x64xf32>
    %238 = vector.broadcast %217 : vector<1x64xf32> to vector<16x64xf32>
    %239 = arith.mulf %237, %238 : vector<16x64xf32>
    %240 = vector.broadcast %219 : vector<1x64xf32> to vector<16x64xf32>
    %241 = arith.addf %239, %240 : vector<16x64xf32>
    %242 = arith.addf %159, %241 : vector<16x64xf32>
    %c0_114 = arith.constant 0 : index
    %c0_115 = arith.constant 0 : index
    %c0_116 = arith.constant 0 : index
    %243 = vector.load %arg18[%c0_114, %c0_115, %c0_116] : memref<2x1x64xf32, #tpu.memory_space<vmem>>, vector<1x1x64xf32>
    %244 = vector.shape_cast %243 : vector<1x1x64xf32> to vector<1x64xf32>
    %c0_117 = arith.constant 0 : index
    %c0_118 = arith.constant 0 : index
    %c0_119 = arith.constant 0 : index
    %245 = vector.load %arg19[%c0_117, %c0_118, %c0_119] : memref<2x1x64xf32, #tpu.memory_space<vmem>>, vector<1x1x64xf32>
    %246 = vector.shape_cast %245 : vector<1x1x64xf32> to vector<1x64xf32>
    %cst_120 = arith.constant dense<0.000000e+00> : vector<16xf32>
    %247 = vector.multi_reduction <add>, %242, %cst_120 [1] : vector<16x64xf32> to vector<16xf32>
    %248 = vector.shape_cast %247 : vector<16xf32> to vector<16x1xf32>
    %cst_121 = arith.constant 6.400000e+01 : f32
    %249 = vector.broadcast %cst_121 : f32 to vector<16x1xf32>
    %250 = arith.divf %248, %249 : vector<16x1xf32>
    %251 = vector.broadcast %250 : vector<16x1xf32> to vector<16x64xf32>
    %252 = arith.subf %242, %251 : vector<16x64xf32>
    %253 = arith.mulf %252, %252 : vector<16x64xf32>
    %cst_122 = arith.constant dense<0.000000e+00> : vector<16xf32>
    %254 = vector.multi_reduction <add>, %253, %cst_122 [1] : vector<16x64xf32> to vector<16xf32>
    %255 = vector.shape_cast %254 : vector<16xf32> to vector<16x1xf32>
    %cst_123 = arith.constant 6.400000e+01 : f32
    %256 = vector.broadcast %cst_123 : f32 to vector<16x1xf32>
    %257 = arith.divf %255, %256 : vector<16x1xf32>
    %258 = vector.broadcast %250 : vector<16x1xf32> to vector<16x64xf32>
    %259 = arith.subf %242, %258 : vector<16x64xf32>
    %cst_124 = arith.constant 9.99999974E-6 : f32
    %260 = vector.broadcast %cst_124 : f32 to vector<16x1xf32>
    %261 = arith.addf %257, %260 : vector<16x1xf32>
    %262 = math.rsqrt %261 : vector<16x1xf32>
    %263 = vector.broadcast %262 : vector<16x1xf32> to vector<16x64xf32>
    %264 = arith.mulf %259, %263 : vector<16x64xf32>
    %265 = vector.broadcast %244 : vector<1x64xf32> to vector<16x64xf32>
    %266 = arith.mulf %264, %265 : vector<16x64xf32>
    %267 = vector.broadcast %246 : vector<1x64xf32> to vector<16x64xf32>
    %268 = arith.addf %266, %267 : vector<16x64xf32>
    %c2 = arith.constant 2 : index
    %c0_125 = arith.constant 0 : index
    %c0_126 = arith.constant 0 : index
    %269 = vector.load %arg5[%c2, %c0_125, %c0_126] : memref<4x64x384xf32, #tpu.memory_space<vmem>>, vector<1x64x384xf32>
    %270 = vector.shape_cast %269 : vector<1x64x384xf32> to vector<64x384xf32>
    %cst_127 = arith.constant dense<0.000000e+00> : vector<16x384xf32>
    %271 = tpu.matmul %268, %270, %cst_127 {dimension_numbers = #tpu.dot_dimension_numbers<[1], [0], [0], [1], [0, 0, 1, 1], [], []>} : vector<16x64xf32>, vector<64x384xf32>, vector<16x384xf32> -> vector<16x384xf32>
    %c2_128 = arith.constant 2 : index
    %c0_129 = arith.constant 0 : index
    %c0_130 = arith.constant 0 : index
    %272 = vector.load %arg6[%c2_128, %c0_129, %c0_130] : memref<4x1x384xf32, #tpu.memory_space<vmem>>, vector<1x1x384xf32>
    %273 = vector.shape_cast %272 : vector<1x1x384xf32> to vector<1x384xf32>
    %274 = vector.broadcast %273 : vector<1x384xf32> to vector<16x384xf32>
    %275 = arith.addf %271, %274 : vector<16x384xf32>
    %276 = vector.extract_strided_slice %275 {offsets = [0, 0], sizes = [16, 64], strides = [1, 1]} : vector<16x384xf32> to vector<16x64xf32>
    %277 = vector.extract_strided_slice %275 {offsets = [0, 128], sizes = [16, 64], strides = [1, 1]} : vector<16x384xf32> to vector<16x64xf32>
    %278 = vector.extract_strided_slice %275 {offsets = [0, 256], sizes = [16, 64], strides = [1, 1]} : vector<16x384xf32> to vector<16x64xf32>
    %c2_131 = arith.constant 2 : index
    %c0_132 = arith.constant 0 : index
    %c0_133 = arith.constant 0 : index
    %279 = vector.load %arg9[%c2_131, %c0_132, %c0_133] : memref<4x6x64xf32, #tpu.memory_space<vmem>>, vector<1x6x64xf32>
    %280 = vector.shape_cast %279 : vector<1x6x64xf32> to vector<6x64xf32>
    %281 = vector.shape_cast %276 : vector<16x64xf32> to vector<1x16x64xf32>
    %282 = vector.shape_cast %280 : vector<6x64xf32> to vector<6x1x64xf32>
    %283 = vector.broadcast %281 : vector<1x16x64xf32> to vector<6x16x64xf32>
    %284 = vector.broadcast %282 : vector<6x1x64xf32> to vector<6x16x64xf32>
    %285 = arith.mulf %283, %284 : vector<6x16x64xf32>
    %286 = vector.shape_cast %278 : vector<16x64xf32> to vector<1x16x64xf32>
    %287 = vector.shape_cast %280 : vector<6x64xf32> to vector<6x1x64xf32>
    %288 = vector.broadcast %286 : vector<1x16x64xf32> to vector<6x16x64xf32>
    %289 = vector.broadcast %287 : vector<6x1x64xf32> to vector<6x16x64xf32>
    %290 = arith.mulf %288, %289 : vector<6x16x64xf32>
    %291 = vector.shape_cast %277 : vector<16x64xf32> to vector<1x16x64xf32>
    %292 = vector.shape_cast %291 : vector<1x16x64xf32> to vector<1x16x64xf32>
    %293 = vector.broadcast %292 : vector<1x16x64xf32> to vector<6x16x64xf32>
    "tpu.trace_start"() <{level = 10 : i32, message = "hnd,hmd->hnm"}> : () -> ()
    %cst_134 = arith.constant dense<0.000000e+00> : vector<6x16x16xf32>
    %294 = tpu.matmul %285, %293, %cst_134 {dimension_numbers = #tpu.dot_dimension_numbers<[2], [2], [1], [1], [0, 0, 0, 1, 1, 1], [0], [0]>} : vector<6x16x64xf32>, vector<6x16x64xf32>, vector<6x16x16xf32> -> vector<6x16x16xf32>
    "tpu.trace_stop"() : () -> ()
    %295 = vector.broadcast %11 : vector<1x16x16xf32> to vector<6x16x16xf32>
    %296 = arith.addf %294, %295 : vector<6x16x16xf32>
    %cst_135 = arith.constant dense<0xFF800000> : vector<6x16xf32>
    %297 = vector.multi_reduction <maximumf>, %296, %cst_135 [2] : vector<6x16x16xf32> to vector<6x16xf32>
    %298 = vector.shape_cast %297 : vector<6x16xf32> to vector<6x16x1xf32>
    %299 = vector.broadcast %298 : vector<6x16x1xf32> to vector<6x16x16xf32>
    %300 = arith.subf %296, %299 : vector<6x16x16xf32>
    %301 = math.exp %300 : vector<6x16x16xf32>
    %cst_136 = arith.constant dense<0.000000e+00> : vector<6x16xf32>
    %302 = vector.multi_reduction <add>, %301, %cst_136 [2] : vector<6x16x16xf32> to vector<6x16xf32>
    %303 = vector.shape_cast %302 : vector<6x16xf32> to vector<6x16x1xf32>
    %304 = tpu.reciprocal %303 {approx = true} : vector<6x16x1xf32> -> vector<6x16x1xf32>
    %305 = vector.broadcast %304 : vector<6x16x1xf32> to vector<6x16x16xf32>
    %306 = arith.mulf %301, %305 : vector<6x16x16xf32>
    "tpu.trace_start"() <{level = 10 : i32, message = "hnm,hmd->hnd"}> : () -> ()
    %cst_137 = arith.constant dense<0.000000e+00> : vector<6x16x64xf32>
    %307 = tpu.matmul %306, %290, %cst_137 {dimension_numbers = #tpu.dot_dimension_numbers<[2], [1], [1], [2], [0, 0, 0, 1, 1, 2], [0], [0]>} : vector<6x16x16xf32>, vector<6x16x64xf32>, vector<6x16x64xf32> -> vector<6x16x64xf32>
    "tpu.trace_stop"() : () -> ()
    %cst_138 = arith.constant dense<0.000000e+00> : vector<16x64xf32>
    %308 = vector.multi_reduction <add>, %307, %cst_138 [0] : vector<6x16x64xf32> to vector<16x64xf32>
    %c2_139 = arith.constant 2 : index
    %c0_140 = arith.constant 0 : index
    %c0_141 = arith.constant 0 : index
    %309 = vector.load %arg7[%c2_139, %c0_140, %c0_141] : memref<4x64x64xf32, #tpu.memory_space<vmem>>, vector<1x64x64xf32>
    %310 = vector.shape_cast %309 : vector<1x64x64xf32> to vector<64x64xf32>
    %cst_142 = arith.constant dense<0.000000e+00> : vector<16x64xf32>
    %311 = tpu.matmul %308, %310, %cst_142 {dimension_numbers = #tpu.dot_dimension_numbers<[1], [0], [0], [1], [0, 0, 1, 1], [], []>} : vector<16x64xf32>, vector<64x64xf32>, vector<16x64xf32> -> vector<16x64xf32>
    %c2_143 = arith.constant 2 : index
    %c0_144 = arith.constant 0 : index
    %c0_145 = arith.constant 0 : index
    %312 = vector.load %arg8[%c2_143, %c0_144, %c0_145] : memref<4x1x64xf32, #tpu.memory_space<vmem>>, vector<1x1x64xf32>
    %313 = vector.shape_cast %312 : vector<1x1x64xf32> to vector<1x64xf32>
    %314 = vector.broadcast %313 : vector<1x64xf32> to vector<16x64xf32>
    %315 = arith.addf %311, %314 : vector<16x64xf32>
    %316 = arith.addf %268, %315 : vector<16x64xf32>
    %c2_146 = arith.constant 2 : index
    %c0_147 = arith.constant 0 : index
    %c0_148 = arith.constant 0 : index
    %317 = vector.load %arg10[%c2_146, %c0_147, %c0_148] : memref<4x1x64xf32, #tpu.memory_space<vmem>>, vector<1x1x64xf32>
    %318 = vector.shape_cast %317 : vector<1x1x64xf32> to vector<1x64xf32>
    %c2_149 = arith.constant 2 : index
    %c0_150 = arith.constant 0 : index
    %c0_151 = arith.constant 0 : index
    %319 = vector.load %arg11[%c2_149, %c0_150, %c0_151] : memref<4x1x64xf32, #tpu.memory_space<vmem>>, vector<1x1x64xf32>
    %320 = vector.shape_cast %319 : vector<1x1x64xf32> to vector<1x64xf32>
    %cst_152 = arith.constant dense<0.000000e+00> : vector<16xf32>
    %321 = vector.multi_reduction <add>, %316, %cst_152 [1] : vector<16x64xf32> to vector<16xf32>
    %322 = vector.shape_cast %321 : vector<16xf32> to vector<16x1xf32>
    %cst_153 = arith.constant 6.400000e+01 : f32
    %323 = vector.broadcast %cst_153 : f32 to vector<16x1xf32>
    %324 = arith.divf %322, %323 : vector<16x1xf32>
    %325 = vector.broadcast %324 : vector<16x1xf32> to vector<16x64xf32>
    %326 = arith.subf %316, %325 : vector<16x64xf32>
    %327 = arith.mulf %326, %326 : vector<16x64xf32>
    %cst_154 = arith.constant dense<0.000000e+00> : vector<16xf32>
    %328 = vector.multi_reduction <add>, %327, %cst_154 [1] : vector<16x64xf32> to vector<16xf32>
    %329 = vector.shape_cast %328 : vector<16xf32> to vector<16x1xf32>
    %cst_155 = arith.constant 6.400000e+01 : f32
    %330 = vector.broadcast %cst_155 : f32 to vector<16x1xf32>
    %331 = arith.divf %329, %330 : vector<16x1xf32>
    %332 = vector.broadcast %324 : vector<16x1xf32> to vector<16x64xf32>
    %333 = arith.subf %316, %332 : vector<16x64xf32>
    %cst_156 = arith.constant 9.99999974E-6 : f32
    %334 = vector.broadcast %cst_156 : f32 to vector<16x1xf32>
    %335 = arith.addf %331, %334 : vector<16x1xf32>
    %336 = math.rsqrt %335 : vector<16x1xf32>
    %337 = vector.broadcast %336 : vector<16x1xf32> to vector<16x64xf32>
    %338 = arith.mulf %333, %337 : vector<16x64xf32>
    %339 = vector.broadcast %318 : vector<1x64xf32> to vector<16x64xf32>
    %340 = arith.mulf %338, %339 : vector<16x64xf32>
    %341 = vector.broadcast %320 : vector<1x64xf32> to vector<16x64xf32>
    %342 = arith.addf %340, %341 : vector<16x64xf32>
    %c3 = arith.constant 3 : index
    %c0_157 = arith.constant 0 : index
    %c0_158 = arith.constant 0 : index
    %343 = vector.load %arg5[%c3, %c0_157, %c0_158] : memref<4x64x384xf32, #tpu.memory_space<vmem>>, vector<1x64x384xf32>
    %344 = vector.shape_cast %343 : vector<1x64x384xf32> to vector<64x384xf32>
    %cst_159 = arith.constant dense<0.000000e+00> : vector<16x384xf32>
    %345 = tpu.matmul %342, %344, %cst_159 {dimension_numbers = #tpu.dot_dimension_numbers<[1], [0], [0], [1], [0, 0, 1, 1], [], []>} : vector<16x64xf32>, vector<64x384xf32>, vector<16x384xf32> -> vector<16x384xf32>
    %c3_160 = arith.constant 3 : index
    %c0_161 = arith.constant 0 : index
    %c0_162 = arith.constant 0 : index
    %346 = vector.load %arg6[%c3_160, %c0_161, %c0_162] : memref<4x1x384xf32, #tpu.memory_space<vmem>>, vector<1x1x384xf32>
    %347 = vector.shape_cast %346 : vector<1x1x384xf32> to vector<1x384xf32>
    %348 = vector.broadcast %347 : vector<1x384xf32> to vector<16x384xf32>
    %349 = arith.addf %345, %348 : vector<16x384xf32>
    %350 = vector.extract_strided_slice %349 {offsets = [0, 0], sizes = [16, 64], strides = [1, 1]} : vector<16x384xf32> to vector<16x64xf32>
    %351 = vector.extract_strided_slice %349 {offsets = [0, 128], sizes = [16, 64], strides = [1, 1]} : vector<16x384xf32> to vector<16x64xf32>
    %352 = vector.extract_strided_slice %349 {offsets = [0, 256], sizes = [16, 64], strides = [1, 1]} : vector<16x384xf32> to vector<16x64xf32>
    %c3_163 = arith.constant 3 : index
    %c0_164 = arith.constant 0 : index
    %c0_165 = arith.constant 0 : index
    %353 = vector.load %arg9[%c3_163, %c0_164, %c0_165] : memref<4x6x64xf32, #tpu.memory_space<vmem>>, vector<1x6x64xf32>
    %354 = vector.shape_cast %353 : vector<1x6x64xf32> to vector<6x64xf32>
    %355 = vector.shape_cast %350 : vector<16x64xf32> to vector<1x16x64xf32>
    %356 = vector.shape_cast %354 : vector<6x64xf32> to vector<6x1x64xf32>
    %357 = vector.broadcast %355 : vector<1x16x64xf32> to vector<6x16x64xf32>
    %358 = vector.broadcast %356 : vector<6x1x64xf32> to vector<6x16x64xf32>
    %359 = arith.mulf %357, %358 : vector<6x16x64xf32>
    %360 = vector.shape_cast %352 : vector<16x64xf32> to vector<1x16x64xf32>
    %361 = vector.shape_cast %354 : vector<6x64xf32> to vector<6x1x64xf32>
    %362 = vector.broadcast %360 : vector<1x16x64xf32> to vector<6x16x64xf32>
    %363 = vector.broadcast %361 : vector<6x1x64xf32> to vector<6x16x64xf32>
    %364 = arith.mulf %362, %363 : vector<6x16x64xf32>
    %365 = vector.shape_cast %351 : vector<16x64xf32> to vector<1x16x64xf32>
    %366 = vector.shape_cast %365 : vector<1x16x64xf32> to vector<1x16x64xf32>
    %367 = vector.broadcast %366 : vector<1x16x64xf32> to vector<6x16x64xf32>
    "tpu.trace_start"() <{level = 10 : i32, message = "hnd,hmd->hnm"}> : () -> ()
    %cst_166 = arith.constant dense<0.000000e+00> : vector<6x16x16xf32>
    %368 = tpu.matmul %359, %367, %cst_166 {dimension_numbers = #tpu.dot_dimension_numbers<[2], [2], [1], [1], [0, 0, 0, 1, 1, 1], [0], [0]>} : vector<6x16x64xf32>, vector<6x16x64xf32>, vector<6x16x16xf32> -> vector<6x16x16xf32>
    "tpu.trace_stop"() : () -> ()
    %369 = vector.broadcast %11 : vector<1x16x16xf32> to vector<6x16x16xf32>
    %370 = arith.addf %368, %369 : vector<6x16x16xf32>
    %cst_167 = arith.constant dense<0xFF800000> : vector<6x16xf32>
    %371 = vector.multi_reduction <maximumf>, %370, %cst_167 [2] : vector<6x16x16xf32> to vector<6x16xf32>
    %372 = vector.shape_cast %371 : vector<6x16xf32> to vector<6x16x1xf32>
    %373 = vector.broadcast %372 : vector<6x16x1xf32> to vector<6x16x16xf32>
    %374 = arith.subf %370, %373 : vector<6x16x16xf32>
    %375 = math.exp %374 : vector<6x16x16xf32>
    %cst_168 = arith.constant dense<0.000000e+00> : vector<6x16xf32>
    %376 = vector.multi_reduction <add>, %375, %cst_168 [2] : vector<6x16x16xf32> to vector<6x16xf32>
    %377 = vector.shape_cast %376 : vector<6x16xf32> to vector<6x16x1xf32>
    %378 = tpu.reciprocal %377 {approx = true} : vector<6x16x1xf32> -> vector<6x16x1xf32>
    %379 = vector.broadcast %378 : vector<6x16x1xf32> to vector<6x16x16xf32>
    %380 = arith.mulf %375, %379 : vector<6x16x16xf32>
    "tpu.trace_start"() <{level = 10 : i32, message = "hnm,hmd->hnd"}> : () -> ()
    %cst_169 = arith.constant dense<0.000000e+00> : vector<6x16x64xf32>
    %381 = tpu.matmul %380, %364, %cst_169 {dimension_numbers = #tpu.dot_dimension_numbers<[2], [1], [1], [2], [0, 0, 0, 1, 1, 2], [0], [0]>} : vector<6x16x16xf32>, vector<6x16x64xf32>, vector<6x16x64xf32> -> vector<6x16x64xf32>
    "tpu.trace_stop"() : () -> ()
    %cst_170 = arith.constant dense<0.000000e+00> : vector<16x64xf32>
    %382 = vector.multi_reduction <add>, %381, %cst_170 [0] : vector<6x16x64xf32> to vector<16x64xf32>
    %c3_171 = arith.constant 3 : index
    %c0_172 = arith.constant 0 : index
    %c0_173 = arith.constant 0 : index
    %383 = vector.load %arg7[%c3_171, %c0_172, %c0_173] : memref<4x64x64xf32, #tpu.memory_space<vmem>>, vector<1x64x64xf32>
    %384 = vector.shape_cast %383 : vector<1x64x64xf32> to vector<64x64xf32>
    %cst_174 = arith.constant dense<0.000000e+00> : vector<16x64xf32>
    %385 = tpu.matmul %382, %384, %cst_174 {dimension_numbers = #tpu.dot_dimension_numbers<[1], [0], [0], [1], [0, 0, 1, 1], [], []>} : vector<16x64xf32>, vector<64x64xf32>, vector<16x64xf32> -> vector<16x64xf32>
    %c3_175 = arith.constant 3 : index
    %c0_176 = arith.constant 0 : index
    %c0_177 = arith.constant 0 : index
    %386 = vector.load %arg8[%c3_175, %c0_176, %c0_177] : memref<4x1x64xf32, #tpu.memory_space<vmem>>, vector<1x1x64xf32>
    %387 = vector.shape_cast %386 : vector<1x1x64xf32> to vector<1x64xf32>
    %388 = vector.broadcast %387 : vector<1x64xf32> to vector<16x64xf32>
    %389 = arith.addf %385, %388 : vector<16x64xf32>
    %390 = arith.addf %342, %389 : vector<16x64xf32>
    %c3_178 = arith.constant 3 : index
    %c0_179 = arith.constant 0 : index
    %c0_180 = arith.constant 0 : index
    %391 = vector.load %arg10[%c3_178, %c0_179, %c0_180] : memref<4x1x64xf32, #tpu.memory_space<vmem>>, vector<1x1x64xf32>
    %392 = vector.shape_cast %391 : vector<1x1x64xf32> to vector<1x64xf32>
    %c3_181 = arith.constant 3 : index
    %c0_182 = arith.constant 0 : index
    %c0_183 = arith.constant 0 : index
    %393 = vector.load %arg11[%c3_181, %c0_182, %c0_183] : memref<4x1x64xf32, #tpu.memory_space<vmem>>, vector<1x1x64xf32>
    %394 = vector.shape_cast %393 : vector<1x1x64xf32> to vector<1x64xf32>
    %cst_184 = arith.constant dense<0.000000e+00> : vector<16xf32>
    %395 = vector.multi_reduction <add>, %390, %cst_184 [1] : vector<16x64xf32> to vector<16xf32>
    %396 = vector.shape_cast %395 : vector<16xf32> to vector<16x1xf32>
    %cst_185 = arith.constant 6.400000e+01 : f32
    %397 = vector.broadcast %cst_185 : f32 to vector<16x1xf32>
    %398 = arith.divf %396, %397 : vector<16x1xf32>
    %399 = vector.broadcast %398 : vector<16x1xf32> to vector<16x64xf32>
    %400 = arith.subf %390, %399 : vector<16x64xf32>
    %401 = arith.mulf %400, %400 : vector<16x64xf32>
    %cst_186 = arith.constant dense<0.000000e+00> : vector<16xf32>
    %402 = vector.multi_reduction <add>, %401, %cst_186 [1] : vector<16x64xf32> to vector<16xf32>
    %403 = vector.shape_cast %402 : vector<16xf32> to vector<16x1xf32>
    %cst_187 = arith.constant 6.400000e+01 : f32
    %404 = vector.broadcast %cst_187 : f32 to vector<16x1xf32>
    %405 = arith.divf %403, %404 : vector<16x1xf32>
    %406 = vector.broadcast %398 : vector<16x1xf32> to vector<16x64xf32>
    %407 = arith.subf %390, %406 : vector<16x64xf32>
    %cst_188 = arith.constant 9.99999974E-6 : f32
    %408 = vector.broadcast %cst_188 : f32 to vector<16x1xf32>
    %409 = arith.addf %405, %408 : vector<16x1xf32>
    %410 = math.rsqrt %409 : vector<16x1xf32>
    %411 = vector.broadcast %410 : vector<16x1xf32> to vector<16x64xf32>
    %412 = arith.mulf %407, %411 : vector<16x64xf32>
    %413 = vector.broadcast %392 : vector<1x64xf32> to vector<16x64xf32>
    %414 = arith.mulf %412, %413 : vector<16x64xf32>
    %415 = vector.broadcast %394 : vector<1x64xf32> to vector<16x64xf32>
    %416 = arith.addf %414, %415 : vector<16x64xf32>
    %c1_189 = arith.constant 1 : index
    %c0_190 = arith.constant 0 : index
    %c0_191 = arith.constant 0 : index
    %417 = vector.load %arg12[%c1_189, %c0_190, %c0_191] : memref<2x64x128xf32, #tpu.memory_space<vmem>>, vector<1x64x128xf32>
    %418 = vector.shape_cast %417 : vector<1x64x128xf32> to vector<64x128xf32>
    %cst_192 = arith.constant dense<0.000000e+00> : vector<16x128xf32>
    %419 = tpu.matmul %416, %418, %cst_192 {dimension_numbers = #tpu.dot_dimension_numbers<[1], [0], [0], [1], [0, 0, 1, 1], [], []>} : vector<16x64xf32>, vector<64x128xf32>, vector<16x128xf32> -> vector<16x128xf32>
    %c1_193 = arith.constant 1 : index
    %c0_194 = arith.constant 0 : index
    %c0_195 = arith.constant 0 : index
    %420 = vector.load %arg13[%c1_193, %c0_194, %c0_195] : memref<2x1x128xf32, #tpu.memory_space<vmem>>, vector<1x1x128xf32>
    %421 = vector.shape_cast %420 : vector<1x1x128xf32> to vector<1x128xf32>
    %422 = vector.broadcast %421 : vector<1x128xf32> to vector<16x128xf32>
    %423 = arith.addf %419, %422 : vector<16x128xf32>
    %cst_196 = arith.constant 5.000000e-01 : f32
    %424 = vector.broadcast %cst_196 : f32 to vector<16x128xf32>
    %425 = arith.mulf %424, %423 : vector<16x128xf32>
    %cst_197 = arith.constant 0.707106769 : f32
    %426 = vector.broadcast %cst_197 : f32 to vector<16x128xf32>
    %427 = arith.mulf %423, %426 : vector<16x128xf32>
    %cst_198 = arith.constant 0.000000e+00 : f32
    %428 = vector.broadcast %cst_198 : f32 to vector<16x128xf32>
    %429 = arith.cmpf oge, %427, %428 : vector<16x128xf32>
    %cst_199 = arith.constant 1.000000e+00 : f32
    %cst_200 = arith.constant -1.000000e+00 : f32
    %430 = vector.broadcast %cst_199 : f32 to vector<16x128xf32>
    %431 = vector.broadcast %cst_200 : f32 to vector<16x128xf32>
    %432 = arith.select %429, %430, %431 : vector<16x128xi1>, vector<16x128xf32>
    %433 = math.absf %427 : vector<16x128xf32>
    %cst_201 = arith.constant 0.327591091 : f32
    %434 = vector.broadcast %cst_201 : f32 to vector<16x128xf32>
    %435 = arith.mulf %434, %433 : vector<16x128xf32>
    %cst_202 = arith.constant 1.000000e+00 : f32
    %436 = vector.broadcast %cst_202 : f32 to vector<16x128xf32>
    %437 = arith.addf %436, %435 : vector<16x128xf32>
    %cst_203 = arith.constant 1.000000e+00 : f32
    %438 = vector.broadcast %cst_203 : f32 to vector<16x128xf32>
    %439 = arith.divf %438, %437 : vector<16x128xf32>
    %cst_204 = arith.constant 1.06140542 : f32
    %440 = vector.broadcast %cst_204 : f32 to vector<16x128xf32>
    %441 = arith.mulf %440, %439 : vector<16x128xf32>
    %cst_205 = arith.constant -1.45315206 : f32
    %442 = vector.broadcast %cst_205 : f32 to vector<16x128xf32>
    %443 = arith.addf %441, %442 : vector<16x128xf32>
    %444 = arith.mulf %443, %439 : vector<16x128xf32>
    %cst_206 = arith.constant 1.42141378 : f32
    %445 = vector.broadcast %cst_206 : f32 to vector<16x128xf32>
    %446 = arith.addf %444, %445 : vector<16x128xf32>
    %447 = arith.mulf %446, %439 : vector<16x128xf32>
    %cst_207 = arith.constant -0.284496725 : f32
    %448 = vector.broadcast %cst_207 : f32 to vector<16x128xf32>
    %449 = arith.addf %447, %448 : vector<16x128xf32>
    %450 = arith.mulf %449, %439 : vector<16x128xf32>
    %cst_208 = arith.constant 0.254829586 : f32
    %451 = vector.broadcast %cst_208 : f32 to vector<16x128xf32>
    %452 = arith.addf %450, %451 : vector<16x128xf32>
    %453 = arith.mulf %452, %439 : vector<16x128xf32>
    %cst_209 = arith.constant 0.000000e+00 : f32
    %454 = vector.broadcast %cst_209 : f32 to vector<16x128xf32>
    %455 = arith.subf %454, %433 : vector<16x128xf32>
    %456 = arith.mulf %455, %433 : vector<16x128xf32>
    %457 = math.exp %456 : vector<16x128xf32>
    %458 = arith.mulf %453, %457 : vector<16x128xf32>
    %cst_210 = arith.constant 1.000000e+00 : f32
    %459 = vector.broadcast %cst_210 : f32 to vector<16x128xf32>
    %460 = arith.subf %459, %458 : vector<16x128xf32>
    %461 = arith.mulf %432, %460 : vector<16x128xf32>
    %cst_211 = arith.constant 1.000000e+00 : f32
    %462 = vector.broadcast %cst_211 : f32 to vector<16x128xf32>
    %463 = arith.addf %462, %461 : vector<16x128xf32>
    %464 = arith.mulf %425, %463 : vector<16x128xf32>
    %c1_212 = arith.constant 1 : index
    %c0_213 = arith.constant 0 : index
    %c0_214 = arith.constant 0 : index
    %465 = vector.load %arg14[%c1_212, %c0_213, %c0_214] : memref<2x128x64xf32, #tpu.memory_space<vmem>>, vector<1x128x64xf32>
    %466 = vector.shape_cast %465 : vector<1x128x64xf32> to vector<128x64xf32>
    %cst_215 = arith.constant dense<0.000000e+00> : vector<16x64xf32>
    %467 = tpu.matmul %464, %466, %cst_215 {dimension_numbers = #tpu.dot_dimension_numbers<[1], [0], [0], [1], [0, 0, 1, 1], [], []>} : vector<16x128xf32>, vector<128x64xf32>, vector<16x64xf32> -> vector<16x64xf32>
    %c1_216 = arith.constant 1 : index
    %c0_217 = arith.constant 0 : index
    %c0_218 = arith.constant 0 : index
    %468 = vector.load %arg15[%c1_216, %c0_217, %c0_218] : memref<2x1x64xf32, #tpu.memory_space<vmem>>, vector<1x1x64xf32>
    %469 = vector.shape_cast %468 : vector<1x1x64xf32> to vector<1x64xf32>
    %470 = vector.broadcast %469 : vector<1x64xf32> to vector<16x64xf32>
    %471 = arith.addf %467, %470 : vector<16x64xf32>
    %472 = arith.addf %471, %416 : vector<16x64xf32>
    %c1_219 = arith.constant 1 : index
    %c0_220 = arith.constant 0 : index
    %c0_221 = arith.constant 0 : index
    %473 = vector.load %arg16[%c1_219, %c0_220, %c0_221] : memref<2x1x64xf32, #tpu.memory_space<vmem>>, vector<1x1x64xf32>
    %474 = vector.shape_cast %473 : vector<1x1x64xf32> to vector<1x64xf32>
    %c1_222 = arith.constant 1 : index
    %c0_223 = arith.constant 0 : index
    %c0_224 = arith.constant 0 : index
    %475 = vector.load %arg17[%c1_222, %c0_223, %c0_224] : memref<2x1x64xf32, #tpu.memory_space<vmem>>, vector<1x1x64xf32>
    %476 = vector.shape_cast %475 : vector<1x1x64xf32> to vector<1x64xf32>
    %cst_225 = arith.constant dense<0.000000e+00> : vector<16xf32>
    %477 = vector.multi_reduction <add>, %472, %cst_225 [1] : vector<16x64xf32> to vector<16xf32>
    %478 = vector.shape_cast %477 : vector<16xf32> to vector<16x1xf32>
    %cst_226 = arith.constant 6.400000e+01 : f32
    %479 = vector.broadcast %cst_226 : f32 to vector<16x1xf32>
    %480 = arith.divf %478, %479 : vector<16x1xf32>
    %481 = vector.broadcast %480 : vector<16x1xf32> to vector<16x64xf32>
    %482 = arith.subf %472, %481 : vector<16x64xf32>
    %483 = arith.mulf %482, %482 : vector<16x64xf32>
    %cst_227 = arith.constant dense<0.000000e+00> : vector<16xf32>
    %484 = vector.multi_reduction <add>, %483, %cst_227 [1] : vector<16x64xf32> to vector<16xf32>
    %485 = vector.shape_cast %484 : vector<16xf32> to vector<16x1xf32>
    %cst_228 = arith.constant 6.400000e+01 : f32
    %486 = vector.broadcast %cst_228 : f32 to vector<16x1xf32>
    %487 = arith.divf %485, %486 : vector<16x1xf32>
    %488 = vector.broadcast %480 : vector<16x1xf32> to vector<16x64xf32>
    %489 = arith.subf %472, %488 : vector<16x64xf32>
    %cst_229 = arith.constant 9.99999974E-6 : f32
    %490 = vector.broadcast %cst_229 : f32 to vector<16x1xf32>
    %491 = arith.addf %487, %490 : vector<16x1xf32>
    %492 = math.rsqrt %491 : vector<16x1xf32>
    %493 = vector.broadcast %492 : vector<16x1xf32> to vector<16x64xf32>
    %494 = arith.mulf %489, %493 : vector<16x64xf32>
    %495 = vector.broadcast %474 : vector<1x64xf32> to vector<16x64xf32>
    %496 = arith.mulf %494, %495 : vector<16x64xf32>
    %497 = vector.broadcast %476 : vector<1x64xf32> to vector<16x64xf32>
    %498 = arith.addf %496, %497 : vector<16x64xf32>
    %499 = arith.addf %416, %498 : vector<16x64xf32>
    %c1_230 = arith.constant 1 : index
    %c0_231 = arith.constant 0 : index
    %c0_232 = arith.constant 0 : index
    %500 = vector.load %arg18[%c1_230, %c0_231, %c0_232] : memref<2x1x64xf32, #tpu.memory_space<vmem>>, vector<1x1x64xf32>
    %501 = vector.shape_cast %500 : vector<1x1x64xf32> to vector<1x64xf32>
    %c1_233 = arith.constant 1 : index
    %c0_234 = arith.constant 0 : index
    %c0_235 = arith.constant 0 : index
    %502 = vector.load %arg19[%c1_233, %c0_234, %c0_235] : memref<2x1x64xf32, #tpu.memory_space<vmem>>, vector<1x1x64xf32>
    %503 = vector.shape_cast %502 : vector<1x1x64xf32> to vector<1x64xf32>
    %cst_236 = arith.constant dense<0.000000e+00> : vector<16xf32>
    %504 = vector.multi_reduction <add>, %499, %cst_236 [1] : vector<16x64xf32> to vector<16xf32>
    %505 = vector.shape_cast %504 : vector<16xf32> to vector<16x1xf32>
    %cst_237 = arith.constant 6.400000e+01 : f32
    %506 = vector.broadcast %cst_237 : f32 to vector<16x1xf32>
    %507 = arith.divf %505, %506 : vector<16x1xf32>
    %508 = vector.broadcast %507 : vector<16x1xf32> to vector<16x64xf32>
    %509 = arith.subf %499, %508 : vector<16x64xf32>
    %510 = arith.mulf %509, %509 : vector<16x64xf32>
    %cst_238 = arith.constant dense<0.000000e+00> : vector<16xf32>
    %511 = vector.multi_reduction <add>, %510, %cst_238 [1] : vector<16x64xf32> to vector<16xf32>
    %512 = vector.shape_cast %511 : vector<16xf32> to vector<16x1xf32>
    %cst_239 = arith.constant 6.400000e+01 : f32
    %513 = vector.broadcast %cst_239 : f32 to vector<16x1xf32>
    %514 = arith.divf %512, %513 : vector<16x1xf32>
    %515 = vector.broadcast %507 : vector<16x1xf32> to vector<16x64xf32>
    %516 = arith.subf %499, %515 : vector<16x64xf32>
    %cst_240 = arith.constant 9.99999974E-6 : f32
    %517 = vector.broadcast %cst_240 : f32 to vector<16x1xf32>
    %518 = arith.addf %514, %517 : vector<16x1xf32>
    %519 = math.rsqrt %518 : vector<16x1xf32>
    %520 = vector.broadcast %519 : vector<16x1xf32> to vector<16x64xf32>
    %521 = arith.mulf %516, %520 : vector<16x64xf32>
    %522 = vector.broadcast %501 : vector<1x64xf32> to vector<16x64xf32>
    %523 = arith.mulf %521, %522 : vector<16x64xf32>
    %524 = vector.broadcast %503 : vector<1x64xf32> to vector<16x64xf32>
    %525 = arith.addf %523, %524 : vector<16x64xf32>
    %c0_241 = arith.constant 0 : index
    %c0_242 = arith.constant 0 : index
    %526 = vector.load %arg20[%c0_241, %c0_242] : memref<16x64xf32, #tpu.memory_space<vmem>>, vector<16x64xf32>
    tpu.vector_store %arg20[%c0_241, %c0_242], %525 {strides = array<i32>} : memref<16x64xf32, #tpu.memory_space<vmem>>, vector<16x64xf32>,
    return
  }
}

</mosaic_0001>

<llo_original>
// kernel: tpu_custom_call.1
$region0: #{tpu_custom_call.1}
  #allocation0 [shape = 'u32[]', space=smem, size = 0x4, offset = 0x4, fixed_abs, tag = 'smem constant byte address 0x4 - core index']
  #allocation1 [shape = 'u32[144,128]{1,0:T(1,128)}', space=vmem, size = 0x12000, scoped, tag = 'internal scratch']
  %s0 = inlined_call_operand.vmem [shape: f32[16,1], index: 0, kind: input, shape index: {}]
  %s1 = inlined_call_operand.vmem [shape: f32[1,64], index: 1, kind: input, shape index: {}]
  %s2 = inlined_call_operand.vmem [shape: f32[1,64], index: 2, kind: input, shape index: {}]
  %s3 = inlined_call_operand.vmem [shape: f32[16,64], index: 3, kind: input, shape index: {}]
  %s4 = inlined_call_operand.vmem [shape: f32[16,16], index: 4, kind: input, shape index: {}]
  %s5 = inlined_call_operand.hbm [shape: f32[4,64,384], index: 5, kind: input, shape index: {}]
  %s6 = inlined_call_operand.vmem [shape: f32[4,1,384], index: 6, kind: input, shape index: {}]
  %s7 = inlined_call_operand.vmem [shape: f32[4,64,64], index: 7, kind: input, shape index: {}]
  %s8 = inlined_call_operand.vmem [shape: f32[4,1,64], index: 8, kind: input, shape index: {}]
  %s9 = inlined_call_operand.vmem [shape: f32[4,6,64], index: 9, kind: input, shape index: {}]
  %s10 = inlined_call_operand.vmem [shape: f32[4,1,64], index: 10, kind: input, shape index: {}]
  %s11 = inlined_call_operand.vmem [shape: f32[4,1,64], index: 11, kind: input, shape index: {}]
  %s12 = inlined_call_operand.vmem [shape: f32[2,64,128], index: 12, kind: input, shape index: {}]
  %s13 = inlined_call_operand.vmem [shape: f32[2,1,128], index: 13, kind: input, shape index: {}]
  %s14 = inlined_call_operand.vmem [shape: f32[2,128,64], index: 14, kind: input, shape index: {}]
  %s15 = inlined_call_operand.vmem [shape: f32[2,1,64], index: 15, kind: input, shape index: {}]
  %s16 = inlined_call_operand.vmem [shape: f32[2,1,64], index: 16, kind: input, shape index: {}]
  %s17 = inlined_call_operand.vmem [shape: f32[2,1,64], index: 17, kind: input, shape index: {}]
  %s18 = inlined_call_operand.vmem [shape: f32[2,1,64], index: 18, kind: input, shape index: {}]
  %s19 = inlined_call_operand.vmem [shape: f32[2,1,64], index: 19, kind: input, shape index: {}]
  %s20 = inlined_call_operand.hbm [shape: f32[16,64], index: 20, kind: output, shape index: {}]
  %s21 = sld [smem:[#allocation0]]
  $region94: #{tpu_custom_call.1} parent=0
    _
  %s23 = ssub.s32 1, %s21
  %s24 = scalar_select 0, %s23, %s21
  $region1: #{tpu_custom_call.1} parent=0
    #allocation2 [shape = 'u8[393216]{0}', space=vmem, size = 0x60000, scoped, tag = 'input window, operand 5, single buffered']
    #allocation3 [shape = 's32[1]{0}', space=sflag, size = 0x4, scoped, tag = 'scoped memory for tpu_custom_call.1']
    #allocation4 [shape = 's32[1]{0}', space=sflag, size = 0x4, scoped, tag = 'scoped memory for tpu_custom_call.1']
    #allocation5 [shape = 'u8[8192]{0}', space=vmem, size = 0x2000, scoped, tag = 'output window, operand 0, single buffered']
    %25 = vsyncpa [#allocation3], 0
    %26 = vsyncpa [#allocation4], 0
    // Predicated region
    $region2: #{tpu_custom_call.1} parent=1 // pred_check
      _
    $region3: #{tpu_custom_call.1} parent=1 // pred_check_branch
      %28 = sbr.rel (0) target = $region5
    $region4: #{tpu_custom_call.1} parent=1 // pred_region
      _
    $region5: #{tpu_custom_call.1} parent=1 // pred_fallthru
      _
    // Predicated region
    $region6: #{tpu_custom_call.1} parent=1 // pred_check
      _
    $region7: #{tpu_custom_call.1} parent=1 // pred_check_branch
      %30 = sbr.rel (0) target = $region9
    $region8: #{tpu_custom_call.1} parent=1 // pred_region
      _
    $region9: #{tpu_custom_call.1} parent=1 // pred_fallthru
      _
    // Predicated region
    $region10: #{tpu_custom_call.1} parent=1 // pred_check
      _
    $region11: #{tpu_custom_call.1} parent=1 // pred_check_branch
      %32 = sbr.rel (0) target = $region13
    $region12: #{tpu_custom_call.1} parent=1 // pred_region
      _
    $region13: #{tpu_custom_call.1} parent=1 // pred_fallthru
      _
    // Predicated region
    $region14: #{tpu_custom_call.1} parent=1 // pred_check
      _
    $region15: #{tpu_custom_call.1} parent=1 // pred_check_branch
      %34 = sbr.rel (0) target = $region17
    $region16: #{tpu_custom_call.1} parent=1 // pred_region
      _
    $region17: #{tpu_custom_call.1} parent=1 // pred_fallthru
      _
    // Predicated region
    $region18: #{tpu_custom_call.1} parent=1 // pred_check
      _
    $region19: #{tpu_custom_call.1} parent=1 // pred_check_branch
      %36 = sbr.rel (0) target = $region21
    $region20: #{tpu_custom_call.1} parent=1 // pred_region
      _
    $region21: #{tpu_custom_call.1} parent=1 // pred_fallthru
      _
    // Predicated region
    $region22: #{tpu_custom_call.1} parent=1 // pred_check
      _
    $region23: #{tpu_custom_call.1} parent=1 // pred_check_branch
      %38 = sbr.rel (0) target = $region25
    $region24: #{tpu_custom_call.1} parent=1 // pred_region
      %s40 = ssub.s32 12288, 12288
      %41 = vsyncadd [#allocation3], %s40
      %s42 = sshll.u32 [#allocation2], 4
      %s43 = int_to_ptr.vmem [resolvable:$true] %s42
      %48 = dma.hbm_to_vmem [thread:$0]  %s5, 12288, %s43, [#allocation3], 384, 384, 24
    $region25: #{tpu_custom_call.1} parent=1 // pred_fallthru
      _
    // Predicated region
    $region26: #{tpu_custom_call.1} parent=1 // pred_check
      _
    $region27: #{tpu_custom_call.1} parent=1 // pred_check_branch
      %50 = sbr.rel (0) target = $region29
    $region28: #{tpu_custom_call.1} parent=1 // pred_region
      _
    $region29: #{tpu_custom_call.1} parent=1 // pred_fallthru
      _
    // Predicated region
    $region30: #{tpu_custom_call.1} parent=1 // pred_check
      _
    $region31: #{tpu_custom_call.1} parent=1 // pred_check_branch
      %52 = sbr.rel (0) target = $region33
    $region32: #{tpu_custom_call.1} parent=1 // pred_region
      _
    $region33: #{tpu_custom_call.1} parent=1 // pred_fallthru
      _
    // Predicated region
    $region34: #{tpu_custom_call.1} parent=1 // pred_check
      _
    $region35: #{tpu_custom_call.1} parent=1 // pred_check_branch
      %54 = sbr.rel (0) target = $region37
    $region36: #{tpu_custom_call.1} parent=1 // pred_region
      _
    $region37: #{tpu_custom_call.1} parent=1 // pred_fallthru
      _
    // Predicated region
    $region38: #{tpu_custom_call.1} parent=1 // pred_check
      _
    $region39: #{tpu_custom_call.1} parent=1 // pred_check_branch
      %56 = sbr.rel (0) target = $region41
    $region40: #{tpu_custom_call.1} parent=1 // pred_region
      _
    $region41: #{tpu_custom_call.1} parent=1 // pred_fallthru
      _
    // Predicated region
    $region42: #{tpu_custom_call.1} parent=1 // pred_check
      _
    $region43: #{tpu_custom_call.1} parent=1 // pred_check_branch
      %58 = sbr.rel (0) target = $region45
    $region44: #{tpu_custom_call.1} parent=1 // pred_region
      _
    $region45: #{tpu_custom_call.1} parent=1 // pred_fallthru
      _
    // Predicated region
    $region46: #{tpu_custom_call.1} parent=1 // pred_check
      _
    $region47: #{tpu_custom_call.1} parent=1 // pred_check_branch
      %60 = sbr.rel (0) target = $region49
    $region48: #{tpu_custom_call.1} parent=1 // pred_region
      _
    $region49: #{tpu_custom_call.1} parent=1 // pred_fallthru
      _
    // Predicated region
    $region50: #{tpu_custom_call.1} parent=1 // pred_check
      _
    $region51: #{tpu_custom_call.1} parent=1 // pred_check_branch
      %62 = sbr.rel (0) target = $region53
    $region52: #{tpu_custom_call.1} parent=1 // pred_region
      _
    $region53: #{tpu_custom_call.1} parent=1 // pred_fallthru
      _
    // Predicated region
    $region54: #{tpu_custom_call.1} parent=1 // pred_check
      _
    $region55: #{tpu_custom_call.1} parent=1 // pred_check_branch
      %64 = sbr.rel (0) target = $region57
    $region56: #{tpu_custom_call.1} parent=1 // pred_region
      _
    $region57: #{tpu_custom_call.1} parent=1 // pred_fallthru
      _
    // Predicated region
    $region58: #{tpu_custom_call.1} parent=1 // pred_check
      _
    $region59: #{tpu_custom_call.1} parent=1 // pred_check_branch
      %66 = sbr.rel (0) target = $region61
    $region60: #{tpu_custom_call.1} parent=1 // pred_region
      _
    $region61: #{tpu_custom_call.1} parent=1 // pred_fallthru
      _
    // Predicated region
    $region62: #{tpu_custom_call.1} parent=1 // pred_check
      _
    $region63: #{tpu_custom_call.1} parent=1 // pred_check_branch
      %68 = sbr.rel (0) target = $region65
    $region64: #{tpu_custom_call.1} parent=1 // pred_region
      _
    $region65: #{tpu_custom_call.1} parent=1 // pred_fallthru
      _
    // Predicated region
    $region66: #{tpu_custom_call.1} parent=1 // pred_check
      _
    $region67: #{tpu_custom_call.1} parent=1 // pred_check_branch
      %70 = sbr.rel (0) target = $region69
    $region68: #{tpu_custom_call.1} parent=1 // pred_region
      _
    $region69: #{tpu_custom_call.1} parent=1 // pred_fallthru
      _
    // Predicated region
    $region70: #{tpu_custom_call.1} parent=1 // pred_check
      _
    $region71: #{tpu_custom_call.1} parent=1 // pred_check_branch
      %72 = sbr.rel (0) target = $region73
    $region72: #{tpu_custom_call.1} parent=1 // pred_region
      _
    $region73: #{tpu_custom_call.1} parent=1 // pred_fallthru
      _
    // Predicated region
    $region74: #{tpu_custom_call.1} parent=1 // pred_check
      _
    $region75: #{tpu_custom_call.1} parent=1 // pred_check_branch
      %74 = sbr.rel (0) target = $region77
    $region76: #{tpu_custom_call.1} parent=1 // pred_region
      _
    $region77: #{tpu_custom_call.1} parent=1 // pred_fallthru
      _
    // Predicated region
    $region78: #{tpu_custom_call.1} parent=1 // pred_check
      _
    $region79: #{tpu_custom_call.1} parent=1 // pred_check_branch
      %76 = sbr.rel (0) target = $region81
    $region80: #{tpu_custom_call.1} parent=1 // pred_region
      _
    $region81: #{tpu_custom_call.1} parent=1 // pred_fallthru
      _
    // Predicated region
    $region82: #{tpu_custom_call.1} parent=1 // pred_check
      _
    $region83: #{tpu_custom_call.1} parent=1 // pred_check_branch
      %78 = sbr.rel (0) target = $region85
    $region84: #{tpu_custom_call.1} parent=1 // pred_region
      %79 = dma.done [#allocation3], 12288
    $region85: #{tpu_custom_call.1} parent=1 // pred_fallthru
      _
    %v80 = vld [vmem:[%s0] sm:$0xff]
    %v81 = vld [vmem:[%s0 + $0x8] sm:$0xff]
    %v82 = vld [vmem:[%s1] sm:$0x1]
    %84 = vset.pattern.permute.xlu0 0
    %85 = vperm.xlu0 %84, %v80
    %v86 = vpop.permute.xlu0 %85
    %89 = vset.pattern.permute.xlu0 0
    %90 = vperm.xlu0 %89, %v81
    %v91 = vpop.permute.xlu0 %90
    %v94 = vlaneseq
    %v95 = vshrl.u32 %v94, 7
    %v96 = vsub.s32 0, %v95
    %v97 = vrot.slane %v82, %v96
    %v99 = vmul.f32 %v86, %v97
    %v100 = vmul.f32 %v91, %v97
    %v101 = vld [vmem:[%s2] sm:$0x1]
    %v103 = vlaneseq
    %v104 = vshrl.u32 %v103, 7
    %v105 = vsub.s32 0, %v104
    %v106 = vrot.slane %v101, %v105
    %v108 = vadd.f32 %v99, %v106
    %v109 = vadd.f32 %v100, %v106
    %v110 = vld [vmem:[%s3] sm:$0xff]
    %v111 = vld [vmem:[%s3 + $0x8] sm:$0xff]
    %v112 = vadd.f32 %v108, %v110
    %v113 = vadd.f32 %v109, %v111
    %v114 = vld [vmem:[%s4] sm:$0xff]
    %v115 = vld [vmem:[%s4 + $0x8] sm:$0xff]
    %v116 = vld [vmem:[#allocation2] sm:$0xff]
    %v117 = vld [vmem:[#allocation2 + $0x8] sm:$0xff]
    %v118 = vld [vmem:[#allocation2 + $0x10] sm:$0xff]
    %v119 = vld [vmem:[#allocation2 + $0x18] sm:$0xff]
    %v120 = vld [vmem:[#allocation2 + $0x20] sm:$0xff]
    %v121 = vld [vmem:[#allocation2 + $0x28] sm:$0xff]
    %v122 = vld [vmem:[#allocation2 + $0x30] sm:$0xff]
    %v123 = vld [vmem:[#allocation2 + $0x38] sm:$0xff]
    %v124 = vld [vmem:[#allocation2 + $0x40] sm:$0xff]
    %v125 = vld [vmem:[#allocation2 + $0x48] sm:$0xff]
    %v126 = vld [vmem:[#allocation2 + $0x50] sm:$0xff]
    %v127 = vld [vmem:[#allocation2 + $0x58] sm:$0xff]
    %v128 = vld [vmem:[#allocation2 + $0x60] sm:$0xff]
    %v129 = vld [vmem:[#allocation2 + $0x68] sm:$0xff]
    %v130 = vld [vmem:[#allocation2 + $0x70] sm:$0xff]
    %v131 = vld [vmem:[#allocation2 + $0x78] sm:$0xff]
    %v132 = vld [vmem:[#allocation2 + $0x80] sm:$0xff]
    %v133 = vld [vmem:[#allocation2 + $0x88] sm:$0xff]
    %v134 = vld [vmem:[#allocation2 + $0x90] sm:$0xff]
    %v135 = vld [vmem:[#allocation2 + $0x98] sm:$0xff]
    %v136 = vld [vmem:[#allocation2 + $0xa0] sm:$0xff]
    %v137 = vld [vmem:[#allocation2 + $0xa8] sm:$0xff]
    %v138 = vld [vmem:[#allocation2 + $0xb0] sm:$0xff]
    %v139 = vld [vmem:[#allocation2 + $0xb8] sm:$0xff]
    %v140 = vld [vmem:[%s6] sm:$0x7]
    %v142 = vlaneseq
    %v143 = vshrl.u32 %v142, 7
    %v144 = vsub.s32 0, %v143
    %v145 = vrot.slane %v140, %v144
    %v146 = vlaneseq
    %v147 = vshrl.u32 %v146, 7
    %v148 = vsub.s32 1, %v147
    %v149 = vrot.slane %v140, %v148
    %v150 = vlaneseq
    %v151 = vshrl.u32 %v150, 7
    %v152 = vsub.s32 2, %v151
    %v153 = vrot.slane %v140, %v152
    %vm157 = vcmask 523264
    %v159 = vsel %vm157, %v112, 0
    %v162 = vsel %vm157, %v113, 0
    %164 = vmatprep.subr.mxu0 %v117
    %165 = vmatpush1.msra.mxu0 %v116
    %166 = vmatprep.subr.mxu0 %v120
    %167 = vmatpush1.msra.mxu0 %v119
    %168 = vmatprep.subr.mxu0 %v123
    %169 = vmatpush1.msra.mxu0 %v122
    %170 = vmatprep.subr.mxu0 %v126
    %171 = vmatpush1.msra.mxu0 %v125
    %172 = vmatprep.subr.mxu0 %v129
    %173 = vmatpush1.msra.mxu0 %v128
    %174 = vmatprep.subr.mxu0 %v132
    %175 = vmatpush1.msra.mxu0 %v131
    %176 = vmatprep.subr.mxu0 %v135
    %177 = vmatpush1.msra.mxu0 %v134
    %178 = vmatprep.subr.mxu0 %v138
    %179 = vmatpush1.msra.mxu0 %v137
    %180 = vmatprep.subr.mxu0 0.0
    %181 = vmatpush1.msra.mxu0 0.0
    %182 = vmatprep.subr.mxu0 0.0
    %183 = vmatpush1.msra.mxu0 0.0
    %184 = vmatprep.subr.mxu0 0.0
    %185 = vmatpush1.msra.mxu0 0.0
    %186 = vmatprep.subr.mxu0 0.0
    %187 = vmatpush1.msra.mxu0 0.0
    %188 = vmatprep.subr.mxu0 0.0
    %189 = vmatpush1.msra.mxu0 0.0
    %190 = vmatprep.subr.mxu0 0.0
    %191 = vmatpush1.msra.mxu0 0.0
    %192 = vmatprep.subr.mxu0 0.0
    %193 = vmatpush1.msra.mxu0 0.0
    %194 = vmatprep.subr.mxu0 0.0
    %195 = vmatpush1.msra.mxu0 0.0
    %196 = vmatprep.subr.mxu0 0.0
    %197 = vmatpush1.msra.mxu0 0.0
    %198 = vmatprep.subr.mxu0 0.0
    %199 = vmatpush1.msra.mxu0 0.0
    %200 = vmatprep.subr.mxu0 0.0
    %201 = vmatpush1.msra.mxu0 0.0
    %202 = vmatprep.subr.mxu0 0.0
    %203 = vmatpush1.msra.mxu0 0.0
    %204 = vmatprep.subr.mxu0 0.0
    %205 = vmatpush1.msra.mxu0 0.0
    %206 = vmatprep.subr.mxu0 0.0
    %207 = vmatpush1.msra.mxu0 0.0
    %208 = vmatprep.subr.mxu0 0.0
    %209 = vmatpush1.msra.mxu0 0.0
    %210 = vmatprep.subr.mxu0 0.0
    %211 = vmatpush1.msra.mxu0 0.0
    %212 = vmatprep.subr.mxu0 0.0
    %213 = vmatpush1.msra.mxu0 0.0
    %214 = vmatprep.subr.mxu0 0.0
    %215 = vmatpush1.msra.mxu0 0.0
    %216 = vmatprep.subr.mxu0 0.0
    %217 = vmatpush1.msra.mxu0 0.0
    %218 = vmatprep.subr.mxu0 0.0
    %219 = vmatpush1.msra.mxu0 0.0
    %220 = vmatprep.subr.mxu0 0.0
    %221 = vmatpush1.msra.mxu0 0.0
    %222 = vmatprep.subr.mxu0 0.0
    %223 = vmatpush1.msra.mxu0 0.0
    %224 = vmatprep.subr.mxu0 0.0
    %225 = vmatpush1.msra.mxu0 0.0
    %226 = vmatprep.subr.mxu0 0.0
    %227 = vmatpush1.msra.mxu0 0.0
    %228 = vmatprep.mubr.f32.mxu0 0.0
    %229 = vmatmul.mubr.f32.gmra.mrb[0].mxu0 %v159
    %v230 = vpop.f32.mrb[0].mxu0
    %v231 = vadd.f32 %v145, %v230
    %v232 = vpop.f32.mrb[0].mxu0
    %v233 = vadd.f32 %v149, %v232
    %234 = vmatprep.mubr.f32.mxu0 0.0
    %235 = vmatmul.mubr.f32.gmra.mrb[0].mxu0 %v162
    %v236 = vpop.f32.mrb[0].mxu0
    %v237 = vadd.f32 %v145, %v236
    %v238 = vpop.f32.mrb[0].mxu0
    %v239 = vadd.f32 %v149, %v238
    %240 = vdwg.mxu0
    %241 = vmatprep.subr.mxu0 0.0
    %242 = vmatpush1.msra.mxu0 %v118
    %243 = vmatprep.subr.mxu0 0.0
    %244 = vmatpush1.msra.mxu0 %v121
    %245 = vmatprep.subr.mxu0 0.0
    %246 = vmatpush1.msra.mxu0 %v124
    %247 = vmatprep.subr.mxu0 0.0
    %248 = vmatpush1.msra.mxu0 %v127
    %249 = vmatprep.subr.mxu0 0.0
    %250 = vmatpush1.msra.mxu0 %v130
    %251 = vmatprep.subr.mxu0 0.0
    %252 = vmatpush1.msra.mxu0 %v133
    %253 = vmatprep.subr.mxu0 0.0
    %254 = vmatpush1.msra.mxu0 %v136
    %255 = vmatprep.subr.mxu0 0.0
    %256 = vmatpush1.msra.mxu0 %v139
    %257 = vmatprep.subr.mxu0 0.0
    %258 = vmatpush1.msra.mxu0 0.0
    %259 = vmatprep.subr.mxu0 0.0
    %260 = vmatpush1.msra.mxu0 0.0
    %261 = vmatprep.subr.mxu0 0.0
    %262 = vmatpush1.msra.mxu0 0.0
    %263 = vmatprep.subr.mxu0 0.0
    %264 = vmatpush1.msra.mxu0 0.0
    %265 = vmatprep.subr.mxu0 0.0
    %266 = vmatpush1.msra.mxu0 0.0
    %267 = vmatprep.subr.mxu0 0.0
    %268 = vmatpush1.msra.mxu0 0.0
    %269 = vmatprep.subr.mxu0 0.0
    %270 = vmatpush1.msra.mxu0 0.0
    %271 = vmatprep.subr.mxu0 0.0
    %272 = vmatpush1.msra.mxu0 0.0
    %273 = vmatprep.subr.mxu0 0.0
    %274 = vmatpush1.msra.mxu0 0.0
    %275 = vmatprep.subr.mxu0 0.0
    %276 = vmatpush1.msra.mxu0 0.0
    %277 = vmatprep.subr.mxu0 0.0
    %278 = vmatpush1.msra.mxu0 0.0
    %279 = vmatprep.subr.mxu0 0.0
    %280 = vmatpush1.msra.mxu0 0.0
    %281 = vmatprep.subr.mxu0 0.0
    %282 = vmatpush1.msra.mxu0 0.0
    %283 = vmatprep.subr.mxu0 0.0
    %284 = vmatpush1.msra.mxu0 0.0
    %285 = vmatprep.subr.mxu0 0.0
    %286 = vmatpush1.msra.mxu0 0.0
    %287 = vmatprep.subr.mxu0 0.0
    %288 = vmatpush1.msra.mxu0 0.0
    %289 = vmatprep.subr.mxu0 0.0
    %290 = vmatpush1.msra.mxu0 0.0
    %291 = vmatprep.subr.mxu0 0.0
    %292 = vmatpush1.msra.mxu0 0.0
    %293 = vmatprep.subr.mxu0 0.0
    %294 = vmatpush1.msra.mxu0 0.0
    %295 = vmatprep.subr.mxu0 0.0
    %296 = vmatpush1.msra.mxu0 0.0
    %297 = vmatprep.subr.mxu0 0.0
    %298 = vmatpush1.msra.mxu0 0.0
    %299 = vmatprep.subr.mxu0 0.0
    %300 = vmatpush1.msra.mxu0 0.0
    %301 = vmatprep.subr.mxu0 0.0
    %302 = vmatpush1.msra.mxu0 0.0
    %303 = vmatprep.subr.mxu0 0.0
    %304 = vmatpush1.msra.mxu0 0.0
    %305 = vmatprep.mubr.f32.mxu0 0.0
    %306 = vmatmul.mubr.f32.gmra.mrb[0].mxu0 %v159
    %v307 = vpop.f32.mrb[0].mxu0
    %v308 = vadd.f32 %v153, %v307
    %v309 = vpop.f32.mrb[0].mxu0
    %310 = vmatprep.mubr.f32.mxu0 0.0
    %311 = vmatmul.mubr.f32.gmra.mrb[0].mxu0 %v162
    %v312 = vpop.f32.mrb[0].mxu0
    %v313 = vadd.f32 %v153, %v312
    %v314 = vpop.f32.mrb[0].mxu0
    %315 = vdwg.mxu0
    %v316 = vld [vmem:[%s9] sm:$0x3f]
    %v318 = vcombine.high %v316, %v316
    %v320 = vunpack.c.l.s4 1966171168
    %v321 = vunpack.c.0.s8 %v320
    %v322 = vlaneseq
    %v323 = vshrl.u32 %v322, 7
    %v324 = vsub.s32 %v321, %v323
    %v325 = vrot.slane %v316, %v324
    %v327 = vunpack.c.l.s4 1966171168
    %v328 = vunpack.c.0.s8 %v327
    %v329 = vlaneseq
    %v330 = vshrl.u32 %v329, 7
    %v331 = vsub.s32 %v328, %v330
    %v332 = vrot.slane %v318, %v331
    %v333 = vcombine.high %v325, %v325
    %v334 = vcombine.high %v332, %v332
    %v336 = vunpack.c.l.s4 1966171168
    %v337 = vunpack.c.0.s8 %v336
    %v338 = vlaneseq
    %v339 = vshrl.u32 %v338, 7
    %v340 = vsub.s32 %v337, %v339
    %v341 = vrot.slane %v325, %v340
    %v343 = vunpack.c.l.s4 1966171168
    %v344 = vunpack.c.0.s8 %v343
    %v345 = vlaneseq
    %v346 = vshrl.u32 %v345, 7
    %v347 = vsub.s32 %v344, %v346
    %v348 = vrot.slane %v332, %v347
    %v350 = vunpack.c.l.s4 1966171168
    %v351 = vunpack.c.0.s8 %v350
    %v352 = vlaneseq
    %v353 = vshrl.u32 %v352, 7
    %v354 = vsub.s32 %v351, %v353
    %v355 = vrot.slane %v333, %v354
    %v357 = vunpack.c.l.s4 1966171168
    %v358 = vunpack.c.0.s8 %v357
    %v359 = vlaneseq
    %v360 = vshrl.u32 %v359, 7
    %v361 = vsub.s32 %v358, %v360
    %v362 = vrot.slane %v334, %v361
    %v363 = vcombine.high %v341, %v341
    %v364 = vcombine.high %v355, %v355
    %v365 = vlaneseq
    %v366 = vshrl.u32 %v365, 7
    %v367 = vsub.s32 0, %v366
    %v368 = vrot.slane %v341, %v367
    %v369 = vlaneseq
    %v370 = vshrl.u32 %v369, 7
    %v371 = vsub.s32 0, %v370
    %v372 = vrot.slane %v355, %v371
    %v373 = vlaneseq
    %v374 = vshrl.u32 %v373, 7
    %v375 = vsub.s32 0, %v374
    %v376 = vrot.slane %v363, %v375
    %v377 = vlaneseq
    %v378 = vshrl.u32 %v377, 7
    %v379 = vsub.s32 0, %v378
    %v380 = vrot.slane %v364, %v379
    %v381 = vlaneseq
    %v382 = vshrl.u32 %v381, 7
    %v383 = vsub.s32 0, %v382
    %v384 = vrot.slane %v348, %v383
    %v385 = vlaneseq
    %v386 = vshrl.u32 %v385, 7
    %v387 = vsub.s32 0, %v386
    %v388 = vrot.slane %v362, %v387
    %v395 = vmul.f32 %v231, %v368
    %v396 = vmul.f32 %v237, %v368
    %v397 = vmul.f32 %v231, %v372
    %v398 = vmul.f32 %v237, %v372
    %v399 = vmul.f32 %v231, %v376
    %v400 = vmul.f32 %v237, %v376
    %v401 = vmul.f32 %v231, %v380
    %v402 = vmul.f32 %v237, %v380
    %v403 = vmul.f32 %v231, %v384
    %v404 = vmul.f32 %v237, %v384
    %v405 = vmul.f32 %v231, %v388
    %v406 = vmul.f32 %v237, %v388
    %v407 = vmul.f32 %v308, %v368
    %v408 = vmul.f32 %v313, %v368
    %v409 = vmul.f32 %v308, %v372
    %v410 = vmul.f32 %v313, %v372
    %v411 = vmul.f32 %v308, %v376
    %v412 = vmul.f32 %v313, %v376
    %v413 = vmul.f32 %v308, %v380
    %v414 = vmul.f32 %v313, %v380
    %v415 = vmul.f32 %v308, %v384
    %v416 = vmul.f32 %v313, %v384
    %v417 = vmul.f32 %v308, %v388
    %v418 = vmul.f32 %v313, %v388
    %v420 = vsel %vm157, %v395, 0
    %v423 = vsel %vm157, %v396, 0
    %v426 = vsel %vm157, %v233, 0
    %v429 = vsel %vm157, %v239, 0
    %431 = vmatprep.subr.mxu0 0.0
    %432 = vmatpush1.xpose.msra.mxu0 %v426
    %433 = vmatprep.subr.mxu0 0.0
    %434 = vmatpush1.xpose.msra.mxu0 %v429
    %435 = vmatprep.subr.mxu0 0.0
    %436 = vmatpush1.xpose.msra.mxu0 0.0
    %437 = vmatprep.subr.mxu0 0.0
    %438 = vmatpush1.xpose.msra.mxu0 0.0
    %439 = vmatprep.subr.mxu0 0.0
    %440 = vmatpush1.xpose.msra.mxu0 0.0
    %441 = vmatprep.subr.mxu0 0.0
    %442 = vmatpush1.xpose.msra.mxu0 0.0
    %443 = vmatprep.subr.mxu0 0.0
    %444 = vmatpush1.xpose.msra.mxu0 0.0
    %445 = vmatprep.subr.mxu0 0.0
    %446 = vmatpush1.xpose.msra.mxu0 0.0
    %447 = vmatprep.subr.mxu0 0.0
    %448 = vmatpush1.xpose.msra.mxu0 0.0
    %449 = vmatprep.subr.mxu0 0.0
    %450 = vmatpush1.xpose.msra.mxu0 0.0
    %451 = vmatprep.subr.mxu0 0.0
    %452 = vmatpush1.xpose.msra.mxu0 0.0
    %453 = vmatprep.subr.mxu0 0.0
    %454 = vmatpush1.xpose.msra.mxu0 0.0
    %455 = vmatprep.subr.mxu0 0.0
    %456 = vmatpush1.xpose.msra.mxu0 0.0
    %457 = vmatprep.subr.mxu0 0.0
    %458 = vmatpush1.xpose.msra.mxu0 0.0
    %459 = vmatprep.subr.mxu0 0.0
    %460 = vmatpush1.xpose.msra.mxu0 0.0
    %461 = vmatprep.subr.mxu0 0.0
    %462 = vmatpush1.xpose.msra.mxu0 0.0
    %463 = vmatprep.subr.mxu0 0.0
    %464 = vmatpush1.xpose.msra.mxu0 0.0
    %465 = vmatprep.subr.mxu0 0.0
    %466 = vmatpush1.xpose.msra.mxu0 0.0
    %467 = vmatprep.subr.mxu0 0.0
    %468 = vmatpush1.xpose.msra.mxu0 0.0
    %469 = vmatprep.subr.mxu0 0.0
    %470 = vmatpush1.xpose.msra.mxu0 0.0
    %471 = vmatprep.subr.mxu0 0.0
    %472 = vmatpush1.xpose.msra.mxu0 0.0
    %473 = vmatprep.subr.mxu0 0.0
    %474 = vmatpush1.xpose.msra.mxu0 0.0
    %475 = vmatprep.subr.mxu0 0.0
    %476 = vmatpush1.xpose.msra.mxu0 0.0
    %477 = vmatprep.subr.mxu0 0.0
    %478 = vmatpush1.xpose.msra.mxu0 0.0
    %479 = vmatprep.subr.mxu0 0.0
    %480 = vmatpush1.xpose.msra.mxu0 0.0
    %481 = vmatprep.subr.mxu0 0.0
    %482 = vmatpush1.xpose.msra.mxu0 0.0
    %483 = vmatprep.subr.mxu0 0.0
    %484 = vmatpush1.xpose.msra.mxu0 0.0
    %485 = vmatprep.subr.mxu0 0.0
    %486 = vmatpush1.xpose.msra.mxu0 0.0
    %487 = vmatprep.subr.mxu0 0.0
    %488 = vmatpush1.xpose.msra.mxu0 0.0
    %489 = vmatprep.subr.mxu0 0.0
    %490 = vmatpush1.xpose.msra.mxu0 0.0
    %491 = vmatprep.subr.mxu0 0.0
    %492 = vmatpush1.xpose.msra.mxu0 0.0
    %493 = vmatprep.subr.mxu0 0.0
    %494 = vmatpush1.xpose.msra.mxu0 0.0
    %495 = vmatprep.mubr.f32.mxu0 0.0
    %496 = vmatmul.mubr.f32.gmra.mrb[0].mxu0 %v420
    %v497 = vpop.f32.mrb[0].mxu0
    %v498 = vadd.f32 %v114, %v497
    %v499 = vpop.f32.mrb[0].mxu0
    %500 = vmatprep.mubr.f32.mxu0 0.0
    %501 = vmatmul.mubr.f32.gmra.mrb[0].mxu0 %v423
    %v502 = vpop.f32.mrb[0].mxu0
    %v503 = vadd.f32 %v115, %v502
    %v504 = vpop.f32.mrb[0].mxu0
    %505 = vdwg.mxu0
    %v507 = vsel %vm157, %v397, 0
    %v510 = vsel %vm157, %v398, 0
    %512 = vmatprep.subr.mxu0 0.0
    %513 = vmatpush1.xpose.msra.mxu0 %v426
    %514 = vmatprep.subr.mxu0 0.0
    %515 = vmatpush1.xpose.msra.mxu0 %v429
    %516 = vmatprep.subr.mxu0 0.0
    %517 = vmatpush1.xpose.msra.mxu0 0.0
    %518 = vmatprep.subr.mxu0 0.0
    %519 = vmatpush1.xpose.msra.mxu0 0.0
    %520 = vmatprep.subr.mxu0 0.0
    %521 = vmatpush1.xpose.msra.mxu0 0.0
    %522 = vmatprep.subr.mxu0 0.0
    %523 = vmatpush1.xpose.msra.mxu0 0.0
    %524 = vmatprep.subr.mxu0 0.0
    %525 = vmatpush1.xpose.msra.mxu0 0.0
    %526 = vmatprep.subr.mxu0 0.0
    %527 = vmatpush1.xpose.msra.mxu0 0.0
    %528 = vmatprep.subr.mxu0 0.0
    %529 = vmatpush1.xpose.msra.mxu0 0.0
    %530 = vmatprep.subr.mxu0 0.0
    %531 = vmatpush1.xpose.msra.mxu0 0.0
    %532 = vmatprep.subr.mxu0 0.0
    %533 = vmatpush1.xpose.msra.mxu0 0.0
    %534 = vmatprep.subr.mxu0 0.0
    %535 = vmatpush1.xpose.msra.mxu0 0.0
    %536 = vmatprep.subr.mxu0 0.0
    %537 = vmatpush1.xpose.msra.mxu0 0.0
    %538 = vmatprep.subr.mxu0 0.0
    %539 = vmatpush1.xpose.msra.mxu0 0.0
    %540 = vmatprep.subr.mxu0 0.0
    %541 = vmatpush1.xpose.msra.mxu0 0.0
    %542 = vmatprep.subr.mxu0 0.0
    %543 = vmatpush1.xpose.msra.mxu0 0.0
    %544 = vmatprep.subr.mxu0 0.0
    %545 = vmatpush1.xpose.msra.mxu0 0.0
    %546 = vmatprep.subr.mxu0 0.0
    %547 = vmatpush1.xpose.msra.mxu0 0.0
    %548 = vmatprep.subr.mxu0 0.0
    %549 = vmatpush1.xpose.msra.mxu0 0.0
    %550 = vmatprep.subr.mxu0 0.0
    %551 = vmatpush1.xpose.msra.mxu0 0.0
    %552 = vmatprep.subr.mxu0 0.0
    %553 = vmatpush1.xpose.msra.mxu0 0.0
    %554 = vmatprep.subr.mxu0 0.0
    %555 = vmatpush1.xpose.msra.mxu0 0.0
    %556 = vmatprep.subr.mxu0 0.0
    %557 = vmatpush1.xpose.msra.mxu0 0.0
    %558 = vmatprep.subr.mxu0 0.0
    %559 = vmatpush1.xpose.msra.mxu0 0.0
    %560 = vmatprep.subr.mxu0 0.0
    %561 = vmatpush1.xpose.msra.mxu0 0.0
    %562 = vmatprep.subr.mxu0 0.0
    %563 = vmatpush1.xpose.msra.mxu0 0.0
    %564 = vmatprep.subr.mxu0 0.0
    %565 = vmatpush1.xpose.msra.mxu0 0.0
    %566 = vmatprep.subr.mxu0 0.0
    %567 = vmatpush1.xpose.msra.mxu0 0.0
    %568 = vmatprep.subr.mxu0 0.0
    %569 = vmatpush1.xpose.msra.mxu0 0.0
    %570 = vmatprep.subr.mxu0 0.0
    %571 = vmatpush1.xpose.msra.mxu0 0.0
    %572 = vmatprep.subr.mxu0 0.0
    %573 = vmatpush1.xpose.msra.mxu0 0.0
    %574 = vmatprep.subr.mxu0 0.0
    %575 = vmatpush1.xpose.msra.mxu0 0.0
    %576 = vmatprep.mubr.f32.mxu0 0.0
    %577 = vmatmul.mubr.f32.gmra.mrb[0].mxu0 %v507
    %v578 = vpop.f32.mrb[0].mxu0
    %v579 = vadd.f32 %v114, %v578
    %v580 = vpop.f32.mrb[0].mxu0
    %581 = vmatprep.mubr.f32.mxu0 0.0
    %582 = vmatmul.mubr.f32.gmra.mrb[0].mxu0 %v510
    %v583 = vpop.f32.mrb[0].mxu0
    %v584 = vadd.f32 %v115, %v583
    %v585 = vpop.f32.mrb[0].mxu0
    %586 = vdwg.mxu0
    %v588 = vsel %vm157, %v399, 0
    %v591 = vsel %vm157, %v400, 0
    %593 = vmatprep.subr.mxu0 0.0
    %594 = vmatpush1.xpose.msra.mxu0 %v426
    %595 = vmatprep.subr.mxu0 0.0
    %596 = vmatpush1.xpose.msra.mxu0 %v429
    %597 = vmatprep.subr.mxu0 0.0
    %598 = vmatpush1.xpose.msra.mxu0 0.0
    %599 = vmatprep.subr.mxu0 0.0
    %600 = vmatpush1.xpose.msra.mxu0 0.0
    %601 = vmatprep.subr.mxu0 0.0
    %602 = vmatpush1.xpose.msra.mxu0 0.0
    %603 = vmatprep.subr.mxu0 0.0
    %604 = vmatpush1.xpose.msra.mxu0 0.0
    %605 = vmatprep.subr.mxu0 0.0
    %606 = vmatpush1.xpose.msra.mxu0 0.0
    %607 = vmatprep.subr.mxu0 0.0
    %608 = vmatpush1.xpose.msra.mxu0 0.0
    %609 = vmatprep.subr.mxu0 0.0
    %610 = vmatpush1.xpose.msra.mxu0 0.0
    %611 = vmatprep.subr.mxu0 0.0
    %612 = vmatpush1.xpose.msra.mxu0 0.0
    %613 = vmatprep.subr.mxu0 0.0
    %614 = vmatpush1.xpose.msra.mxu0 0.0
    %615 = vmatprep.subr.mxu0 0.0
    %616 = vmatpush1.xpose.msra.mxu0 0.0
    %617 = vmatprep.subr.mxu0 0.0
    %618 = vmatpush1.xpose.msra.mxu0 0.0
    %619 = vmatprep.subr.mxu0 0.0
    %620 = vmatpush1.xpose.msra.mxu0 0.0
    %621 = vmatprep.subr.mxu0 0.0
    %622 = vmatpush1.xpose.msra.mxu0 0.0
    %623 = vmatprep.subr.mxu0 0.0
    %624 = vmatpush1.xpose.msra.mxu0 0.0
    %625 = vmatprep.subr.mxu0 0.0
    %626 = vmatpush1.xpose.msra.mxu0 0.0
    %627 = vmatprep.subr.mxu0 0.0
    %628 = vmatpush1.xpose.msra.mxu0 0.0
    %629 = vmatprep.subr.mxu0 0.0
    %630 = vmatpush1.xpose.msra.mxu0 0.0
    %631 = vmatprep.subr.mxu0 0.0
    %632 = vmatpush1.xpose.msra.mxu0 0.0
    %633 = vmatprep.subr.mxu0 0.0
    %634 = vmatpush1.xpose.msra.mxu0 0.0
    %635 = vmatprep.subr.mxu0 0.0
    %636 = vmatpush1.xpose.msra.mxu0 0.0
    %637 = vmatprep.subr.mxu0 0.0
    %638 = vmatpush1.xpose.msra.mxu0 0.0
    %639 = vmatprep.subr.mxu0 0.0
    %640 = vmatpush1.xpose.msra.mxu0 0.0
    %641 = vmatprep.subr.mxu0 0.0
    %642 = vmatpush1.xpose.msra.mxu0 0.0
    %643 = vmatprep.subr.mxu0 0.0
    %644 = vmatpush1.xpose.msra.mxu0 0.0
    %645 = vmatprep.subr.mxu0 0.0
    %646 = vmatpush1.xpose.msra.mxu0 0.0
    %647 = vmatprep.subr.mxu0 0.0
    %648 = vmatpush1.xpose.msra.mxu0 0.0
    %649 = vmatprep.subr.mxu0 0.0
    %650 = vmatpush1.xpose.msra.mxu0 0.0
    %651 = vmatprep.subr.mxu0 0.0
    %652 = vmatpush1.xpose.msra.mxu0 0.0
    %653 = vmatprep.subr.mxu0 0.0
    %654 = vmatpush1.xpose.msra.mxu0 0.0
    %655 = vmatprep.subr.mxu0 0.0
    %656 = vmatpush1.xpose.msra.mxu0 0.0
    %657 = vmatprep.mubr.f32.mxu0 0.0
    %658 = vmatmul.mubr.f32.gmra.mrb[0].mxu0 %v588
    %v659 = vpop.f32.mrb[0].mxu0
    %v660 = vadd.f32 %v114, %v659
    %v661 = vpop.f32.mrb[0].mxu0
    %662 = vmatprep.mubr.f32.mxu0 0.0
    %663 = vmatmul.mubr.f32.gmra.mrb[0].mxu0 %v591
    %v664 = vpop.f32.mrb[0].mxu0
    %v665 = vadd.f32 %v115, %v664
    %v666 = vpop.f32.mrb[0].mxu0
    %667 = vdwg.mxu0
    %v669 = vsel %vm157, %v401, 0
    %v672 = vsel %vm157, %v402, 0
    %674 = vmatprep.subr.mxu0 0.0
    %675 = vmatpush1.xpose.msra.mxu0 %v426
    %676 = vmatprep.subr.mxu0 0.0
    %677 = vmatpush1.xpose.msra.mxu0 %v429
    %678 = vmatprep.subr.mxu0 0.0
    %679 = vmatpush1.xpose.msra.mxu0 0.0
    %680 = vmatprep.subr.mxu0 0.0
    %681 = vmatpush1.xpose.msra.mxu0 0.0
    %682 = vmatprep.subr.mxu0 0.0
    %683 = vmatpush1.xpose.msra.mxu0 0.0
    %684 = vmatprep.subr.mxu0 0.0
    %685 = vmatpush1.xpose.msra.mxu0 0.0
    %686 = vmatprep.subr.mxu0 0.0
    %687 = vmatpush1.xpose.msra.mxu0 0.0
    %688 = vmatprep.subr.mxu0 0.0
    %689 = vmatpush1.xpose.msra.mxu0 0.0
    %690 = vmatprep.subr.mxu0 0.0
    %691 = vmatpush1.xpose.msra.mxu0 0.0
    %692 = vmatprep.subr.mxu0 0.0
    %693 = vmatpush1.xpose.msra.mxu0 0.0
    %694 = vmatprep.subr.mxu0 0.0
    %695 = vmatpush1.xpose.msra.mxu0 0.0
    %696 = vmatprep.subr.mxu0 0.0
    %697 = vmatpush1.xpose.msra.mxu0 0.0
    %698 = vmatprep.subr.mxu0 0.0
    %699 = vmatpush1.xpose.msra.mxu0 0.0
    %700 = vmatprep.subr.mxu0 0.0
    %701 = vmatpush1.xpose.msra.mxu0 0.0
    %702 = vmatprep.subr.mxu0 0.0
    %703 = vmatpush1.xpose.msra.mxu0 0.0
    %704 = vmatprep.subr.mxu0 0.0
    %705 = vmatpush1.xpose.msra.mxu0 0.0
    %706 = vmatprep.subr.mxu0 0.0
    %707 = vmatpush1.xpose.msra.mxu0 0.0
    %708 = vmatprep.subr.mxu0 0.0
    %709 = vmatpush1.xpose.msra.mxu0 0.0
    %710 = vmatprep.subr.mxu0 0.0
    %711 = vmatpush1.xpose.msra.mxu0 0.0
    %712 = vmatprep.subr.mxu0 0.0
    %713 = vmatpush1.xpose.msra.mxu0 0.0
    %714 = vmatprep.subr.mxu0 0.0
    %715 = vmatpush1.xpose.msra.mxu0 0.0
    %716 = vmatprep.subr.mxu0 0.0
    %717 = vmatpush1.xpose.msra.mxu0 0.0
    %718 = vmatprep.subr.mxu0 0.0
    %719 = vmatpush1.xpose.msra.mxu0 0.0
    %720 = vmatprep.subr.mxu0 0.0
    %721 = vmatpush1.xpose.msra.mxu0 0.0
    %722 = vmatprep.subr.mxu0 0.0
    %723 = vmatpush1.xpose.msra.mxu0 0.0
    %724 = vmatprep.subr.mxu0 0.0
    %725 = vmatpush1.xpose.msra.mxu0 0.0
    %726 = vmatprep.subr.mxu0 0.0
    %727 = vmatpush1.xpose.msra.mxu0 0.0
    %728 = vmatprep.subr.mxu0 0.0
    %729 = vmatpush1.xpose.msra.mxu0 0.0
    %730 = vmatprep.subr.mxu0 0.0
    %731 = vmatpush1.xpose.msra.mxu0 0.0
    %732 = vmatprep.subr.mxu0 0.0
    %733 = vmatpush1.xpose.msra.mxu0 0.0
    %734 = vmatprep.subr.mxu0 0.0
    %735 = vmatpush1.xpose.msra.mxu0 0.0
    %736 = vmatprep.subr.mxu0 0.0
    %737 = vmatpush1.xpose.msra.mxu0 0.0
    %738 = vmatprep.mubr.f32.mxu0 0.0
    %739 = vmatmul.mubr.f32.gmra.mrb[0].mxu0 %v669
    %v740 = vpop.f32.mrb[0].mxu0
    %v741 = vadd.f32 %v114, %v740
    %v742 = vpop.f32.mrb[0].mxu0
    %743 = vmatprep.mubr.f32.mxu0 0.0
    %744 = vmatmul.mubr.f32.gmra.mrb[0].mxu0 %v672
    %v745 = vpop.f32.mrb[0].mxu0
    %v746 = vadd.f32 %v115, %v745
    %v747 = vpop.f32.mrb[0].mxu0
    %748 = vdwg.mxu0
    %v750 = vsel %vm157, %v403, 0
    %v753 = vsel %vm157, %v404, 0
    %755 = vmatprep.subr.mxu0 0.0
    %756 = vmatpush1.xpose.msra.mxu0 %v426
    %757 = vmatprep.subr.mxu0 0.0
    %758 = vmatpush1.xpose.msra.mxu0 %v429
    %759 = vmatprep.subr.mxu0 0.0
    %760 = vmatpush1.xpose.msra.mxu0 0.0
    %761 = vmatprep.subr.mxu0 0.0
    %762 = vmatpush1.xpose.msra.mxu0 0.0
    %763 = vmatprep.subr.mxu0 0.0
    %764 = vmatpush1.xpose.msra.mxu0 0.0
    %765 = vmatprep.subr.mxu0 0.0
    %766 = vmatpush1.xpose.msra.mxu0 0.0
    %767 = vmatprep.subr.mxu0 0.0
    %768 = vmatpush1.xpose.msra.mxu0 0.0
    %769 = vmatprep.subr.mxu0 0.0
    %770 = vmatpush1.xpose.msra.mxu0 0.0
    %771 = vmatprep.subr.mxu0 0.0
    %772 = vmatpush1.xpose.msra.mxu0 0.0
    %773 = vmatprep.subr.mxu0 0.0
    %774 = vmatpush1.xpose.msra.mxu0 0.0
    %775 = vmatprep.subr.mxu0 0.0
    %776 = vmatpush1.xpose.msra.mxu0 0.0
    %777 = vmatprep.subr.mxu0 0.0
    %778 = vmatpush1.xpose.msra.mxu0 0.0
    %779 = vmatprep.subr.mxu0 0.0
    %780 = vmatpush1.xpose.msra.mxu0 0.0
    %781 = vmatprep.subr.mxu0 0.0
    %782 = vmatpush1.xpose.msra.mxu0 0.0
    %783 = vmatprep.subr.mxu0 0.0
    %784 = vmatpush1.xpose.msra.mxu0 0.0
    %785 = vmatprep.subr.mxu0 0.0
    %786 = vmatpush1.xpose.msra.mxu0 0.0
    %787 = vmatprep.subr.mxu0 0.0
    %788 = vmatpush1.xpose.msra.mxu0 0.0
    %789 = vmatprep.subr.mxu0 0.0
    %790 = vmatpush1.xpose.msra.mxu0 0.0
    %791 = vmatprep.subr.mxu0 0.0
    %792 = vmatpush1.xpose.msra.mxu0 0.0
    %793 = vmatprep.subr.mxu0 0.0
    %794 = vmatpush1.xpose.msra.mxu0 0.0
    %795 = vmatprep.subr.mxu0 0.0
    %796 = vmatpush1.xpose.msra.mxu0 0.0
    %797 = vmatprep.subr.mxu0 0.0
    %798 = vmatpush1.xpose.msra.mxu0 0.0
    %799 = vmatprep.subr.mxu0 0.0
    %800 = vmatpush1.xpose.msra.mxu0 0.0
    %801 = vmatprep.subr.mxu0 0.0
    %802 = vmatpush1.xpose.msra.mxu0 0.0
    %803 = vmatprep.subr.mxu0 0.0
    %804 = vmatpush1.xpose.msra.mxu0 0.0
    %805 = vmatprep.subr.mxu0 0.0
    %806 = vmatpush1.xpose.msra.mxu0 0.0
    %807 = vmatprep.subr.mxu0 0.0
    %808 = vmatpush1.xpose.msra.mxu0 0.0
    %809 = vmatprep.subr.mxu0 0.0
    %810 = vmatpush1.xpose.msra.mxu0 0.0
    %811 = vmatprep.subr.mxu0 0.0
    %812 = vmatpush1.xpose.msra.mxu0 0.0
    %813 = vmatprep.subr.mxu0 0.0
    %814 = vmatpush1.xpose.msra.mxu0 0.0
    %815 = vmatprep.subr.mxu0 0.0
    %816 = vmatpush1.xpose.msra.mxu0 0.0
    %817 = vmatprep.subr.mxu0 0.0
    %818 = vmatpush1.xpose.msra.mxu0 0.0
    %819 = vmatprep.mubr.f32.mxu0 0.0
    %820 = vmatmul.mubr.f32.gmra.mrb[0].mxu0 %v750
    %v821 = vpop.f32.mrb[0].mxu0
    %v822 = vadd.f32 %v114, %v821
    %v823 = vpop.f32.mrb[0].mxu0
    %824 = vmatprep.mubr.f32.mxu0 0.0
    %825 = vmatmul.mubr.f32.gmra.mrb[0].mxu0 %v753
    %v826 = vpop.f32.mrb[0].mxu0
    %v827 = vadd.f32 %v115, %v826
    %v828 = vpop.f32.mrb[0].mxu0
    %829 = vdwg.mxu0
    %v831 = vsel %vm157, %v405, 0
    %v834 = vsel %vm157, %v406, 0
    %836 = vmatprep.subr.mxu0 0.0
    %837 = vmatpush1.xpose.msra.mxu0 %v426
    %838 = vmatprep.subr.mxu0 0.0
    %839 = vmatpush1.xpose.msra.mxu0 %v429
    %840 = vmatprep.subr.mxu0 0.0
    %841 = vmatpush1.xpose.msra.mxu0 0.0
    %842 = vmatprep.subr.mxu0 0.0
    %843 = vmatpush1.xpose.msra.mxu0 0.0
    %844 = vmatprep.subr.mxu0 0.0
    %845 = vmatpush1.xpose.msra.mxu0 0.0
    %846 = vmatprep.subr.mxu0 0.0
    %847 = vmatpush1.xpose.msra.mxu0 0.0
    %848 = vmatprep.subr.mxu0 0.0
    %849 = vmatpush1.xpose.msra.mxu0 0.0
    %850 = vmatprep.subr.mxu0 0.0
    %851 = vmatpush1.xpose.msra.mxu0 0.0
    %852 = vmatprep.subr.mxu0 0.0
    %853 = vmatpush1.xpose.msra.mxu0 0.0
    %854 = vmatprep.subr.mxu0 0.0
    %855 = vmatpush1.xpose.msra.mxu0 0.0
    %856 = vmatprep.subr.mxu0 0.0
    %857 = vmatpush1.xpose.msra.mxu0 0.0
    %858 = vmatprep.subr.mxu0 0.0
    %859 = vmatpush1.xpose.msra.mxu0 0.0
    %860 = vmatprep.subr.mxu0 0.0
    %861 = vmatpush1.xpose.msra.mxu0 0.0
    %862 = vmatprep.subr.mxu0 0.0
    %863 = vmatpush1.xpose.msra.mxu0 0.0
    %864 = vmatprep.subr.mxu0 0.0
    %865 = vmatpush1.xpose.msra.mxu0 0.0
    %866 = vmatprep.subr.mxu0 0.0
    %867 = vmatpush1.xpose.msra.mxu0 0.0
    %868 = vmatprep.subr.mxu0 0.0
    %869 = vmatpush1.xpose.msra.mxu0 0.0
    %870 = vmatprep.subr.mxu0 0.0
    %871 = vmatpush1.xpose.msra.mxu0 0.0
    %872 = vmatprep.subr.mxu0 0.0
    %873 = vmatpush1.xpose.msra.mxu0 0.0
    %874 = vmatprep.subr.mxu0 0.0
    %875 = vmatpush1.xpose.msra.mxu0 0.0
    %876 = vmatprep.subr.mxu0 0.0
    %877 = vmatpush1.xpose.msra.mxu0 0.0
    %878 = vmatprep.subr.mxu0 0.0
    %879 = vmatpush1.xpose.msra.mxu0 0.0
    %880 = vmatprep.subr.mxu0 0.0
    %881 = vmatpush1.xpose.msra.mxu0 0.0
    %882 = vmatprep.subr.mxu0 0.0
    %883 = vmatpush1.xpose.msra.mxu0 0.0
    %884 = vmatprep.subr.mxu0 0.0
    %885 = vmatpush1.xpose.msra.mxu0 0.0
    %886 = vmatprep.subr.mxu0 0.0
    %887 = vmatpush1.xpose.msra.mxu0 0.0
    %888 = vmatprep.subr.mxu0 0.0
    %889 = vmatpush1.xpose.msra.mxu0 0.0
    %890 = vmatprep.subr.mxu0 0.0
    %891 = vmatpush1.xpose.msra.mxu0 0.0
    %892 = vmatprep.subr.mxu0 0.0
    %893 = vmatpush1.xpose.msra.mxu0 0.0
    %894 = vmatprep.subr.mxu0 0.0
    %895 = vmatpush1.xpose.msra.mxu0 0.0
    %896 = vmatprep.subr.mxu0 0.0
    %897 = vmatpush1.xpose.msra.mxu0 0.0
    %898 = vmatprep.subr.mxu0 0.0
    %899 = vmatpush1.xpose.msra.mxu0 0.0
    %900 = vmatprep.mubr.f32.mxu0 0.0
    %901 = vmatmul.mubr.f32.gmra.mrb[0].mxu0 %v831
    %v902 = vpop.f32.mrb[0].mxu0
    %v903 = vadd.f32 %v114, %v902
    %v904 = vpop.f32.mrb[0].mxu0
    %905 = vmatprep.mubr.f32.mxu0 0.0
    %906 = vmatmul.mubr.f32.gmra.mrb[0].mxu0 %v834
    %v907 = vpop.f32.mrb[0].mxu0
    %v908 = vadd.f32 %v115, %v907
    %v909 = vpop.f32.mrb[0].mxu0
    %910 = vdwg.mxu0
    %vm911 = vcmask 130048
    %v912 = vsel %vm911, %v498, -inf
    %913 = vmax.xlane.f32.xlu0 %v912
    %v914 = vpop.xlane.xlu0 %913
    %v915 = vsel %vm911, %v503, -inf
    %916 = vmax.xlane.f32.xlu0 %v915
    %v917 = vpop.xlane.xlu0 %916
    %v918 = vsel %vm911, %v579, -inf
    %919 = vmax.xlane.f32.xlu0 %v918
    %v920 = vpop.xlane.xlu0 %919
    %v921 = vsel %vm911, %v584, -inf
    %922 = vmax.xlane.f32.xlu0 %v921
    %v923 = vpop.xlane.xlu0 %922
    %v924 = vsel %vm911, %v660, -inf
    %925 = vmax.xlane.f32.xlu0 %v924
    %v926 = vpop.xlane.xlu0 %925
    %v927 = vsel %vm911, %v665, -inf
    %928 = vmax.xlane.f32.xlu0 %v927
    %v929 = vpop.xlane.xlu0 %928
    %v930 = vsel %vm911, %v741, -inf
    %931 = vmax.xlane.f32.xlu0 %v930
    %v932 = vpop.xlane.xlu0 %931
    %v933 = vsel %vm911, %v746, -inf
    %934 = vmax.xlane.f32.xlu0 %v933
    %v935 = vpop.xlane.xlu0 %934
    %v936 = vsel %vm911, %v822, -inf
    %937 = vmax.xlane.f32.xlu0 %v936
    %v938 = vpop.xlane.xlu0 %937
    %v939 = vsel %vm911, %v827, -inf
    %940 = vmax.xlane.f32.xlu0 %v939
    %v941 = vpop.xlane.xlu0 %940
    %v942 = vsel %vm911, %v903, -inf
    %943 = vmax.xlane.f32.xlu0 %v942
    %v944 = vpop.xlane.xlu0 %943
    %v945 = vsel %vm911, %v908, -inf
    %946 = vmax.xlane.f32.xlu0 %v945
    %v947 = vpop.xlane.xlu0 %946
    %v948 = vsub.f32 %v498, %v914
    %v949 = vsub.f32 %v503, %v917
    %v950 = vsub.f32 %v579, %v920
    %v951 = vsub.f32 %v584, %v923
    %v952 = vsub.f32 %v660, %v926
    %v953 = vsub.f32 %v665, %v929
    %v954 = vsub.f32 %v741, %v932
    %v955 = vsub.f32 %v746, %v935
    %v956 = vsub.f32 %v822, %v938
    %v957 = vsub.f32 %v827, %v941
    %v958 = vsub.f32 %v903, %v944
    %v959 = vsub.f32 %v908, %v947
    %v960 = vmul.f32 %v948, 1.442695
    %v961 = vpow.pop %v960
    %v962 = vmul.f32 %v949, 1.442695
    %v963 = vpow.pop %v962
    %v964 = vmul.f32 %v950, 1.442695
    %v965 = vpow.pop %v964
    %v966 = vmul.f32 %v951, 1.442695
    %v967 = vpow.pop %v966
    %v968 = vmul.f32 %v952, 1.442695
    %v969 = vpow.pop %v968
    %v970 = vmul.f32 %v953, 1.442695
    %v971 = vpow.pop %v970
    %v972 = vmul.f32 %v954, 1.442695
    %v973 = vpow.pop %v972
    %v974 = vmul.f32 %v955, 1.442695
    %v975 = vpow.pop %v974
    %v976 = vmul.f32 %v956, 1.442695
    %v977 = vpow.pop %v976
    %v978 = vmul.f32 %v957, 1.442695
    %v979 = vpow.pop %v978
    %v980 = vmul.f32 %v958, 1.442695
    %v981 = vpow.pop %v980
    %v982 = vmul.f32 %v959, 1.442695
    %v983 = vpow.pop %v982
    %v984 = vsel %vm911, %v961, 0.0
    %985 = vadd.xlane.f32.xlu0 %v984
    %v986 = vpop.xlane.xlu0 %985
    %v987 = vsel %vm911, %v963, 0.0
    %988 = vadd.xlane.f32.xlu0 %v987
    %v989 = vpop.xlane.xlu0 %988
    %v990 = vsel %vm911, %v965, 0.0
    %991 = vadd.xlane.f32.xlu0 %v990
    %v992 = vpop.xlane.xlu0 %991
    %v993 = vsel %vm911, %v967, 0.0
    %994 = vadd.xlane.f32.xlu0 %v993
    %v995 = vpop.xlane.xlu0 %994
    %v996 = vsel %vm911, %v969, 0.0
    %997 = vadd.xlane.f32.xlu0 %v996
    %v998 = vpop.xlane.xlu0 %997
    %v999 = vsel %vm911, %v971, 0.0
    %1000 = vadd.xlane.f32.xlu0 %v999
    %v1001 = vpop.xlane.xlu0 %1000
    %v1002 = vsel %vm911, %v973, 0.0
    %1003 = vadd.xlane.f32.xlu0 %v1002
    %v1004 = vpop.xlane.xlu0 %1003
    %v1005 = vsel %vm911, %v975, 0.0
    %1006 = vadd.xlane.f32.xlu0 %v1005
    %v1007 = vpop.xlane.xlu0 %1006
    %v1008 = vsel %vm911, %v977, 0.0
    %1009 = vadd.xlane.f32.xlu0 %v1008
    %v1010 = vpop.xlane.xlu0 %1009
    %v1011 = vsel %vm911, %v979, 0.0
    %1012 = vadd.xlane.f32.xlu0 %v1011
    %v1013 = vpop.xlane.xlu0 %1012
    %v1014 = vsel %vm911, %v981, 0.0
    %1015 = vadd.xlane.f32.xlu0 %v1014
    %v1016 = vpop.xlane.xlu0 %1015
    %v1017 = vsel %vm911, %v983, 0.0
    %1018 = vadd.xlane.f32.xlu0 %v1017
    %v1019 = vpop.xlane.xlu0 %1018
    %v1020 = vrcp.pop %v986
    %v1021 = vrcp.pop %v989
    %v1022 = vrcp.pop %v992
    %v1023 = vrcp.pop %v995
    %v1024 = vrcp.pop %v998
    %v1025 = vrcp.pop %v1001
    %v1026 = vrcp.pop %v1004
    %v1027 = vrcp.pop %v1007
    %v1028 = vrcp.pop %v1010
    %v1029 = vrcp.pop %v1013
    %v1030 = vrcp.pop %v1016
    %v1031 = vrcp.pop %v1019
    %v1032 = vmul.f32 %v961, %v1020
    %v1033 = vmul.f32 %v963, %v1021
    %v1034 = vmul.f32 %v965, %v1022
    %v1035 = vmul.f32 %v967, %v1023
    %v1036 = vmul.f32 %v969, %v1024
    %v1037 = vmul.f32 %v971, %v1025
    %v1038 = vmul.f32 %v973, %v1026
    %v1039 = vmul.f32 %v975, %v1027
    %v1040 = vmul.f32 %v977, %v1028
    %v1041 = vmul.f32 %v979, %v1029
    %v1042 = vmul.f32 %v981, %v1030
    %v1043 = vmul.f32 %v983, %v1031
    %v1045 = vsel %vm911, %v1032, 0
    %v1048 = vsel %vm911, %v1033, 0
    %1050 = vmatprep.subr.mxu0 0.0
    %1051 = vmatpush1.msra.mxu0 %v407
    %1052 = vmatprep.subr.mxu0 0.0
    %1053 = vmatpush1.msra.mxu0 %v408
    %1054 = vmatprep.subr.mxu0 0.0
    %1055 = vmatpush1.msra.mxu0 0.0
    %1056 = vmatprep.subr.mxu0 0.0
    %1057 = vmatpush1.msra.mxu0 0.0
    %1058 = vmatprep.subr.mxu0 0.0
    %1059 = vmatpush1.msra.mxu0 0.0
    %1060 = vmatprep.subr.mxu0 0.0
    %1061 = vmatpush1.msra.mxu0 0.0
    %1062 = vmatprep.subr.mxu0 0.0
    %1063 = vmatpush1.msra.mxu0 0.0
    %1064 = vmatprep.subr.mxu0 0.0
    %1065 = vmatpush1.msra.mxu0 0.0
    %1066 = vmatprep.subr.mxu0 0.0
    %1067 = vmatpush1.msra.mxu0 0.0
    %1068 = vmatprep.subr.mxu0 0.0
    %1069 = vmatpush1.msra.mxu0 0.0
    %1070 = vmatprep.subr.mxu0 0.0
    %1071 = vmatpush1.msra.mxu0 0.0
    %1072 = vmatprep.subr.mxu0 0.0
    %1073 = vmatpush1.msra.mxu0 0.0
    %1074 = vmatprep.subr.mxu0 0.0
    %1075 = vmatpush1.msra.mxu0 0.0
    %1076 = vmatprep.subr.mxu0 0.0
    %1077 = vmatpush1.msra.mxu0 0.0
    %1078 = vmatprep.subr.mxu0 0.0
    %1079 = vmatpush1.msra.mxu0 0.0
    %1080 = vmatprep.subr.mxu0 0.0
    %1081 = vmatpush1.msra.mxu0 0.0
    %1082 = vmatprep.subr.mxu0 0.0
    %1083 = vmatpush1.msra.mxu0 0.0
    %1084 = vmatprep.subr.mxu0 0.0
    %1085 = vmatpush1.msra.mxu0 0.0
    %1086 = vmatprep.subr.mxu0 0.0
    %1087 = vmatpush1.msra.mxu0 0.0
    %1088 = vmatprep.subr.mxu0 0.0
    %1089 = vmatpush1.msra.mxu0 0.0
    %1090 = vmatprep.subr.mxu0 0.0
    %1091 = vmatpush1.msra.mxu0 0.0
    %1092 = vmatprep.subr.mxu0 0.0
    %1093 = vmatpush1.msra.mxu0 0.0
    %1094 = vmatprep.subr.mxu0 0.0
    %1095 = vmatpush1.msra.mxu0 0.0
    %1096 = vmatprep.subr.mxu0 0.0
    %1097 = vmatpush1.msra.mxu0 0.0
    %1098 = vmatprep.subr.mxu0 0.0
    %1099 = vmatpush1.msra.mxu0 0.0
    %1100 = vmatprep.subr.mxu0 0.0
    %1101 = vmatpush1.msra.mxu0 0.0
    %1102 = vmatprep.subr.mxu0 0.0
    %1103 = vmatpush1.msra.mxu0 0.0
    %1104 = vmatprep.subr.mxu0 0.0
    %1105 = vmatpush1.msra.mxu0 0.0
    %1106 = vmatprep.subr.mxu0 0.0
    %1107 = vmatpush1.msra.mxu0 0.0
    %1108 = vmatprep.subr.mxu0 0.0
    %1109 = vmatpush1.msra.mxu0 0.0
    %1110 = vmatprep.subr.mxu0 0.0
    %1111 = vmatpush1.msra.mxu0 0.0
    %1112 = vmatprep.subr.mxu0 0.0
    %1113 = vmatpush1.msra.mxu0 0.0
    %1114 = vmatprep.mubr.f32.mxu0 0.0
    %1115 = vmatmul.mubr.f32.gmra.mrb[0].mxu0 %v1045
    %v1116 = vpop.f32.mrb[0].mxu0
    %v1117 = vadd.f32 0.0, %v1116
    %v1118 = vpop.f32.mrb[0].mxu0
    %1119 = vmatprep.mubr.f32.mxu0 0.0
    %1120 = vmatmul.mubr.f32.gmra.mrb[0].mxu0 %v1048
    %v1121 = vpop.f32.mrb[0].mxu0
    %v1122 = vadd.f32 0.0, %v1121
    %v1123 = vpop.f32.mrb[0].mxu0
    %1124 = vdwg.mxu0
    %v1126 = vsel %vm911, %v1034, 0
    %v1129 = vsel %vm911, %v1035, 0
    %1131 = vmatprep.subr.mxu0 0.0
    %1132 = vmatpush1.msra.mxu0 %v409
    %1133 = vmatprep.subr.mxu0 0.0
    %1134 = vmatpush1.msra.mxu0 %v410
    %1135 = vmatprep.subr.mxu0 0.0
    %1136 = vmatpush1.msra.mxu0 0.0
    %1137 = vmatprep.subr.mxu0 0.0
    %1138 = vmatpush1.msra.mxu0 0.0
    %1139 = vmatprep.subr.mxu0 0.0
    %1140 = vmatpush1.msra.mxu0 0.0
    %1141 = vmatprep.subr.mxu0 0.0
    %1142 = vmatpush1.msra.mxu0 0.0
    %1143 = vmatprep.subr.mxu0 0.0
    %1144 = vmatpush1.msra.mxu0 0.0
    %1145 = vmatprep.subr.mxu0 0.0
    %1146 = vmatpush1.msra.mxu0 0.0
    %1147 = vmatprep.subr.mxu0 0.0
    %1148 = vmatpush1.msra.mxu0 0.0
    %1149 = vmatprep.subr.mxu0 0.0
    %1150 = vmatpush1.msra.mxu0 0.0
    %1151 = vmatprep.subr.mxu0 0.0
    %1152 = vmatpush1.msra.mxu0 0.0
    %1153 = vmatprep.subr.mxu0 0.0
    %1154 = vmatpush1.msra.mxu0 0.0
    %1155 = vmatprep.subr.mxu0 0.0
    %1156 = vmatpush1.msra.mxu0 0.0
    %1157 = vmatprep.subr.mxu0 0.0
    %1158 = vmatpush1.msra.mxu0 0.0
    %1159 = vmatprep.subr.mxu0 0.0
    %1160 = vmatpush1.msra.mxu0 0.0
    %1161 = vmatprep.subr.mxu0 0.0
    %1162 = vmatpush1.msra.mxu0 0.0
    %1163 = vmatprep.subr.mxu0 0.0
    %1164 = vmatpush1.msra.mxu0 0.0
    %1165 = vmatprep.subr.mxu0 0.0
    %1166 = vmatpush1.msra.mxu0 0.0
    %1167 = vmatprep.subr.mxu0 0.0
    %1168 = vmatpush1.msra.mxu0 0.0
    %1169 = vmatprep.subr.mxu0 0.0
    %1170 = vmatpush1.msra.mxu0 0.0
    %1171 = vmatprep.subr.mxu0 0.0
    %1172 = vmatpush1.msra.mxu0 0.0
    %1173 = vmatprep.subr.mxu0 0.0
    %1174 = vmatpush1.msra.mxu0 0.0
    %1175 = vmatprep.subr.mxu0 0.0
    %1176 = vmatpush1.msra.mxu0 0.0
    %1177 = vmatprep.subr.mxu0 0.0
    %1178 = vmatpush1.msra.mxu0 0.0
    %1179 = vmatprep.subr.mxu0 0.0
    %1180 = vmatpush1.msra.mxu0 0.0
    %1181 = vmatprep.subr.mxu0 0.0
    %1182 = vmatpush1.msra.mxu0 0.0
    %1183 = vmatprep.subr.mxu0 0.0
    %1184 = vmatpush1.msra.mxu0 0.0
    %1185 = vmatprep.subr.mxu0 0.0
    %1186 = vmatpush1.msra.mxu0 0.0
    %1187 = vmatprep.subr.mxu0 0.0
    %1188 = vmatpush1.msra.mxu0 0.0
    %1189 = vmatprep.subr.mxu0 0.0
    %1190 = vmatpush1.msra.mxu0 0.0
    %1191 = vmatprep.subr.mxu0 0.0
    %1192 = vmatpush1.msra.mxu0 0.0
    %1193 = vmatprep.subr.mxu0 0.0
    %1194 = vmatpush1.msra.mxu0 0.0
    %1195 = vmatprep.mubr.f32.mxu0 0.0
    %1196 = vmatmul.mubr.f32.gmra.mrb[0].mxu0 %v1126
    %v1197 = vpop.f32.mrb[0].mxu0
    %v1198 = vadd.f32 0.0, %v1197
    %v1199 = vpop.f32.mrb[0].mxu0
    %1200 = vmatprep.mubr.f32.mxu0 0.0
    %1201 = vmatmul.mubr.f32.gmra.mrb[0].mxu0 %v1129
    %v1202 = vpop.f32.mrb[0].mxu0
    %v1203 = vadd.f32 0.0, %v1202
    %v1204 = vpop.f32.mrb[0].mxu0
    %1205 = vdwg.mxu0
    %v1207 = vsel %vm911, %v1036, 0
    %v1210 = vsel %vm911, %v1037, 0
    %1212 = vmatprep.subr.mxu0 0.0
    %1213 = vmatpush1.msra.mxu0 %v411
    %1214 = vmatprep.subr.mxu0 0.0
    %1215 = vmatpush1.msra.mxu0 %v412
    %1216 = vmatprep.subr.mxu0 0.0
    %1217 = vmatpush1.msra.mxu0 0.0
    %1218 = vmatprep.subr.mxu0 0.0
    %1219 = vmatpush1.msra.mxu0 0.0
    %1220 = vmatprep.subr.mxu0 0.0
    %1221 = vmatpush1.msra.mxu0 0.0
    %1222 = vmatprep.subr.mxu0 0.0
    %1223 = vmatpush1.msra.mxu0 0.0
    %1224 = vmatprep.subr.mxu0 0.0
    %1225 = vmatpush1.msra.mxu0 0.0
    %1226 = vmatprep.subr.mxu0 0.0
    %1227 = vmatpush1.msra.mxu0 0.0
    %1228 = vmatprep.subr.mxu0 0.0
    %1229 = vmatpush1.msra.mxu0 0.0
    %1230 = vmatprep.subr.mxu0 0.0
    %1231 = vmatpush1.msra.mxu0 0.0
    %1232 = vmatprep.subr.mxu0 0.0
    %1233 = vmatpush1.msra.mxu0 0.0
    %1234 = vmatprep.subr.mxu0 0.0
    %1235 = vmatpush1.msra.mxu0 0.0
    %1236 = vmatprep.subr.mxu0 0.0
    %1237 = vmatpush1.msra.mxu0 0.0
    %1238 = vmatprep.subr.mxu0 0.0
    %1239 = vmatpush1.msra.mxu0 0.0
    %1240 = vmatprep.subr.mxu0 0.0
    %1241 = vmatpush1.msra.mxu0 0.0
    %1242 = vmatprep.subr.mxu0 0.0
    %1243 = vmatpush1.msra.mxu0 0.0
    %1244 = vmatprep.subr.mxu0 0.0
    %1245 = vmatpush1.msra.mxu0 0.0
    %1246 = vmatprep.subr.mxu0 0.0
    %1247 = vmatpush1.msra.mxu0 0.0
    %1248 = vmatprep.subr.mxu0 0.0
    %1249 = vmatpush1.msra.mxu0 0.0
    %1250 = vmatprep.subr.mxu0 0.0
    %1251 = vmatpush1.msra.mxu0 0.0
    %1252 = vmatprep.subr.mxu0 0.0
    %1253 = vmatpush1.msra.mxu0 0.0
    %1254 = vmatprep.subr.mxu0 0.0
    %1255 = vmatpush1.msra.mxu0 0.0
    %1256 = vmatprep.subr.mxu0 0.0
    %1257 = vmatpush1.msra.mxu0 0.0
    %1258 = vmatprep.subr.mxu0 0.0
    %1259 = vmatpush1.msra.mxu0 0.0
    %1260 = vmatprep.subr.mxu0 0.0
    %1261 = vmatpush1.msra.mxu0 0.0
    %1262 = vmatprep.subr.mxu0 0.0
    %1263 = vmatpush1.msra.mxu0 0.0
    %1264 = vmatprep.subr.mxu0 0.0
    %1265 = vmatpush1.msra.mxu0 0.0
    %1266 = vmatprep.subr.mxu0 0.0
    %1267 = vmatpush1.msra.mxu0 0.0
    %1268 = vmatprep.subr.mxu0 0.0
    %1269 = vmatpush1.msra.mxu0 0.0
    %1270 = vmatprep.subr.mxu0 0.0
    %1271 = vmatpush1.msra.mxu0 0.0
    %1272 = vmatprep.subr.mxu0 0.0
    %1273 = vmatpush1.msra.mxu0 0.0
    %1274 = vmatprep.subr.mxu0 0.0
    %1275 = vmatpush1.msra.mxu0 0.0
    %1276 = vmatprep.mubr.f32.mxu0 0.0
    %1277 = vmatmul.mubr.f32.gmra.mrb[0].mxu0 %v1207
    %v1278 = vpop.f32.mrb[0].mxu0
    %v1279 = vadd.f32 0.0, %v1278
    %v1280 = vpop.f32.mrb[0].mxu0
    %1281 = vmatprep.mubr.f32.mxu0 0.0
    %1282 = vmatmul.mubr.f32.gmra.mrb[0].mxu0 %v1210
    %v1283 = vpop.f32.mrb[0].mxu0
    %v1284 = vadd.f32 0.0, %v1283
    %v1285 = vpop.f32.mrb[0].mxu0
    %1286 = vdwg.mxu0
    %v1288 = vsel %vm911, %v1038, 0
    %v1291 = vsel %vm911, %v1039, 0
    %1293 = vmatprep.subr.mxu0 0.0
    %1294 = vmatpush1.msra.mxu0 %v413
    %1295 = vmatprep.subr.mxu0 0.0
    %1296 = vmatpush1.msra.mxu0 %v414
    %1297 = vmatprep.subr.mxu0 0.0
    %1298 = vmatpush1.msra.mxu0 0.0
    %1299 = vmatprep.subr.mxu0 0.0
    %1300 = vmatpush1.msra.mxu0 0.0
    %1301 = vmatprep.subr.mxu0 0.0
    %1302 = vmatpush1.msra.mxu0 0.0
    %1303 = vmatprep.subr.mxu0 0.0
    %1304 = vmatpush1.msra.mxu0 0.0
    %1305 = vmatprep.subr.mxu0 0.0
    %1306 = vmatpush1.msra.mxu0 0.0
    %1307 = vmatprep.subr.mxu0 0.0
    %1308 = vmatpush1.msra.mxu0 0.0
    %1309 = vmatprep.subr.mxu0 0.0
    %1310 = vmatpush1.msra.mxu0 0.0
    %1311 = vmatprep.subr.mxu0 0.0
    %1312 = vmatpush1.msra.mxu0 0.0
    %1313 = vmatprep.subr.mxu0 0.0
    %1314 = vmatpush1.msra.mxu0 0.0
    %1315 = vmatprep.subr.mxu0 0.0
    %1316 = vmatpush1.msra.mxu0 0.0
    %1317 = vmatprep.subr.mxu0 0.0
    %1318 = vmatpush1.msra.mxu0 0.0
    %1319 = vmatprep.subr.mxu0 0.0
    %1320 = vmatpush1.msra.mxu0 0.0
    %1321 = vmatprep.subr.mxu0 0.0
    %1322 = vmatpush1.msra.mxu0 0.0
    %1323 = vmatprep.subr.mxu0 0.0
    %1324 = vmatpush1.msra.mxu0 0.0
    %1325 = vmatprep.subr.mxu0 0.0
    %1326 = vmatpush1.msra.mxu0 0.0
    %1327 = vmatprep.subr.mxu0 0.0
    %1328 = vmatpush1.msra.mxu0 0.0
    %1329 = vmatprep.subr.mxu0 0.0
    %1330 = vmatpush1.msra.mxu0 0.0
    %1331 = vmatprep.subr.mxu0 0.0
    %1332 = vmatpush1.msra.mxu0 0.0
    %1333 = vmatprep.subr.mxu0 0.0
    %1334 = vmatpush1.msra.mxu0 0.0
    %1335 = vmatprep.subr.mxu0 0.0
    %1336 = vmatpush1.msra.mxu0 0.0
    %1337 = vmatprep.subr.mxu0 0.0
    %1338 = vmatpush1.msra.mxu0 0.0
    %1339 = vmatprep.subr.mxu0 0.0
    %1340 = vmatpush1.msra.mxu0 0.0
    %1341 = vmatprep.subr.mxu0 0.0
    %1342 = vmatpush1.msra.mxu0 0.0
    %1343 = vmatprep.subr.mxu0 0.0
    %1344 = vmatpush1.msra.mxu0 0.0
    %1345 = vmatprep.subr.mxu0 0.0
    %1346 = vmatpush1.msra.mxu0 0.0
    %1347 = vmatprep.subr.mxu0 0.0
    %1348 = vmatpush1.msra.mxu0 0.0
    %1349 = vmatprep.subr.mxu0 0.0
    %1350 = vmatpush1.msra.mxu0 0.0
    %1351 = vmatprep.subr.mxu0 0.0
    %1352 = vmatpush1.msra.mxu0 0.0
    %1353 = vmatprep.subr.mxu0 0.0
    %1354 = vmatpush1.msra.mxu0 0.0
    %1355 = vmatprep.subr.mxu0 0.0
    %1356 = vmatpush1.msra.mxu0 0.0
    %1357 = vmatprep.mubr.f32.mxu0 0.0
    %1358 = vmatmul.mubr.f32.gmra.mrb[0].mxu0 %v1288
    %v1359 = vpop.f32.mrb[0].mxu0
    %v1360 = vadd.f32 0.0, %v1359
    %v1361 = vpop.f32.mrb[0].mxu0
    %1362 = vmatprep.mubr.f32.mxu0 0.0
    %1363 = vmatmul.mubr.f32.gmra.mrb[0].mxu0 %v1291
    %v1364 = vpop.f32.mrb[0].mxu0
    %v1365 = vadd.f32 0.0, %v1364
    %v1366 = vpop.f32.mrb[0].mxu0
    %1367 = vdwg.mxu0
    %v1369 = vsel %vm911, %v1040, 0
    %v1372 = vsel %vm911, %v1041, 0
    %1374 = vmatprep.subr.mxu0 0.0
    %1375 = vmatpush1.msra.mxu0 %v415
    %1376 = vmatprep.subr.mxu0 0.0
    %1377 = vmatpush1.msra.mxu0 %v416
    %1378 = vmatprep.subr.mxu0 0.0
    %1379 = vmatpush1.msra.mxu0 0.0
    %1380 = vmatprep.subr.mxu0 0.0
    %1381 = vmatpush1.msra.mxu0 0.0
    %1382 = vmatprep.subr.mxu0 0.0
    %1383 = vmatpush1.msra.mxu0 0.0
    %1384 = vmatprep.subr.mxu0 0.0
    %1385 = vmatpush1.msra.mxu0 0.0
    %1386 = vmatprep.subr.mxu0 0.0
    %1387 = vmatpush1.msra.mxu0 0.0
    %1388 = vmatprep.subr.mxu0 0.0
    %1389 = vmatpush1.msra.mxu0 0.0
    %1390 = vmatprep.subr.mxu0 0.0
    %1391 = vmatpush1.msra.mxu0 0.0
    %1392 = vmatprep.subr.mxu0 0.0
    %1393 = vmatpush1.msra.mxu0 0.0
    %1394 = vmatprep.subr.mxu0 0.0
    %1395 = vmatpush1.msra.mxu0 0.0
    %1396 = vmatprep.subr.mxu0 0.0
    %1397 = vmatpush1.msra.mxu0 0.0
    %1398 = vmatprep.subr.mxu0 0.0
    %1399 = vmatpush1.msra.mxu0 0.0
    %1400 = vmatprep.subr.mxu0 0.0
    %1401 = vmatpush1.msra.mxu0 0.0
    %1402 = vmatprep.subr.mxu0 0.0
    %1403 = vmatpush1.msra.mxu0 0.0
    %1404 = vmatprep.subr.mxu0 0.0
    %1405 = vmatpush1.msra.mxu0 0.0
    %1406 = vmatprep.subr.mxu0 0.0
    %1407 = vmatpush1.msra.mxu0 0.0
    %1408 = vmatprep.subr.mxu0 0.0
    %1409 = vmatpush1.msra.mxu0 0.0
    %1410 = vmatprep.subr.mxu0 0.0
    %1411 = vmatpush1.msra.mxu0 0.0
    %1412 = vmatprep.subr.mxu0 0.0
    %1413 = vmatpush1.msra.mxu0 0.0
    %1414 = vmatprep.subr.mxu0 0.0
    %1415 = vmatpush1.msra.mxu0 0.0
    %1416 = vmatprep.subr.mxu0 0.0
    %1417 = vmatpush1.msra.mxu0 0.0
    %1418 = vmatprep.subr.mxu0 0.0
    %1419 = vmatpush1.msra.mxu0 0.0
    %1420 = vmatprep.subr.mxu0 0.0
    %1421 = vmatpush1.msra.mxu0 0.0
    %1422 = vmatprep.subr.mxu0 0.0
    %1423 = vmatpush1.msra.mxu0 0.0
    %1424 = vmatprep.subr.mxu0 0.0
    %1425 = vmatpush1.msra.mxu0 0.0
    %1426 = vmatprep.subr.mxu0 0.0
    %1427 = vmatpush1.msra.mxu0 0.0
    %1428 = vmatprep.subr.mxu0 0.0
    %1429 = vmatpush1.msra.mxu0 0.0
    %1430 = vmatprep.subr.mxu0 0.0
    %1431 = vmatpush1.msra.mxu0 0.0
    %1432 = vmatprep.subr.mxu0 0.0
    %1433 = vmatpush1.msra.mxu0 0.0
    %1434 = vmatprep.subr.mxu0 0.0
    %1435 = vmatpush1.msra.mxu0 0.0
    %1436 = vmatprep.subr.mxu0 0.0
    %1437 = vmatpush1.msra.mxu0 0.0
    %1438 = vmatprep.mubr.f32.mxu0 0.0
    %1439 = vmatmul.mubr.f32.gmra.mrb[0].mxu0 %v1369
    %v1440 = vpop.f32.mrb[0].mxu0
    %v1441 = vadd.f32 0.0, %v1440
    %v1442 = vpop.f32.mrb[0].mxu0
    %1443 = vmatprep.mubr.f32.mxu0 0.0
    %1444 = vmatmul.mubr.f32.gmra.mrb[0].mxu0 %v1372
    %v1445 = vpop.f32.mrb[0].mxu0
    %v1446 = vadd.f32 0.0, %v1445
    %v1447 = vpop.f32.mrb[0].mxu0
    %1448 = vdwg.mxu0
    %v1450 = vsel %vm911, %v1042, 0
    %v1453 = vsel %vm911, %v1043, 0
    %1455 = vmatprep.subr.mxu0 0.0
    %1456 = vmatpush1.msra.mxu0 %v417
    %1457 = vmatprep.subr.mxu0 0.0
    %1458 = vmatpush1.msra.mxu0 %v418
    %1459 = vmatprep.subr.mxu0 0.0
    %1460 = vmatpush1.msra.mxu0 0.0
    %1461 = vmatprep.subr.mxu0 0.0
    %1462 = vmatpush1.msra.mxu0 0.0
    %1463 = vmatprep.subr.mxu0 0.0
    %1464 = vmatpush1.msra.mxu0 0.0
    %1465 = vmatprep.subr.mxu0 0.0
    %1466 = vmatpush1.msra.mxu0 0.0
    %1467 = vmatprep.subr.mxu0 0.0
    %1468 = vmatpush1.msra.mxu0 0.0
    %1469 = vmatprep.subr.mxu0 0.0
    %1470 = vmatpush1.msra.mxu0 0.0
    %1471 = vmatprep.subr.mxu0 0.0
    %1472 = vmatpush1.msra.mxu0 0.0
    %1473 = vmatprep.subr.mxu0 0.0
    %1474 = vmatpush1.msra.mxu0 0.0
    %1475 = vmatprep.subr.mxu0 0.0
    %1476 = vmatpush1.msra.mxu0 0.0
    %1477 = vmatprep.subr.mxu0 0.0
    %1478 = vmatpush1.msra.mxu0 0.0
    %1479 = vmatprep.subr.mxu0 0.0
    %1480 = vmatpush1.msra.mxu0 0.0
    %1481 = vmatprep.subr.mxu0 0.0
    %1482 = vmatpush1.msra.mxu0 0.0
    %1483 = vmatprep.subr.mxu0 0.0
    %1484 = vmatpush1.msra.mxu0 0.0
    %1485 = vmatprep.subr.mxu0 0.0
    %1486 = vmatpush1.msra.mxu0 0.0
    %1487 = vmatprep.subr.mxu0 0.0
    %1488 = vmatpush1.msra.mxu0 0.0
    %1489 = vmatprep.subr.mxu0 0.0
    %1490 = vmatpush1.msra.mxu0 0.0
    %1491 = vmatprep.subr.mxu0 0.0
    %1492 = vmatpush1.msra.mxu0 0.0
    %1493 = vmatprep.subr.mxu0 0.0
    %1494 = vmatpush1.msra.mxu0 0.0
    %1495 = vmatprep.subr.mxu0 0.0
    %1496 = vmatpush1.msra.mxu0 0.0
    %1497 = vmatprep.subr.mxu0 0.0
    %1498 = vmatpush1.msra.mxu0 0.0
    %1499 = vmatprep.subr.mxu0 0.0
    %1500 = vmatpush1.msra.mxu0 0.0
    %1501 = vmatprep.subr.mxu0 0.0
    %1502 = vmatpush1.msra.mxu0 0.0
    %1503 = vmatprep.subr.mxu0 0.0
    %1504 = vmatpush1.msra.mxu0 0.0
    %1505 = vmatprep.subr.mxu0 0.0
    %1506 = vmatpush1.msra.mxu0 0.0
    %1507 = vmatprep.subr.mxu0 0.0
    %1508 = vmatpush1.msra.mxu0 0.0
    %1509 = vmatprep.subr.mxu0 0.0
    %1510 = vmatpush1.msra.mxu0 0.0
    %1511 = vmatprep.subr.mxu0 0.0
    %1512 = vmatpush1.msra.mxu0 0.0
    %1513 = vmatprep.subr.mxu0 0.0
    %1514 = vmatpush1.msra.mxu0 0.0
    %1515 = vmatprep.subr.mxu0 0.0
    %1516 = vmatpush1.msra.mxu0 0.0
    %1517 = vmatprep.subr.mxu0 0.0
    %1518 = vmatpush1.msra.mxu0 0.0
    %1519 = vmatprep.mubr.f32.mxu0 0.0
    %1520 = vmatmul.mubr.f32.gmra.mrb[0].mxu0 %v1450
    %v1521 = vpop.f32.mrb[0].mxu0
    %v1522 = vadd.f32 0.0, %v1521
    %v1523 = vpop.f32.mrb[0].mxu0
    %1524 = vmatprep.mubr.f32.mxu0 0.0
    %1525 = vmatmul.mubr.f32.gmra.mrb[0].mxu0 %v1453
    %v1526 = vpop.f32.mrb[0].mxu0
    %v1527 = vadd.f32 0.0, %v1526
    %v1528 = vpop.f32.mrb[0].mxu0
    %1529 = vdwg.mxu0
    %v1530 = vsel %vm157, %v1117, 0.0
    %v1531 = vsel %vm157, %v1198, 0.0
    %v1532 = vadd.f32 %v1530, %v1531
    %v1533 = vsel %vm157, %v1279, 0.0
    %v1534 = vadd.f32 %v1532, %v1533
    %v1535 = vsel %vm157, %v1360, 0.0
    %v1536 = vadd.f32 %v1534, %v1535
    %v1537 = vsel %vm157, %v1441, 0.0
    %v1538 = vadd.f32 %v1536, %v1537
    %v1539 = vsel %vm157, %v1522, 0.0
    %v1540 = vadd.f32 %v1538, %v1539
    %v1541 = vsel %vm157, %v1122, 0.0
    %v1542 = vsel %vm157, %v1203, 0.0
    %v1543 = vadd.f32 %v1541, %v1542
    %v1544 = vsel %vm157, %v1284, 0.0
    %v1545 = vadd.f32 %v1543, %v1544
    %v1546 = vsel %vm157, %v1365, 0.0
    %v1547 = vadd.f32 %v1545, %v1546
    %v1548 = vsel %vm157, %v1446, 0.0
    %v1549 = vadd.f32 %v1547, %v1548
    %v1550 = vsel %vm157, %v1527, 0.0
    %v1551 = vadd.f32 %v1549, %v1550
    %v1552 = vld [vmem:[%s7] sm:$0xff]
    %v1553 = vld [vmem:[%s7 + $0x8] sm:$0xff]
    %v1554 = vld [vmem:[%s7 + $0x10] sm:$0xff]
    %v1555 = vld [vmem:[%s7 + $0x18] sm:$0xff]
    %v1556 = vld [vmem:[%s7 + $0x20] sm:$0xff]
    %v1557 = vld [vmem:[%s7 + $0x28] sm:$0xff]
    %v1558 = vld [vmem:[%s7 + $0x30] sm:$0xff]
    %v1559 = vld [vmem:[%s7 + $0x38] sm:$0xff]
    %v1560 = vld [vmem:[%s8] sm:$0x1]
    %v1562 = vlaneseq
    %v1563 = vshrl.u32 %v1562, 7
    %v1564 = vsub.s32 0, %v1563
    %v1565 = vrot.slane %v1560, %v1564
    %v1568 = vsel %vm157, %v1540, 0
    %v1571 = vsel %vm157, %v1551, 0
    %1573 = vmatprep.subr.mxu0 0.0
    %1574 = vmatpush1.msra.mxu0 %v1552
    %1575 = vmatprep.subr.mxu0 0.0
    %1576 = vmatpush1.msra.mxu0 %v1553
    %1577 = vmatprep.subr.mxu0 0.0
    %1578 = vmatpush1.msra.mxu0 %v1554
    %1579 = vmatprep.subr.mxu0 0.0
    %1580 = vmatpush1.msra.mxu0 %v1555
    %1581 = vmatprep.subr.mxu0 0.0
    %1582 = vmatpush1.msra.mxu0 %v1556
    %1583 = vmatprep.subr.mxu0 0.0
    %1584 = vmatpush1.msra.mxu0 %v1557
    %1585 = vmatprep.subr.mxu0 0.0
    %1586 = vmatpush1.msra.mxu0 %v1558
    %1587 = vmatprep.subr.mxu0 0.0
    %1588 = vmatpush1.msra.mxu0 %v1559
    %1589 = vmatprep.subr.mxu0 0.0
    %1590 = vmatpush1.msra.mxu0 0.0
    %1591 = vmatprep.subr.mxu0 0.0
    %1592 = vmatpush1.msra.mxu0 0.0
    %1593 = vmatprep.subr.mxu0 0.0
    %1594 = vmatpush1.msra.mxu0 0.0
    %1595 = vmatprep.subr.mxu0 0.0
    %1596 = vmatpush1.msra.mxu0 0.0
    %1597 = vmatprep.subr.mxu0 0.0
    %1598 = vmatpush1.msra.mxu0 0.0
    %1599 = vmatprep.subr.mxu0 0.0
    %1600 = vmatpush1.msra.mxu0 0.0
    %1601 = vmatprep.subr.mxu0 0.0
    %1602 = vmatpush1.msra.mxu0 0.0
    %1603 = vmatprep.subr.mxu0 0.0
    %1604 = vmatpush1.msra.mxu0 0.0
    %1605 = vmatprep.subr.mxu0 0.0
    %1606 = vmatpush1.msra.mxu0 0.0
    %1607 = vmatprep.subr.mxu0 0.0
    %1608 = vmatpush1.msra.mxu0 0.0
    %1609 = vmatprep.subr.mxu0 0.0
    %1610 = vmatpush1.msra.mxu0 0.0
    %1611 = vmatprep.subr.mxu0 0.0
    %1612 = vmatpush1.msra.mxu0 0.0
    %1613 = vmatprep.subr.mxu0 0.0
    %1614 = vmatpush1.msra.mxu0 0.0
    %1615 = vmatprep.subr.mxu0 0.0
    %1616 = vmatpush1.msra.mxu0 0.0
    %1617 = vmatprep.subr.mxu0 0.0
    %1618 = vmatpush1.msra.mxu0 0.0
    %1619 = vmatprep.subr.mxu0 0.0
    %1620 = vmatpush1.msra.mxu0 0.0
    %1621 = vmatprep.subr.mxu0 0.0
    %1622 = vmatpush1.msra.mxu0 0.0
    %1623 = vmatprep.subr.mxu0 0.0
    %1624 = vmatpush1.msra.mxu0 0.0
    %1625 = vmatprep.subr.mxu0 0.0
    %1626 = vmatpush1.msra.mxu0 0.0
    %1627 = vmatprep.subr.mxu0 0.0
    %1628 = vmatpush1.msra.mxu0 0.0
    %1629 = vmatprep.subr.mxu0 0.0
    %1630 = vmatpush1.msra.mxu0 0.0
    %1631 = vmatprep.subr.mxu0 0.0
    %1632 = vmatpush1.msra.mxu0 0.0
    %1633 = vmatprep.subr.mxu0 0.0
    %1634 = vmatpush1.msra.mxu0 0.0
    %1635 = vmatprep.subr.mxu0 0.0
    %1636 = vmatpush1.msra.mxu0 0.0
    %1637 = vmatprep.mubr.f32.mxu0 0.0
    %1638 = vmatmul.mubr.f32.gmra.mrb[0].mxu0 %v1568
    %v1639 = vpop.f32.mrb[0].mxu0
    %v1640 = vadd.f32 %v1565, %v1639
    %v1641 = vpop.f32.mrb[0].mxu0
    %1642 = vmatprep.mubr.f32.mxu0 0.0
    %1643 = vmatmul.mubr.f32.gmra.mrb[0].mxu0 %v1571
    %v1644 = vpop.f32.mrb[0].mxu0
    %v1645 = vadd.f32 %v1565, %v1644
    %v1646 = vpop.f32.mrb[0].mxu0
    %1647 = vdwg.mxu0
    %v1648 = vadd.f32 %v112, %v1640
    %v1649 = vadd.f32 %v113, %v1645
    %v1650 = vld [vmem:[%s10] sm:$0x1]
    %v1651 = vld [vmem:[%s11] sm:$0x1]
    %v1652 = vsel %vm157, %v1648, 0.0
    %1653 = vadd.xlane.f32.xlu0 %v1652
    %v1654 = vpop.xlane.xlu0 %1653
    %v1655 = vsel %vm157, %v1649, 0.0
    %1656 = vadd.xlane.f32.xlu0 %v1655
    %v1657 = vpop.xlane.xlu0 %1656
    %v1658 = vrcp.pop 64.0
    %v1659 = vmul.f32 %v1654, %v1658
    %v1660 = vmul.f32 %v1657, %v1658
    %v1661 = vsub.f32 %v1648, %v1659
    %v1662 = vsub.f32 %v1649, %v1660
    %v1663 = vmul.f32 %v1661, %v1661
    %v1664 = vmul.f32 %v1662, %v1662
    %v1665 = vsel %vm157, %v1663, 0.0
    %1666 = vadd.xlane.f32.xlu0 %v1665
    %v1667 = vpop.xlane.xlu0 %1666
    %v1668 = vsel %vm157, %v1664, 0.0
    %1669 = vadd.xlane.f32.xlu0 %v1668
    %v1670 = vpop.xlane.xlu0 %1669
    %v1671 = vmul.f32 %v1667, %v1658
    %v1672 = vmul.f32 %v1670, %v1658
    %v1673 = vadd.f32 %v1671, 1e-05
    %v1674 = vadd.f32 %v1672, 1e-05
    %v1675 = vrsqrt.pop %v1673
    %v1676 = vrsqrt.pop %v1674
    %v1677 = vmul.f32 %v1661, %v1675
    %v1678 = vmul.f32 %v1662, %v1676
    %v1680 = vlaneseq
    %v1681 = vshrl.u32 %v1680, 7
    %v1682 = vsub.s32 0, %v1681
    %v1683 = vrot.slane %v1650, %v1682
    %v1685 = vmul.f32 %v1677, %v1683
    %v1686 = vmul.f32 %v1678, %v1683
    %v1688 = vlaneseq
    %v1689 = vshrl.u32 %v1688, 7
    %v1690 = vsub.s32 0, %v1689
    %v1691 = vrot.slane %v1651, %v1690
    %v1693 = vadd.f32 %v1685, %v1691
    %v1694 = vadd.f32 %v1686, %v1691
    %s1695 = scalar_lea.vmem [#allocation2], 192
    %v1696 = vld [vmem:[%s1695] sm:$0xff]
    %v1697 = vld [vmem:[%s1695 + $0x8] sm:$0xff]
    %v1698 = vld [vmem:[%s1695 + $0x10] sm:$0xff]
    %v1699 = vld [vmem:[%s1695 + $0x18] sm:$0xff]
    %v1700 = vld [vmem:[%s1695 + $0x20] sm:$0xff]
    %v1701 = vld [vmem:[%s1695 + $0x28] sm:$0xff]
    %v1702 = vld [vmem:[%s1695 + $0x30] sm:$0xff]
    %v1703 = vld [vmem:[%s1695 + $0x38] sm:$0xff]
    %v1704 = vld [vmem:[%s1695 + $0x40] sm:$0xff]
    %v1705 = vld [vmem:[%s1695 + $0x48] sm:$0xff]
    %v1706 = vld [vmem:[%s1695 + $0x50] sm:$0xff]
    %v1707 = vld [vmem:[%s1695 + $0x58] sm:$0xff]
    %v1708 = vld [vmem:[%s1695 + $0x60] sm:$0xff]
    %v1709 = vld [vmem:[%s1695 + $0x68] sm:$0xff]
    %v1710 = vld [vmem:[%s1695 + $0x70] sm:$0xff]
    %v1711 = vld [vmem:[%s1695 + $0x78] sm:$0xff]
    %v1712 = vld [vmem:[%s1695 + $0x80] sm:$0xff]
    %v1713 = vld [vmem:[%s1695 + $0x88] sm:$0xff]
    %v1714 = vld [vmem:[%s1695 + $0x90] sm:$0xff]
    %v1715 = vld [vmem:[%s1695 + $0x98] sm:$0xff]
    %v1716 = vld [vmem:[%s1695 + $0xa0] sm:$0xff]
    %v1717 = vld [vmem:[%s1695 + $0xa8] sm:$0xff]
    %v1718 = vld [vmem:[%s1695 + $0xb0] sm:$0xff]
    %v1719 = vld [vmem:[%s1695 + $0xb8] sm:$0xff]
    %s1720 = scalar_lea.vmem %s6, 3
    %v1721 = vld [vmem:[%s1720] sm:$0x7]
    %v1723 = vlaneseq
    %v1724 = vshrl.u32 %v1723, 7
    %v1725 = vsub.s32 0, %v1724
    %v1726 = vrot.slane %v1721, %v1725
    %v1727 = vlaneseq
    %v1728 = vshrl.u32 %v1727, 7
    %v1729 = vsub.s32 1, %v1728
    %v1730 = vrot.slane %v1721, %v1729
    %v1731 = vlaneseq
    %v1732 = vshrl.u32 %v1731, 7
    %v1733 = vsub.s32 2, %v1732
    %v1734 = vrot.slane %v1721, %v1733
    %v1739 = vsel %vm157, %v1693, 0
    %v1742 = vsel %vm157, %v1694, 0
    %1744 = vmatprep.subr.mxu0 %v1697
    %1745 = vmatpush1.msra.mxu0 %v1696
    %1746 = vmatprep.subr.mxu0 %v1700
    %1747 = vmatpush1.msra.mxu0 %v1699
    %1748 = vmatprep.subr.mxu0 %v1703
    %1749 = vmatpush1.msra.mxu0 %v1702
    %1750 = vmatprep.subr.mxu0 %v1706
    %1751 = vmatpush1.msra.mxu0 %v1705
    %1752 = vmatprep.subr.mxu0 %v1709
    %1753 = vmatpush1.msra.mxu0 %v1708
    %1754 = vmatprep.subr.mxu0 %v1712
    %1755 = vmatpush1.msra.mxu0 %v1711
    %1756 = vmatprep.subr.mxu0 %v1715
    %1757 = vmatpush1.msra.mxu0 %v1714
    %1758 = vmatprep.subr.mxu0 %v1718
    %1759 = vmatpush1.msra.mxu0 %v1717
    %1760 = vmatprep.subr.mxu0 0.0
    %1761 = vmatpush1.msra.mxu0 0.0
    %1762 = vmatprep.subr.mxu0 0.0
    %1763 = vmatpush1.msra.mxu0 0.0
    %1764 = vmatprep.subr.mxu0 0.0
    %1765 = vmatpush1.msra.mxu0 0.0
    %1766 = vmatprep.subr.mxu0 0.0
    %1767 = vmatpush1.msra.mxu0 0.0
    %1768 = vmatprep.subr.mxu0 0.0
    %1769 = vmatpush1.msra.mxu0 0.0
    %1770 = vmatprep.subr.mxu0 0.0
    %1771 = vmatpush1.msra.mxu0 0.0
    %1772 = vmatprep.subr.mxu0 0.0
    %1773 = vmatpush1.msra.mxu0 0.0
    %1774 = vmatprep.subr.mxu0 0.0
    %1775 = vmatpush1.msra.mxu0 0.0
    %1776 = vmatprep.subr.mxu0 0.0
    %1777 = vmatpush1.msra.mxu0 0.0
    %1778 = vmatprep.subr.mxu0 0.0
    %1779 = vmatpush1.msra.mxu0 0.0
    %1780 = vmatprep.subr.mxu0 0.0
    %1781 = vmatpush1.msra.mxu0 0.0
    %1782 = vmatprep.subr.mxu0 0.0
    %1783 = vmatpush1.msra.mxu0 0.0
    %1784 = vmatprep.subr.mxu0 0.0
    %1785 = vmatpush1.msra.mxu0 0.0
    %1786 = vmatprep.subr.mxu0 0.0
    %1787 = vmatpush1.msra.mxu0 0.0
    %1788 = vmatprep.subr.mxu0 0.0
    %1789 = vmatpush1.msra.mxu0 0.0
    %1790 = vmatprep.subr.mxu0 0.0
    %1791 = vmatpush1.msra.mxu0 0.0
    %1792 = vmatprep.subr.mxu0 0.0
    %1793 = vmatpush1.msra.mxu0 0.0
    %1794 = vmatprep.subr.mxu0 0.0
    %1795 = vmatpush1.msra.mxu0 0.0
    %1796 = vmatprep.subr.mxu0 0.0
    %1797 = vmatpush1.msra.mxu0 0.0
    %1798 = vmatprep.subr.mxu0 0.0
    %1799 = vmatpush1.msra.mxu0 0.0
    %1800 = vmatprep.subr.mxu0 0.0
    %1801 = vmatpush1.msra.mxu0 0.0
    %1802 = vmatprep.subr.mxu0 0.0
    %1803 = vmatpush1.msra.mxu0 0.0
    %1804 = vmatprep.subr.mxu0 0.0
    %1805 = vmatpush1.msra.mxu0 0.0
    %1806 = vmatprep.subr.mxu0 0.0
    %1807 = vmatpush1.msra.mxu0 0.0
    %1808 = vmatprep.mubr.f32.mxu0 0.0
    %1809 = vmatmul.mubr.f32.gmra.mrb[0].mxu0 %v1739
    %v1810 = vpop.f32.mrb[0].mxu0
    %v1811 = vadd.f32 %v1726, %v1810
    %v1812 = vpop.f32.mrb[0].mxu0
    %v1813 = vadd.f32 %v1730, %v1812
    %1814 = vmatprep.mubr.f32.mxu0 0.0
    %1815 = vmatmul.mubr.f32.gmra.mrb[0].mxu0 %v1742
    %v1816 = vpop.f32.mrb[0].mxu0
    %v1817 = vadd.f32 %v1726, %v1816
    %v1818 = vpop.f32.mrb[0].mxu0
    %v1819 = vadd.f32 %v1730, %v1818
    %1820 = vdwg.mxu0
    %1821 = vmatprep.subr.mxu0 0.0
    %1822 = vmatpush1.msra.mxu0 %v1698
    %1823 = vmatprep.subr.mxu0 0.0
    %1824 = vmatpush1.msra.mxu0 %v1701
    %1825 = vmatprep.subr.mxu0 0.0
    %1826 = vmatpush1.msra.mxu0 %v1704
    %1827 = vmatprep.subr.mxu0 0.0
    %1828 = vmatpush1.msra.mxu0 %v1707
    %1829 = vmatprep.subr.mxu0 0.0
    %1830 = vmatpush1.msra.mxu0 %v1710
    %1831 = vmatprep.subr.mxu0 0.0
    %1832 = vmatpush1.msra.mxu0 %v1713
    %1833 = vmatprep.subr.mxu0 0.0
    %1834 = vmatpush1.msra.mxu0 %v1716
    %1835 = vmatprep.subr.mxu0 0.0
    %1836 = vmatpush1.msra.mxu0 %v1719
    %1837 = vmatprep.subr.mxu0 0.0
    %1838 = vmatpush1.msra.mxu0 0.0
    %1839 = vmatprep.subr.mxu0 0.0
    %1840 = vmatpush1.msra.mxu0 0.0
    %1841 = vmatprep.subr.mxu0 0.0
    %1842 = vmatpush1.msra.mxu0 0.0
    %1843 = vmatprep.subr.mxu0 0.0
    %1844 = vmatpush1.msra.mxu0 0.0
    %1845 = vmatprep.subr.mxu0 0.0
    %1846 = vmatpush1.msra.mxu0 0.0
    %1847 = vmatprep.subr.mxu0 0.0
    %1848 = vmatpush1.msra.mxu0 0.0
    %1849 = vmatprep.subr.mxu0 0.0
    %1850 = vmatpush1.msra.mxu0 0.0
    %1851 = vmatprep.subr.mxu0 0.0
    %1852 = vmatpush1.msra.mxu0 0.0
    %1853 = vmatprep.subr.mxu0 0.0
    %1854 = vmatpush1.msra.mxu0 0.0
    %1855 = vmatprep.subr.mxu0 0.0
    %1856 = vmatpush1.msra.mxu0 0.0
    %1857 = vmatprep.subr.mxu0 0.0
    %1858 = vmatpush1.msra.mxu0 0.0
    %1859 = vmatprep.subr.mxu0 0.0
    %1860 = vmatpush1.msra.mxu0 0.0
    %1861 = vmatprep.subr.mxu0 0.0
    %1862 = vmatpush1.msra.mxu0 0.0
    %1863 = vmatprep.subr.mxu0 0.0
    %1864 = vmatpush1.msra.mxu0 0.0
    %1865 = vmatprep.subr.mxu0 0.0
    %1866 = vmatpush1.msra.mxu0 0.0
    %1867 = vmatprep.subr.mxu0 0.0
    %1868 = vmatpush1.msra.mxu0 0.0
    %1869 = vmatprep.subr.mxu0 0.0
    %1870 = vmatpush1.msra.mxu0 0.0
    %1871 = vmatprep.subr.mxu0 0.0
    %1872 = vmatpush1.msra.mxu0 0.0
    %1873 = vmatprep.subr.mxu0 0.0
    %1874 = vmatpush1.msra.mxu0 0.0
    %1875 = vmatprep.subr.mxu0 0.0
    %1876 = vmatpush1.msra.mxu0 0.0
    %1877 = vmatprep.subr.mxu0 0.0
    %1878 = vmatpush1.msra.mxu0 0.0
    %1879 = vmatprep.subr.mxu0 0.0
    %1880 = vmatpush1.msra.mxu0 0.0
    %1881 = vmatprep.subr.mxu0 0.0
    %1882 = vmatpush1.msra.mxu0 0.0
    %1883 = vmatprep.subr.mxu0 0.0
    %1884 = vmatpush1.msra.mxu0 0.0
    %1885 = vmatprep.mubr.f32.mxu0 0.0
    %1886 = vmatmul.mubr.f32.gmra.mrb[0].mxu0 %v1739
    %v1887 = vpop.f32.mrb[0].mxu0
    %v1888 = vadd.f32 %v1734, %v1887
    %v1889 = vpop.f32.mrb[0].mxu0
    %1890 = vmatprep.mubr.f32.mxu0 0.0
    %1891 = vmatmul.mubr.f32.gmra.mrb[0].mxu0 %v1742
    %v1892 = vpop.f32.mrb[0].mxu0
    %v1893 = vadd.f32 %v1734, %v1892
    %v1894 = vpop.f32.mrb[0].mxu0
    %1895 = vdwg.mxu0
    %s1896 = scalar_lea.vmem %s9, 8
    %v1897 = vld [vmem:[%s1896] sm:$0x3f]
    %v1899 = vcombine.high %v1897, %v1897
    %v1901 = vunpack.c.l.s4 1966171168
    %v1902 = vunpack.c.0.s8 %v1901
    %v1903 = vlaneseq
    %v1904 = vshrl.u32 %v1903, 7
    %v1905 = vsub.s32 %v1902, %v1904
    %v1906 = vrot.slane %v1897, %v1905
    %v1908 = vunpack.c.l.s4 1966171168
    %v1909 = vunpack.c.0.s8 %v1908
    %v1910 = vlaneseq
    %v1911 = vshrl.u32 %v1910, 7
    %v1912 = vsub.s32 %v1909, %v1911
    %v1913 = vrot.slane %v1899, %v1912
    %v1914 = vcombine.high %v1906, %v1906
    %v1915 = vcombine.high %v1913, %v1913
    %v1917 = vunpack.c.l.s4 1966171168
    %v1918 = vunpack.c.0.s8 %v1917
    %v1919 = vlaneseq
    %v1920 = vshrl.u32 %v1919, 7
    %v1921 = vsub.s32 %v1918, %v1920
    %v1922 = vrot.slane %v1906, %v1921
    %v1924 = vunpack.c.l.s4 1966171168
    %v1925 = vunpack.c.0.s8 %v1924
    %v1926 = vlaneseq
    %v1927 = vshrl.u32 %v1926, 7
    %v1928 = vsub.s32 %v1925, %v1927
    %v1929 = vrot.slane %v1913, %v1928
    %v1931 = vunpack.c.l.s4 1966171168
    %v1932 = vunpack.c.0.s8 %v1931
    %v1933 = vlaneseq
    %v1934 = vshrl.u32 %v1933, 7
    %v1935 = vsub.s32 %v1932, %v1934
    %v1936 = vrot.slane %v1914, %v1935
    %v1938 = vunpack.c.l.s4 1966171168
    %v1939 = vunpack.c.0.s8 %v1938
    %v1940 = vlaneseq
    %v1941 = vshrl.u32 %v1940, 7
    %v1942 = vsub.s32 %v1939, %v1941
    %v1943 = vrot.slane %v1915, %v1942
    %v1944 = vcombine.high %v1922, %v1922
    %v1945 = vcombine.high %v1936, %v1936
    %v1946 = vlaneseq
    %v1947 = vshrl.u32 %v1946, 7
    %v1948 = vsub.s32 0, %v1947
    %v1949 = vrot.slane %v1922, %v1948
    %v1950 = vlaneseq
    %v1951 = vshrl.u32 %v1950, 7
    %v1952 = vsub.s32 0, %v1951
    %v1953 = vrot.slane %v1936, %v1952
    %v1954 = vlaneseq
    %v1955 = vshrl.u32 %v1954, 7
    %v1956 = vsub.s32 0, %v1955
    %v1957 = vrot.slane %v1944, %v1956
    %v1958 = vlaneseq
    %v1959 = vshrl.u32 %v1958, 7
    %v1960 = vsub.s32 0, %v1959
    %v1961 = vrot.slane %v1945, %v1960
    %v1962 = vlaneseq
    %v1963 = vshrl.u32 %v1962, 7
    %v1964 = vsub.s32 0, %v1963
    %v1965 = vrot.slane %v1929, %v1964
    %v1966 = vlaneseq
    %v1967 = vshrl.u32 %v1966, 7
    %v1968 = vsub.s32 0, %v1967
    %v1969 = vrot.slane %v1943, %v1968
    %v1976 = vmul.f32 %v1811, %v1949
    %v1977 = vmul.f32 %v1817, %v1949
    %v1978 = vmul.f32 %v1811, %v1953
    %v1979 = vmul.f32 %v1817, %v1953
    %v1980 = vmul.f32 %v1811, %v1957
    %v1981 = vmul.f32 %v1817, %v1957
    %v1982 = vmul.f32 %v1811, %v1961
    %v1983 = vmul.f32 %v1817, %v1961
    %v1984 = vmul.f32 %v1811, %v1965
    %v1985 = vmul.f32 %v1817, %v1965
    %v1986 = vmul.f32 %v1811, %v1969
    %v1987 = vmul.f32 %v1817, %v1969
    %v1988 = vmul.f32 %v1888, %v1949
    %v1989 = vmul.f32 %v1893, %v1949
    %v1990 = vmul.f32 %v1888, %v1953
    %v1991 = vmul.f32 %v1893, %v1953
    %v1992 = vmul.f32 %v1888, %v1957
    %v1993 = vmul.f32 %v1893, %v1957
    %v1994 = vmul.f32 %v1888, %v1961
    %v1995 = vmul.f32 %v1893, %v1961
    %v1996 = vmul.f32 %v1888, %v1965
    %v1997 = vmul.f32 %v1893, %v1965
    %v1998 = vmul.f32 %v1888, %v1969
    %v1999 = vmul.f32 %v1893, %v1969
    %v2001 = vsel %vm157, %v1976, 0
    %v2004 = vsel %vm157, %v1977, 0
    %v2007 = vsel %vm157, %v1813, 0
    %v2010 = vsel %vm157, %v1819, 0
    %2012 = vmatprep.subr.mxu0 0.0
    %2013 = vmatpush1.xpose.msra.mxu0 %v2007
    %2014 = vmatprep.subr.mxu0 0.0
    %2015 = vmatpush1.xpose.msra.mxu0 %v2010
    %2016 = vmatprep.subr.mxu0 0.0
    %2017 = vmatpush1.xpose.msra.mxu0 0.0
    %2018 = vmatprep.subr.mxu0 0.0
    %2019 = vmatpush1.xpose.msra.mxu0 0.0
    %2020 = vmatprep.subr.mxu0 0.0
    %2021 = vmatpush1.xpose.msra.mxu0 0.0
    %2022 = vmatprep.subr.mxu0 0.0
    %2023 = vmatpush1.xpose.msra.mxu0 0.0
    %2024 = vmatprep.subr.mxu0 0.0
    %2025 = vmatpush1.xpose.msra.mxu0 0.0
    %2026 = vmatprep.subr.mxu0 0.0
    %2027 = vmatpush1.xpose.msra.mxu0 0.0
    %2028 = vmatprep.subr.mxu0 0.0
    %2029 = vmatpush1.xpose.msra.mxu0 0.0
    %2030 = vmatprep.subr.mxu0 0.0
    %2031 = vmatpush1.xpose.msra.mxu0 0.0
    %2032 = vmatprep.subr.mxu0 0.0
    %2033 = vmatpush1.xpose.msra.mxu0 0.0
    %2034 = vmatprep.subr.mxu0 0.0
    %2035 = vmatpush1.xpose.msra.mxu0 0.0
    %2036 = vmatprep.subr.mxu0 0.0
    %2037 = vmatpush1.xpose.msra.mxu0 0.0
    %2038 = vmatprep.subr.mxu0 0.0
    %2039 = vmatpush1.xpose.msra.mxu0 0.0
    %2040 = vmatprep.subr.mxu0 0.0
    %2041 = vmatpush1.xpose.msra.mxu0 0.0
    %2042 = vmatprep.subr.mxu0 0.0
    %2043 = vmatpush1.xpose.msra.mxu0 0.0
    %2044 = vmatprep.subr.mxu0 0.0
    %2045 = vmatpush1.xpose.msra.mxu0 0.0
    %2046 = vmatprep.subr.mxu0 0.0
    %2047 = vmatpush1.xpose.msra.mxu0 0.0
    %2048 = vmatprep.subr.mxu0 0.0
    %2049 = vmatpush1.xpose.msra.mxu0 0.0
    %2050 = vmatprep.subr.mxu0 0.0
    %2051 = vmatpush1.xpose.msra.mxu0 0.0
    %2052 = vmatprep.subr.mxu0 0.0
    %2053 = vmatpush1.xpose.msra.mxu0 0.0
    %2054 = vmatprep.subr.mxu0 0.0
    %2055 = vmatpush1.xpose.msra.mxu0 0.0
    %2056 = vmatprep.subr.mxu0 0.0
    %2057 = vmatpush1.xpose.msra.mxu0 0.0
    %2058 = vmatprep.subr.mxu0 0.0
    %2059 = vmatpush1.xpose.msra.mxu0 0.0
    %2060 = vmatprep.subr.mxu0 0.0
    %2061 = vmatpush1.xpose.msra.mxu0 0.0
    %2062 = vmatprep.subr.mxu0 0.0
    %2063 = vmatpush1.xpose.msra.mxu0 0.0
    %2064 = vmatprep.subr.mxu0 0.0
    %2065 = vmatpush1.xpose.msra.mxu0 0.0
    %2066 = vmatprep.subr.mxu0 0.0
    %2067 = vmatpush1.xpose.msra.mxu0 0.0
    %2068 = vmatprep.subr.mxu0 0.0
    %2069 = vmatpush1.xpose.msra.mxu0 0.0
    %2070 = vmatprep.subr.mxu0 0.0
    %2071 = vmatpush1.xpose.msra.mxu0 0.0
    %2072 = vmatprep.subr.mxu0 0.0
    %2073 = vmatpush1.xpose.msra.mxu0 0.0
    %2074 = vmatprep.subr.mxu0 0.0
    %2075 = vmatpush1.xpose.msra.mxu0 0.0
    %2076 = vmatprep.mubr.f32.mxu0 0.0
    %2077 = vmatmul.mubr.f32.gmra.mrb[0].mxu0 %v2001
    %v2078 = vpop.f32.mrb[0].mxu0
    %v2079 = vadd.f32 %v114, %v2078
    %v2080 = vpop.f32.mrb[0].mxu0
    %2081 = vmatprep.mubr.f32.mxu0 0.0
    %2082 = vmatmul.mubr.f32.gmra.mrb[0].mxu0 %v2004
    %v2083 = vpop.f32.mrb[0].mxu0
    %v2084 = vadd.f32 %v115, %v2083
    %v2085 = vpop.f32.mrb[0].mxu0
    %2086 = vdwg.mxu0
    %v2088 = vsel %vm157, %v1978, 0
    %v2091 = vsel %vm157, %v1979, 0
    %2093 = vmatprep.subr.mxu0 0.0
    %2094 = vmatpush1.xpose.msra.mxu0 %v2007
    %2095 = vmatprep.subr.mxu0 0.0
    %2096 = vmatpush1.xpose.msra.mxu0 %v2010
    %2097 = vmatprep.subr.mxu0 0.0
    %2098 = vmatpush1.xpose.msra.mxu0 0.0
    %2099 = vmatprep.subr.mxu0 0.0
    %2100 = vmatpush1.xpose.msra.mxu0 0.0
    %2101 = vmatprep.subr.mxu0 0.0
    %2102 = vmatpush1.xpose.msra.mxu0 0.0
    %2103 = vmatprep.subr.mxu0 0.0
    %2104 = vmatpush1.xpose.msra.mxu0 0.0
    %2105 = vmatprep.subr.mxu0 0.0
    %2106 = vmatpush1.xpose.msra.mxu0 0.0
    %2107 = vmatprep.subr.mxu0 0.0
    %2108 = vmatpush1.xpose.msra.mxu0 0.0
    %2109 = vmatprep.subr.mxu0 0.0
    %2110 = vmatpush1.xpose.msra.mxu0 0.0
    %2111 = vmatprep.subr.mxu0 0.0
    %2112 = vmatpush1.xpose.msra.mxu0 0.0
    %2113 = vmatprep.subr.mxu0 0.0
    %2114 = vmatpush1.xpose.msra.mxu0 0.0
    %2115 = vmatprep.subr.mxu0 0.0
    %2116 = vmatpush1.xpose.msra.mxu0 0.0
    %2117 = vmatprep.subr.mxu0 0.0
    %2118 = vmatpush1.xpose.msra.mxu0 0.0
    %2119 = vmatprep.subr.mxu0 0.0
    %2120 = vmatpush1.xpose.msra.mxu0 0.0
    %2121 = vmatprep.subr.mxu0 0.0
    %2122 = vmatpush1.xpose.msra.mxu0 0.0
    %2123 = vmatprep.subr.mxu0 0.0
    %2124 = vmatpush1.xpose.msra.mxu0 0.0
    %2125 = vmatprep.subr.mxu0 0.0
    %2126 = vmatpush1.xpose.msra.mxu0 0.0
    %2127 = vmatprep.subr.mxu0 0.0
    %2128 = vmatpush1.xpose.msra.mxu0 0.0
    %2129 = vmatprep.subr.mxu0 0.0
    %2130 = vmatpush1.xpose.msra.mxu0 0.0
    %2131 = vmatprep.subr.mxu0 0.0
    %2132 = vmatpush1.xpose.msra.mxu0 0.0
    %2133 = vmatprep.subr.mxu0 0.0
    %2134 = vmatpush1.xpose.msra.mxu0 0.0
    %2135 = vmatprep.subr.mxu0 0.0
    %2136 = vmatpush1.xpose.msra.mxu0 0.0
    %2137 = vmatprep.subr.mxu0 0.0
    %2138 = vmatpush1.xpose.msra.mxu0 0.0
    %2139 = vmatprep.subr.mxu0 0.0
    %2140 = vmatpush1.xpose.msra.mxu0 0.0
    %2141 = vmatprep.subr.mxu0 0.0
    %2142 = vmatpush1.xpose.msra.mxu0 0.0
    %2143 = vmatprep.subr.mxu0 0.0
    %2144 = vmatpush1.xpose.msra.mxu0 0.0
    %2145 = vmatprep.subr.mxu0 0.0
    %2146 = vmatpush1.xpose.msra.mxu0 0.0
    %2147 = vmatprep.subr.mxu0 0.0
    %2148 = vmatpush1.xpose.msra.mxu0 0.0
    %2149 = vmatprep.subr.mxu0 0.0
    %2150 = vmatpush1.xpose.msra.mxu0 0.0
    %2151 = vmatprep.subr.mxu0 0.0
    %2152 = vmatpush1.xpose.msra.mxu0 0.0
    %2153 = vmatprep.subr.mxu0 0.0
    %2154 = vmatpush1.xpose.msra.mxu0 0.0
    %2155 = vmatprep.subr.mxu0 0.0
    %2156 = vmatpush1.xpose.msra.mxu0 0.0
    %2157 = vmatprep.mubr.f32.mxu0 0.0
    %2158 = vmatmul.mubr.f32.gmra.mrb[0].mxu0 %v2088
    %v2159 = vpop.f32.mrb[0].mxu0
    %v2160 = vadd.f32 %v114, %v2159
    %v2161 = vpop.f32.mrb[0].mxu0
    %2162 = vmatprep.mubr.f32.mxu0 0.0
    %2163 = vmatmul.mubr.f32.gmra.mrb[0].mxu0 %v2091
    %v2164 = vpop.f32.mrb[0].mxu0
    %v2165 = vadd.f32 %v115, %v2164
    %v2166 = vpop.f32.mrb[0].mxu0
    %2167 = vdwg.mxu0
    %v2169 = vsel %vm157, %v1980, 0
    %v2172 = vsel %vm157, %v1981, 0
    %2174 = vmatprep.subr.mxu0 0.0
    %2175 = vmatpush1.xpose.msra.mxu0 %v2007
    %2176 = vmatprep.subr.mxu0 0.0
    %2177 = vmatpush1.xpose.msra.mxu0 %v2010
    %2178 = vmatprep.subr.mxu0 0.0
    %2179 = vmatpush1.xpose.msra.mxu0 0.0
    %2180 = vmatprep.subr.mxu0 0.0
    %2181 = vmatpush1.xpose.msra.mxu0 0.0
    %2182 = vmatprep.subr.mxu0 0.0
    %2183 = vmatpush1.xpose.msra.mxu0 0.0
    %2184 = vmatprep.subr.mxu0 0.0
    %2185 = vmatpush1.xpose.msra.mxu0 0.0
    %2186 = vmatprep.subr.mxu0 0.0
    %2187 = vmatpush1.xpose.msra.mxu0 0.0
    %2188 = vmatprep.subr.mxu0 0.0
    %2189 = vmatpush1.xpose.msra.mxu0 0.0
    %2190 = vmatprep.subr.mxu0 0.0
    %2191 = vmatpush1.xpose.msra.mxu0 0.0
    %2192 = vmatprep.subr.mxu0 0.0
    %2193 = vmatpush1.xpose.msra.mxu0 0.0
    %2194 = vmatprep.subr.mxu0 0.0
    %2195 = vmatpush1.xpose.msra.mxu0 0.0
    %2196 = vmatprep.subr.mxu0 0.0
    %2197 = vmatpush1.xpose.msra.mxu0 0.0
    %2198 = vmatprep.subr.mxu0 0.0
    %2199 = vmatpush1.xpose.msra.mxu0 0.0
    %2200 = vmatprep.subr.mxu0 0.0
    %2201 = vmatpush1.xpose.msra.mxu0 0.0
    %2202 = vmatprep.subr.mxu0 0.0
    %2203 = vmatpush1.xpose.msra.mxu0 0.0
    %2204 = vmatprep.subr.mxu0 0.0
    %2205 = vmatpush1.xpose.msra.mxu0 0.0
    %2206 = vmatprep.subr.mxu0 0.0
    %2207 = vmatpush1.xpose.msra.mxu0 0.0
    %2208 = vmatprep.subr.mxu0 0.0
    %2209 = vmatpush1.xpose.msra.mxu0 0.0
    %2210 = vmatprep.subr.mxu0 0.0
    %2211 = vmatpush1.xpose.msra.mxu0 0.0
    %2212 = vmatprep.subr.mxu0 0.0
    %2213 = vmatpush1.xpose.msra.mxu0 0.0
    %2214 = vmatprep.subr.mxu0 0.0
    %2215 = vmatpush1.xpose.msra.mxu0 0.0
    %2216 = vmatprep.subr.mxu0 0.0
    %2217 = vmatpush1.xpose.msra.mxu0 0.0
    %2218 = vmatprep.subr.mxu0 0.0
    %2219 = vmatpush1.xpose.msra.mxu0 0.0
    %2220 = vmatprep.subr.mxu0 0.0
    %2221 = vmatpush1.xpose.msra.mxu0 0.0
    %2222 = vmatprep.subr.mxu0 0.0
    %2223 = vmatpush1.xpose.msra.mxu0 0.0
    %2224 = vmatprep.subr.mxu0 0.0
    %2225 = vmatpush1.xpose.msra.mxu0 0.0
    %2226 = vmatprep.subr.mxu0 0.0
    %2227 = vmatpush1.xpose.msra.mxu0 0.0
    %2228 = vmatprep.subr.mxu0 0.0
    %2229 = vmatpush1.xpose.msra.mxu0 0.0
    %2230 = vmatprep.subr.mxu0 0.0
    %2231 = vmatpush1.xpose.msra.mxu0 0.0
    %2232 = vmatprep.subr.mxu0 0.0
    %2233 = vmatpush1.xpose.msra.mxu0 0.0
    %2234 = vmatprep.subr.mxu0 0.0
    %2235 = vmatpush1.xpose.msra.mxu0 0.0
    %2236 = vmatprep.subr.mxu0 0.0
    %2237 = vmatpush1.xpose.msra.mxu0 0.0
    %2238 = vmatprep.mubr.f32.mxu0 0.0
    %2239 = vmatmul.mubr.f32.gmra.mrb[0].mxu0 %v2169
    %v2240 = vpop.f32.mrb[0].mxu0
    %v2241 = vadd.f32 %v114, %v2240
    %v2242 = vpop.f32.mrb[0].mxu0
    %2243 = vmatprep.mubr.f32.mxu0 0.0
    %2244 = vmatmul.mubr.f32.gmra.mrb[0].mxu0 %v2172
    %v2245 = vpop.f32.mrb[0].mxu0
    %v2246 = vadd.f32 %v115, %v2245
    %v2247 = vpop.f32.mrb[0].mxu0
    %2248 = vdwg.mxu0
    %v2250 = vsel %vm157, %v1982, 0
    %v2253 = vsel %vm157, %v1983, 0
    %2255 = vmatprep.subr.mxu0 0.0
    %2256 = vmatpush1.xpose.msra.mxu0 %v2007
    %2257 = vmatprep.subr.mxu0 0.0
    %2258 = vmatpush1.xpose.msra.mxu0 %v2010
    %2259 = vmatprep.subr.mxu0 0.0
    %2260 = vmatpush1.xpose.msra.mxu0 0.0
    %2261 = vmatprep.subr.mxu0 0.0
    %2262 = vmatpush1.xpose.msra.mxu0 0.0
    %2263 = vmatprep.subr.mxu0 0.0
    %2264 = vmatpush1.xpose.msra.mxu0 0.0
    %2265 = vmatprep.subr.mxu0 0.0
    %2266 = vmatpush1.xpose.msra.mxu0 0.0
    %2267 = vmatprep.subr.mxu0 0.0
    %2268 = vmatpush1.xpose.msra.mxu0 0.0
    %2269 = vmatprep.subr.mxu0 0.0
    %2270 = vmatpush1.xpose.msra.mxu0 0.0
    %2271 = vmatprep.subr.mxu0 0.0
    %2272 = vmatpush1.xpose.msra.mxu0 0.0
    %2273 = vmatprep.subr.mxu0 0.0
    %2274 = vmatpush1.xpose.msra.mxu0 0.0
    %2275 = vmatprep.subr.mxu0 0.0
    %2276 = vmatpush1.xpose.msra.mxu0 0.0
    %2277 = vmatprep.subr.mxu0 0.0
    %2278 = vmatpush1.xpose.msra.mxu0 0.0
    %2279 = vmatprep.subr.mxu0 0.0
    %2280 = vmatpush1.xpose.msra.mxu0 0.0
    %2281 = vmatprep.subr.mxu0 0.0
    %2282 = vmatpush1.xpose.msra.mxu0 0.0
    %2283 = vmatprep.subr.mxu0 0.0
    %2284 = vmatpush1.xpose.msra.mxu0 0.0
    %2285 = vmatprep.subr.mxu0 0.0
    %2286 = vmatpush1.xpose.msra.mxu0 0.0
    %2287 = vmatprep.subr.mxu0 0.0
    %2288 = vmatpush1.xpose.msra.mxu0 0.0
    %2289 = vmatprep.subr.mxu0 0.0
    %2290 = vmatpush1.xpose.msra.mxu0 0.0
    %2291 = vmatprep.subr.mxu0 0.0
    %2292 = vmatpush1.xpose.msra.mxu0 0.0
    %2293 = vmatprep.subr.mxu0 0.0
    %2294 = vmatpush1.xpose.msra.mxu0 0.0
    %2295 = vmatprep.subr.mxu0 0.0
    %2296 = vmatpush1.xpose.msra.mxu0 0.0
    %2297 = vmatprep.subr.mxu0 0.0
    %2298 = vmatpush1.xpose.msra.mxu0 0.0
    %2299 = vmatprep.subr.mxu0 0.0
    %2300 = vmatpush1.xpose.msra.mxu0 0.0
    %2301 = vmatprep.subr.mxu0 0.0
    %2302 = vmatpush1.xpose.msra.mxu0 0.0
    %2303 = vmatprep.subr.mxu0 0.0
    %2304 = vmatpush1.xpose.msra.mxu0 0.0
    %2305 = vmatprep.subr.mxu0 0.0
    %2306 = vmatpush1.xpose.msra.mxu0 0.0
    %2307 = vmatprep.subr.mxu0 0.0
    %2308 = vmatpush1.xpose.msra.mxu0 0.0
    %2309 = vmatprep.subr.mxu0 0.0
    %2310 = vmatpush1.xpose.msra.mxu0 0.0
    %2311 = vmatprep.subr.mxu0 0.0
    %2312 = vmatpush1.xpose.msra.mxu0 0.0
    %2313 = vmatprep.subr.mxu0 0.0
    %2314 = vmatpush1.xpose.msra.mxu0 0.0
    %2315 = vmatprep.subr.mxu0 0.0
    %2316 = vmatpush1.xpose.msra.mxu0 0.0
    %2317 = vmatprep.subr.mxu0 0.0
    %2318 = vmatpush1.xpose.msra.mxu0 0.0
    %2319 = vmatprep.mubr.f32.mxu0 0.0
    %2320 = vmatmul.mubr.f32.gmra.mrb[0].mxu0 %v2250
    %v2321 = vpop.f32.mrb[0].mxu0
    %v2322 = vadd.f32 %v114, %v2321
    %v2323 = vpop.f32.mrb[0].mxu0
    %2324 = vmatprep.mubr.f32.mxu0 0.0
    %2325 = vmatmul.mubr.f32.gmra.mrb[0].mxu0 %v2253
    %v2326 = vpop.f32.mrb[0].mxu0
    %v2327 = vadd.f32 %v115, %v2326
    %v2328 = vpop.f32.mrb[0].mxu0
    %2329 = vdwg.mxu0
    %v2331 = vsel %vm157, %v1984, 0
    %v2334 = vsel %vm157, %v1985, 0
    %2336 = vmatprep.subr.mxu0 0.0
    %2337 = vmatpush1.xpose.msra.mxu0 %v2007
    %2338 = vmatprep.subr.mxu0 0.0
    %2339 = vmatpush1.xpose.msra.mxu0 %v2010
    %2340 = vmatprep.subr.mxu0 0.0
    %2341 = vmatpush1.xpose.msra.mxu0 0.0
    %2342 = vmatprep.subr.mxu0 0.0
    %2343 = vmatpush1.xpose.msra.mxu0 0.0
    %2344 = vmatprep.subr.mxu0 0.0
    %2345 = vmatpush1.xpose.msra.mxu0 0.0
    %2346 = vmatprep.subr.mxu0 0.0
    %2347 = vmatpush1.xpose.msra.mxu0 0.0
    %2348 = vmatprep.subr.mxu0 0.0
    %2349 = vmatpush1.xpose.msra.mxu0 0.0
    %2350 = vmatprep.subr.mxu0 0.0
    %2351 = vmatpush1.xpose.msra.mxu0 0.0
    %2352 = vmatprep.subr.mxu0 0.0
    %2353 = vmatpush1.xpose.msra.mxu0 0.0
    %2354 = vmatprep.subr.mxu0 0.0
    %2355 = vmatpush1.xpose.msra.mxu0 0.0
    %2356 = vmatprep.subr.mxu0 0.0
    %2357 = vmatpush1.xpose.msra.mxu0 0.0
    %2358 = vmatprep.subr.mxu0 0.0
    %2359 = vmatpush1.xpose.msra.mxu0 0.0
    %2360 = vmatprep.subr.mxu0 0.0
    %2361 = vmatpush1.xpose.msra.mxu0 0.0
    %2362 = vmatprep.subr.mxu0 0.0
    %2363 = vmatpush1.xpose.msra.mxu0 0.0
    %2364 = vmatprep.subr.mxu0 0.0
    %2365 = vmatpush1.xpose.msra.mxu0 0.0
    %2366 = vmatprep.subr.mxu0 0.0
    %2367 = vmatpush1.xpose.msra.mxu0 0.0
    %2368 = vmatprep.subr.mxu0 0.0
    %2369 = vmatpush1.xpose.msra.mxu0 0.0
    %2370 = vmatprep.subr.mxu0 0.0
    %2371 = vmatpush1.xpose.msra.mxu0 0.0
    %2372 = vmatprep.subr.mxu0 0.0
    %2373 = vmatpush1.xpose.msra.mxu0 0.0
    %2374 = vmatprep.subr.mxu0 0.0
    %2375 = vmatpush1.xpose.msra.mxu0 0.0
    %2376 = vmatprep.subr.mxu0 0.0
    %2377 = vmatpush1.xpose.msra.mxu0 0.0
    %2378 = vmatprep.subr.mxu0 0.0
    %2379 = vmatpush1.xpose.msra.mxu0 0.0
    %2380 = vmatprep.subr.mxu0 0.0
    %2381 = vmatpush1.xpose.msra.mxu0 0.0
    %2382 = vmatprep.subr.mxu0 0.0
    %2383 = vmatpush1.xpose.msra.mxu0 0.0
    %2384 = vmatprep.subr.mxu0 0.0
    %2385 = vmatpush1.xpose.msra.mxu0 0.0
    %2386 = vmatprep.subr.mxu0 0.0
    %2387 = vmatpush1.xpose.msra.mxu0 0.0
    %2388 = vmatprep.subr.mxu0 0.0
    %2389 = vmatpush1.xpose.msra.mxu0 0.0
    %2390 = vmatprep.subr.mxu0 0.0
    %2391 = vmatpush1.xpose.msra.mxu0 0.0
    %2392 = vmatprep.subr.mxu0 0.0
    %2393 = vmatpush1.xpose.msra.mxu0 0.0
    %2394 = vmatprep.subr.mxu0 0.0
    %2395 = vmatpush1.xpose.msra.mxu0 0.0
    %2396 = vmatprep.subr.mxu0 0.0
    %2397 = vmatpush1.xpose.msra.mxu0 0.0
    %2398 = vmatprep.subr.mxu0 0.0
    %2399 = vmatpush1.xpose.msra.mxu0 0.0
    %2400 = vmatprep.mubr.f32.mxu0 0.0
    %2401 = vmatmul.mubr.f32.gmra.mrb[0].mxu0 %v2331
    %v2402 = vpop.f32.mrb[0].mxu0
    %v2403 = vadd.f32 %v114, %v2402
    %v2404 = vpop.f32.mrb[0].mxu0
    %2405 = vmatprep.mubr.f32.mxu0 0.0
    %2406 = vmatmul.mubr.f32.gmra.mrb[0].mxu0 %v2334
    %v2407 = vpop.f32.mrb[0].mxu0
    %v2408 = vadd.f32 %v115, %v2407
    %v2409 = vpop.f32.mrb[0].mxu0
    %2410 = vdwg.mxu0
    %v2412 = vsel %vm157, %v1986, 0
    %v2415 = vsel %vm157, %v1987, 0
    %2417 = vmatprep.subr.mxu0 0.0
    %2418 = vmatpush1.xpose.msra.mxu0 %v2007
    %2419 = vmatprep.subr.mxu0 0.0
    %2420 = vmatpush1.xpose.msra.mxu0 %v2010
    %2421 = vmatprep.subr.mxu0 0.0
    %2422 = vmatpush1.xpose.msra.mxu0 0.0
    %2423 = vmatprep.subr.mxu0 0.0
    %2424 = vmatpush1.xpose.msra.mxu0 0.0
    %2425 = vmatprep.subr.mxu0 0.0
    %2426 = vmatpush1.xpose.msra.mxu0 0.0
    %2427 = vmatprep.subr.mxu0 0.0
    %2428 = vmatpush1.xpose.msra.mxu0 0.0
    %2429 = vmatprep.subr.mxu0 0.0
    %2430 = vmatpush1.xpose.msra.mxu0 0.0
    %2431 = vmatprep.subr.mxu0 0.0
    %2432 = vmatpush1.xpose.msra.mxu0 0.0
    %2433 = vmatprep.subr.mxu0 0.0
    %2434 = vmatpush1.xpose.msra.mxu0 0.0
    %2435 = vmatprep.subr.mxu0 0.0
    %2436 = vmatpush1.xpose.msra.mxu0 0.0
    %2437 = vmatprep.subr.mxu0 0.0
    %2438 = vmatpush1.xpose.msra.mxu0 0.0
    %2439 = vmatprep.subr.mxu0 0.0
    %2440 = vmatpush1.xpose.msra.mxu0 0.0
    %2441 = vmatprep.subr.mxu0 0.0
    %2442 = vmatpush1.xpose.msra.mxu0 0.0
    %2443 = vmatprep.subr.mxu0 0.0
    %2444 = vmatpush1.xpose.msra.mxu0 0.0
    %2445 = vmatprep.subr.mxu0 0.0
    %2446 = vmatpush1.xpose.msra.mxu0 0.0
    %2447 = vmatprep.subr.mxu0 0.0
    %2448 = vmatpush1.xpose.msra.mxu0 0.0
    %2449 = vmatprep.subr.mxu0 0.0
    %2450 = vmatpush1.xpose.msra.mxu0 0.0
    %2451 = vmatprep.subr.mxu0 0.0
    %2452 = vmatpush1.xpose.msra.mxu0 0.0
    %2453 = vmatprep.subr.mxu0 0.0
    %2454 = vmatpush1.xpose.msra.mxu0 0.0
    %2455 = vmatprep.subr.mxu0 0.0
    %2456 = vmatpush1.xpose.msra.mxu0 0.0
    %2457 = vmatprep.subr.mxu0 0.0
    %2458 = vmatpush1.xpose.msra.mxu0 0.0
    %2459 = vmatprep.subr.mxu0 0.0
    %2460 = vmatpush1.xpose.msra.mxu0 0.0
    %2461 = vmatprep.subr.mxu0 0.0
    %2462 = vmatpush1.xpose.msra.mxu0 0.0
    %2463 = vmatprep.subr.mxu0 0.0
    %2464 = vmatpush1.xpose.msra.mxu0 0.0
    %2465 = vmatprep.subr.mxu0 0.0
    %2466 = vmatpush1.xpose.msra.mxu0 0.0
    %2467 = vmatprep.subr.mxu0 0.0
    %2468 = vmatpush1.xpose.msra.mxu0 0.0
    %2469 = vmatprep.subr.mxu0 0.0
    %2470 = vmatpush1.xpose.msra.mxu0 0.0
    %2471 = vmatprep.subr.mxu0 0.0
    %2472 = vmatpush1.xpose.msra.mxu0 0.0
    %2473 = vmatprep.subr.mxu0 0.0
    %2474 = vmatpush1.xpose.msra.mxu0 0.0
    %2475 = vmatprep.subr.mxu0 0.0
    %2476 = vmatpush1.xpose.msra.mxu0 0.0
    %2477 = vmatprep.subr.mxu0 0.0
    %2478 = vmatpush1.xpose.msra.mxu0 0.0
    %2479 = vmatprep.subr.mxu0 0.0
    %2480 = vmatpush1.xpose.msra.mxu0 0.0
    %2481 = vmatprep.mubr.f32.mxu0 0.0
    %2482 = vmatmul.mubr.f32.gmra.mrb[0].mxu0 %v2412
    %v2483 = vpop.f32.mrb[0].mxu0
    %v2484 = vadd.f32 %v114, %v2483
    %v2485 = vpop.f32.mrb[0].mxu0
    %2486 = vmatprep.mubr.f32.mxu0 0.0
    %2487 = vmatmul.mubr.f32.gmra.mrb[0].mxu0 %v2415
    %v2488 = vpop.f32.mrb[0].mxu0
    %v2489 = vadd.f32 %v115, %v2488
    %v2490 = vpop.f32.mrb[0].mxu0
    %2491 = vdwg.mxu0
    %v2492 = vsel %vm911, %v2079, -inf
    %2493 = vmax.xlane.f32.xlu0 %v2492
    %v2494 = vpop.xlane.xlu0 %2493
    %v2495 = vsel %vm911, %v2084, -inf
    %2496 = vmax.xlane.f32.xlu0 %v2495
    %v2497 = vpop.xlane.xlu0 %2496
    %v2498 = vsel %vm911, %v2160, -inf
    %2499 = vmax.xlane.f32.xlu0 %v2498
    %v2500 = vpop.xlane.xlu0 %2499
    %v2501 = vsel %vm911, %v2165, -inf
    %2502 = vmax.xlane.f32.xlu0 %v2501
    %v2503 = vpop.xlane.xlu0 %2502
    %v2504 = vsel %vm911, %v2241, -inf
    %2505 = vmax.xlane.f32.xlu0 %v2504
    %v2506 = vpop.xlane.xlu0 %2505
    %v2507 = vsel %vm911, %v2246, -inf
    %2508 = vmax.xlane.f32.xlu0 %v2507
    %v2509 = vpop.xlane.xlu0 %2508
    %v2510 = vsel %vm911, %v2322, -inf
    %2511 = vmax.xlane.f32.xlu0 %v2510
    %v2512 = vpop.xlane.xlu0 %2511
    %v2513 = vsel %vm911, %v2327, -inf
    %2514 = vmax.xlane.f32.xlu0 %v2513
    %v2515 = vpop.xlane.xlu0 %2514
    %v2516 = vsel %vm911, %v2403, -inf
    %2517 = vmax.xlane.f32.xlu0 %v2516
    %v2518 = vpop.xlane.xlu0 %2517
    %v2519 = vsel %vm911, %v2408, -inf
    %2520 = vmax.xlane.f32.xlu0 %v2519
    %v2521 = vpop.xlane.xlu0 %2520
    %v2522 = vsel %vm911, %v2484, -inf
    %2523 = vmax.xlane.f32.xlu0 %v2522
    %v2524 = vpop.xlane.xlu0 %2523
    %v2525 = vsel %vm911, %v2489, -inf
    %2526 = vmax.xlane.f32.xlu0 %v2525
    %v2527 = vpop.xlane.xlu0 %2526
    %v2528 = vsub.f32 %v2079, %v2494
    %v2529 = vsub.f32 %v2084, %v2497
    %v2530 = vsub.f32 %v2160, %v2500
    %v2531 = vsub.f32 %v2165, %v2503
    %v2532 = vsub.f32 %v2241, %v2506
    %v2533 = vsub.f32 %v2246, %v2509
    %v2534 = vsub.f32 %v2322, %v2512
    %v2535 = vsub.f32 %v2327, %v2515
    %v2536 = vsub.f32 %v2403, %v2518
    %v2537 = vsub.f32 %v2408, %v2521
    %v2538 = vsub.f32 %v2484, %v2524
    %v2539 = vsub.f32 %v2489, %v2527
    %v2540 = vmul.f32 %v2528, 1.442695
    %v2541 = vpow.pop %v2540
    %v2542 = vmul.f32 %v2529, 1.442695
    %v2543 = vpow.pop %v2542
    %v2544 = vmul.f32 %v2530, 1.442695
    %v2545 = vpow.pop %v2544
    %v2546 = vmul.f32 %v2531, 1.442695
    %v2547 = vpow.pop %v2546
    %v2548 = vmul.f32 %v2532, 1.442695
    %v2549 = vpow.pop %v2548
    %v2550 = vmul.f32 %v2533, 1.442695
    %v2551 = vpow.pop %v2550
    %v2552 = vmul.f32 %v2534, 1.442695
    %v2553 = vpow.pop %v2552
    %v2554 = vmul.f32 %v2535, 1.442695
    %v2555 = vpow.pop %v2554
    %v2556 = vmul.f32 %v2536, 1.442695
    %v2557 = vpow.pop %v2556
    %v2558 = vmul.f32 %v2537, 1.442695
    %v2559 = vpow.pop %v2558
    %v2560 = vmul.f32 %v2538, 1.442695
    %v2561 = vpow.pop %v2560
    %v2562 = vmul.f32 %v2539, 1.442695
    %v2563 = vpow.pop %v2562
    %v2564 = vsel %vm911, %v2541, 0.0
    %2565 = vadd.xlane.f32.xlu0 %v2564
    %v2566 = vpop.xlane.xlu0 %2565
    %v2567 = vsel %vm911, %v2543, 0.0
    %2568 = vadd.xlane.f32.xlu0 %v2567
    %v2569 = vpop.xlane.xlu0 %2568
    %v2570 = vsel %vm911, %v2545, 0.0
    %2571 = vadd.xlane.f32.xlu0 %v2570
    %v2572 = vpop.xlane.xlu0 %2571
    %v2573 = vsel %vm911, %v2547, 0.0
    %2574 = vadd.xlane.f32.xlu0 %v2573
    %v2575 = vpop.xlane.xlu0 %2574
    %v2576 = vsel %vm911, %v2549, 0.0
    %2577 = vadd.xlane.f32.xlu0 %v2576
    %v2578 = vpop.xlane.xlu0 %2577
    %v2579 = vsel %vm911, %v2551, 0.0
    %2580 = vadd.xlane.f32.xlu0 %v2579
    %v2581 = vpop.xlane.xlu0 %2580
    %v2582 = vsel %vm911, %v2553, 0.0
    %2583 = vadd.xlane.f32.xlu0 %v2582
    %v2584 = vpop.xlane.xlu0 %2583
    %v2585 = vsel %vm911, %v2555, 0.0
    %2586 = vadd.xlane.f32.xlu0 %v2585
    %v2587 = vpop.xlane.xlu0 %2586
    %v2588 = vsel %vm911, %v2557, 0.0
    %2589 = vadd.xlane.f32.xlu0 %v2588
    %v2590 = vpop.xlane.xlu0 %2589
    %v2591 = vsel %vm911, %v2559, 0.0
    %2592 = vadd.xlane.f32.xlu0 %v2591
    %v2593 = vpop.xlane.xlu0 %2592
    %v2594 = vsel %vm911, %v2561, 0.0
    %2595 = vadd.xlane.f32.xlu0 %v2594
    %v2596 = vpop.xlane.xlu0 %2595
    %v2597 = vsel %vm911, %v2563, 0.0
    %2598 = vadd.xlane.f32.xlu0 %v2597
    %v2599 = vpop.xlane.xlu0 %2598
    %v2600 = vrcp.pop %v2566
    %v2601 = vrcp.pop %v2569
    %v2602 = vrcp.pop %v2572
    %v2603 = vrcp.pop %v2575
    %v2604 = vrcp.pop %v2578
    %v2605 = vrcp.pop %v2581
    %v2606 = vrcp.pop %v2584
    %v2607 = vrcp.pop %v2587
    %v2608 = vrcp.pop %v2590
    %v2609 = vrcp.pop %v2593
    %v2610 = vrcp.pop %v2596
    %v2611 = vrcp.pop %v2599
    %v2612 = vmul.f32 %v2541, %v2600
    %v2613 = vmul.f32 %v2543, %v2601
    %v2614 = vmul.f32 %v2545, %v2602
    %v2615 = vmul.f32 %v2547, %v2603
    %v2616 = vmul.f32 %v2549, %v2604
    %v2617 = vmul.f32 %v2551, %v2605
    %v2618 = vmul.f32 %v2553, %v2606
    %v2619 = vmul.f32 %v2555, %v2607
    %v2620 = vmul.f32 %v2557, %v2608
    %v2621 = vmul.f32 %v2559, %v2609
    %v2622 = vmul.f32 %v2561, %v2610
    %v2623 = vmul.f32 %v2563, %v2611
    %v2625 = vsel %vm911, %v2612, 0
    %v2628 = vsel %vm911, %v2613, 0
    %2630 = vmatprep.subr.mxu0 0.0
    %2631 = vmatpush1.msra.mxu0 %v1988
    %2632 = vmatprep.subr.mxu0 0.0
    %2633 = vmatpush1.msra.mxu0 %v1989
    %2634 = vmatprep.subr.mxu0 0.0
    %2635 = vmatpush1.msra.mxu0 0.0
    %2636 = vmatprep.subr.mxu0 0.0
    %2637 = vmatpush1.msra.mxu0 0.0
    %2638 = vmatprep.subr.mxu0 0.0
    %2639 = vmatpush1.msra.mxu0 0.0
    %2640 = vmatprep.subr.mxu0 0.0
    %2641 = vmatpush1.msra.mxu0 0.0
    %2642 = vmatprep.subr.mxu0 0.0
    %2643 = vmatpush1.msra.mxu0 0.0
    %2644 = vmatprep.subr.mxu0 0.0
    %2645 = vmatpush1.msra.mxu0 0.0
    %2646 = vmatprep.subr.mxu0 0.0
    %2647 = vmatpush1.msra.mxu0 0.0
    %2648 = vmatprep.subr.mxu0 0.0
    %2649 = vmatpush1.msra.mxu0 0.0
    %2650 = vmatprep.subr.mxu0 0.0
    %2651 = vmatpush1.msra.mxu0 0.0
    %2652 = vmatprep.subr.mxu0 0.0
    %2653 = vmatpush1.msra.mxu0 0.0
    %2654 = vmatprep.subr.mxu0 0.0
    %2655 = vmatpush1.msra.mxu0 0.0
    %2656 = vmatprep.subr.mxu0 0.0
    %2657 = vmatpush1.msra.mxu0 0.0
    %2658 = vmatprep.subr.mxu0 0.0
    %2659 = vmatpush1.msra.mxu0 0.0
    %2660 = vmatprep.subr.mxu0 0.0
    %2661 = vmatpush1.msra.mxu0 0.0
    %2662 = vmatprep.subr.mxu0 0.0
    %2663 = vmatpush1.msra.mxu0 0.0
    %2664 = vmatprep.subr.mxu0 0.0
    %2665 = vmatpush1.msra.mxu0 0.0
    %2666 = vmatprep.subr.mxu0 0.0
    %2667 = vmatpush1.msra.mxu0 0.0
    %2668 = vmatprep.subr.mxu0 0.0
    %2669 = vmatpush1.msra.mxu0 0.0
    %2670 = vmatprep.subr.mxu0 0.0
    %2671 = vmatpush1.msra.mxu0 0.0
    %2672 = vmatprep.subr.mxu0 0.0
    %2673 = vmatpush1.msra.mxu0 0.0
    %2674 = vmatprep.subr.mxu0 0.0
    %2675 = vmatpush1.msra.mxu0 0.0
    %2676 = vmatprep.subr.mxu0 0.0
    %2677 = vmatpush1.msra.mxu0 0.0
    %2678 = vmatprep.subr.mxu0 0.0
    %2679 = vmatpush1.msra.mxu0 0.0
    %2680 = vmatprep.subr.mxu0 0.0
    %2681 = vmatpush1.msra.mxu0 0.0
    %2682 = vmatprep.subr.mxu0 0.0
    %2683 = vmatpush1.msra.mxu0 0.0
    %2684 = vmatprep.subr.mxu0 0.0
    %2685 = vmatpush1.msra.mxu0 0.0
    %2686 = vmatprep.subr.mxu0 0.0
    %2687 = vmatpush1.msra.mxu0 0.0
    %2688 = vmatprep.subr.mxu0 0.0
    %2689 = vmatpush1.msra.mxu0 0.0
    %2690 = vmatprep.subr.mxu0 0.0
    %2691 = vmatpush1.msra.mxu0 0.0
    %2692 = vmatprep.subr.mxu0 0.0
    %2693 = vmatpush1.msra.mxu0 0.0
    %2694 = vmatprep.mubr.f32.mxu0 0.0
    %2695 = vmatmul.mubr.f32.gmra.mrb[0].mxu0 %v2625
    %v2696 = vpop.f32.mrb[0].mxu0
    %v2697 = vadd.f32 0.0, %v2696
    %v2698 = vpop.f32.mrb[0].mxu0
    %2699 = vmatprep.mubr.f32.mxu0 0.0
    %2700 = vmatmul.mubr.f32.gmra.mrb[0].mxu0 %v2628
    %v2701 = vpop.f32.mrb[0].mxu0
    %v2702 = vadd.f32 0.0, %v2701
    %v2703 = vpop.f32.mrb[0].mxu0
    %2704 = vdwg.mxu0
    %v2706 = vsel %vm911, %v2614, 0
    %v2709 = vsel %vm911, %v2615, 0
    %2711 = vmatprep.subr.mxu0 0.0
    %2712 = vmatpush1.msra.mxu0 %v1990
    %2713 = vmatprep.subr.mxu0 0.0
    %2714 = vmatpush1.msra.mxu0 %v1991
    %2715 = vmatprep.subr.mxu0 0.0
    %2716 = vmatpush1.msra.mxu0 0.0
    %2717 = vmatprep.subr.mxu0 0.0
    %2718 = vmatpush1.msra.mxu0 0.0
    %2719 = vmatprep.subr.mxu0 0.0
    %2720 = vmatpush1.msra.mxu0 0.0
    %2721 = vmatprep.subr.mxu0 0.0
    %2722 = vmatpush1.msra.mxu0 0.0
    %2723 = vmatprep.subr.mxu0 0.0
    %2724 = vmatpush1.msra.mxu0 0.0
    %2725 = vmatprep.subr.mxu0 0.0
    %2726 = vmatpush1.msra.mxu0 0.0
    %2727 = vmatprep.subr.mxu0 0.0
    %2728 = vmatpush1.msra.mxu0 0.0
    %2729 = vmatprep.subr.mxu0 0.0
    %2730 = vmatpush1.msra.mxu0 0.0
    %2731 = vmatprep.subr.mxu0 0.0
    %2732 = vmatpush1.msra.mxu0 0.0
    %2733 = vmatprep.subr.mxu0 0.0
    %2734 = vmatpush1.msra.mxu0 0.0
    %2735 = vmatprep.subr.mxu0 0.0
    %2736 = vmatpush1.msra.mxu0 0.0
    %2737 = vmatprep.subr.mxu0 0.0
    %2738 = vmatpush1.msra.mxu0 0.0
    %2739 = vmatprep.subr.mxu0 0.0
    %2740 = vmatpush1.msra.mxu0 0.0
    %2741 = vmatprep.subr.mxu0 0.0
    %2742 = vmatpush1.msra.mxu0 0.0
    %2743 = vmatprep.subr.mxu0 0.0
    %2744 = vmatpush1.msra.mxu0 0.0
    %2745 = vmatprep.subr.mxu0 0.0
    %2746 = vmatpush1.msra.mxu0 0.0
    %2747 = vmatprep.subr.mxu0 0.0
    %2748 = vmatpush1.msra.mxu0 0.0
    %2749 = vmatprep.subr.mxu0 0.0
    %2750 = vmatpush1.msra.mxu0 0.0
    %2751 = vmatprep.subr.mxu0 0.0
    %2752 = vmatpush1.msra.mxu0 0.0
    %2753 = vmatprep.subr.mxu0 0.0
    %2754 = vmatpush1.msra.mxu0 0.0
    %2755 = vmatprep.subr.mxu0 0.0
    %2756 = vmatpush1.msra.mxu0 0.0
    %2757 = vmatprep.subr.mxu0 0.0
    %2758 = vmatpush1.msra.mxu0 0.0
    %2759 = vmatprep.subr.mxu0 0.0
    %2760 = vmatpush1.msra.mxu0 0.0
    %2761 = vmatprep.subr.mxu0 0.0
    %2762 = vmatpush1.msra.mxu0 0.0
    %2763 = vmatprep.subr.mxu0 0.0
    %2764 = vmatpush1.msra.mxu0 0.0
    %2765 = vmatprep.subr.mxu0 0.0
    %2766 = vmatpush1.msra.mxu0 0.0
    %2767 = vmatprep.subr.mxu0 0.0
    %2768 = vmatpush1.msra.mxu0 0.0
    %2769 = vmatprep.subr.mxu0 0.0
    %2770 = vmatpush1.msra.mxu0 0.0
    %2771 = vmatprep.subr.mxu0 0.0
    %2772 = vmatpush1.msra.mxu0 0.0
    %2773 = vmatprep.subr.mxu0 0.0
    %2774 = vmatpush1.msra.mxu0 0.0
    %2775 = vmatprep.mubr.f32.mxu0 0.0
    %2776 = vmatmul.mubr.f32.gmra.mrb[0].mxu0 %v2706
    %v2777 = vpop.f32.mrb[0].mxu0
    %v2778 = vadd.f32 0.0, %v2777
    %v2779 = vpop.f32.mrb[0].mxu0
    %2780 = vmatprep.mubr.f32.mxu0 0.0
    %2781 = vmatmul.mubr.f32.gmra.mrb[0].mxu0 %v2709
    %v2782 = vpop.f32.mrb[0].mxu0
    %v2783 = vadd.f32 0.0, %v2782
    %v2784 = vpop.f32.mrb[0].mxu0
    %2785 = vdwg.mxu0
    %v2787 = vsel %vm911, %v2616, 0
    %v2790 = vsel %vm911, %v2617, 0
    %2792 = vmatprep.subr.mxu0 0.0
    %2793 = vmatpush1.msra.mxu0 %v1992
    %2794 = vmatprep.subr.mxu0 0.0
    %2795 = vmatpush1.msra.mxu0 %v1993
    %2796 = vmatprep.subr.mxu0 0.0
    %2797 = vmatpush1.msra.mxu0 0.0
    %2798 = vmatprep.subr.mxu0 0.0
    %2799 = vmatpush1.msra.mxu0 0.0
    %2800 = vmatprep.subr.mxu0 0.0
    %2801 = vmatpush1.msra.mxu0 0.0
    %2802 = vmatprep.subr.mxu0 0.0
    %2803 = vmatpush1.msra.mxu0 0.0
    %2804 = vmatprep.subr.mxu0 0.0
    %2805 = vmatpush1.msra.mxu0 0.0
    %2806 = vmatprep.subr.mxu0 0.0
    %2807 = vmatpush1.msra.mxu0 0.0
    %2808 = vmatprep.subr.mxu0 0.0
    %2809 = vmatpush1.msra.mxu0 0.0
    %2810 = vmatprep.subr.mxu0 0.0
    %2811 = vmatpush1.msra.mxu0 0.0
    %2812 = vmatprep.subr.mxu0 0.0
    %2813 = vmatpush1.msra.mxu0 0.0
    %2814 = vmatprep.subr.mxu0 0.0
    %2815 = vmatpush1.msra.mxu0 0.0
    %2816 = vmatprep.subr.mxu0 0.0
    %2817 = vmatpush1.msra.mxu0 0.0
    %2818 = vmatprep.subr.mxu0 0.0
    %2819 = vmatpush1.msra.mxu0 0.0
    %2820 = vmatprep.subr.mxu0 0.0
    %2821 = vmatpush1.msra.mxu0 0.0
    %2822 = vmatprep.subr.mxu0 0.0
    %2823 = vmatpush1.msra.mxu0 0.0
    %2824 = vmatprep.subr.mxu0 0.0
    %2825 = vmatpush1.msra.mxu0 0.0
    %2826 = vmatprep.subr.mxu0 0.0
    %2827 = vmatpush1.msra.mxu0 0.0
    %2828 = vmatprep.subr.mxu0 0.0
    %2829 = vmatpush1.msra.mxu0 0.0
    %2830 = vmatprep.subr.mxu0 0.0
    %2831 = vmatpush1.msra.mxu0 0.0
    %2832 = vmatprep.subr.mxu0 0.0
    %2833 = vmatpush1.msra.mxu0 0.0
    %2834 = vmatprep.subr.mxu0 0.0
    %2835 = vmatpush1.msra.mxu0 0.0
    %2836 = vmatprep.subr.mxu0 0.0
    %2837 = vmatpush1.msra.mxu0 0.0
    %2838 = vmatprep.subr.mxu0 0.0
    %2839 = vmatpush1.msra.mxu0 0.0
    %2840 = vmatprep.subr.mxu0 0.0
    %2841 = vmatpush1.msra.mxu0 0.0
    %2842 = vmatprep.subr.mxu0 0.0
    %2843 = vmatpush1.msra.mxu0 0.0
    %2844 = vmatprep.subr.mxu0 0.0
    %2845 = vmatpush1.msra.mxu0 0.0
    %2846 = vmatprep.subr.mxu0 0.0
    %2847 = vmatpush1.msra.mxu0 0.0
    %2848 = vmatprep.subr.mxu0 0.0
    %2849 = vmatpush1.msra.mxu0 0.0
    %2850 = vmatprep.subr.mxu0 0.0
    %2851 = vmatpush1.msra.mxu0 0.0
    %2852 = vmatprep.subr.mxu0 0.0
    %2853 = vmatpush1.msra.mxu0 0.0
    %2854 = vmatprep.subr.mxu0 0.0
    %2855 = vmatpush1.msra.mxu0 0.0
    %2856 = vmatprep.mubr.f32.mxu0 0.0
    %2857 = vmatmul.mubr.f32.gmra.mrb[0].mxu0 %v2787
    %v2858 = vpop.f32.mrb[0].mxu0
    %v2859 = vadd.f32 0.0, %v2858
    %v2860 = vpop.f32.mrb[0].mxu0
    %2861 = vmatprep.mubr.f32.mxu0 0.0
    %2862 = vmatmul.mubr.f32.gmra.mrb[0].mxu0 %v2790
    %v2863 = vpop.f32.mrb[0].mxu0
    %v2864 = vadd.f32 0.0, %v2863
    %v2865 = vpop.f32.mrb[0].mxu0
    %2866 = vdwg.mxu0
    %v2868 = vsel %vm911, %v2618, 0
    %v2871 = vsel %vm911, %v2619, 0
    %2873 = vmatprep.subr.mxu0 0.0
    %2874 = vmatpush1.msra.mxu0 %v1994
    %2875 = vmatprep.subr.mxu0 0.0
    %2876 = vmatpush1.msra.mxu0 %v1995
    %2877 = vmatprep.subr.mxu0 0.0
    %2878 = vmatpush1.msra.mxu0 0.0
    %2879 = vmatprep.subr.mxu0 0.0
    %2880 = vmatpush1.msra.mxu0 0.0
    %2881 = vmatprep.subr.mxu0 0.0
    %2882 = vmatpush1.msra.mxu0 0.0
    %2883 = vmatprep.subr.mxu0 0.0
    %2884 = vmatpush1.msra.mxu0 0.0
    %2885 = vmatprep.subr.mxu0 0.0
    %2886 = vmatpush1.msra.mxu0 0.0
    %2887 = vmatprep.subr.mxu0 0.0
    %2888 = vmatpush1.msra.mxu0 0.0
    %2889 = vmatprep.subr.mxu0 0.0
    %2890 = vmatpush1.msra.mxu0 0.0
    %2891 = vmatprep.subr.mxu0 0.0
    %2892 = vmatpush1.msra.mxu0 0.0
    %2893 = vmatprep.subr.mxu0 0.0
    %2894 = vmatpush1.msra.mxu0 0.0
    %2895 = vmatprep.subr.mxu0 0.0
    %2896 = vmatpush1.msra.mxu0 0.0
    %2897 = vmatprep.subr.mxu0 0.0
    %2898 = vmatpush1.msra.mxu0 0.0
    %2899 = vmatprep.subr.mxu0 0.0
    %2900 = vmatpush1.msra.mxu0 0.0
    %2901 = vmatprep.subr.mxu0 0.0
    %2902 = vmatpush1.msra.mxu0 0.0
    %2903 = vmatprep.subr.mxu0 0.0
    %2904 = vmatpush1.msra.mxu0 0.0
    %2905 = vmatprep.subr.mxu0 0.0
    %2906 = vmatpush1.msra.mxu0 0.0
    %2907 = vmatprep.subr.mxu0 0.0
    %2908 = vmatpush1.msra.mxu0 0.0
    %2909 = vmatprep.subr.mxu0 0.0
    %2910 = vmatpush1.msra.mxu0 0.0
    %2911 = vmatprep.subr.mxu0 0.0
    %2912 = vmatpush1.msra.mxu0 0.0
    %2913 = vmatprep.subr.mxu0 0.0
    %2914 = vmatpush1.msra.mxu0 0.0
    %2915 = vmatprep.subr.mxu0 0.0
    %2916 = vmatpush1.msra.mxu0 0.0
    %2917 = vmatprep.subr.mxu0 0.0
    %2918 = vmatpush1.msra.mxu0 0.0
    %2919 = vmatprep.subr.mxu0 0.0
    %2920 = vmatpush1.msra.mxu0 0.0
    %2921 = vmatprep.subr.mxu0 0.0
    %2922 = vmatpush1.msra.mxu0 0.0
    %2923 = vmatprep.subr.mxu0 0.0
    %2924 = vmatpush1.msra.mxu0 0.0
    %2925 = vmatprep.subr.mxu0 0.0
    %2926 = vmatpush1.msra.mxu0 0.0
    %2927 = vmatprep.subr.mxu0 0.0
    %2928 = vmatpush1.msra.mxu0 0.0
    %2929 = vmatprep.subr.mxu0 0.0
    %2930 = vmatpush1.msra.mxu0 0.0
    %2931 = vmatprep.subr.mxu0 0.0
    %2932 = vmatpush1.msra.mxu0 0.0
    %2933 = vmatprep.subr.mxu0 0.0
    %2934 = vmatpush1.msra.mxu0 0.0
    %2935 = vmatprep.subr.mxu0 0.0
    %2936 = vmatpush1.msra.mxu0 0.0
    %2937 = vmatprep.mubr.f32.mxu0 0.0
    %2938 = vmatmul.mubr.f32.gmra.mrb[0].mxu0 %v2868
    %v2939 = vpop.f32.mrb[0].mxu0
    %v2940 = vadd.f32 0.0, %v2939
    %v2941 = vpop.f32.mrb[0].mxu0
    %2942 = vmatprep.mubr.f32.mxu0 0.0
    %2943 = vmatmul.mubr.f32.gmra.mrb[0].mxu0 %v2871
    %v2944 = vpop.f32.mrb[0].mxu0
    %v2945 = vadd.f32 0.0, %v2944
    %v2946 = vpop.f32.mrb[0].mxu0
    %2947 = vdwg.mxu0
    %v2949 = vsel %vm911, %v2620, 0
    %v2952 = vsel %vm911, %v2621, 0
    %2954 = vmatprep.subr.mxu0 0.0
    %2955 = vmatpush1.msra.mxu0 %v1996
    %2956 = vmatprep.subr.mxu0 0.0
    %2957 = vmatpush1.msra.mxu0 %v1997
    %2958 = vmatprep.subr.mxu0 0.0
    %2959 = vmatpush1.msra.mxu0 0.0
    %2960 = vmatprep.subr.mxu0 0.0
    %2961 = vmatpush1.msra.mxu0 0.0
    %2962 = vmatprep.subr.mxu0 0.0
    %2963 = vmatpush1.msra.mxu0 0.0
    %2964 = vmatprep.subr.mxu0 0.0
    %2965 = vmatpush1.msra.mxu0 0.0
    %2966 = vmatprep.subr.mxu0 0.0
    %2967 = vmatpush1.msra.mxu0 0.0
    %2968 = vmatprep.subr.mxu0 0.0
    %2969 = vmatpush1.msra.mxu0 0.0
    %2970 = vmatprep.subr.mxu0 0.0
    %2971 = vmatpush1.msra.mxu0 0.0
    %2972 = vmatprep.subr.mxu0 0.0
    %2973 = vmatpush1.msra.mxu0 0.0
    %2974 = vmatprep.subr.mxu0 0.0
    %2975 = vmatpush1.msra.mxu0 0.0
    %2976 = vmatprep.subr.mxu0 0.0
    %2977 = vmatpush1.msra.mxu0 0.0
    %2978 = vmatprep.subr.mxu0 0.0
    %2979 = vmatpush1.msra.mxu0 0.0
    %2980 = vmatprep.subr.mxu0 0.0
    %2981 = vmatpush1.msra.mxu0 0.0
    %2982 = vmatprep.subr.mxu0 0.0
    %2983 = vmatpush1.msra.mxu0 0.0
    %2984 = vmatprep.subr.mxu0 0.0
    %2985 = vmatpush1.msra.mxu0 0.0
    %2986 = vmatprep.subr.mxu0 0.0
    %2987 = vmatpush1.msra.mxu0 0.0
    %2988 = vmatprep.subr.mxu0 0.0
    %2989 = vmatpush1.msra.mxu0 0.0
    %2990 = vmatprep.subr.mxu0 0.0
    %2991 = vmatpush1.msra.mxu0 0.0
    %2992 = vmatprep.subr.mxu0 0.0
    %2993 = vmatpush1.msra.mxu0 0.0
    %2994 = vmatprep.subr.mxu0 0.0
    %2995 = vmatpush1.msra.mxu0 0.0
    %2996 = vmatprep.subr.mxu0 0.0
    %2997 = vmatpush1.msra.mxu0 0.0
    %2998 = vmatprep.subr.mxu0 0.0
    %2999 = vmatpush1.msra.mxu0 0.0
    %3000 = vmatprep.subr.mxu0 0.0
    %3001 = vmatpush1.msra.mxu0 0.0
    %3002 = vmatprep.subr.mxu0 0.0
    %3003 = vmatpush1.msra.mxu0 0.0
    %3004 = vmatprep.subr.mxu0 0.0
    %3005 = vmatpush1.msra.mxu0 0.0
    %3006 = vmatprep.subr.mxu0 0.0
    %3007 = vmatpush1.msra.mxu0 0.0
    %3008 = vmatprep.subr.mxu0 0.0
    %3009 = vmatpush1.msra.mxu0 0.0
    %3010 = vmatprep.subr.mxu0 0.0
    %3011 = vmatpush1.msra.mxu0 0.0
    %3012 = vmatprep.subr.mxu0 0.0
    %3013 = vmatpush1.msra.mxu0 0.0
    %3014 = vmatprep.subr.mxu0 0.0
    %3015 = vmatpush1.msra.mxu0 0.0
    %3016 = vmatprep.subr.mxu0 0.0
    %3017 = vmatpush1.msra.mxu0 0.0
    %3018 = vmatprep.mubr.f32.mxu0 0.0
    %3019 = vmatmul.mubr.f32.gmra.mrb[0].mxu0 %v2949
    %v3020 = vpop.f32.mrb[0].mxu0
    %v3021 = vadd.f32 0.0, %v3020
    %v3022 = vpop.f32.mrb[0].mxu0
    %3023 = vmatprep.mubr.f32.mxu0 0.0
    %3024 = vmatmul.mubr.f32.gmra.mrb[0].mxu0 %v2952
    %v3025 = vpop.f32.mrb[0].mxu0
    %v3026 = vadd.f32 0.0, %v3025
    %v3027 = vpop.f32.mrb[0].mxu0
    %3028 = vdwg.mxu0
    %v3030 = vsel %vm911, %v2622, 0
    %v3033 = vsel %vm911, %v2623, 0
    %3035 = vmatprep.subr.mxu0 0.0
    %3036 = vmatpush1.msra.mxu0 %v1998
    %3037 = vmatprep.subr.mxu0 0.0
    %3038 = vmatpush1.msra.mxu0 %v1999
    %3039 = vmatprep.subr.mxu0 0.0
    %3040 = vmatpush1.msra.mxu0 0.0
    %3041 = vmatprep.subr.mxu0 0.0
    %3042 = vmatpush1.msra.mxu0 0.0
    %3043 = vmatprep.subr.mxu0 0.0
    %3044 = vmatpush1.msra.mxu0 0.0
    %3045 = vmatprep.subr.mxu0 0.0
    %3046 = vmatpush1.msra.mxu0 0.0
    %3047 = vmatprep.subr.mxu0 0.0
    %3048 = vmatpush1.msra.mxu0 0.0
    %3049 = vmatprep.subr.mxu0 0.0
    %3050 = vmatpush1.msra.mxu0 0.0
    %3051 = vmatprep.subr.mxu0 0.0
    %3052 = vmatpush1.msra.mxu0 0.0
    %3053 = vmatprep.subr.mxu0 0.0
    %3054 = vmatpush1.msra.mxu0 0.0
    %3055 = vmatprep.subr.mxu0 0.0
    %3056 = vmatpush1.msra.mxu0 0.0
    %3057 = vmatprep.subr.mxu0 0.0
    %3058 = vmatpush1.msra.mxu0 0.0
    %3059 = vmatprep.subr.mxu0 0.0
    %3060 = vmatpush1.msra.mxu0 0.0
    %3061 = vmatprep.subr.mxu0 0.0
    %3062 = vmatpush1.msra.mxu0 0.0
    %3063 = vmatprep.subr.mxu0 0.0
    %3064 = vmatpush1.msra.mxu0 0.0
    %3065 = vmatprep.subr.mxu0 0.0
    %3066 = vmatpush1.msra.mxu0 0.0
    %3067 = vmatprep.subr.mxu0 0.0
    %3068 = vmatpush1.msra.mxu0 0.0
    %3069 = vmatprep.subr.mxu0 0.0
    %3070 = vmatpush1.msra.mxu0 0.0
    %3071 = vmatprep.subr.mxu0 0.0
    %3072 = vmatpush1.msra.mxu0 0.0
    %3073 = vmatprep.subr.mxu0 0.0
    %3074 = vmatpush1.msra.mxu0 0.0
    %3075 = vmatprep.subr.mxu0 0.0
    %3076 = vmatpush1.msra.mxu0 0.0
    %3077 = vmatprep.subr.mxu0 0.0
    %3078 = vmatpush1.msra.mxu0 0.0
    %3079 = vmatprep.subr.mxu0 0.0
    %3080 = vmatpush1.msra.mxu0 0.0
    %3081 = vmatprep.subr.mxu0 0.0
    %3082 = vmatpush1.msra.mxu0 0.0
    %3083 = vmatprep.subr.mxu0 0.0
    %3084 = vmatpush1.msra.mxu0 0.0
    %3085 = vmatprep.subr.mxu0 0.0
    %3086 = vmatpush1.msra.mxu0 0.0
    %3087 = vmatprep.subr.mxu0 0.0
    %3088 = vmatpush1.msra.mxu0 0.0
    %3089 = vmatprep.subr.mxu0 0.0
    %3090 = vmatpush1.msra.mxu0 0.0
    %3091 = vmatprep.subr.mxu0 0.0
    %3092 = vmatpush1.msra.mxu0 0.0
    %3093 = vmatprep.subr.mxu0 0.0
    %3094 = vmatpush1.msra.mxu0 0.0
    %3095 = vmatprep.subr.mxu0 0.0
    %3096 = vmatpush1.msra.mxu0 0.0
    %3097 = vmatprep.subr.mxu0 0.0
    %3098 = vmatpush1.msra.mxu0 0.0
    %3099 = vmatprep.mubr.f32.mxu0 0.0
    %3100 = vmatmul.mubr.f32.gmra.mrb[0].mxu0 %v3030
    %v3101 = vpop.f32.mrb[0].mxu0
    %v3102 = vadd.f32 0.0, %v3101
    %v3103 = vpop.f32.mrb[0].mxu0
    %3104 = vmatprep.mubr.f32.mxu0 0.0
    %3105 = vmatmul.mubr.f32.gmra.mrb[0].mxu0 %v3033
    %v3106 = vpop.f32.mrb[0].mxu0
    %v3107 = vadd.f32 0.0, %v3106
    %v3108 = vpop.f32.mrb[0].mxu0
    %3109 = vdwg.mxu0
    %v3110 = vsel %vm157, %v2697, 0.0
    %v3111 = vsel %vm157, %v2778, 0.0
    %v3112 = vadd.f32 %v3110, %v3111
    %v3113 = vsel %vm157, %v2859, 0.0
    %v3114 = vadd.f32 %v3112, %v3113
    %v3115 = vsel %vm157, %v2940, 0.0
    %v3116 = vadd.f32 %v3114, %v3115
    %v3117 = vsel %vm157, %v3021, 0.0
    %v3118 = vadd.f32 %v3116, %v3117
    %v3119 = vsel %vm157, %v3102, 0.0
    %v3120 = vadd.f32 %v3118, %v3119
    %v3121 = vsel %vm157, %v2702, 0.0
    %v3122 = vsel %vm157, %v2783, 0.0
    %v3123 = vadd.f32 %v3121, %v3122
    %v3124 = vsel %vm157, %v2864, 0.0
    %v3125 = vadd.f32 %v3123, %v3124
    %v3126 = vsel %vm157, %v2945, 0.0
    %v3127 = vadd.f32 %v3125, %v3126
    %v3128 = vsel %vm157, %v3026, 0.0
    %v3129 = vadd.f32 %v3127, %v3128
    %v3130 = vsel %vm157, %v3107, 0.0
    %v3131 = vadd.f32 %v3129, %v3130
    %s3132 = scalar_lea.vmem %s7, 64
    %v3133 = vld [vmem:[%s3132] sm:$0xff]
    %v3134 = vld [vmem:[%s3132 + $0x8] sm:$0xff]
    %v3135 = vld [vmem:[%s3132 + $0x10] sm:$0xff]
    %v3136 = vld [vmem:[%s3132 + $0x18] sm:$0xff]
    %v3137 = vld [vmem:[%s3132 + $0x20] sm:$0xff]
    %v3138 = vld [vmem:[%s3132 + $0x28] sm:$0xff]
    %v3139 = vld [vmem:[%s3132 + $0x30] sm:$0xff]
    %v3140 = vld [vmem:[%s3132 + $0x38] sm:$0xff]
    %s3141 = scalar_lea.vmem %s8, 1
    %v3142 = vld [vmem:[%s3141] sm:$0x1]
    %v3144 = vlaneseq
    %v3145 = vshrl.u32 %v3144, 7
    %v3146 = vsub.s32 0, %v3145
    %v3147 = vrot.slane %v3142, %v3146
    %v3150 = vsel %vm157, %v3120, 0
    %v3153 = vsel %vm157, %v3131, 0
    %3155 = vmatprep.subr.mxu0 0.0
    %3156 = vmatpush1.msra.mxu0 %v3133
    %3157 = vmatprep.subr.mxu0 0.0
    %3158 = vmatpush1.msra.mxu0 %v3134
    %3159 = vmatprep.subr.mxu0 0.0
    %3160 = vmatpush1.msra.mxu0 %v3135
    %3161 = vmatprep.subr.mxu0 0.0
    %3162 = vmatpush1.msra.mxu0 %v3136
    %3163 = vmatprep.subr.mxu0 0.0
    %3164 = vmatpush1.msra.mxu0 %v3137
    %3165 = vmatprep.subr.mxu0 0.0
    %3166 = vmatpush1.msra.mxu0 %v3138
    %3167 = vmatprep.subr.mxu0 0.0
    %3168 = vmatpush1.msra.mxu0 %v3139
    %3169 = vmatprep.subr.mxu0 0.0
    %3170 = vmatpush1.msra.mxu0 %v3140
    %3171 = vmatprep.subr.mxu0 0.0
    %3172 = vmatpush1.msra.mxu0 0.0
    %3173 = vmatprep.subr.mxu0 0.0
    %3174 = vmatpush1.msra.mxu0 0.0
    %3175 = vmatprep.subr.mxu0 0.0
    %3176 = vmatpush1.msra.mxu0 0.0
    %3177 = vmatprep.subr.mxu0 0.0
    %3178 = vmatpush1.msra.mxu0 0.0
    %3179 = vmatprep.subr.mxu0 0.0
    %3180 = vmatpush1.msra.mxu0 0.0
    %3181 = vmatprep.subr.mxu0 0.0
    %3182 = vmatpush1.msra.mxu0 0.0
    %3183 = vmatprep.subr.mxu0 0.0
    %3184 = vmatpush1.msra.mxu0 0.0
    %3185 = vmatprep.subr.mxu0 0.0
    %3186 = vmatpush1.msra.mxu0 0.0
    %3187 = vmatprep.subr.mxu0 0.0
    %3188 = vmatpush1.msra.mxu0 0.0
    %3189 = vmatprep.subr.mxu0 0.0
    %3190 = vmatpush1.msra.mxu0 0.0
    %3191 = vmatprep.subr.mxu0 0.0
    %3192 = vmatpush1.msra.mxu0 0.0
    %3193 = vmatprep.subr.mxu0 0.0
    %3194 = vmatpush1.msra.mxu0 0.0
    %3195 = vmatprep.subr.mxu0 0.0
    %3196 = vmatpush1.msra.mxu0 0.0
    %3197 = vmatprep.subr.mxu0 0.0
    %3198 = vmatpush1.msra.mxu0 0.0
    %3199 = vmatprep.subr.mxu0 0.0
    %3200 = vmatpush1.msra.mxu0 0.0
    %3201 = vmatprep.subr.mxu0 0.0
    %3202 = vmatpush1.msra.mxu0 0.0
    %3203 = vmatprep.subr.mxu0 0.0
    %3204 = vmatpush1.msra.mxu0 0.0
    %3205 = vmatprep.subr.mxu0 0.0
    %3206 = vmatpush1.msra.mxu0 0.0
    %3207 = vmatprep.subr.mxu0 0.0
    %3208 = vmatpush1.msra.mxu0 0.0
    %3209 = vmatprep.subr.mxu0 0.0
    %3210 = vmatpush1.msra.mxu0 0.0
    %3211 = vmatprep.subr.mxu0 0.0
    %3212 = vmatpush1.msra.mxu0 0.0
    %3213 = vmatprep.subr.mxu0 0.0
    %3214 = vmatpush1.msra.mxu0 0.0
    %3215 = vmatprep.subr.mxu0 0.0
    %3216 = vmatpush1.msra.mxu0 0.0
    %3217 = vmatprep.subr.mxu0 0.0
    %3218 = vmatpush1.msra.mxu0 0.0
    %3219 = vmatprep.mubr.f32.mxu0 0.0
    %3220 = vmatmul.mubr.f32.gmra.mrb[0].mxu0 %v3150
    %v3221 = vpop.f32.mrb[0].mxu0
    %v3222 = vadd.f32 %v3147, %v3221
    %v3223 = vpop.f32.mrb[0].mxu0
    %3224 = vmatprep.mubr.f32.mxu0 0.0
    %3225 = vmatmul.mubr.f32.gmra.mrb[0].mxu0 %v3153
    %v3226 = vpop.f32.mrb[0].mxu0
    %v3227 = vadd.f32 %v3147, %v3226
    %v3228 = vpop.f32.mrb[0].mxu0
    %3229 = vdwg.mxu0
    %v3230 = vadd.f32 %v1693, %v3222
    %v3231 = vadd.f32 %v1694, %v3227
    %s3232 = scalar_lea.vmem %s10, 1
    %v3233 = vld [vmem:[%s3232] sm:$0x1]
    %s3234 = scalar_lea.vmem %s11, 1
    %v3235 = vld [vmem:[%s3234] sm:$0x1]
    %v3236 = vsel %vm157, %v3230, 0.0
    %3237 = vadd.xlane.f32.xlu0 %v3236
    %v3238 = vpop.xlane.xlu0 %3237
    %v3239 = vsel %vm157, %v3231, 0.0
    %3240 = vadd.xlane.f32.xlu0 %v3239
    %v3241 = vpop.xlane.xlu0 %3240
    %v3242 = vmul.f32 %v3238, %v1658
    %v3243 = vmul.f32 %v3241, %v1658
    %v3244 = vsub.f32 %v3230, %v3242
    %v3245 = vsub.f32 %v3231, %v3243
    %v3246 = vmul.f32 %v3244, %v3244
    %v3247 = vmul.f32 %v3245, %v3245
    %v3248 = vsel %vm157, %v3246, 0.0
    %3249 = vadd.xlane.f32.xlu0 %v3248
    %v3250 = vpop.xlane.xlu0 %3249
    %v3251 = vsel %vm157, %v3247, 0.0
    %3252 = vadd.xlane.f32.xlu0 %v3251
    %v3253 = vpop.xlane.xlu0 %3252
    %v3254 = vmul.f32 %v3250, %v1658
    %v3255 = vmul.f32 %v3253, %v1658
    %v3256 = vadd.f32 %v3254, 1e-05
    %v3257 = vadd.f32 %v3255, 1e-05
    %v3258 = vrsqrt.pop %v3256
    %v3259 = vrsqrt.pop %v3257
    %v3260 = vmul.f32 %v3244, %v3258
    %v3261 = vmul.f32 %v3245, %v3259
    %v3263 = vlaneseq
    %v3264 = vshrl.u32 %v3263, 7
    %v3265 = vsub.s32 0, %v3264
    %v3266 = vrot.slane %v3233, %v3265
    %v3268 = vmul.f32 %v3260, %v3266
    %v3269 = vmul.f32 %v3261, %v3266
    %v3271 = vlaneseq
    %v3272 = vshrl.u32 %v3271, 7
    %v3273 = vsub.s32 0, %v3272
    %v3274 = vrot.slane %v3235, %v3273
    %v3276 = vadd.f32 %v3268, %v3274
    %v3277 = vadd.f32 %v3269, %v3274
    %v3278 = vld [vmem:[%s12] sm:$0xff]
    %v3279 = vld [vmem:[%s12 + $0x8] sm:$0xff]
    %v3280 = vld [vmem:[%s12 + $0x10] sm:$0xff]
    %v3281 = vld [vmem:[%s12 + $0x18] sm:$0xff]
    %v3282 = vld [vmem:[%s12 + $0x20] sm:$0xff]
    %v3283 = vld [vmem:[%s12 + $0x28] sm:$0xff]
    %v3284 = vld [vmem:[%s12 + $0x30] sm:$0xff]
    %v3285 = vld [vmem:[%s12 + $0x38] sm:$0xff]
    %v3286 = vld [vmem:[%s13] sm:$0x1]
    %v3288 = vlaneseq
    %v3289 = vshrl.u32 %v3288, 7
    %v3290 = vsub.s32 0, %v3289
    %v3291 = vrot.slane %v3286, %v3290
    %v3294 = vsel %vm157, %v3276, 0
    %v3297 = vsel %vm157, %v3277, 0
    %3299 = vmatprep.subr.mxu0 0.0
    %3300 = vmatpush1.msra.mxu0 %v3278
    %3301 = vmatprep.subr.mxu0 0.0
    %3302 = vmatpush1.msra.mxu0 %v3279
    %3303 = vmatprep.subr.mxu0 0.0
    %3304 = vmatpush1.msra.mxu0 %v3280
    %3305 = vmatprep.subr.mxu0 0.0
    %3306 = vmatpush1.msra.mxu0 %v3281
    %3307 = vmatprep.subr.mxu0 0.0
    %3308 = vmatpush1.msra.mxu0 %v3282
    %3309 = vmatprep.subr.mxu0 0.0
    %3310 = vmatpush1.msra.mxu0 %v3283
    %3311 = vmatprep.subr.mxu0 0.0
    %3312 = vmatpush1.msra.mxu0 %v3284
    %3313 = vmatprep.subr.mxu0 0.0
    %3314 = vmatpush1.msra.mxu0 %v3285
    %3315 = vmatprep.subr.mxu0 0.0
    %3316 = vmatpush1.msra.mxu0 0.0
    %3317 = vmatprep.subr.mxu0 0.0
    %3318 = vmatpush1.msra.mxu0 0.0
    %3319 = vmatprep.subr.mxu0 0.0
    %3320 = vmatpush1.msra.mxu0 0.0
    %3321 = vmatprep.subr.mxu0 0.0
    %3322 = vmatpush1.msra.mxu0 0.0
    %3323 = vmatprep.subr.mxu0 0.0
    %3324 = vmatpush1.msra.mxu0 0.0
    %3325 = vmatprep.subr.mxu0 0.0
    %3326 = vmatpush1.msra.mxu0 0.0
    %3327 = vmatprep.subr.mxu0 0.0
    %3328 = vmatpush1.msra.mxu0 0.0
    %3329 = vmatprep.subr.mxu0 0.0
    %3330 = vmatpush1.msra.mxu0 0.0
    %3331 = vmatprep.subr.mxu0 0.0
    %3332 = vmatpush1.msra.mxu0 0.0
    %3333 = vmatprep.subr.mxu0 0.0
    %3334 = vmatpush1.msra.mxu0 0.0
    %3335 = vmatprep.subr.mxu0 0.0
    %3336 = vmatpush1.msra.mxu0 0.0
    %3337 = vmatprep.subr.mxu0 0.0
    %3338 = vmatpush1.msra.mxu0 0.0
    %3339 = vmatprep.subr.mxu0 0.0
    %3340 = vmatpush1.msra.mxu0 0.0
    %3341 = vmatprep.subr.mxu0 0.0
    %3342 = vmatpush1.msra.mxu0 0.0
    %3343 = vmatprep.subr.mxu0 0.0
    %3344 = vmatpush1.msra.mxu0 0.0
    %3345 = vmatprep.subr.mxu0 0.0
    %3346 = vmatpush1.msra.mxu0 0.0
    %3347 = vmatprep.subr.mxu0 0.0
    %3348 = vmatpush1.msra.mxu0 0.0
    %3349 = vmatprep.subr.mxu0 0.0
    %3350 = vmatpush1.msra.mxu0 0.0
    %3351 = vmatprep.subr.mxu0 0.0
    %3352 = vmatpush1.msra.mxu0 0.0
    %3353 = vmatprep.subr.mxu0 0.0
    %3354 = vmatpush1.msra.mxu0 0.0
    %3355 = vmatprep.subr.mxu0 0.0
    %3356 = vmatpush1.msra.mxu0 0.0
    %3357 = vmatprep.subr.mxu0 0.0
    %3358 = vmatpush1.msra.mxu0 0.0
    %3359 = vmatprep.subr.mxu0 0.0
    %3360 = vmatpush1.msra.mxu0 0.0
    %3361 = vmatprep.subr.mxu0 0.0
    %3362 = vmatpush1.msra.mxu0 0.0
    %3363 = vmatprep.mubr.f32.mxu0 0.0
    %3364 = vmatmul.mubr.f32.gmra.mrb[0].mxu0 %v3294
    %v3365 = vpop.f32.mrb[0].mxu0
    %v3366 = vadd.f32 %v3291, %v3365
    %v3367 = vpop.f32.mrb[0].mxu0
    %3368 = vmatprep.mubr.f32.mxu0 0.0
    %3369 = vmatmul.mubr.f32.gmra.mrb[0].mxu0 %v3297
    %v3370 = vpop.f32.mrb[0].mxu0
    %v3371 = vadd.f32 %v3291, %v3370
    %v3372 = vpop.f32.mrb[0].mxu0
    %3373 = vdwg.mxu0
    %v3374 = vmul.f32 %v3366, 0.5
    %v3375 = vmul.f32 %v3371, 0.5
    %v3376 = vmul.f32 %v3366, 0.70710677
    %v3377 = vmul.f32 %v3371, 0.70710677
    %vm3378 = vcmp.ge.f32.partialorder %v3376, 0.0
    %vm3379 = vcmp.ge.f32.partialorder %v3377, 0.0
    %v3380 = vsel %vm3378, 1.0, -1.0
    %v3381 = vsel %vm3379, 1.0, -1.0
    %v3382 = vand.u32 2147483647, %v3376
    %v3383 = vand.u32 2147483647, %v3377
    %v3384 = vmul.f32 %v3382, 0.3275911
    %v3385 = vmul.f32 %v3383, 0.3275911
    %v3386 = vadd.f32 %v3384, 1.0
    %v3387 = vadd.f32 %v3385, 1.0
    %v3388 = vrcp.pop %v3386
    %v3389 = vmul.f32 1.0, %v3388
    %v3390 = vrcp.pop %v3387
    %v3391 = vmul.f32 1.0, %v3390
    %v3392 = vmul.f32 %v3389, 1.0614054
    %v3393 = vmul.f32 %v3391, 1.0614054
    %v3394 = vadd.f32 %v3392, -1.4531521
    %v3395 = vadd.f32 %v3393, -1.4531521
    %v3396 = vmul.f32 %v3394, %v3389
    %v3397 = vmul.f32 %v3395, %v3391
    %v3398 = vadd.f32 %v3396, 1.4214138
    %v3399 = vadd.f32 %v3397, 1.4214138
    %v3400 = vmul.f32 %v3398, %v3389
    %v3401 = vmul.f32 %v3399, %v3391
    %v3402 = vadd.f32 %v3400, -0.28449672
    %v3403 = vadd.f32 %v3401, -0.28449672
    %v3404 = vmul.f32 %v3402, %v3389
    %v3405 = vmul.f32 %v3403, %v3391
    %v3406 = vadd.f32 %v3404, 0.2548296
    %v3407 = vadd.f32 %v3405, 0.2548296
    %v3408 = vmul.f32 %v3406, %v3389
    %v3409 = vmul.f32 %v3407, %v3391
    %v3410 = vsub.f32 0.0, %v3382
    %v3411 = vsub.f32 0.0, %v3383
    %v3412 = vmul.f32 %v3410, %v3382
    %v3413 = vmul.f32 %v3411, %v3383
    %v3414 = vmul.f32 %v3412, 1.442695
    %v3415 = vpow.pop %v3414
    %v3416 = vmul.f32 %v3413, 1.442695
    %v3417 = vpow.pop %v3416
    %v3418 = vmul.f32 %v3408, %v3415
    %v3419 = vmul.f32 %v3409, %v3417
    %v3420 = vsub.f32 1.0, %v3418
    %v3421 = vsub.f32 1.0, %v3419
    %v3422 = vmul.f32 %v3380, %v3420
    %v3423 = vmul.f32 %v3381, %v3421
    %v3424 = vadd.f32 %v3422, 1.0
    %v3425 = vadd.f32 %v3423, 1.0
    %v3426 = vmul.f32 %v3374, %v3424
    %v3427 = vmul.f32 %v3375, %v3425
    %v3428 = vld [vmem:[%s14] sm:$0xff]
    %v3429 = vld [vmem:[%s14 + $0x8] sm:$0xff]
    %v3430 = vld [vmem:[%s14 + $0x10] sm:$0xff]
    %v3431 = vld [vmem:[%s14 + $0x18] sm:$0xff]
    %v3432 = vld [vmem:[%s14 + $0x20] sm:$0xff]
    %v3433 = vld [vmem:[%s14 + $0x28] sm:$0xff]
    %v3434 = vld [vmem:[%s14 + $0x30] sm:$0xff]
    %v3435 = vld [vmem:[%s14 + $0x38] sm:$0xff]
    %v3436 = vld [vmem:[%s14 + $0x40] sm:$0xff]
    %v3437 = vld [vmem:[%s14 + $0x48] sm:$0xff]
    %v3438 = vld [vmem:[%s14 + $0x50] sm:$0xff]
    %v3439 = vld [vmem:[%s14 + $0x58] sm:$0xff]
    %v3440 = vld [vmem:[%s14 + $0x60] sm:$0xff]
    %v3441 = vld [vmem:[%s14 + $0x68] sm:$0xff]
    %v3442 = vld [vmem:[%s14 + $0x70] sm:$0xff]
    %v3443 = vld [vmem:[%s14 + $0x78] sm:$0xff]
    %v3444 = vld [vmem:[%s15] sm:$0x1]
    %v3446 = vlaneseq
    %v3447 = vshrl.u32 %v3446, 7
    %v3448 = vsub.s32 0, %v3447
    %v3449 = vrot.slane %v3444, %v3448
    %3451 = vmatprep.subr.mxu0 0.0
    %3452 = vmatpush1.msra.mxu0 %v3428
    %3453 = vmatprep.subr.mxu0 0.0
    %3454 = vmatpush1.msra.mxu0 %v3429
    %3455 = vmatprep.subr.mxu0 0.0
    %3456 = vmatpush1.msra.mxu0 %v3430
    %3457 = vmatprep.subr.mxu0 0.0
    %3458 = vmatpush1.msra.mxu0 %v3431
    %3459 = vmatprep.subr.mxu0 0.0
    %3460 = vmatpush1.msra.mxu0 %v3432
    %3461 = vmatprep.subr.mxu0 0.0
    %3462 = vmatpush1.msra.mxu0 %v3433
    %3463 = vmatprep.subr.mxu0 0.0
    %3464 = vmatpush1.msra.mxu0 %v3434
    %3465 = vmatprep.subr.mxu0 0.0
    %3466 = vmatpush1.msra.mxu0 %v3435
    %3467 = vmatprep.subr.mxu0 0.0
    %3468 = vmatpush1.msra.mxu0 %v3436
    %3469 = vmatprep.subr.mxu0 0.0
    %3470 = vmatpush1.msra.mxu0 %v3437
    %3471 = vmatprep.subr.mxu0 0.0
    %3472 = vmatpush1.msra.mxu0 %v3438
    %3473 = vmatprep.subr.mxu0 0.0
    %3474 = vmatpush1.msra.mxu0 %v3439
    %3475 = vmatprep.subr.mxu0 0.0
    %3476 = vmatpush1.msra.mxu0 %v3440
    %3477 = vmatprep.subr.mxu0 0.0
    %3478 = vmatpush1.msra.mxu0 %v3441
    %3479 = vmatprep.subr.mxu0 0.0
    %3480 = vmatpush1.msra.mxu0 %v3442
    %3481 = vmatprep.subr.mxu0 0.0
    %3482 = vmatpush1.msra.mxu0 %v3443
    %3483 = vmatprep.subr.mxu0 0.0
    %3484 = vmatpush1.msra.mxu0 0.0
    %3485 = vmatprep.subr.mxu0 0.0
    %3486 = vmatpush1.msra.mxu0 0.0
    %3487 = vmatprep.subr.mxu0 0.0
    %3488 = vmatpush1.msra.mxu0 0.0
    %3489 = vmatprep.subr.mxu0 0.0
    %3490 = vmatpush1.msra.mxu0 0.0
    %3491 = vmatprep.subr.mxu0 0.0
    %3492 = vmatpush1.msra.mxu0 0.0
    %3493 = vmatprep.subr.mxu0 0.0
    %3494 = vmatpush1.msra.mxu0 0.0
    %3495 = vmatprep.subr.mxu0 0.0
    %3496 = vmatpush1.msra.mxu0 0.0
    %3497 = vmatprep.subr.mxu0 0.0
    %3498 = vmatpush1.msra.mxu0 0.0
    %3499 = vmatprep.subr.mxu0 0.0
    %3500 = vmatpush1.msra.mxu0 0.0
    %3501 = vmatprep.subr.mxu0 0.0
    %3502 = vmatpush1.msra.mxu0 0.0
    %3503 = vmatprep.subr.mxu0 0.0
    %3504 = vmatpush1.msra.mxu0 0.0
    %3505 = vmatprep.subr.mxu0 0.0
    %3506 = vmatpush1.msra.mxu0 0.0
    %3507 = vmatprep.subr.mxu0 0.0
    %3508 = vmatpush1.msra.mxu0 0.0
    %3509 = vmatprep.subr.mxu0 0.0
    %3510 = vmatpush1.msra.mxu0 0.0
    %3511 = vmatprep.subr.mxu0 0.0
    %3512 = vmatpush1.msra.mxu0 0.0
    %3513 = vmatprep.subr.mxu0 0.0
    %3514 = vmatpush1.msra.mxu0 0.0
    %3515 = vmatprep.mubr.f32.mxu0 0.0
    %3516 = vmatmul.mubr.f32.gmra.mrb[0].mxu0 %v3426
    %v3517 = vpop.f32.mrb[0].mxu0
    %v3518 = vadd.f32 %v3449, %v3517
    %v3519 = vpop.f32.mrb[0].mxu0
    %3520 = vmatprep.mubr.f32.mxu0 0.0
    %3521 = vmatmul.mubr.f32.gmra.mrb[0].mxu0 %v3427
    %v3522 = vpop.f32.mrb[0].mxu0
    %v3523 = vadd.f32 %v3449, %v3522
    %v3524 = vpop.f32.mrb[0].mxu0
    %3525 = vdwg.mxu0
    %v3526 = vadd.f32 %v3518, %v3276
    %v3527 = vadd.f32 %v3523, %v3277
    %v3528 = vld [vmem:[%s16] sm:$0x1]
    %v3529 = vld [vmem:[%s17] sm:$0x1]
    %v3530 = vsel %vm157, %v3526, 0.0
    %3531 = vadd.xlane.f32.xlu0 %v3530
    %v3532 = vpop.xlane.xlu0 %3531
    %v3533 = vsel %vm157, %v3527, 0.0
    %3534 = vadd.xlane.f32.xlu0 %v3533
    %v3535 = vpop.xlane.xlu0 %3534
    %v3536 = vmul.f32 %v3532, %v1658
    %v3537 = vmul.f32 %v3535, %v1658
    %v3538 = vsub.f32 %v3526, %v3536
    %v3539 = vsub.f32 %v3527, %v3537
    %v3540 = vmul.f32 %v3538, %v3538
    %v3541 = vmul.f32 %v3539, %v3539
    %v3542 = vsel %vm157, %v3540, 0.0
    %3543 = vadd.xlane.f32.xlu0 %v3542
    %v3544 = vpop.xlane.xlu0 %3543
    %v3545 = vsel %vm157, %v3541, 0.0
    %3546 = vadd.xlane.f32.xlu0 %v3545
    %v3547 = vpop.xlane.xlu0 %3546
    %v3548 = vmul.f32 %v3544, %v1658
    %v3549 = vmul.f32 %v3547, %v1658
    %v3550 = vadd.f32 %v3548, 1e-05
    %v3551 = vadd.f32 %v3549, 1e-05
    %v3552 = vrsqrt.pop %v3550
    %v3553 = vrsqrt.pop %v3551
    %v3554 = vmul.f32 %v3538, %v3552
    %v3555 = vmul.f32 %v3539, %v3553
    %v3557 = vlaneseq
    %v3558 = vshrl.u32 %v3557, 7
    %v3559 = vsub.s32 0, %v3558
    %v3560 = vrot.slane %v3528, %v3559
    %v3562 = vmul.f32 %v3554, %v3560
    %v3563 = vmul.f32 %v3555, %v3560
    %v3565 = vlaneseq
    %v3566 = vshrl.u32 %v3565, 7
    %v3567 = vsub.s32 0, %v3566
    %v3568 = vrot.slane %v3529, %v3567
    %v3570 = vadd.f32 %v3562, %v3568
    %v3571 = vadd.f32 %v3563, %v3568
    %v3572 = vadd.f32 %v3276, %v3570
    %v3573 = vadd.f32 %v3277, %v3571
    %v3574 = vld [vmem:[%s18] sm:$0x1]
    %v3575 = vld [vmem:[%s19] sm:$0x1]
    %v3576 = vsel %vm157, %v3572, 0.0
    %3577 = vadd.xlane.f32.xlu0 %v3576
    %v3578 = vpop.xlane.xlu0 %3577
    %v3579 = vsel %vm157, %v3573, 0.0
    %3580 = vadd.xlane.f32.xlu0 %v3579
    %v3581 = vpop.xlane.xlu0 %3580
    %v3582 = vmul.f32 %v3578, %v1658
    %v3583 = vmul.f32 %v3581, %v1658
    %v3584 = vsub.f32 %v3572, %v3582
    %v3585 = vsub.f32 %v3573, %v3583
    %v3586 = vmul.f32 %v3584, %v3584
    %v3587 = vmul.f32 %v3585, %v3585
    %v3588 = vsel %vm157, %v3586, 0.0
    %3589 = vadd.xlane.f32.xlu0 %v3588
    %v3590 = vpop.xlane.xlu0 %3589
    %v3591 = vsel %vm157, %v3587, 0.0
    %3592 = vadd.xlane.f32.xlu0 %v3591
    %v3593 = vpop.xlane.xlu0 %3592
    %v3594 = vmul.f32 %v3590, %v1658
    %v3595 = vmul.f32 %v3593, %v1658
    %v3596 = vadd.f32 %v3594, 1e-05
    %v3597 = vadd.f32 %v3595, 1e-05
    %v3598 = vrsqrt.pop %v3596
    %v3599 = vrsqrt.pop %v3597
    %v3600 = vmul.f32 %v3584, %v3598
    %v3601 = vmul.f32 %v3585, %v3599
    %v3603 = vlaneseq
    %v3604 = vshrl.u32 %v3603, 7
    %v3605 = vsub.s32 0, %v3604
    %v3606 = vrot.slane %v3574, %v3605
    %v3608 = vmul.f32 %v3600, %v3606
    %v3609 = vmul.f32 %v3601, %v3606
    %v3611 = vlaneseq
    %v3612 = vshrl.u32 %v3611, 7
    %v3613 = vsub.s32 0, %v3612
    %v3614 = vrot.slane %v3575, %v3613
    %v3616 = vadd.f32 %v3608, %v3614
    %v3617 = vadd.f32 %v3609, %v3614
    %s3618 = scalar_lea.vmem [#allocation2], 384
    %v3619 = vld [vmem:[%s3618] sm:$0xff]
    %v3620 = vld [vmem:[%s3618 + $0x8] sm:$0xff]
    %v3621 = vld [vmem:[%s3618 + $0x10] sm:$0xff]
    %v3622 = vld [vmem:[%s3618 + $0x18] sm:$0xff]
    %v3623 = vld [vmem:[%s3618 + $0x20] sm:$0xff]
    %v3624 = vld [vmem:[%s3618 + $0x28] sm:$0xff]
    %v3625 = vld [vmem:[%s3618 + $0x30] sm:$0xff]
    %v3626 = vld [vmem:[%s3618 + $0x38] sm:$0xff]
    %v3627 = vld [vmem:[%s3618 + $0x40] sm:$0xff]
    %v3628 = vld [vmem:[%s3618 + $0x48] sm:$0xff]
    %v3629 = vld [vmem:[%s3618 + $0x50] sm:$0xff]
    %v3630 = vld [vmem:[%s3618 + $0x58] sm:$0xff]
    %v3631 = vld [vmem:[%s3618 + $0x60] sm:$0xff]
    %v3632 = vld [vmem:[%s3618 + $0x68] sm:$0xff]
    %v3633 = vld [vmem:[%s3618 + $0x70] sm:$0xff]
    %v3634 = vld [vmem:[%s3618 + $0x78] sm:$0xff]
    %v3635 = vld [vmem:[%s3618 + $0x80] sm:$0xff]
    %v3636 = vld [vmem:[%s3618 + $0x88] sm:$0xff]
    %v3637 = vld [vmem:[%s3618 + $0x90] sm:$0xff]
    %v3638 = vld [vmem:[%s3618 + $0x98] sm:$0xff]
    %v3639 = vld [vmem:[%s3618 + $0xa0] sm:$0xff]
    %v3640 = vld [vmem:[%s3618 + $0xa8] sm:$0xff]
    %v3641 = vld [vmem:[%s3618 + $0xb0] sm:$0xff]
    %v3642 = vld [vmem:[%s3618 + $0xb8] sm:$0xff]
    %s3643 = scalar_lea.vmem %s6, 6
    %v3644 = vld [vmem:[%s3643] sm:$0x7]
    %v3646 = vlaneseq
    %v3647 = vshrl.u32 %v3646, 7
    %v3648 = vsub.s32 0, %v3647
    %v3649 = vrot.slane %v3644, %v3648
    %v3650 = vlaneseq
    %v3651 = vshrl.u32 %v3650, 7
    %v3652 = vsub.s32 1, %v3651
    %v3653 = vrot.slane %v3644, %v3652
    %v3654 = vlaneseq
    %v3655 = vshrl.u32 %v3654, 7
    %v3656 = vsub.s32 2, %v3655
    %v3657 = vrot.slane %v3644, %v3656
    %v3662 = vsel %vm157, %v3616, 0
    %v3665 = vsel %vm157, %v3617, 0
    %3667 = vmatprep.subr.mxu0 %v3620
    %3668 = vmatpush1.msra.mxu0 %v3619
    %3669 = vmatprep.subr.mxu0 %v3623
    %3670 = vmatpush1.msra.mxu0 %v3622
    %3671 = vmatprep.subr.mxu0 %v3626
    %3672 = vmatpush1.msra.mxu0 %v3625
    %3673 = vmatprep.subr.mxu0 %v3629
    %3674 = vmatpush1.msra.mxu0 %v3628
    %3675 = vmatprep.subr.mxu0 %v3632
    %3676 = vmatpush1.msra.mxu0 %v3631
    %3677 = vmatprep.subr.mxu0 %v3635
    %3678 = vmatpush1.msra.mxu0 %v3634
    %3679 = vmatprep.subr.mxu0 %v3638
    %3680 = vmatpush1.msra.mxu0 %v3637
    %3681 = vmatprep.subr.mxu0 %v3641
    %3682 = vmatpush1.msra.mxu0 %v3640
    %3683 = vmatprep.subr.mxu0 0.0
    %3684 = vmatpush1.msra.mxu0 0.0
    %3685 = vmatprep.subr.mxu0 0.0
    %3686 = vmatpush1.msra.mxu0 0.0
    %3687 = vmatprep.subr.mxu0 0.0
    %3688 = vmatpush1.msra.mxu0 0.0
    %3689 = vmatprep.subr.mxu0 0.0
    %3690 = vmatpush1.msra.mxu0 0.0
    %3691 = vmatprep.subr.mxu0 0.0
    %3692 = vmatpush1.msra.mxu0 0.0
    %3693 = vmatprep.subr.mxu0 0.0
    %3694 = vmatpush1.msra.mxu0 0.0
    %3695 = vmatprep.subr.mxu0 0.0
    %3696 = vmatpush1.msra.mxu0 0.0
    %3697 = vmatprep.subr.mxu0 0.0
    %3698 = vmatpush1.msra.mxu0 0.0
    %3699 = vmatprep.subr.mxu0 0.0
    %3700 = vmatpush1.msra.mxu0 0.0
    %3701 = vmatprep.subr.mxu0 0.0
    %3702 = vmatpush1.msra.mxu0 0.0
    %3703 = vmatprep.subr.mxu0 0.0
    %3704 = vmatpush1.msra.mxu0 0.0
    %3705 = vmatprep.subr.mxu0 0.0
    %3706 = vmatpush1.msra.mxu0 0.0
    %3707 = vmatprep.subr.mxu0 0.0
    %3708 = vmatpush1.msra.mxu0 0.0
    %3709 = vmatprep.subr.mxu0 0.0
    %3710 = vmatpush1.msra.mxu0 0.0
    %3711 = vmatprep.subr.mxu0 0.0
    %3712 = vmatpush1.msra.mxu0 0.0
    %3713 = vmatprep.subr.mxu0 0.0
    %3714 = vmatpush1.msra.mxu0 0.0
    %3715 = vmatprep.subr.mxu0 0.0
    %3716 = vmatpush1.msra.mxu0 0.0
    %3717 = vmatprep.subr.mxu0 0.0
    %3718 = vmatpush1.msra.mxu0 0.0
    %3719 = vmatprep.subr.mxu0 0.0
    %3720 = vmatpush1.msra.mxu0 0.0
    %3721 = vmatprep.subr.mxu0 0.0
    %3722 = vmatpush1.msra.mxu0 0.0
    %3723 = vmatprep.subr.mxu0 0.0
    %3724 = vmatpush1.msra.mxu0 0.0
    %3725 = vmatprep.subr.mxu0 0.0
    %3726 = vmatpush1.msra.mxu0 0.0
    %3727 = vmatprep.subr.mxu0 0.0
    %3728 = vmatpush1.msra.mxu0 0.0
    %3729 = vmatprep.subr.mxu0 0.0
    %3730 = vmatpush1.msra.mxu0 0.0
    %3731 = vmatprep.mubr.f32.mxu0 0.0
    %3732 = vmatmul.mubr.f32.gmra.mrb[0].mxu0 %v3662
    %v3733 = vpop.f32.mrb[0].mxu0
    %v3734 = vadd.f32 %v3649, %v3733
    %v3735 = vpop.f32.mrb[0].mxu0
    %v3736 = vadd.f32 %v3653, %v3735
    %3737 = vmatprep.mubr.f32.mxu0 0.0
    %3738 = vmatmul.mubr.f32.gmra.mrb[0].mxu0 %v3665
    %v3739 = vpop.f32.mrb[0].mxu0
    %v3740 = vadd.f32 %v3649, %v3739
    %v3741 = vpop.f32.mrb[0].mxu0
    %v3742 = vadd.f32 %v3653, %v3741
    %3743 = vdwg.mxu0
    %3744 = vmatprep.subr.mxu0 0.0
    %3745 = vmatpush1.msra.mxu0 %v3621
    %3746 = vmatprep.subr.mxu0 0.0
    %3747 = vmatpush1.msra.mxu0 %v3624
    %3748 = vmatprep.subr.mxu0 0.0
    %3749 = vmatpush1.msra.mxu0 %v3627
    %3750 = vmatprep.subr.mxu0 0.0
    %3751 = vmatpush1.msra.mxu0 %v3630
    %3752 = vmatprep.subr.mxu0 0.0
    %3753 = vmatpush1.msra.mxu0 %v3633
    %3754 = vmatprep.subr.mxu0 0.0
    %3755 = vmatpush1.msra.mxu0 %v3636
    %3756 = vmatprep.subr.mxu0 0.0
    %3757 = vmatpush1.msra.mxu0 %v3639
    %3758 = vmatprep.subr.mxu0 0.0
    %3759 = vmatpush1.msra.mxu0 %v3642
    %3760 = vmatprep.subr.mxu0 0.0
    %3761 = vmatpush1.msra.mxu0 0.0
    %3762 = vmatprep.subr.mxu0 0.0
    %3763 = vmatpush1.msra.mxu0 0.0
    %3764 = vmatprep.subr.mxu0 0.0
    %3765 = vmatpush1.msra.mxu0 0.0
    %3766 = vmatprep.subr.mxu0 0.0
    %3767 = vmatpush1.msra.mxu0 0.0
    %3768 = vmatprep.subr.mxu0 0.0
    %3769 = vmatpush1.msra.mxu0 0.0
    %3770 = vmatprep.subr.mxu0 0.0
    %3771 = vmatpush1.msra.mxu0 0.0
    %3772 = vmatprep.subr.mxu0 0.0
    %3773 = vmatpush1.msra.mxu0 0.0
    %3774 = vmatprep.subr.mxu0 0.0
    %3775 = vmatpush1.msra.mxu0 0.0
    %3776 = vmatprep.subr.mxu0 0.0
    %3777 = vmatpush1.msra.mxu0 0.0
    %3778 = vmatprep.subr.mxu0 0.0
    %3779 = vmatpush1.msra.mxu0 0.0
    %3780 = vmatprep.subr.mxu0 0.0
    %3781 = vmatpush1.msra.mxu0 0.0
    %3782 = vmatprep.subr.mxu0 0.0
    %3783 = vmatpush1.msra.mxu0 0.0
    %3784 = vmatprep.subr.mxu0 0.0
    %3785 = vmatpush1.msra.mxu0 0.0
    %3786 = vmatprep.subr.mxu0 0.0
    %3787 = vmatpush1.msra.mxu0 0.0
    %3788 = vmatprep.subr.mxu0 0.0
    %3789 = vmatpush1.msra.mxu0 0.0
    %3790 = vmatprep.subr.mxu0 0.0
    %3791 = vmatpush1.msra.mxu0 0.0
    %3792 = vmatprep.subr.mxu0 0.0
    %3793 = vmatpush1.msra.mxu0 0.0
    %3794 = vmatprep.subr.mxu0 0.0
    %3795 = vmatpush1.msra.mxu0 0.0
    %3796 = vmatprep.subr.mxu0 0.0
    %3797 = vmatpush1.msra.mxu0 0.0
    %3798 = vmatprep.subr.mxu0 0.0
    %3799 = vmatpush1.msra.mxu0 0.0
    %3800 = vmatprep.subr.mxu0 0.0
    %3801 = vmatpush1.msra.mxu0 0.0
    %3802 = vmatprep.subr.mxu0 0.0
    %3803 = vmatpush1.msra.mxu0 0.0
    %3804 = vmatprep.subr.mxu0 0.0
    %3805 = vmatpush1.msra.mxu0 0.0
    %3806 = vmatprep.subr.mxu0 0.0
    %3807 = vmatpush1.msra.mxu0 0.0
    %3808 = vmatprep.mubr.f32.mxu0 0.0
    %3809 = vmatmul.mubr.f32.gmra.mrb[0].mxu0 %v3662
    %v3810 = vpop.f32.mrb[0].mxu0
    %v3811 = vadd.f32 %v3657, %v3810
    %v3812 = vpop.f32.mrb[0].mxu0
    %3813 = vmatprep.mubr.f32.mxu0 0.0
    %3814 = vmatmul.mubr.f32.gmra.mrb[0].mxu0 %v3665
    %v3815 = vpop.f32.mrb[0].mxu0
    %v3816 = vadd.f32 %v3657, %v3815
    %v3817 = vpop.f32.mrb[0].mxu0
    %3818 = vdwg.mxu0
    %s3819 = scalar_lea.vmem %s9, 16
    %v3820 = vld [vmem:[%s3819] sm:$0x3f]
    %v3822 = vcombine.high %v3820, %v3820
    %v3824 = vunpack.c.l.s4 1966171168
    %v3825 = vunpack.c.0.s8 %v3824
    %v3826 = vlaneseq
    %v3827 = vshrl.u32 %v3826, 7
    %v3828 = vsub.s32 %v3825, %v3827
    %v3829 = vrot.slane %v3820, %v3828
    %v3831 = vunpack.c.l.s4 1966171168
    %v3832 = vunpack.c.0.s8 %v3831
    %v3833 = vlaneseq
    %v3834 = vshrl.u32 %v3833, 7
    %v3835 = vsub.s32 %v3832, %v3834
    %v3836 = vrot.slane %v3822, %v3835
    %v3837 = vcombine.high %v3829, %v3829
    %v3838 = vcombine.high %v3836, %v3836
    %v3840 = vunpack.c.l.s4 1966171168
    %v3841 = vunpack.c.0.s8 %v3840
    %v3842 = vlaneseq
    %v3843 = vshrl.u32 %v3842, 7
    %v3844 = vsub.s32 %v3841, %v3843
    %v3845 = vrot.slane %v3829, %v3844
    %v3847 = vunpack.c.l.s4 1966171168
    %v3848 = vunpack.c.0.s8 %v3847
    %v3849 = vlaneseq
    %v3850 = vshrl.u32 %v3849, 7
    %v3851 = vsub.s32 %v3848, %v3850
    %v3852 = vrot.slane %v3836, %v3851
    %v3854 = vunpack.c.l.s4 1966171168
    %v3855 = vunpack.c.0.s8 %v3854
    %v3856 = vlaneseq
    %v3857 = vshrl.u32 %v3856, 7
    %v3858 = vsub.s32 %v3855, %v3857
    %v3859 = vrot.slane %v3837, %v3858
    %v3861 = vunpack.c.l.s4 1966171168
    %v3862 = vunpack.c.0.s8 %v3861
    %v3863 = vlaneseq
    %v3864 = vshrl.u32 %v3863, 7
    %v3865 = vsub.s32 %v3862, %v3864
    %v3866 = vrot.slane %v3838, %v3865
    %v3867 = vcombine.high %v3845, %v3845
    %v3868 = vcombine.high %v3859, %v3859
    %v3869 = vlaneseq
    %v3870 = vshrl.u32 %v3869, 7
    %v3871 = vsub.s32 0, %v3870
    %v3872 = vrot.slane %v3845, %v3871
    %v3873 = vlaneseq
    %v3874 = vshrl.u32 %v3873, 7
    %v3875 = vsub.s32 0, %v3874
    %v3876 = vrot.slane %v3859, %v3875
    %v3877 = vlaneseq
    %v3878 = vshrl.u32 %v3877, 7
    %v3879 = vsub.s32 0, %v3878
    %v3880 = vrot.slane %v3867, %v3879
    %v3881 = vlaneseq
    %v3882 = vshrl.u32 %v3881, 7
    %v3883 = vsub.s32 0, %v3882
    %v3884 = vrot.slane %v3868, %v3883
    %v3885 = vlaneseq
    %v3886 = vshrl.u32 %v3885, 7
    %v3887 = vsub.s32 0, %v3886
    %v3888 = vrot.slane %v3852, %v3887
    %v3889 = vlaneseq
    %v3890 = vshrl.u32 %v3889, 7
    %v3891 = vsub.s32 0, %v3890
    %v3892 = vrot.slane %v3866, %v3891
    %v3899 = vmul.f32 %v3734, %v3872
    %v3900 = vmul.f32 %v3740, %v3872
    %v3901 = vmul.f32 %v3734, %v3876
    %v3902 = vmul.f32 %v3740, %v3876
    %v3903 = vmul.f32 %v3734, %v3880
    %v3904 = vmul.f32 %v3740, %v3880
    %v3905 = vmul.f32 %v3734, %v3884
    %v3906 = vmul.f32 %v3740, %v3884
    %v3907 = vmul.f32 %v3734, %v3888
    %v3908 = vmul.f32 %v3740, %v3888
    %v3909 = vmul.f32 %v3734, %v3892
    %v3910 = vmul.f32 %v3740, %v3892
    %v3911 = vmul.f32 %v3811, %v3872
    %v3912 = vmul.f32 %v3816, %v3872
    %v3913 = vmul.f32 %v3811, %v3876
    %v3914 = vmul.f32 %v3816, %v3876
    %v3915 = vmul.f32 %v3811, %v3880
    %v3916 = vmul.f32 %v3816, %v3880
    %v3917 = vmul.f32 %v3811, %v3884
    %v3918 = vmul.f32 %v3816, %v3884
    %v3919 = vmul.f32 %v3811, %v3888
    %v3920 = vmul.f32 %v3816, %v3888
    %v3921 = vmul.f32 %v3811, %v3892
    %v3922 = vmul.f32 %v3816, %v3892
    %v3924 = vsel %vm157, %v3899, 0
    %v3927 = vsel %vm157, %v3900, 0
    %v3930 = vsel %vm157, %v3736, 0
    %v3933 = vsel %vm157, %v3742, 0
    %3935 = vmatprep.subr.mxu0 0.0
    %3936 = vmatpush1.xpose.msra.mxu0 %v3930
    %3937 = vmatprep.subr.mxu0 0.0
    %3938 = vmatpush1.xpose.msra.mxu0 %v3933
    %3939 = vmatprep.subr.mxu0 0.0
    %3940 = vmatpush1.xpose.msra.mxu0 0.0
    %3941 = vmatprep.subr.mxu0 0.0
    %3942 = vmatpush1.xpose.msra.mxu0 0.0
    %3943 = vmatprep.subr.mxu0 0.0
    %3944 = vmatpush1.xpose.msra.mxu0 0.0
    %3945 = vmatprep.subr.mxu0 0.0
    %3946 = vmatpush1.xpose.msra.mxu0 0.0
    %3947 = vmatprep.subr.mxu0 0.0
    %3948 = vmatpush1.xpose.msra.mxu0 0.0
    %3949 = vmatprep.subr.mxu0 0.0
    %3950 = vmatpush1.xpose.msra.mxu0 0.0
    %3951 = vmatprep.subr.mxu0 0.0
    %3952 = vmatpush1.xpose.msra.mxu0 0.0
    %3953 = vmatprep.subr.mxu0 0.0
    %3954 = vmatpush1.xpose.msra.mxu0 0.0
    %3955 = vmatprep.subr.mxu0 0.0
    %3956 = vmatpush1.xpose.msra.mxu0 0.0
    %3957 = vmatprep.subr.mxu0 0.0
    %3958 = vmatpush1.xpose.msra.mxu0 0.0
    %3959 = vmatprep.subr.mxu0 0.0
    %3960 = vmatpush1.xpose.msra.mxu0 0.0
    %3961 = vmatprep.subr.mxu0 0.0
    %3962 = vmatpush1.xpose.msra.mxu0 0.0
    %3963 = vmatprep.subr.mxu0 0.0
    %3964 = vmatpush1.xpose.msra.mxu0 0.0
    %3965 = vmatprep.subr.mxu0 0.0
    %3966 = vmatpush1.xpose.msra.mxu0 0.0
    %3967 = vmatprep.subr.mxu0 0.0
    %3968 = vmatpush1.xpose.msra.mxu0 0.0
    %3969 = vmatprep.subr.mxu0 0.0
    %3970 = vmatpush1.xpose.msra.mxu0 0.0
    %3971 = vmatprep.subr.mxu0 0.0
    %3972 = vmatpush1.xpose.msra.mxu0 0.0
    %3973 = vmatprep.subr.mxu0 0.0
    %3974 = vmatpush1.xpose.msra.mxu0 0.0
    %3975 = vmatprep.subr.mxu0 0.0
    %3976 = vmatpush1.xpose.msra.mxu0 0.0
    %3977 = vmatprep.subr.mxu0 0.0
    %3978 = vmatpush1.xpose.msra.mxu0 0.0
    %3979 = vmatprep.subr.mxu0 0.0
    %3980 = vmatpush1.xpose.msra.mxu0 0.0
    %3981 = vmatprep.subr.mxu0 0.0
    %3982 = vmatpush1.xpose.msra.mxu0 0.0
    %3983 = vmatprep.subr.mxu0 0.0
    %3984 = vmatpush1.xpose.msra.mxu0 0.0
    %3985 = vmatprep.subr.mxu0 0.0
    %3986 = vmatpush1.xpose.msra.mxu0 0.0
    %3987 = vmatprep.subr.mxu0 0.0
    %3988 = vmatpush1.xpose.msra.mxu0 0.0
    %3989 = vmatprep.subr.mxu0 0.0
    %3990 = vmatpush1.xpose.msra.mxu0 0.0
    %3991 = vmatprep.subr.mxu0 0.0
    %3992 = vmatpush1.xpose.msra.mxu0 0.0
    %3993 = vmatprep.subr.mxu0 0.0
    %3994 = vmatpush1.xpose.msra.mxu0 0.0
    %3995 = vmatprep.subr.mxu0 0.0
    %3996 = vmatpush1.xpose.msra.mxu0 0.0
    %3997 = vmatprep.subr.mxu0 0.0
    %3998 = vmatpush1.xpose.msra.mxu0 0.0
    %3999 = vmatprep.mubr.f32.mxu0 0.0
    %4000 = vmatmul.mubr.f32.gmra.mrb[0].mxu0 %v3924
    %v4001 = vpop.f32.mrb[0].mxu0
    %v4002 = vadd.f32 %v114, %v4001
    %v4003 = vpop.f32.mrb[0].mxu0
    %4004 = vmatprep.mubr.f32.mxu0 0.0
    %4005 = vmatmul.mubr.f32.gmra.mrb[0].mxu0 %v3927
    %v4006 = vpop.f32.mrb[0].mxu0
    %v4007 = vadd.f32 %v115, %v4006
    %v4008 = vpop.f32.mrb[0].mxu0
    %4009 = vdwg.mxu0
    %v4011 = vsel %vm157, %v3901, 0
    %v4014 = vsel %vm157, %v3902, 0
    %4016 = vmatprep.subr.mxu0 0.0
    %4017 = vmatpush1.xpose.msra.mxu0 %v3930
    %4018 = vmatprep.subr.mxu0 0.0
    %4019 = vmatpush1.xpose.msra.mxu0 %v3933
    %4020 = vmatprep.subr.mxu0 0.0
    %4021 = vmatpush1.xpose.msra.mxu0 0.0
    %4022 = vmatprep.subr.mxu0 0.0
    %4023 = vmatpush1.xpose.msra.mxu0 0.0
    %4024 = vmatprep.subr.mxu0 0.0
    %4025 = vmatpush1.xpose.msra.mxu0 0.0
    %4026 = vmatprep.subr.mxu0 0.0
    %4027 = vmatpush1.xpose.msra.mxu0 0.0
    %4028 = vmatprep.subr.mxu0 0.0
    %4029 = vmatpush1.xpose.msra.mxu0 0.0
    %4030 = vmatprep.subr.mxu0 0.0
    %4031 = vmatpush1.xpose.msra.mxu0 0.0
    %4032 = vmatprep.subr.mxu0 0.0
    %4033 = vmatpush1.xpose.msra.mxu0 0.0
    %4034 = vmatprep.subr.mxu0 0.0
    %4035 = vmatpush1.xpose.msra.mxu0 0.0
    %4036 = vmatprep.subr.mxu0 0.0
    %4037 = vmatpush1.xpose.msra.mxu0 0.0
    %4038 = vmatprep.subr.mxu0 0.0
    %4039 = vmatpush1.xpose.msra.mxu0 0.0
    %4040 = vmatprep.subr.mxu0 0.0
    %4041 = vmatpush1.xpose.msra.mxu0 0.0
    %4042 = vmatprep.subr.mxu0 0.0
    %4043 = vmatpush1.xpose.msra.mxu0 0.0
    %4044 = vmatprep.subr.mxu0 0.0
    %4045 = vmatpush1.xpose.msra.mxu0 0.0
    %4046 = vmatprep.subr.mxu0 0.0
    %4047 = vmatpush1.xpose.msra.mxu0 0.0
    %4048 = vmatprep.subr.mxu0 0.0
    %4049 = vmatpush1.xpose.msra.mxu0 0.0
    %4050 = vmatprep.subr.mxu0 0.0
    %4051 = vmatpush1.xpose.msra.mxu0 0.0
    %4052 = vmatprep.subr.mxu0 0.0
    %4053 = vmatpush1.xpose.msra.mxu0 0.0
    %4054 = vmatprep.subr.mxu0 0.0
    %4055 = vmatpush1.xpose.msra.mxu0 0.0
    %4056 = vmatprep.subr.mxu0 0.0
    %4057 = vmatpush1.xpose.msra.mxu0 0.0
    %4058 = vmatprep.subr.mxu0 0.0
    %4059 = vmatpush1.xpose.msra.mxu0 0.0
    %4060 = vmatprep.subr.mxu0 0.0
    %4061 = vmatpush1.xpose.msra.mxu0 0.0
    %4062 = vmatprep.subr.mxu0 0.0
    %4063 = vmatpush1.xpose.msra.mxu0 0.0
    %4064 = vmatprep.subr.mxu0 0.0
    %4065 = vmatpush1.xpose.msra.mxu0 0.0
    %4066 = vmatprep.subr.mxu0 0.0
    %4067 = vmatpush1.xpose.msra.mxu0 0.0
    %4068 = vmatprep.subr.mxu0 0.0
    %4069 = vmatpush1.xpose.msra.mxu0 0.0
    %4070 = vmatprep.subr.mxu0 0.0
    %4071 = vmatpush1.xpose.msra.mxu0 0.0
    %4072 = vmatprep.subr.mxu0 0.0
    %4073 = vmatpush1.xpose.msra.mxu0 0.0
    %4074 = vmatprep.subr.mxu0 0.0
    %4075 = vmatpush1.xpose.msra.mxu0 0.0
    %4076 = vmatprep.subr.mxu0 0.0
    %4077 = vmatpush1.xpose.msra.mxu0 0.0
    %4078 = vmatprep.subr.mxu0 0.0
    %4079 = vmatpush1.xpose.msra.mxu0 0.0
    %4080 = vmatprep.mubr.f32.mxu0 0.0
    %4081 = vmatmul.mubr.f32.gmra.mrb[0].mxu0 %v4011
    %v4082 = vpop.f32.mrb[0].mxu0
    %v4083 = vadd.f32 %v114, %v4082
    %v4084 = vpop.f32.mrb[0].mxu0
    %4085 = vmatprep.mubr.f32.mxu0 0.0
    %4086 = vmatmul.mubr.f32.gmra.mrb[0].mxu0 %v4014
    %v4087 = vpop.f32.mrb[0].mxu0
    %v4088 = vadd.f32 %v115, %v4087
    %v4089 = vpop.f32.mrb[0].mxu0
    %4090 = vdwg.mxu0
    %v4092 = vsel %vm157, %v3903, 0
    %v4095 = vsel %vm157, %v3904, 0
    %4097 = vmatprep.subr.mxu0 0.0
    %4098 = vmatpush1.xpose.msra.mxu0 %v3930
    %4099 = vmatprep.subr.mxu0 0.0
    %4100 = vmatpush1.xpose.msra.mxu0 %v3933
    %4101 = vmatprep.subr.mxu0 0.0
    %4102 = vmatpush1.xpose.msra.mxu0 0.0
    %4103 = vmatprep.subr.mxu0 0.0
    %4104 = vmatpush1.xpose.msra.mxu0 0.0
    %4105 = vmatprep.subr.mxu0 0.0
    %4106 = vmatpush1.xpose.msra.mxu0 0.0
    %4107 = vmatprep.subr.mxu0 0.0
    %4108 = vmatpush1.xpose.msra.mxu0 0.0
    %4109 = vmatprep.subr.mxu0 0.0
    %4110 = vmatpush1.xpose.msra.mxu0 0.0
    %4111 = vmatprep.subr.mxu0 0.0
    %4112 = vmatpush1.xpose.msra.mxu0 0.0
    %4113 = vmatprep.subr.mxu0 0.0
    %4114 = vmatpush1.xpose.msra.mxu0 0.0
    %4115 = vmatprep.subr.mxu0 0.0
    %4116 = vmatpush1.xpose.msra.mxu0 0.0
    %4117 = vmatprep.subr.mxu0 0.0
    %4118 = vmatpush1.xpose.msra.mxu0 0.0
    %4119 = vmatprep.subr.mxu0 0.0
    %4120 = vmatpush1.xpose.msra.mxu0 0.0
    %4121 = vmatprep.subr.mxu0 0.0
    %4122 = vmatpush1.xpose.msra.mxu0 0.0
    %4123 = vmatprep.subr.mxu0 0.0
    %4124 = vmatpush1.xpose.msra.mxu0 0.0
    %4125 = vmatprep.subr.mxu0 0.0
    %4126 = vmatpush1.xpose.msra.mxu0 0.0
    %4127 = vmatprep.subr.mxu0 0.0
    %4128 = vmatpush1.xpose.msra.mxu0 0.0
    %4129 = vmatprep.subr.mxu0 0.0
    %4130 = vmatpush1.xpose.msra.mxu0 0.0
    %4131 = vmatprep.subr.mxu0 0.0
    %4132 = vmatpush1.xpose.msra.mxu0 0.0
    %4133 = vmatprep.subr.mxu0 0.0
    %4134 = vmatpush1.xpose.msra.mxu0 0.0
    %4135 = vmatprep.subr.mxu0 0.0
    %4136 = vmatpush1.xpose.msra.mxu0 0.0
    %4137 = vmatprep.subr.mxu0 0.0
    %4138 = vmatpush1.xpose.msra.mxu0 0.0
    %4139 = vmatprep.subr.mxu0 0.0
    %4140 = vmatpush1.xpose.msra.mxu0 0.0
    %4141 = vmatprep.subr.mxu0 0.0
    %4142 = vmatpush1.xpose.msra.mxu0 0.0
    %4143 = vmatprep.subr.mxu0 0.0
    %4144 = vmatpush1.xpose.msra.mxu0 0.0
    %4145 = vmatprep.subr.mxu0 0.0
    %4146 = vmatpush1.xpose.msra.mxu0 0.0
    %4147 = vmatprep.subr.mxu0 0.0
    %4148 = vmatpush1.xpose.msra.mxu0 0.0
    %4149 = vmatprep.subr.mxu0 0.0
    %4150 = vmatpush1.xpose.msra.mxu0 0.0
    %4151 = vmatprep.subr.mxu0 0.0
    %4152 = vmatpush1.xpose.msra.mxu0 0.0
    %4153 = vmatprep.subr.mxu0 0.0
    %4154 = vmatpush1.xpose.msra.mxu0 0.0
    %4155 = vmatprep.subr.mxu0 0.0
    %4156 = vmatpush1.xpose.msra.mxu0 0.0
    %4157 = vmatprep.subr.mxu0 0.0
    %4158 = vmatpush1.xpose.msra.mxu0 0.0
    %4159 = vmatprep.subr.mxu0 0.0
    %4160 = vmatpush1.xpose.msra.mxu0 0.0
    %4161 = vmatprep.mubr.f32.mxu0 0.0
    %4162 = vmatmul.mubr.f32.gmra.mrb[0].mxu0 %v4092
    %v4163 = vpop.f32.mrb[0].mxu0
    %v4164 = vadd.f32 %v114, %v4163
    %v4165 = vpop.f32.mrb[0].mxu0
    %4166 = vmatprep.mubr.f32.mxu0 0.0
    %4167 = vmatmul.mubr.f32.gmra.mrb[0].mxu0 %v4095
    %v4168 = vpop.f32.mrb[0].mxu0
    %v4169 = vadd.f32 %v115, %v4168
    %v4170 = vpop.f32.mrb[0].mxu0
    %4171 = vdwg.mxu0
    %v4173 = vsel %vm157, %v3905, 0
    %v4176 = vsel %vm157, %v3906, 0
    %4178 = vmatprep.subr.mxu0 0.0
    %4179 = vmatpush1.xpose.msra.mxu0 %v3930
    %4180 = vmatprep.subr.mxu0 0.0
    %4181 = vmatpush1.xpose.msra.mxu0 %v3933
    %4182 = vmatprep.subr.mxu0 0.0
    %4183 = vmatpush1.xpose.msra.mxu0 0.0
    %4184 = vmatprep.subr.mxu0 0.0
    %4185 = vmatpush1.xpose.msra.mxu0 0.0
    %4186 = vmatprep.subr.mxu0 0.0
    %4187 = vmatpush1.xpose.msra.mxu0 0.0
    %4188 = vmatprep.subr.mxu0 0.0
    %4189 = vmatpush1.xpose.msra.mxu0 0.0
    %4190 = vmatprep.subr.mxu0 0.0
    %4191 = vmatpush1.xpose.msra.mxu0 0.0
    %4192 = vmatprep.subr.mxu0 0.0
    %4193 = vmatpush1.xpose.msra.mxu0 0.0
    %4194 = vmatprep.subr.mxu0 0.0
    %4195 = vmatpush1.xpose.msra.mxu0 0.0
    %4196 = vmatprep.subr.mxu0 0.0
    %4197 = vmatpush1.xpose.msra.mxu0 0.0
    %4198 = vmatprep.subr.mxu0 0.0
    %4199 = vmatpush1.xpose.msra.mxu0 0.0
    %4200 = vmatprep.subr.mxu0 0.0
    %4201 = vmatpush1.xpose.msra.mxu0 0.0
    %4202 = vmatprep.subr.mxu0 0.0
    %4203 = vmatpush1.xpose.msra.mxu0 0.0
    %4204 = vmatprep.subr.mxu0 0.0
    %4205 = vmatpush1.xpose.msra.mxu0 0.0
    %4206 = vmatprep.subr.mxu0 0.0
    %4207 = vmatpush1.xpose.msra.mxu0 0.0
    %4208 = vmatprep.subr.mxu0 0.0
    %4209 = vmatpush1.xpose.msra.mxu0 0.0
    %4210 = vmatprep.subr.mxu0 0.0
    %4211 = vmatpush1.xpose.msra.mxu0 0.0
    %4212 = vmatprep.subr.mxu0 0.0
    %4213 = vmatpush1.xpose.msra.mxu0 0.0
    %4214 = vmatprep.subr.mxu0 0.0
    %4215 = vmatpush1.xpose.msra.mxu0 0.0
    %4216 = vmatprep.subr.mxu0 0.0
    %4217 = vmatpush1.xpose.msra.mxu0 0.0
    %4218 = vmatprep.subr.mxu0 0.0
    %4219 = vmatpush1.xpose.msra.mxu0 0.0
    %4220 = vmatprep.subr.mxu0 0.0
    %4221 = vmatpush1.xpose.msra.mxu0 0.0
    %4222 = vmatprep.subr.mxu0 0.0
    %4223 = vmatpush1.xpose.msra.mxu0 0.0
    %4224 = vmatprep.subr.mxu0 0.0
    %4225 = vmatpush1.xpose.msra.mxu0 0.0
    %4226 = vmatprep.subr.mxu0 0.0
    %4227 = vmatpush1.xpose.msra.mxu0 0.0
    %4228 = vmatprep.subr.mxu0 0.0
    %4229 = vmatpush1.xpose.msra.mxu0 0.0
    %4230 = vmatprep.subr.mxu0 0.0
    %4231 = vmatpush1.xpose.msra.mxu0 0.0
    %4232 = vmatprep.subr.mxu0 0.0
    %4233 = vmatpush1.xpose.msra.mxu0 0.0
    %4234 = vmatprep.subr.mxu0 0.0
    %4235 = vmatpush1.xpose.msra.mxu0 0.0
    %4236 = vmatprep.subr.mxu0 0.0
    %4237 = vmatpush1.xpose.msra.mxu0 0.0
    %4238 = vmatprep.subr.mxu0 0.0
    %4239 = vmatpush1.xpose.msra.mxu0 0.0
    %4240 = vmatprep.subr.mxu0 0.0
    %4241 = vmatpush1.xpose.msra.mxu0 0.0
    %4242 = vmatprep.mubr.f32.mxu0 0.0
    %4243 = vmatmul.mubr.f32.gmra.mrb[0].mxu0 %v4173
    %v4244 = vpop.f32.mrb[0].mxu0
    %v4245 = vadd.f32 %v114, %v4244
    %v4246 = vpop.f32.mrb[0].mxu0
    %4247 = vmatprep.mubr.f32.mxu0 0.0
    %4248 = vmatmul.mubr.f32.gmra.mrb[0].mxu0 %v4176
    %v4249 = vpop.f32.mrb[0].mxu0
    %v4250 = vadd.f32 %v115, %v4249
    %v4251 = vpop.f32.mrb[0].mxu0
    %4252 = vdwg.mxu0
    %v4254 = vsel %vm157, %v3907, 0
    %v4257 = vsel %vm157, %v3908, 0
    %4259 = vmatprep.subr.mxu0 0.0
    %4260 = vmatpush1.xpose.msra.mxu0 %v3930
    %4261 = vmatprep.subr.mxu0 0.0
    %4262 = vmatpush1.xpose.msra.mxu0 %v3933
    %4263 = vmatprep.subr.mxu0 0.0
    %4264 = vmatpush1.xpose.msra.mxu0 0.0
    %4265 = vmatprep.subr.mxu0 0.0
    %4266 = vmatpush1.xpose.msra.mxu0 0.0
    %4267 = vmatprep.subr.mxu0 0.0
    %4268 = vmatpush1.xpose.msra.mxu0 0.0
    %4269 = vmatprep.subr.mxu0 0.0
    %4270 = vmatpush1.xpose.msra.mxu0 0.0
    %4271 = vmatprep.subr.mxu0 0.0
    %4272 = vmatpush1.xpose.msra.mxu0 0.0
    %4273 = vmatprep.subr.mxu0 0.0
    %4274 = vmatpush1.xpose.msra.mxu0 0.0
    %4275 = vmatprep.subr.mxu0 0.0
    %4276 = vmatpush1.xpose.msra.mxu0 0.0
    %4277 = vmatprep.subr.mxu0 0.0
    %4278 = vmatpush1.xpose.msra.mxu0 0.0
    %4279 = vmatprep.subr.mxu0 0.0
    %4280 = vmatpush1.xpose.msra.mxu0 0.0
    %4281 = vmatprep.subr.mxu0 0.0
    %4282 = vmatpush1.xpose.msra.mxu0 0.0
    %4283 = vmatprep.subr.mxu0 0.0
    %4284 = vmatpush1.xpose.msra.mxu0 0.0
    %4285 = vmatprep.subr.mxu0 0.0
    %4286 = vmatpush1.xpose.msra.mxu0 0.0
    %4287 = vmatprep.subr.mxu0 0.0
    %4288 = vmatpush1.xpose.msra.mxu0 0.0
    %4289 = vmatprep.subr.mxu0 0.0
    %4290 = vmatpush1.xpose.msra.mxu0 0.0
    %4291 = vmatprep.subr.mxu0 0.0
    %4292 = vmatpush1.xpose.msra.mxu0 0.0
    %4293 = vmatprep.subr.mxu0 0.0
    %4294 = vmatpush1.xpose.msra.mxu0 0.0
    %4295 = vmatprep.subr.mxu0 0.0
    %4296 = vmatpush1.xpose.msra.mxu0 0.0
    %4297 = vmatprep.subr.mxu0 0.0
    %4298 = vmatpush1.xpose.msra.mxu0 0.0
    %4299 = vmatprep.subr.mxu0 0.0
    %4300 = vmatpush1.xpose.msra.mxu0 0.0
    %4301 = vmatprep.subr.mxu0 0.0
    %4302 = vmatpush1.xpose.msra.mxu0 0.0
    %4303 = vmatprep.subr.mxu0 0.0
    %4304 = vmatpush1.xpose.msra.mxu0 0.0
    %4305 = vmatprep.subr.mxu0 0.0
    %4306 = vmatpush1.xpose.msra.mxu0 0.0
    %4307 = vmatprep.subr.mxu0 0.0
    %4308 = vmatpush1.xpose.msra.mxu0 0.0
    %4309 = vmatprep.subr.mxu0 0.0
    %4310 = vmatpush1.xpose.msra.mxu0 0.0
    %4311 = vmatprep.subr.mxu0 0.0
    %4312 = vmatpush1.xpose.msra.mxu0 0.0
    %4313 = vmatprep.subr.mxu0 0.0
    %4314 = vmatpush1.xpose.msra.mxu0 0.0
    %4315 = vmatprep.subr.mxu0 0.0
    %4316 = vmatpush1.xpose.msra.mxu0 0.0
    %4317 = vmatprep.subr.mxu0 0.0
    %4318 = vmatpush1.xpose.msra.mxu0 0.0
    %4319 = vmatprep.subr.mxu0 0.0
    %4320 = vmatpush1.xpose.msra.mxu0 0.0
    %4321 = vmatprep.subr.mxu0 0.0
    %4322 = vmatpush1.xpose.msra.mxu0 0.0
    %4323 = vmatprep.mubr.f32.mxu0 0.0
    %4324 = vmatmul.mubr.f32.gmra.mrb[0].mxu0 %v4254
    %v4325 = vpop.f32.mrb[0].mxu0
    %v4326 = vadd.f32 %v114, %v4325
    %v4327 = vpop.f32.mrb[0].mxu0
    %4328 = vmatprep.mubr.f32.mxu0 0.0
    %4329 = vmatmul.mubr.f32.gmra.mrb[0].mxu0 %v4257
    %v4330 = vpop.f32.mrb[0].mxu0
    %v4331 = vadd.f32 %v115, %v4330
    %v4332 = vpop.f32.mrb[0].mxu0
    %4333 = vdwg.mxu0
    %v4335 = vsel %vm157, %v3909, 0
    %v4338 = vsel %vm157, %v3910, 0
    %4340 = vmatprep.subr.mxu0 0.0
    %4341 = vmatpush1.xpose.msra.mxu0 %v3930
    %4342 = vmatprep.subr.mxu0 0.0
    %4343 = vmatpush1.xpose.msra.mxu0 %v3933
    %4344 = vmatprep.subr.mxu0 0.0
    %4345 = vmatpush1.xpose.msra.mxu0 0.0
    %4346 = vmatprep.subr.mxu0 0.0
    %4347 = vmatpush1.xpose.msra.mxu0 0.0
    %4348 = vmatprep.subr.mxu0 0.0
    %4349 = vmatpush1.xpose.msra.mxu0 0.0
    %4350 = vmatprep.subr.mxu0 0.0
    %4351 = vmatpush1.xpose.msra.mxu0 0.0
    %4352 = vmatprep.subr.mxu0 0.0
    %4353 = vmatpush1.xpose.msra.mxu0 0.0
    %4354 = vmatprep.subr.mxu0 0.0
    %4355 = vmatpush1.xpose.msra.mxu0 0.0
    %4356 = vmatprep.subr.mxu0 0.0
    %4357 = vmatpush1.xpose.msra.mxu0 0.0
    %4358 = vmatprep.subr.mxu0 0.0
    %4359 = vmatpush1.xpose.msra.mxu0 0.0
    %4360 = vmatprep.subr.mxu0 0.0
    %4361 = vmatpush1.xpose.msra.mxu0 0.0
    %4362 = vmatprep.subr.mxu0 0.0
    %4363 = vmatpush1.xpose.msra.mxu0 0.0
    %4364 = vmatprep.subr.mxu0 0.0
    %4365 = vmatpush1.xpose.msra.mxu0 0.0
    %4366 = vmatprep.subr.mxu0 0.0
    %4367 = vmatpush1.xpose.msra.mxu0 0.0
    %4368 = vmatprep.subr.mxu0 0.0
    %4369 = vmatpush1.xpose.msra.mxu0 0.0
    %4370 = vmatprep.subr.mxu0 0.0
    %4371 = vmatpush1.xpose.msra.mxu0 0.0
    %4372 = vmatprep.subr.mxu0 0.0
    %4373 = vmatpush1.xpose.msra.mxu0 0.0
    %4374 = vmatprep.subr.mxu0 0.0
    %4375 = vmatpush1.xpose.msra.mxu0 0.0
    %4376 = vmatprep.subr.mxu0 0.0
    %4377 = vmatpush1.xpose.msra.mxu0 0.0
    %4378 = vmatprep.subr.mxu0 0.0
    %4379 = vmatpush1.xpose.msra.mxu0 0.0
    %4380 = vmatprep.subr.mxu0 0.0
    %4381 = vmatpush1.xpose.msra.mxu0 0.0
    %4382 = vmatprep.subr.mxu0 0.0
    %4383 = vmatpush1.xpose.msra.mxu0 0.0
    %4384 = vmatprep.subr.mxu0 0.0
    %4385 = vmatpush1.xpose.msra.mxu0 0.0
    %4386 = vmatprep.subr.mxu0 0.0
    %4387 = vmatpush1.xpose.msra.mxu0 0.0
    %4388 = vmatprep.subr.mxu0 0.0
    %4389 = vmatpush1.xpose.msra.mxu0 0.0
    %4390 = vmatprep.subr.mxu0 0.0
    %4391 = vmatpush1.xpose.msra.mxu0 0.0
    %4392 = vmatprep.subr.mxu0 0.0
    %4393 = vmatpush1.xpose.msra.mxu0 0.0
    %4394 = vmatprep.subr.mxu0 0.0
    %4395 = vmatpush1.xpose.msra.mxu0 0.0
    %4396 = vmatprep.subr.mxu0 0.0
    %4397 = vmatpush1.xpose.msra.mxu0 0.0
    %4398 = vmatprep.subr.mxu0 0.0
    %4399 = vmatpush1.xpose.msra.mxu0 0.0
    %4400 = vmatprep.subr.mxu0 0.0
    %4401 = vmatpush1.xpose.msra.mxu0 0.0
    %4402 = vmatprep.subr.mxu0 0.0
    %4403 = vmatpush1.xpose.msra.mxu0 0.0
    %4404 = vmatprep.mubr.f32.mxu0 0.0
    %4405 = vmatmul.mubr.f32.gmra.mrb[0].mxu0 %v4335
    %v4406 = vpop.f32.mrb[0].mxu0
    %v4407 = vadd.f32 %v114, %v4406
    %v4408 = vpop.f32.mrb[0].mxu0
    %4409 = vmatprep.mubr.f32.mxu0 0.0
    %4410 = vmatmul.mubr.f32.gmra.mrb[0].mxu0 %v4338
    %v4411 = vpop.f32.mrb[0].mxu0
    %v4412 = vadd.f32 %v115, %v4411
    %v4413 = vpop.f32.mrb[0].mxu0
    %4414 = vdwg.mxu0
    %v4415 = vsel %vm911, %v4002, -inf
    %4416 = vmax.xlane.f32.xlu0 %v4415
    %v4417 = vpop.xlane.xlu0 %4416
    %v4418 = vsel %vm911, %v4007, -inf
    %4419 = vmax.xlane.f32.xlu0 %v4418
    %v4420 = vpop.xlane.xlu0 %4419
    %v4421 = vsel %vm911, %v4083, -inf
    %4422 = vmax.xlane.f32.xlu0 %v4421
    %v4423 = vpop.xlane.xlu0 %4422
    %v4424 = vsel %vm911, %v4088, -inf
    %4425 = vmax.xlane.f32.xlu0 %v4424
    %v4426 = vpop.xlane.xlu0 %4425
    %v4427 = vsel %vm911, %v4164, -inf
    %4428 = vmax.xlane.f32.xlu0 %v4427
    %v4429 = vpop.xlane.xlu0 %4428
    %v4430 = vsel %vm911, %v4169, -inf
    %4431 = vmax.xlane.f32.xlu0 %v4430
    %v4432 = vpop.xlane.xlu0 %4431
    %v4433 = vsel %vm911, %v4245, -inf
    %4434 = vmax.xlane.f32.xlu0 %v4433
    %v4435 = vpop.xlane.xlu0 %4434
    %v4436 = vsel %vm911, %v4250, -inf
    %4437 = vmax.xlane.f32.xlu0 %v4436
    %v4438 = vpop.xlane.xlu0 %4437
    %v4439 = vsel %vm911, %v4326, -inf
    %4440 = vmax.xlane.f32.xlu0 %v4439
    %v4441 = vpop.xlane.xlu0 %4440
    %v4442 = vsel %vm911, %v4331, -inf
    %4443 = vmax.xlane.f32.xlu0 %v4442
    %v4444 = vpop.xlane.xlu0 %4443
    %v4445 = vsel %vm911, %v4407, -inf
    %4446 = vmax.xlane.f32.xlu0 %v4445
    %v4447 = vpop.xlane.xlu0 %4446
    %v4448 = vsel %vm911, %v4412, -inf
    %4449 = vmax.xlane.f32.xlu0 %v4448
    %v4450 = vpop.xlane.xlu0 %4449
    %v4451 = vsub.f32 %v4002, %v4417
    %v4452 = vsub.f32 %v4007, %v4420
    %v4453 = vsub.f32 %v4083, %v4423
    %v4454 = vsub.f32 %v4088, %v4426
    %v4455 = vsub.f32 %v4164, %v4429
    %v4456 = vsub.f32 %v4169, %v4432
    %v4457 = vsub.f32 %v4245, %v4435
    %v4458 = vsub.f32 %v4250, %v4438
    %v4459 = vsub.f32 %v4326, %v4441
    %v4460 = vsub.f32 %v4331, %v4444
    %v4461 = vsub.f32 %v4407, %v4447
    %v4462 = vsub.f32 %v4412, %v4450
    %v4463 = vmul.f32 %v4451, 1.442695
    %v4464 = vpow.pop %v4463
    %v4465 = vmul.f32 %v4452, 1.442695
    %v4466 = vpow.pop %v4465
    %v4467 = vmul.f32 %v4453, 1.442695
    %v4468 = vpow.pop %v4467
    %v4469 = vmul.f32 %v4454, 1.442695
    %v4470 = vpow.pop %v4469
    %v4471 = vmul.f32 %v4455, 1.442695
    %v4472 = vpow.pop %v4471
    %v4473 = vmul.f32 %v4456, 1.442695
    %v4474 = vpow.pop %v4473
    %v4475 = vmul.f32 %v4457, 1.442695
    %v4476 = vpow.pop %v4475
    %v4477 = vmul.f32 %v4458, 1.442695
    %v4478 = vpow.pop %v4477
    %v4479 = vmul.f32 %v4459, 1.442695
    %v4480 = vpow.pop %v4479
    %v4481 = vmul.f32 %v4460, 1.442695
    %v4482 = vpow.pop %v4481
    %v4483 = vmul.f32 %v4461, 1.442695
    %v4484 = vpow.pop %v4483
    %v4485 = vmul.f32 %v4462, 1.442695
    %v4486 = vpow.pop %v4485
    %v4487 = vsel %vm911, %v4464, 0.0
    %4488 = vadd.xlane.f32.xlu0 %v4487
    %v4489 = vpop.xlane.xlu0 %4488
    %v4490 = vsel %vm911, %v4466, 0.0
    %4491 = vadd.xlane.f32.xlu0 %v4490
    %v4492 = vpop.xlane.xlu0 %4491
    %v4493 = vsel %vm911, %v4468, 0.0
    %4494 = vadd.xlane.f32.xlu0 %v4493
    %v4495 = vpop.xlane.xlu0 %4494
    %v4496 = vsel %vm911, %v4470, 0.0
    %4497 = vadd.xlane.f32.xlu0 %v4496
    %v4498 = vpop.xlane.xlu0 %4497
    %v4499 = vsel %vm911, %v4472, 0.0
    %4500 = vadd.xlane.f32.xlu0 %v4499
    %v4501 = vpop.xlane.xlu0 %4500
    %v4502 = vsel %vm911, %v4474, 0.0
    %4503 = vadd.xlane.f32.xlu0 %v4502
    %v4504 = vpop.xlane.xlu0 %4503
    %v4505 = vsel %vm911, %v4476, 0.0
    %4506 = vadd.xlane.f32.xlu0 %v4505
    %v4507 = vpop.xlane.xlu0 %4506
    %v4508 = vsel %vm911, %v4478, 0.0
    %4509 = vadd.xlane.f32.xlu0 %v4508
    %v4510 = vpop.xlane.xlu0 %4509
    %v4511 = vsel %vm911, %v4480, 0.0
    %4512 = vadd.xlane.f32.xlu0 %v4511
    %v4513 = vpop.xlane.xlu0 %4512
    %v4514 = vsel %vm911, %v4482, 0.0
    %4515 = vadd.xlane.f32.xlu0 %v4514
    %v4516 = vpop.xlane.xlu0 %4515
    %v4517 = vsel %vm911, %v4484, 0.0
    %4518 = vadd.xlane.f32.xlu0 %v4517
    %v4519 = vpop.xlane.xlu0 %4518
    %v4520 = vsel %vm911, %v4486, 0.0
    %4521 = vadd.xlane.f32.xlu0 %v4520
    %v4522 = vpop.xlane.xlu0 %4521
    %v4523 = vrcp.pop %v4489
    %v4524 = vrcp.pop %v4492
    %v4525 = vrcp.pop %v4495
    %v4526 = vrcp.pop %v4498
    %v4527 = vrcp.pop %v4501
    %v4528 = vrcp.pop %v4504
    %v4529 = vrcp.pop %v4507
    %v4530 = vrcp.pop %v4510
    %v4531 = vrcp.pop %v4513
    %v4532 = vrcp.pop %v4516
    %v4533 = vrcp.pop %v4519
    %v4534 = vrcp.pop %v4522
    %v4535 = vmul.f32 %v4464, %v4523
    %v4536 = vmul.f32 %v4466, %v4524
    %v4537 = vmul.f32 %v4468, %v4525
    %v4538 = vmul.f32 %v4470, %v4526
    %v4539 = vmul.f32 %v4472, %v4527
    %v4540 = vmul.f32 %v4474, %v4528
    %v4541 = vmul.f32 %v4476, %v4529
    %v4542 = vmul.f32 %v4478, %v4530
    %v4543 = vmul.f32 %v4480, %v4531
    %v4544 = vmul.f32 %v4482, %v4532
    %v4545 = vmul.f32 %v4484, %v4533
    %v4546 = vmul.f32 %v4486, %v4534
    %v4548 = vsel %vm911, %v4535, 0
    %v4551 = vsel %vm911, %v4536, 0
    %4553 = vmatprep.subr.mxu0 0.0
    %4554 = vmatpush1.msra.mxu0 %v3911
    %4555 = vmatprep.subr.mxu0 0.0
    %4556 = vmatpush1.msra.mxu0 %v3912
    %4557 = vmatprep.subr.mxu0 0.0
    %4558 = vmatpush1.msra.mxu0 0.0
    %4559 = vmatprep.subr.mxu0 0.0
    %4560 = vmatpush1.msra.mxu0 0.0
    %4561 = vmatprep.subr.mxu0 0.0
    %4562 = vmatpush1.msra.mxu0 0.0
    %4563 = vmatprep.subr.mxu0 0.0
    %4564 = vmatpush1.msra.mxu0 0.0
    %4565 = vmatprep.subr.mxu0 0.0
    %4566 = vmatpush1.msra.mxu0 0.0
    %4567 = vmatprep.subr.mxu0 0.0
    %4568 = vmatpush1.msra.mxu0 0.0
    %4569 = vmatprep.subr.mxu0 0.0
    %4570 = vmatpush1.msra.mxu0 0.0
    %4571 = vmatprep.subr.mxu0 0.0
    %4572 = vmatpush1.msra.mxu0 0.0
    %4573 = vmatprep.subr.mxu0 0.0
    %4574 = vmatpush1.msra.mxu0 0.0
    %4575 = vmatprep.subr.mxu0 0.0
    %4576 = vmatpush1.msra.mxu0 0.0
    %4577 = vmatprep.subr.mxu0 0.0
    %4578 = vmatpush1.msra.mxu0 0.0
    %4579 = vmatprep.subr.mxu0 0.0
    %4580 = vmatpush1.msra.mxu0 0.0
    %4581 = vmatprep.subr.mxu0 0.0
    %4582 = vmatpush1.msra.mxu0 0.0
    %4583 = vmatprep.subr.mxu0 0.0
    %4584 = vmatpush1.msra.mxu0 0.0
    %4585 = vmatprep.subr.mxu0 0.0
    %4586 = vmatpush1.msra.mxu0 0.0
    %4587 = vmatprep.subr.mxu0 0.0
    %4588 = vmatpush1.msra.mxu0 0.0
    %4589 = vmatprep.subr.mxu0 0.0
    %4590 = vmatpush1.msra.mxu0 0.0
    %4591 = vmatprep.subr.mxu0 0.0
    %4592 = vmatpush1.msra.mxu0 0.0
    %4593 = vmatprep.subr.mxu0 0.0
    %4594 = vmatpush1.msra.mxu0 0.0
    %4595 = vmatprep.subr.mxu0 0.0
    %4596 = vmatpush1.msra.mxu0 0.0
    %4597 = vmatprep.subr.mxu0 0.0
    %4598 = vmatpush1.msra.mxu0 0.0
    %4599 = vmatprep.subr.mxu0 0.0
    %4600 = vmatpush1.msra.mxu0 0.0
    %4601 = vmatprep.subr.mxu0 0.0
    %4602 = vmatpush1.msra.mxu0 0.0
    %4603 = vmatprep.subr.mxu0 0.0
    %4604 = vmatpush1.msra.mxu0 0.0
    %4605 = vmatprep.subr.mxu0 0.0
    %4606 = vmatpush1.msra.mxu0 0.0
    %4607 = vmatprep.subr.mxu0 0.0
    %4608 = vmatpush1.msra.mxu0 0.0
    %4609 = vmatprep.subr.mxu0 0.0
    %4610 = vmatpush1.msra.mxu0 0.0
    %4611 = vmatprep.subr.mxu0 0.0
    %4612 = vmatpush1.msra.mxu0 0.0
    %4613 = vmatprep.subr.mxu0 0.0
    %4614 = vmatpush1.msra.mxu0 0.0
    %4615 = vmatprep.subr.mxu0 0.0
    %4616 = vmatpush1.msra.mxu0 0.0
    %4617 = vmatprep.mubr.f32.mxu0 0.0
    %4618 = vmatmul.mubr.f32.gmra.mrb[0].mxu0 %v4548
    %v4619 = vpop.f32.mrb[0].mxu0
    %v4620 = vadd.f32 0.0, %v4619
    %v4621 = vpop.f32.mrb[0].mxu0
    %4622 = vmatprep.mubr.f32.mxu0 0.0
    %4623 = vmatmul.mubr.f32.gmra.mrb[0].mxu0 %v4551
    %v4624 = vpop.f32.mrb[0].mxu0
    %v4625 = vadd.f32 0.0, %v4624
    %v4626 = vpop.f32.mrb[0].mxu0
    %4627 = vdwg.mxu0
    %v4629 = vsel %vm911, %v4537, 0
    %v4632 = vsel %vm911, %v4538, 0
    %4634 = vmatprep.subr.mxu0 0.0
    %4635 = vmatpush1.msra.mxu0 %v3913
    %4636 = vmatprep.subr.mxu0 0.0
    %4637 = vmatpush1.msra.mxu0 %v3914
    %4638 = vmatprep.subr.mxu0 0.0
    %4639 = vmatpush1.msra.mxu0 0.0
    %4640 = vmatprep.subr.mxu0 0.0
    %4641 = vmatpush1.msra.mxu0 0.0
    %4642 = vmatprep.subr.mxu0 0.0
    %4643 = vmatpush1.msra.mxu0 0.0
    %4644 = vmatprep.subr.mxu0 0.0
    %4645 = vmatpush1.msra.mxu0 0.0
    %4646 = vmatprep.subr.mxu0 0.0
    %4647 = vmatpush1.msra.mxu0 0.0
    %4648 = vmatprep.subr.mxu0 0.0
    %4649 = vmatpush1.msra.mxu0 0.0
    %4650 = vmatprep.subr.mxu0 0.0
    %4651 = vmatpush1.msra.mxu0 0.0
    %4652 = vmatprep.subr.mxu0 0.0
    %4653 = vmatpush1.msra.mxu0 0.0
    %4654 = vmatprep.subr.mxu0 0.0
    %4655 = vmatpush1.msra.mxu0 0.0
    %4656 = vmatprep.subr.mxu0 0.0
    %4657 = vmatpush1.msra.mxu0 0.0
    %4658 = vmatprep.subr.mxu0 0.0
    %4659 = vmatpush1.msra.mxu0 0.0
    %4660 = vmatprep.subr.mxu0 0.0
    %4661 = vmatpush1.msra.mxu0 0.0
    %4662 = vmatprep.subr.mxu0 0.0
    %4663 = vmatpush1.msra.mxu0 0.0
    %4664 = vmatprep.subr.mxu0 0.0
    %4665 = vmatpush1.msra.mxu0 0.0
    %4666 = vmatprep.subr.mxu0 0.0
    %4667 = vmatpush1.msra.mxu0 0.0
    %4668 = vmatprep.subr.mxu0 0.0
    %4669 = vmatpush1.msra.mxu0 0.0
    %4670 = vmatprep.subr.mxu0 0.0
    %4671 = vmatpush1.msra.mxu0 0.0
    %4672 = vmatprep.subr.mxu0 0.0
    %4673 = vmatpush1.msra.mxu0 0.0
    %4674 = vmatprep.subr.mxu0 0.0
    %4675 = vmatpush1.msra.mxu0 0.0
    %4676 = vmatprep.subr.mxu0 0.0
    %4677 = vmatpush1.msra.mxu0 0.0
    %4678 = vmatprep.subr.mxu0 0.0
    %4679 = vmatpush1.msra.mxu0 0.0
    %4680 = vmatprep.subr.mxu0 0.0
    %4681 = vmatpush1.msra.mxu0 0.0
    %4682 = vmatprep.subr.mxu0 0.0
    %4683 = vmatpush1.msra.mxu0 0.0
    %4684 = vmatprep.subr.mxu0 0.0
    %4685 = vmatpush1.msra.mxu0 0.0
    %4686 = vmatprep.subr.mxu0 0.0
    %4687 = vmatpush1.msra.mxu0 0.0
    %4688 = vmatprep.subr.mxu0 0.0
    %4689 = vmatpush1.msra.mxu0 0.0
    %4690 = vmatprep.subr.mxu0 0.0
    %4691 = vmatpush1.msra.mxu0 0.0
    %4692 = vmatprep.subr.mxu0 0.0
    %4693 = vmatpush1.msra.mxu0 0.0
    %4694 = vmatprep.subr.mxu0 0.0
    %4695 = vmatpush1.msra.mxu0 0.0
    %4696 = vmatprep.subr.mxu0 0.0
    %4697 = vmatpush1.msra.mxu0 0.0
    %4698 = vmatprep.mubr.f32.mxu0 0.0
    %4699 = vmatmul.mubr.f32.gmra.mrb[0].mxu0 %v4629
    %v4700 = vpop.f32.mrb[0].mxu0
    %v4701 = vadd.f32 0.0, %v4700
    %v4702 = vpop.f32.mrb[0].mxu0
    %4703 = vmatprep.mubr.f32.mxu0 0.0
    %4704 = vmatmul.mubr.f32.gmra.mrb[0].mxu0 %v4632
    %v4705 = vpop.f32.mrb[0].mxu0
    %v4706 = vadd.f32 0.0, %v4705
    %v4707 = vpop.f32.mrb[0].mxu0
    %4708 = vdwg.mxu0
    %v4710 = vsel %vm911, %v4539, 0
    %v4713 = vsel %vm911, %v4540, 0
    %4715 = vmatprep.subr.mxu0 0.0
    %4716 = vmatpush1.msra.mxu0 %v3915
    %4717 = vmatprep.subr.mxu0 0.0
    %4718 = vmatpush1.msra.mxu0 %v3916
    %4719 = vmatprep.subr.mxu0 0.0
    %4720 = vmatpush1.msra.mxu0 0.0
    %4721 = vmatprep.subr.mxu0 0.0
    %4722 = vmatpush1.msra.mxu0 0.0
    %4723 = vmatprep.subr.mxu0 0.0
    %4724 = vmatpush1.msra.mxu0 0.0
    %4725 = vmatprep.subr.mxu0 0.0
    %4726 = vmatpush1.msra.mxu0 0.0
    %4727 = vmatprep.subr.mxu0 0.0
    %4728 = vmatpush1.msra.mxu0 0.0
    %4729 = vmatprep.subr.mxu0 0.0
    %4730 = vmatpush1.msra.mxu0 0.0
    %4731 = vmatprep.subr.mxu0 0.0
    %4732 = vmatpush1.msra.mxu0 0.0
    %4733 = vmatprep.subr.mxu0 0.0
    %4734 = vmatpush1.msra.mxu0 0.0
    %4735 = vmatprep.subr.mxu0 0.0
    %4736 = vmatpush1.msra.mxu0 0.0
    %4737 = vmatprep.subr.mxu0 0.0
    %4738 = vmatpush1.msra.mxu0 0.0
    %4739 = vmatprep.subr.mxu0 0.0
    %4740 = vmatpush1.msra.mxu0 0.0
    %4741 = vmatprep.subr.mxu0 0.0
    %4742 = vmatpush1.msra.mxu0 0.0
    %4743 = vmatprep.subr.mxu0 0.0
    %4744 = vmatpush1.msra.mxu0 0.0
    %4745 = vmatprep.subr.mxu0 0.0
    %4746 = vmatpush1.msra.mxu0 0.0
    %4747 = vmatprep.subr.mxu0 0.0
    %4748 = vmatpush1.msra.mxu0 0.0
    %4749 = vmatprep.subr.mxu0 0.0
    %4750 = vmatpush1.msra.mxu0 0.0
    %4751 = vmatprep.subr.mxu0 0.0
    %4752 = vmatpush1.msra.mxu0 0.0
    %4753 = vmatprep.subr.mxu0 0.0
    %4754 = vmatpush1.msra.mxu0 0.0
    %4755 = vmatprep.subr.mxu0 0.0
    %4756 = vmatpush1.msra.mxu0 0.0
    %4757 = vmatprep.subr.mxu0 0.0
    %4758 = vmatpush1.msra.mxu0 0.0
    %4759 = vmatprep.subr.mxu0 0.0
    %4760 = vmatpush1.msra.mxu0 0.0
    %4761 = vmatprep.subr.mxu0 0.0
    %4762 = vmatpush1.msra.mxu0 0.0
    %4763 = vmatprep.subr.mxu0 0.0
    %4764 = vmatpush1.msra.mxu0 0.0
    %4765 = vmatprep.subr.mxu0 0.0
    %4766 = vmatpush1.msra.mxu0 0.0
    %4767 = vmatprep.subr.mxu0 0.0
    %4768 = vmatpush1.msra.mxu0 0.0
    %4769 = vmatprep.subr.mxu0 0.0
    %4770 = vmatpush1.msra.mxu0 0.0
    %4771 = vmatprep.subr.mxu0 0.0
    %4772 = vmatpush1.msra.mxu0 0.0
    %4773 = vmatprep.subr.mxu0 0.0
    %4774 = vmatpush1.msra.mxu0 0.0
    %4775 = vmatprep.subr.mxu0 0.0
    %4776 = vmatpush1.msra.mxu0 0.0
    %4777 = vmatprep.subr.mxu0 0.0
    %4778 = vmatpush1.msra.mxu0 0.0
    %4779 = vmatprep.mubr.f32.mxu0 0.0
    %4780 = vmatmul.mubr.f32.gmra.mrb[0].mxu0 %v4710
    %v4781 = vpop.f32.mrb[0].mxu0
    %v4782 = vadd.f32 0.0, %v4781
    %v4783 = vpop.f32.mrb[0].mxu0
    %4784 = vmatprep.mubr.f32.mxu0 0.0
    %4785 = vmatmul.mubr.f32.gmra.mrb[0].mxu0 %v4713
    %v4786 = vpop.f32.mrb[0].mxu0
    %v4787 = vadd.f32 0.0, %v4786
    %v4788 = vpop.f32.mrb[0].mxu0
    %4789 = vdwg.mxu0
    %v4791 = vsel %vm911, %v4541, 0
    %v4794 = vsel %vm911, %v4542, 0
    %4796 = vmatprep.subr.mxu0 0.0
    %4797 = vmatpush1.msra.mxu0 %v3917
    %4798 = vmatprep.subr.mxu0 0.0
    %4799 = vmatpush1.msra.mxu0 %v3918
    %4800 = vmatprep.subr.mxu0 0.0
    %4801 = vmatpush1.msra.mxu0 0.0
    %4802 = vmatprep.subr.mxu0 0.0
    %4803 = vmatpush1.msra.mxu0 0.0
    %4804 = vmatprep.subr.mxu0 0.0
    %4805 = vmatpush1.msra.mxu0 0.0
    %4806 = vmatprep.subr.mxu0 0.0
    %4807 = vmatpush1.msra.mxu0 0.0
    %4808 = vmatprep.subr.mxu0 0.0
    %4809 = vmatpush1.msra.mxu0 0.0
    %4810 = vmatprep.subr.mxu0 0.0
    %4811 = vmatpush1.msra.mxu0 0.0
    %4812 = vmatprep.subr.mxu0 0.0
    %4813 = vmatpush1.msra.mxu0 0.0
    %4814 = vmatprep.subr.mxu0 0.0
    %4815 = vmatpush1.msra.mxu0 0.0
    %4816 = vmatprep.subr.mxu0 0.0
    %4817 = vmatpush1.msra.mxu0 0.0
    %4818 = vmatprep.subr.mxu0 0.0
    %4819 = vmatpush1.msra.mxu0 0.0
    %4820 = vmatprep.subr.mxu0 0.0
    %4821 = vmatpush1.msra.mxu0 0.0
    %4822 = vmatprep.subr.mxu0 0.0
    %4823 = vmatpush1.msra.mxu0 0.0
    %4824 = vmatprep.subr.mxu0 0.0
    %4825 = vmatpush1.msra.mxu0 0.0
    %4826 = vmatprep.subr.mxu0 0.0
    %4827 = vmatpush1.msra.mxu0 0.0
    %4828 = vmatprep.subr.mxu0 0.0
    %4829 = vmatpush1.msra.mxu0 0.0
    %4830 = vmatprep.subr.mxu0 0.0
    %4831 = vmatpush1.msra.mxu0 0.0
    %4832 = vmatprep.subr.mxu0 0.0
    %4833 = vmatpush1.msra.mxu0 0.0
    %4834 = vmatprep.subr.mxu0 0.0
    %4835 = vmatpush1.msra.mxu0 0.0
    %4836 = vmatprep.subr.mxu0 0.0
    %4837 = vmatpush1.msra.mxu0 0.0
    %4838 = vmatprep.subr.mxu0 0.0
    %4839 = vmatpush1.msra.mxu0 0.0
    %4840 = vmatprep.subr.mxu0 0.0
    %4841 = vmatpush1.msra.mxu0 0.0
    %4842 = vmatprep.subr.mxu0 0.0
    %4843 = vmatpush1.msra.mxu0 0.0
    %4844 = vmatprep.subr.mxu0 0.0
    %4845 = vmatpush1.msra.mxu0 0.0
    %4846 = vmatprep.subr.mxu0 0.0
    %4847 = vmatpush1.msra.mxu0 0.0
    %4848 = vmatprep.subr.mxu0 0.0
    %4849 = vmatpush1.msra.mxu0 0.0
    %4850 = vmatprep.subr.mxu0 0.0
    %4851 = vmatpush1.msra.mxu0 0.0
    %4852 = vmatprep.subr.mxu0 0.0
    %4853 = vmatpush1.msra.mxu0 0.0
    %4854 = vmatprep.subr.mxu0 0.0
    %4855 = vmatpush1.msra.mxu0 0.0
    %4856 = vmatprep.subr.mxu0 0.0
    %4857 = vmatpush1.msra.mxu0 0.0
    %4858 = vmatprep.subr.mxu0 0.0
    %4859 = vmatpush1.msra.mxu0 0.0
    %4860 = vmatprep.mubr.f32.mxu0 0.0
    %4861 = vmatmul.mubr.f32.gmra.mrb[0].mxu0 %v4791
    %v4862 = vpop.f32.mrb[0].mxu0
    %v4863 = vadd.f32 0.0, %v4862
    %v4864 = vpop.f32.mrb[0].mxu0
    %4865 = vmatprep.mubr.f32.mxu0 0.0
    %4866 = vmatmul.mubr.f32.gmra.mrb[0].mxu0 %v4794
    %v4867 = vpop.f32.mrb[0].mxu0
    %v4868 = vadd.f32 0.0, %v4867
    %v4869 = vpop.f32.mrb[0].mxu0
    %4870 = vdwg.mxu0
    %v4872 = vsel %vm911, %v4543, 0
    %v4875 = vsel %vm911, %v4544, 0
    %4877 = vmatprep.subr.mxu0 0.0
    %4878 = vmatpush1.msra.mxu0 %v3919
    %4879 = vmatprep.subr.mxu0 0.0
    %4880 = vmatpush1.msra.mxu0 %v3920
    %4881 = vmatprep.subr.mxu0 0.0
    %4882 = vmatpush1.msra.mxu0 0.0
    %4883 = vmatprep.subr.mxu0 0.0
    %4884 = vmatpush1.msra.mxu0 0.0
    %4885 = vmatprep.subr.mxu0 0.0
    %4886 = vmatpush1.msra.mxu0 0.0
    %4887 = vmatprep.subr.mxu0 0.0
    %4888 = vmatpush1.msra.mxu0 0.0
    %4889 = vmatprep.subr.mxu0 0.0
    %4890 = vmatpush1.msra.mxu0 0.0
    %4891 = vmatprep.subr.mxu0 0.0
    %4892 = vmatpush1.msra.mxu0 0.0
    %4893 = vmatprep.subr.mxu0 0.0
    %4894 = vmatpush1.msra.mxu0 0.0
    %4895 = vmatprep.subr.mxu0 0.0
    %4896 = vmatpush1.msra.mxu0 0.0
    %4897 = vmatprep.subr.mxu0 0.0
    %4898 = vmatpush1.msra.mxu0 0.0
    %4899 = vmatprep.subr.mxu0 0.0
    %4900 = vmatpush1.msra.mxu0 0.0
    %4901 = vmatprep.subr.mxu0 0.0
    %4902 = vmatpush1.msra.mxu0 0.0
    %4903 = vmatprep.subr.mxu0 0.0
    %4904 = vmatpush1.msra.mxu0 0.0
    %4905 = vmatprep.subr.mxu0 0.0
    %4906 = vmatpush1.msra.mxu0 0.0
    %4907 = vmatprep.subr.mxu0 0.0
    %4908 = vmatpush1.msra.mxu0 0.0
    %4909 = vmatprep.subr.mxu0 0.0
    %4910 = vmatpush1.msra.mxu0 0.0
    %4911 = vmatprep.subr.mxu0 0.0
    %4912 = vmatpush1.msra.mxu0 0.0
    %4913 = vmatprep.subr.mxu0 0.0
    %4914 = vmatpush1.msra.mxu0 0.0
    %4915 = vmatprep.subr.mxu0 0.0
    %4916 = vmatpush1.msra.mxu0 0.0
    %4917 = vmatprep.subr.mxu0 0.0
    %4918 = vmatpush1.msra.mxu0 0.0
    %4919 = vmatprep.subr.mxu0 0.0
    %4920 = vmatpush1.msra.mxu0 0.0
    %4921 = vmatprep.subr.mxu0 0.0
    %4922 = vmatpush1.msra.mxu0 0.0
    %4923 = vmatprep.subr.mxu0 0.0
    %4924 = vmatpush1.msra.mxu0 0.0
    %4925 = vmatprep.subr.mxu0 0.0
    %4926 = vmatpush1.msra.mxu0 0.0
    %4927 = vmatprep.subr.mxu0 0.0
    %4928 = vmatpush1.msra.mxu0 0.0
    %4929 = vmatprep.subr.mxu0 0.0
    %4930 = vmatpush1.msra.mxu0 0.0
    %4931 = vmatprep.subr.mxu0 0.0
    %4932 = vmatpush1.msra.mxu0 0.0
    %4933 = vmatprep.subr.mxu0 0.0
    %4934 = vmatpush1.msra.mxu0 0.0
    %4935 = vmatprep.subr.mxu0 0.0
    %4936 = vmatpush1.msra.mxu0 0.0
    %4937 = vmatprep.subr.mxu0 0.0
    %4938 = vmatpush1.msra.mxu0 0.0
    %4939 = vmatprep.subr.mxu0 0.0
    %4940 = vmatpush1.msra.mxu0 0.0
    %4941 = vmatprep.mubr.f32.mxu0 0.0
    %4942 = vmatmul.mubr.f32.gmra.mrb[0].mxu0 %v4872
    %v4943 = vpop.f32.mrb[0].mxu0
    %v4944 = vadd.f32 0.0, %v4943
    %v4945 = vpop.f32.mrb[0].mxu0
    %4946 = vmatprep.mubr.f32.mxu0 0.0
    %4947 = vmatmul.mubr.f32.gmra.mrb[0].mxu0 %v4875
    %v4948 = vpop.f32.mrb[0].mxu0
    %v4949 = vadd.f32 0.0, %v4948
    %v4950 = vpop.f32.mrb[0].mxu0
    %4951 = vdwg.mxu0
    %v4953 = vsel %vm911, %v4545, 0
    %v4956 = vsel %vm911, %v4546, 0
    %4958 = vmatprep.subr.mxu0 0.0
    %4959 = vmatpush1.msra.mxu0 %v3921
    %4960 = vmatprep.subr.mxu0 0.0
    %4961 = vmatpush1.msra.mxu0 %v3922
    %4962 = vmatprep.subr.mxu0 0.0
    %4963 = vmatpush1.msra.mxu0 0.0
    %4964 = vmatprep.subr.mxu0 0.0
    %4965 = vmatpush1.msra.mxu0 0.0
    %4966 = vmatprep.subr.mxu0 0.0
    %4967 = vmatpush1.msra.mxu0 0.0
    %4968 = vmatprep.subr.mxu0 0.0
    %4969 = vmatpush1.msra.mxu0 0.0
    %4970 = vmatprep.subr.mxu0 0.0
    %4971 = vmatpush1.msra.mxu0 0.0
    %4972 = vmatprep.subr.mxu0 0.0
    %4973 = vmatpush1.msra.mxu0 0.0
    %4974 = vmatprep.subr.mxu0 0.0
    %4975 = vmatpush1.msra.mxu0 0.0
    %4976 = vmatprep.subr.mxu0 0.0
    %4977 = vmatpush1.msra.mxu0 0.0
    %4978 = vmatprep.subr.mxu0 0.0
    %4979 = vmatpush1.msra.mxu0 0.0
    %4980 = vmatprep.subr.mxu0 0.0
    %4981 = vmatpush1.msra.mxu0 0.0
    %4982 = vmatprep.subr.mxu0 0.0
    %4983 = vmatpush1.msra.mxu0 0.0
    %4984 = vmatprep.subr.mxu0 0.0
    %4985 = vmatpush1.msra.mxu0 0.0
    %4986 = vmatprep.subr.mxu0 0.0
    %4987 = vmatpush1.msra.mxu0 0.0
    %4988 = vmatprep.subr.mxu0 0.0
    %4989 = vmatpush1.msra.mxu0 0.0
    %4990 = vmatprep.subr.mxu0 0.0
    %4991 = vmatpush1.msra.mxu0 0.0
    %4992 = vmatprep.subr.mxu0 0.0
    %4993 = vmatpush1.msra.mxu0 0.0
    %4994 = vmatprep.subr.mxu0 0.0
    %4995 = vmatpush1.msra.mxu0 0.0
    %4996 = vmatprep.subr.mxu0 0.0
    %4997 = vmatpush1.msra.mxu0 0.0
    %4998 = vmatprep.subr.mxu0 0.0
    %4999 = vmatpush1.msra.mxu0 0.0
    %5000 = vmatprep.subr.mxu0 0.0
    %5001 = vmatpush1.msra.mxu0 0.0
    %5002 = vmatprep.subr.mxu0 0.0
    %5003 = vmatpush1.msra.mxu0 0.0
    %5004 = vmatprep.subr.mxu0 0.0
    %5005 = vmatpush1.msra.mxu0 0.0
    %5006 = vmatprep.subr.mxu0 0.0
    %5007 = vmatpush1.msra.mxu0 0.0
    %5008 = vmatprep.subr.mxu0 0.0
    %5009 = vmatpush1.msra.mxu0 0.0
    %5010 = vmatprep.subr.mxu0 0.0
    %5011 = vmatpush1.msra.mxu0 0.0
    %5012 = vmatprep.subr.mxu0 0.0
    %5013 = vmatpush1.msra.mxu0 0.0
    %5014 = vmatprep.subr.mxu0 0.0
    %5015 = vmatpush1.msra.mxu0 0.0
    %5016 = vmatprep.subr.mxu0 0.0
    %5017 = vmatpush1.msra.mxu0 0.0
    %5018 = vmatprep.subr.mxu0 0.0
    %5019 = vmatpush1.msra.mxu0 0.0
    %5020 = vmatprep.subr.mxu0 0.0
    %5021 = vmatpush1.msra.mxu0 0.0
    %5022 = vmatprep.mubr.f32.mxu0 0.0
    %5023 = vmatmul.mubr.f32.gmra.mrb[0].mxu0 %v4953
    %v5024 = vpop.f32.mrb[0].mxu0
    %v5025 = vadd.f32 0.0, %v5024
    %v5026 = vpop.f32.mrb[0].mxu0
    %5027 = vmatprep.mubr.f32.mxu0 0.0
    %5028 = vmatmul.mubr.f32.gmra.mrb[0].mxu0 %v4956
    %v5029 = vpop.f32.mrb[0].mxu0
    %v5030 = vadd.f32 0.0, %v5029
    %v5031 = vpop.f32.mrb[0].mxu0
    %5032 = vdwg.mxu0
    %v5033 = vsel %vm157, %v4620, 0.0
    %v5034 = vsel %vm157, %v4701, 0.0
    %v5035 = vadd.f32 %v5033, %v5034
    %v5036 = vsel %vm157, %v4782, 0.0
    %v5037 = vadd.f32 %v5035, %v5036
    %v5038 = vsel %vm157, %v4863, 0.0
    %v5039 = vadd.f32 %v5037, %v5038
    %v5040 = vsel %vm157, %v4944, 0.0
    %v5041 = vadd.f32 %v5039, %v5040
    %v5042 = vsel %vm157, %v5025, 0.0
    %v5043 = vadd.f32 %v5041, %v5042
    %v5044 = vsel %vm157, %v4625, 0.0
    %v5045 = vsel %vm157, %v4706, 0.0
    %v5046 = vadd.f32 %v5044, %v5045
    %v5047 = vsel %vm157, %v4787, 0.0
    %v5048 = vadd.f32 %v5046, %v5047
    %v5049 = vsel %vm157, %v4868, 0.0
    %v5050 = vadd.f32 %v5048, %v5049
    %v5051 = vsel %vm157, %v4949, 0.0
    %v5052 = vadd.f32 %v5050, %v5051
    %v5053 = vsel %vm157, %v5030, 0.0
    %v5054 = vadd.f32 %v5052, %v5053
    %s5055 = scalar_lea.vmem %s7, 128
    %v5056 = vld [vmem:[%s5055] sm:$0xff]
    %v5057 = vld [vmem:[%s5055 + $0x8] sm:$0xff]
    %v5058 = vld [vmem:[%s5055 + $0x10] sm:$0xff]
    %v5059 = vld [vmem:[%s5055 + $0x18] sm:$0xff]
    %v5060 = vld [vmem:[%s5055 + $0x20] sm:$0xff]
    %v5061 = vld [vmem:[%s5055 + $0x28] sm:$0xff]
    %v5062 = vld [vmem:[%s5055 + $0x30] sm:$0xff]
    %v5063 = vld [vmem:[%s5055 + $0x38] sm:$0xff]
    %s5064 = scalar_lea.vmem %s8, 2
    %v5065 = vld [vmem:[%s5064] sm:$0x1]
    %v5067 = vlaneseq
    %v5068 = vshrl.u32 %v5067, 7
    %v5069 = vsub.s32 0, %v5068
    %v5070 = vrot.slane %v5065, %v5069
    %v5073 = vsel %vm157, %v5043, 0
    %v5076 = vsel %vm157, %v5054, 0
    %5078 = vmatprep.subr.mxu0 0.0
    %5079 = vmatpush1.msra.mxu0 %v5056
    %5080 = vmatprep.subr.mxu0 0.0
    %5081 = vmatpush1.msra.mxu0 %v5057
    %5082 = vmatprep.subr.mxu0 0.0
    %5083 = vmatpush1.msra.mxu0 %v5058
    %5084 = vmatprep.subr.mxu0 0.0
    %5085 = vmatpush1.msra.mxu0 %v5059
    %5086 = vmatprep.subr.mxu0 0.0
    %5087 = vmatpush1.msra.mxu0 %v5060
    %5088 = vmatprep.subr.mxu0 0.0
    %5089 = vmatpush1.msra.mxu0 %v5061
    %5090 = vmatprep.subr.mxu0 0.0
    %5091 = vmatpush1.msra.mxu0 %v5062
    %5092 = vmatprep.subr.mxu0 0.0
    %5093 = vmatpush1.msra.mxu0 %v5063
    %5094 = vmatprep.subr.mxu0 0.0
    %5095 = vmatpush1.msra.mxu0 0.0
    %5096 = vmatprep.subr.mxu0 0.0
    %5097 = vmatpush1.msra.mxu0 0.0
    %5098 = vmatprep.subr.mxu0 0.0
    %5099 = vmatpush1.msra.mxu0 0.0
    %5100 = vmatprep.subr.mxu0 0.0
    %5101 = vmatpush1.msra.mxu0 0.0
    %5102 = vmatprep.subr.mxu0 0.0
    %5103 = vmatpush1.msra.mxu0 0.0
    %5104 = vmatprep.subr.mxu0 0.0
    %5105 = vmatpush1.msra.mxu0 0.0
    %5106 = vmatprep.subr.mxu0 0.0
    %5107 = vmatpush1.msra.mxu0 0.0
    %5108 = vmatprep.subr.mxu0 0.0
    %5109 = vmatpush1.msra.mxu0 0.0
    %5110 = vmatprep.subr.mxu0 0.0
    %5111 = vmatpush1.msra.mxu0 0.0
    %5112 = vmatprep.subr.mxu0 0.0
    %5113 = vmatpush1.msra.mxu0 0.0
    %5114 = vmatprep.subr.mxu0 0.0
    %5115 = vmatpush1.msra.mxu0 0.0
    %5116 = vmatprep.subr.mxu0 0.0
    %5117 = vmatpush1.msra.mxu0 0.0
    %5118 = vmatprep.subr.mxu0 0.0
    %5119 = vmatpush1.msra.mxu0 0.0
    %5120 = vmatprep.subr.mxu0 0.0
    %5121 = vmatpush1.msra.mxu0 0.0
    %5122 = vmatprep.subr.mxu0 0.0
    %5123 = vmatpush1.msra.mxu0 0.0
    %5124 = vmatprep.subr.mxu0 0.0
    %5125 = vmatpush1.msra.mxu0 0.0
    %5126 = vmatprep.subr.mxu0 0.0
    %5127 = vmatpush1.msra.mxu0 0.0
    %5128 = vmatprep.subr.mxu0 0.0
    %5129 = vmatpush1.msra.mxu0 0.0
    %5130 = vmatprep.subr.mxu0 0.0
    %5131 = vmatpush1.msra.mxu0 0.0
    %5132 = vmatprep.subr.mxu0 0.0
    %5133 = vmatpush1.msra.mxu0 0.0
    %5134 = vmatprep.subr.mxu0 0.0
    %5135 = vmatpush1.msra.mxu0 0.0
    %5136 = vmatprep.subr.mxu0 0.0
    %5137 = vmatpush1.msra.mxu0 0.0
    %5138 = vmatprep.subr.mxu0 0.0
    %5139 = vmatpush1.msra.mxu0 0.0
    %5140 = vmatprep.subr.mxu0 0.0
    %5141 = vmatpush1.msra.mxu0 0.0
    %5142 = vmatprep.mubr.f32.mxu0 0.0
    %5143 = vmatmul.mubr.f32.gmra.mrb[0].mxu0 %v5073
    %v5144 = vpop.f32.mrb[0].mxu0
    %v5145 = vadd.f32 %v5070, %v5144
    %v5146 = vpop.f32.mrb[0].mxu0
    %5147 = vmatprep.mubr.f32.mxu0 0.0
    %5148 = vmatmul.mubr.f32.gmra.mrb[0].mxu0 %v5076
    %v5149 = vpop.f32.mrb[0].mxu0
    %v5150 = vadd.f32 %v5070, %v5149
    %v5151 = vpop.f32.mrb[0].mxu0
    %5152 = vdwg.mxu0
    %v5153 = vadd.f32 %v3616, %v5145
    %v5154 = vadd.f32 %v3617, %v5150
    %s5155 = scalar_lea.vmem %s10, 2
    %v5156 = vld [vmem:[%s5155] sm:$0x1]
    %s5157 = scalar_lea.vmem %s11, 2
    %v5158 = vld [vmem:[%s5157] sm:$0x1]
    %v5159 = vsel %vm157, %v5153, 0.0
    %5160 = vadd.xlane.f32.xlu0 %v5159
    %v5161 = vpop.xlane.xlu0 %5160
    %v5162 = vsel %vm157, %v5154, 0.0
    %5163 = vadd.xlane.f32.xlu0 %v5162
    %v5164 = vpop.xlane.xlu0 %5163
    %v5165 = vmul.f32 %v5161, %v1658
    %v5166 = vmul.f32 %v5164, %v1658
    %v5167 = vsub.f32 %v5153, %v5165
    %v5168 = vsub.f32 %v5154, %v5166
    %v5169 = vmul.f32 %v5167, %v5167
    %v5170 = vmul.f32 %v5168, %v5168
    %v5171 = vsel %vm157, %v5169, 0.0
    %5172 = vadd.xlane.f32.xlu0 %v5171
    %v5173 = vpop.xlane.xlu0 %5172
    %v5174 = vsel %vm157, %v5170, 0.0
    %5175 = vadd.xlane.f32.xlu0 %v5174
    %v5176 = vpop.xlane.xlu0 %5175
    %v5177 = vmul.f32 %v5173, %v1658
    %v5178 = vmul.f32 %v5176, %v1658
    %v5179 = vadd.f32 %v5177, 1e-05
    %v5180 = vadd.f32 %v5178, 1e-05
    %v5181 = vrsqrt.pop %v5179
    %v5182 = vrsqrt.pop %v5180
    %v5183 = vmul.f32 %v5167, %v5181
    %v5184 = vmul.f32 %v5168, %v5182
    %v5186 = vlaneseq
    %v5187 = vshrl.u32 %v5186, 7
    %v5188 = vsub.s32 0, %v5187
    %v5189 = vrot.slane %v5156, %v5188
    %v5191 = vmul.f32 %v5183, %v5189
    %v5192 = vmul.f32 %v5184, %v5189
    %v5194 = vlaneseq
    %v5195 = vshrl.u32 %v5194, 7
    %v5196 = vsub.s32 0, %v5195
    %v5197 = vrot.slane %v5158, %v5196
    %v5199 = vadd.f32 %v5191, %v5197
    %v5200 = vadd.f32 %v5192, %v5197
    %s5201 = scalar_lea.vmem [#allocation2], 576
    %v5202 = vld [vmem:[%s5201] sm:$0xff]
    %v5203 = vld [vmem:[%s5201 + $0x8] sm:$0xff]
    %v5204 = vld [vmem:[%s5201 + $0x10] sm:$0xff]
    %v5205 = vld [vmem:[%s5201 + $0x18] sm:$0xff]
    %v5206 = vld [vmem:[%s5201 + $0x20] sm:$0xff]
    %v5207 = vld [vmem:[%s5201 + $0x28] sm:$0xff]
    %v5208 = vld [vmem:[%s5201 + $0x30] sm:$0xff]
    %v5209 = vld [vmem:[%s5201 + $0x38] sm:$0xff]
    %v5210 = vld [vmem:[%s5201 + $0x40] sm:$0xff]
    %v5211 = vld [vmem:[%s5201 + $0x48] sm:$0xff]
    %v5212 = vld [vmem:[%s5201 + $0x50] sm:$0xff]
    %v5213 = vld [vmem:[%s5201 + $0x58] sm:$0xff]
    %v5214 = vld [vmem:[%s5201 + $0x60] sm:$0xff]
    %v5215 = vld [vmem:[%s5201 + $0x68] sm:$0xff]
    %v5216 = vld [vmem:[%s5201 + $0x70] sm:$0xff]
    %v5217 = vld [vmem:[%s5201 + $0x78] sm:$0xff]
    %v5218 = vld [vmem:[%s5201 + $0x80] sm:$0xff]
    %v5219 = vld [vmem:[%s5201 + $0x88] sm:$0xff]
    %v5220 = vld [vmem:[%s5201 + $0x90] sm:$0xff]
    %v5221 = vld [vmem:[%s5201 + $0x98] sm:$0xff]
    %v5222 = vld [vmem:[%s5201 + $0xa0] sm:$0xff]
    %v5223 = vld [vmem:[%s5201 + $0xa8] sm:$0xff]
    %v5224 = vld [vmem:[%s5201 + $0xb0] sm:$0xff]
    %v5225 = vld [vmem:[%s5201 + $0xb8] sm:$0xff]
    %s5226 = scalar_lea.vmem %s6, 9
    %v5227 = vld [vmem:[%s5226] sm:$0x7]
    %v5229 = vlaneseq
    %v5230 = vshrl.u32 %v5229, 7
    %v5231 = vsub.s32 0, %v5230
    %v5232 = vrot.slane %v5227, %v5231
    %v5233 = vlaneseq
    %v5234 = vshrl.u32 %v5233, 7
    %v5235 = vsub.s32 1, %v5234
    %v5236 = vrot.slane %v5227, %v5235
    %v5237 = vlaneseq
    %v5238 = vshrl.u32 %v5237, 7
    %v5239 = vsub.s32 2, %v5238
    %v5240 = vrot.slane %v5227, %v5239
    %v5245 = vsel %vm157, %v5199, 0
    %v5248 = vsel %vm157, %v5200, 0
    %5250 = vmatprep.subr.mxu0 %v5203
    %5251 = vmatpush1.msra.mxu0 %v5202
    %5252 = vmatprep.subr.mxu0 %v5206
    %5253 = vmatpush1.msra.mxu0 %v5205
    %5254 = vmatprep.subr.mxu0 %v5209
    %5255 = vmatpush1.msra.mxu0 %v5208
    %5256 = vmatprep.subr.mxu0 %v5212
    %5257 = vmatpush1.msra.mxu0 %v5211
    %5258 = vmatprep.subr.mxu0 %v5215
    %5259 = vmatpush1.msra.mxu0 %v5214
    %5260 = vmatprep.subr.mxu0 %v5218
    %5261 = vmatpush1.msra.mxu0 %v5217
    %5262 = vmatprep.subr.mxu0 %v5221
    %5263 = vmatpush1.msra.mxu0 %v5220
    %5264 = vmatprep.subr.mxu0 %v5224
    %5265 = vmatpush1.msra.mxu0 %v5223
    %5266 = vmatprep.subr.mxu0 0.0
    %5267 = vmatpush1.msra.mxu0 0.0
    %5268 = vmatprep.subr.mxu0 0.0
    %5269 = vmatpush1.msra.mxu0 0.0
    %5270 = vmatprep.subr.mxu0 0.0
    %5271 = vmatpush1.msra.mxu0 0.0
    %5272 = vmatprep.subr.mxu0 0.0
    %5273 = vmatpush1.msra.mxu0 0.0
    %5274 = vmatprep.subr.mxu0 0.0
    %5275 = vmatpush1.msra.mxu0 0.0
    %5276 = vmatprep.subr.mxu0 0.0
    %5277 = vmatpush1.msra.mxu0 0.0
    %5278 = vmatprep.subr.mxu0 0.0
    %5279 = vmatpush1.msra.mxu0 0.0
    %5280 = vmatprep.subr.mxu0 0.0
    %5281 = vmatpush1.msra.mxu0 0.0
    %5282 = vmatprep.subr.mxu0 0.0
    %5283 = vmatpush1.msra.mxu0 0.0
    %5284 = vmatprep.subr.mxu0 0.0
    %5285 = vmatpush1.msra.mxu0 0.0
    %5286 = vmatprep.subr.mxu0 0.0
    %5287 = vmatpush1.msra.mxu0 0.0
    %5288 = vmatprep.subr.mxu0 0.0
    %5289 = vmatpush1.msra.mxu0 0.0
    %5290 = vmatprep.subr.mxu0 0.0
    %5291 = vmatpush1.msra.mxu0 0.0
    %5292 = vmatprep.subr.mxu0 0.0
    %5293 = vmatpush1.msra.mxu0 0.0
    %5294 = vmatprep.subr.mxu0 0.0
    %5295 = vmatpush1.msra.mxu0 0.0
    %5296 = vmatprep.subr.mxu0 0.0
    %5297 = vmatpush1.msra.mxu0 0.0
    %5298 = vmatprep.subr.mxu0 0.0
    %5299 = vmatpush1.msra.mxu0 0.0
    %5300 = vmatprep.subr.mxu0 0.0
    %5301 = vmatpush1.msra.mxu0 0.0
    %5302 = vmatprep.subr.mxu0 0.0
    %5303 = vmatpush1.msra.mxu0 0.0
    %5304 = vmatprep.subr.mxu0 0.0
    %5305 = vmatpush1.msra.mxu0 0.0
    %5306 = vmatprep.subr.mxu0 0.0
    %5307 = vmatpush1.msra.mxu0 0.0
    %5308 = vmatprep.subr.mxu0 0.0
    %5309 = vmatpush1.msra.mxu0 0.0
    %5310 = vmatprep.subr.mxu0 0.0
    %5311 = vmatpush1.msra.mxu0 0.0
    %5312 = vmatprep.subr.mxu0 0.0
    %5313 = vmatpush1.msra.mxu0 0.0
    %5314 = vmatprep.mubr.f32.mxu0 0.0
    %5315 = vmatmul.mubr.f32.gmra.mrb[0].mxu0 %v5245
    %v5316 = vpop.f32.mrb[0].mxu0
    %v5317 = vadd.f32 %v5232, %v5316
    %v5318 = vpop.f32.mrb[0].mxu0
    %v5319 = vadd.f32 %v5236, %v5318
    %5320 = vmatprep.mubr.f32.mxu0 0.0
    %5321 = vmatmul.mubr.f32.gmra.mrb[0].mxu0 %v5248
    %v5322 = vpop.f32.mrb[0].mxu0
    %v5323 = vadd.f32 %v5232, %v5322
    %v5324 = vpop.f32.mrb[0].mxu0
    %v5325 = vadd.f32 %v5236, %v5324
    %5326 = vdwg.mxu0
    %5327 = vmatprep.subr.mxu0 0.0
    %5328 = vmatpush1.msra.mxu0 %v5204
    %5329 = vmatprep.subr.mxu0 0.0
    %5330 = vmatpush1.msra.mxu0 %v5207
    %5331 = vmatprep.subr.mxu0 0.0
    %5332 = vmatpush1.msra.mxu0 %v5210
    %5333 = vmatprep.subr.mxu0 0.0
    %5334 = vmatpush1.msra.mxu0 %v5213
    %5335 = vmatprep.subr.mxu0 0.0
    %5336 = vmatpush1.msra.mxu0 %v5216
    %5337 = vmatprep.subr.mxu0 0.0
    %5338 = vmatpush1.msra.mxu0 %v5219
    %5339 = vmatprep.subr.mxu0 0.0
    %5340 = vmatpush1.msra.mxu0 %v5222
    %5341 = vmatprep.subr.mxu0 0.0
    %5342 = vmatpush1.msra.mxu0 %v5225
    %5343 = vmatprep.subr.mxu0 0.0
    %5344 = vmatpush1.msra.mxu0 0.0
    %5345 = vmatprep.subr.mxu0 0.0
    %5346 = vmatpush1.msra.mxu0 0.0
    %5347 = vmatprep.subr.mxu0 0.0
    %5348 = vmatpush1.msra.mxu0 0.0
    %5349 = vmatprep.subr.mxu0 0.0
    %5350 = vmatpush1.msra.mxu0 0.0
    %5351 = vmatprep.subr.mxu0 0.0
    %5352 = vmatpush1.msra.mxu0 0.0
    %5353 = vmatprep.subr.mxu0 0.0
    %5354 = vmatpush1.msra.mxu0 0.0
    %5355 = vmatprep.subr.mxu0 0.0
    %5356 = vmatpush1.msra.mxu0 0.0
    %5357 = vmatprep.subr.mxu0 0.0
    %5358 = vmatpush1.msra.mxu0 0.0
    %5359 = vmatprep.subr.mxu0 0.0
    %5360 = vmatpush1.msra.mxu0 0.0
    %5361 = vmatprep.subr.mxu0 0.0
    %5362 = vmatpush1.msra.mxu0 0.0
    %5363 = vmatprep.subr.mxu0 0.0
    %5364 = vmatpush1.msra.mxu0 0.0
    %5365 = vmatprep.subr.mxu0 0.0
    %5366 = vmatpush1.msra.mxu0 0.0
    %5367 = vmatprep.subr.mxu0 0.0
    %5368 = vmatpush1.msra.mxu0 0.0
    %5369 = vmatprep.subr.mxu0 0.0
    %5370 = vmatpush1.msra.mxu0 0.0
    %5371 = vmatprep.subr.mxu0 0.0
    %5372 = vmatpush1.msra.mxu0 0.0
    %5373 = vmatprep.subr.mxu0 0.0
    %5374 = vmatpush1.msra.mxu0 0.0
    %5375 = vmatprep.subr.mxu0 0.0
    %5376 = vmatpush1.msra.mxu0 0.0
    %5377 = vmatprep.subr.mxu0 0.0
    %5378 = vmatpush1.msra.mxu0 0.0
    %5379 = vmatprep.subr.mxu0 0.0
    %5380 = vmatpush1.msra.mxu0 0.0
    %5381 = vmatprep.subr.mxu0 0.0
    %5382 = vmatpush1.msra.mxu0 0.0
    %5383 = vmatprep.subr.mxu0 0.0
    %5384 = vmatpush1.msra.mxu0 0.0
    %5385 = vmatprep.subr.mxu0 0.0
    %5386 = vmatpush1.msra.mxu0 0.0
    %5387 = vmatprep.subr.mxu0 0.0
    %5388 = vmatpush1.msra.mxu0 0.0
    %5389 = vmatprep.subr.mxu0 0.0
    %5390 = vmatpush1.msra.mxu0 0.0
    %5391 = vmatprep.mubr.f32.mxu0 0.0
    %5392 = vmatmul.mubr.f32.gmra.mrb[0].mxu0 %v5245
    %v5393 = vpop.f32.mrb[0].mxu0
    %v5394 = vadd.f32 %v5240, %v5393
    %v5395 = vpop.f32.mrb[0].mxu0
    %5396 = vmatprep.mubr.f32.mxu0 0.0
    %5397 = vmatmul.mubr.f32.gmra.mrb[0].mxu0 %v5248
    %v5398 = vpop.f32.mrb[0].mxu0
    %v5399 = vadd.f32 %v5240, %v5398
    %v5400 = vpop.f32.mrb[0].mxu0
    %5401 = vdwg.mxu0
    %s5402 = scalar_lea.vmem %s9, 24
    %v5403 = vld [vmem:[%s5402] sm:$0x3f]
    %v5405 = vcombine.high %v5403, %v5403
    %v5407 = vunpack.c.l.s4 1966171168
    %v5408 = vunpack.c.0.s8 %v5407
    %v5409 = vlaneseq
    %v5410 = vshrl.u32 %v5409, 7
    %v5411 = vsub.s32 %v5408, %v5410
    %v5412 = vrot.slane %v5403, %v5411
    %v5414 = vunpack.c.l.s4 1966171168
    %v5415 = vunpack.c.0.s8 %v5414
    %v5416 = vlaneseq
    %v5417 = vshrl.u32 %v5416, 7
    %v5418 = vsub.s32 %v5415, %v5417
    %v5419 = vrot.slane %v5405, %v5418
    %v5420 = vcombine.high %v5412, %v5412
    %v5421 = vcombine.high %v5419, %v5419
    %v5423 = vunpack.c.l.s4 1966171168
    %v5424 = vunpack.c.0.s8 %v5423
    %v5425 = vlaneseq
    %v5426 = vshrl.u32 %v5425, 7
    %v5427 = vsub.s32 %v5424, %v5426
    %v5428 = vrot.slane %v5412, %v5427
    %v5430 = vunpack.c.l.s4 1966171168
    %v5431 = vunpack.c.0.s8 %v5430
    %v5432 = vlaneseq
    %v5433 = vshrl.u32 %v5432, 7
    %v5434 = vsub.s32 %v5431, %v5433
    %v5435 = vrot.slane %v5419, %v5434
    %v5437 = vunpack.c.l.s4 1966171168
    %v5438 = vunpack.c.0.s8 %v5437
    %v5439 = vlaneseq
    %v5440 = vshrl.u32 %v5439, 7
    %v5441 = vsub.s32 %v5438, %v5440
    %v5442 = vrot.slane %v5420, %v5441
    %v5444 = vunpack.c.l.s4 1966171168
    %v5445 = vunpack.c.0.s8 %v5444
    %v5446 = vlaneseq
    %v5447 = vshrl.u32 %v5446, 7
    %v5448 = vsub.s32 %v5445, %v5447
    %v5449 = vrot.slane %v5421, %v5448
    %v5450 = vcombine.high %v5428, %v5428
    %v5451 = vcombine.high %v5442, %v5442
    %v5452 = vlaneseq
    %v5453 = vshrl.u32 %v5452, 7
    %v5454 = vsub.s32 0, %v5453
    %v5455 = vrot.slane %v5428, %v5454
    %v5456 = vlaneseq
    %v5457 = vshrl.u32 %v5456, 7
    %v5458 = vsub.s32 0, %v5457
    %v5459 = vrot.slane %v5442, %v5458
    %v5460 = vlaneseq
    %v5461 = vshrl.u32 %v5460, 7
    %v5462 = vsub.s32 0, %v5461
    %v5463 = vrot.slane %v5450, %v5462
    %v5464 = vlaneseq
    %v5465 = vshrl.u32 %v5464, 7
    %v5466 = vsub.s32 0, %v5465
    %v5467 = vrot.slane %v5451, %v5466
    %v5468 = vlaneseq
    %v5469 = vshrl.u32 %v5468, 7
    %v5470 = vsub.s32 0, %v5469
    %v5471 = vrot.slane %v5435, %v5470
    %v5472 = vlaneseq
    %v5473 = vshrl.u32 %v5472, 7
    %v5474 = vsub.s32 0, %v5473
    %v5475 = vrot.slane %v5449, %v5474
    %v5482 = vmul.f32 %v5317, %v5455
    %v5483 = vmul.f32 %v5323, %v5455
    %v5484 = vmul.f32 %v5317, %v5459
    %v5485 = vmul.f32 %v5323, %v5459
    %v5486 = vmul.f32 %v5317, %v5463
    %v5487 = vmul.f32 %v5323, %v5463
    %v5488 = vmul.f32 %v5317, %v5467
    %v5489 = vmul.f32 %v5323, %v5467
    %v5490 = vmul.f32 %v5317, %v5471
    %v5491 = vmul.f32 %v5323, %v5471
    %v5492 = vmul.f32 %v5317, %v5475
    %v5493 = vmul.f32 %v5323, %v5475
    %v5494 = vmul.f32 %v5394, %v5455
    %v5495 = vmul.f32 %v5399, %v5455
    %v5496 = vmul.f32 %v5394, %v5459
    %v5497 = vmul.f32 %v5399, %v5459
    %v5498 = vmul.f32 %v5394, %v5463
    %v5499 = vmul.f32 %v5399, %v5463
    %v5500 = vmul.f32 %v5394, %v5467
    %v5501 = vmul.f32 %v5399, %v5467
    %v5502 = vmul.f32 %v5394, %v5471
    %v5503 = vmul.f32 %v5399, %v5471
    %v5504 = vmul.f32 %v5394, %v5475
    %v5505 = vmul.f32 %v5399, %v5475
    %v5507 = vsel %vm157, %v5482, 0
    %v5510 = vsel %vm157, %v5483, 0
    %v5513 = vsel %vm157, %v5319, 0
    %v5516 = vsel %vm157, %v5325, 0
    %5518 = vmatprep.subr.mxu0 0.0
    %5519 = vmatpush1.xpose.msra.mxu0 %v5513
    %5520 = vmatprep.subr.mxu0 0.0
    %5521 = vmatpush1.xpose.msra.mxu0 %v5516
    %5522 = vmatprep.subr.mxu0 0.0
    %5523 = vmatpush1.xpose.msra.mxu0 0.0
    %5524 = vmatprep.subr.mxu0 0.0
    %5525 = vmatpush1.xpose.msra.mxu0 0.0
    %5526 = vmatprep.subr.mxu0 0.0
    %5527 = vmatpush1.xpose.msra.mxu0 0.0
    %5528 = vmatprep.subr.mxu0 0.0
    %5529 = vmatpush1.xpose.msra.mxu0 0.0
    %5530 = vmatprep.subr.mxu0 0.0
    %5531 = vmatpush1.xpose.msra.mxu0 0.0
    %5532 = vmatprep.subr.mxu0 0.0
    %5533 = vmatpush1.xpose.msra.mxu0 0.0
    %5534 = vmatprep.subr.mxu0 0.0
    %5535 = vmatpush1.xpose.msra.mxu0 0.0
    %5536 = vmatprep.subr.mxu0 0.0
    %5537 = vmatpush1.xpose.msra.mxu0 0.0
    %5538 = vmatprep.subr.mxu0 0.0
    %5539 = vmatpush1.xpose.msra.mxu0 0.0
    %5540 = vmatprep.subr.mxu0 0.0
    %5541 = vmatpush1.xpose.msra.mxu0 0.0
    %5542 = vmatprep.subr.mxu0 0.0
    %5543 = vmatpush1.xpose.msra.mxu0 0.0
    %5544 = vmatprep.subr.mxu0 0.0
    %5545 = vmatpush1.xpose.msra.mxu0 0.0
    %5546 = vmatprep.subr.mxu0 0.0
    %5547 = vmatpush1.xpose.msra.mxu0 0.0
    %5548 = vmatprep.subr.mxu0 0.0
    %5549 = vmatpush1.xpose.msra.mxu0 0.0
    %5550 = vmatprep.subr.mxu0 0.0
    %5551 = vmatpush1.xpose.msra.mxu0 0.0
    %5552 = vmatprep.subr.mxu0 0.0
    %5553 = vmatpush1.xpose.msra.mxu0 0.0
    %5554 = vmatprep.subr.mxu0 0.0
    %5555 = vmatpush1.xpose.msra.mxu0 0.0
    %5556 = vmatprep.subr.mxu0 0.0
    %5557 = vmatpush1.xpose.msra.mxu0 0.0
    %5558 = vmatprep.subr.mxu0 0.0
    %5559 = vmatpush1.xpose.msra.mxu0 0.0
    %5560 = vmatprep.subr.mxu0 0.0
    %5561 = vmatpush1.xpose.msra.mxu0 0.0
    %5562 = vmatprep.subr.mxu0 0.0
    %5563 = vmatpush1.xpose.msra.mxu0 0.0
    %5564 = vmatprep.subr.mxu0 0.0
    %5565 = vmatpush1.xpose.msra.mxu0 0.0
    %5566 = vmatprep.subr.mxu0 0.0
    %5567 = vmatpush1.xpose.msra.mxu0 0.0
    %5568 = vmatprep.subr.mxu0 0.0
    %5569 = vmatpush1.xpose.msra.mxu0 0.0
    %5570 = vmatprep.subr.mxu0 0.0
    %5571 = vmatpush1.xpose.msra.mxu0 0.0
    %5572 = vmatprep.subr.mxu0 0.0
    %5573 = vmatpush1.xpose.msra.mxu0 0.0
    %5574 = vmatprep.subr.mxu0 0.0
    %5575 = vmatpush1.xpose.msra.mxu0 0.0
    %5576 = vmatprep.subr.mxu0 0.0
    %5577 = vmatpush1.xpose.msra.mxu0 0.0
    %5578 = vmatprep.subr.mxu0 0.0
    %5579 = vmatpush1.xpose.msra.mxu0 0.0
    %5580 = vmatprep.subr.mxu0 0.0
    %5581 = vmatpush1.xpose.msra.mxu0 0.0
    %5582 = vmatprep.mubr.f32.mxu0 0.0
    %5583 = vmatmul.mubr.f32.gmra.mrb[0].mxu0 %v5507
    %v5584 = vpop.f32.mrb[0].mxu0
    %v5585 = vadd.f32 %v114, %v5584
    %v5586 = vpop.f32.mrb[0].mxu0
    %5587 = vmatprep.mubr.f32.mxu0 0.0
    %5588 = vmatmul.mubr.f32.gmra.mrb[0].mxu0 %v5510
    %v5589 = vpop.f32.mrb[0].mxu0
    %v5590 = vadd.f32 %v115, %v5589
    %v5591 = vpop.f32.mrb[0].mxu0
    %5592 = vdwg.mxu0
    %v5594 = vsel %vm157, %v5484, 0
    %v5597 = vsel %vm157, %v5485, 0
    %5599 = vmatprep.subr.mxu0 0.0
    %5600 = vmatpush1.xpose.msra.mxu0 %v5513
    %5601 = vmatprep.subr.mxu0 0.0
    %5602 = vmatpush1.xpose.msra.mxu0 %v5516
    %5603 = vmatprep.subr.mxu0 0.0
    %5604 = vmatpush1.xpose.msra.mxu0 0.0
    %5605 = vmatprep.subr.mxu0 0.0
    %5606 = vmatpush1.xpose.msra.mxu0 0.0
    %5607 = vmatprep.subr.mxu0 0.0
    %5608 = vmatpush1.xpose.msra.mxu0 0.0
    %5609 = vmatprep.subr.mxu0 0.0
    %5610 = vmatpush1.xpose.msra.mxu0 0.0
    %5611 = vmatprep.subr.mxu0 0.0
    %5612 = vmatpush1.xpose.msra.mxu0 0.0
    %5613 = vmatprep.subr.mxu0 0.0
    %5614 = vmatpush1.xpose.msra.mxu0 0.0
    %5615 = vmatprep.subr.mxu0 0.0
    %5616 = vmatpush1.xpose.msra.mxu0 0.0
    %5617 = vmatprep.subr.mxu0 0.0
    %5618 = vmatpush1.xpose.msra.mxu0 0.0
    %5619 = vmatprep.subr.mxu0 0.0
    %5620 = vmatpush1.xpose.msra.mxu0 0.0
    %5621 = vmatprep.subr.mxu0 0.0
    %5622 = vmatpush1.xpose.msra.mxu0 0.0
    %5623 = vmatprep.subr.mxu0 0.0
    %5624 = vmatpush1.xpose.msra.mxu0 0.0
    %5625 = vmatprep.subr.mxu0 0.0
    %5626 = vmatpush1.xpose.msra.mxu0 0.0
    %5627 = vmatprep.subr.mxu0 0.0
    %5628 = vmatpush1.xpose.msra.mxu0 0.0
    %5629 = vmatprep.subr.mxu0 0.0
    %5630 = vmatpush1.xpose.msra.mxu0 0.0
    %5631 = vmatprep.subr.mxu0 0.0
    %5632 = vmatpush1.xpose.msra.mxu0 0.0
    %5633 = vmatprep.subr.mxu0 0.0
    %5634 = vmatpush1.xpose.msra.mxu0 0.0
    %5635 = vmatprep.subr.mxu0 0.0
    %5636 = vmatpush1.xpose.msra.mxu0 0.0
    %5637 = vmatprep.subr.mxu0 0.0
    %5638 = vmatpush1.xpose.msra.mxu0 0.0
    %5639 = vmatprep.subr.mxu0 0.0
    %5640 = vmatpush1.xpose.msra.mxu0 0.0
    %5641 = vmatprep.subr.mxu0 0.0
    %5642 = vmatpush1.xpose.msra.mxu0 0.0
    %5643 = vmatprep.subr.mxu0 0.0
    %5644 = vmatpush1.xpose.msra.mxu0 0.0
    %5645 = vmatprep.subr.mxu0 0.0
    %5646 = vmatpush1.xpose.msra.mxu0 0.0
    %5647 = vmatprep.subr.mxu0 0.0
    %5648 = vmatpush1.xpose.msra.mxu0 0.0
    %5649 = vmatprep.subr.mxu0 0.0
    %5650 = vmatpush1.xpose.msra.mxu0 0.0
    %5651 = vmatprep.subr.mxu0 0.0
    %5652 = vmatpush1.xpose.msra.mxu0 0.0
    %5653 = vmatprep.subr.mxu0 0.0
    %5654 = vmatpush1.xpose.msra.mxu0 0.0
    %5655 = vmatprep.subr.mxu0 0.0
    %5656 = vmatpush1.xpose.msra.mxu0 0.0
    %5657 = vmatprep.subr.mxu0 0.0
    %5658 = vmatpush1.xpose.msra.mxu0 0.0
    %5659 = vmatprep.subr.mxu0 0.0
    %5660 = vmatpush1.xpose.msra.mxu0 0.0
    %5661 = vmatprep.subr.mxu0 0.0
    %5662 = vmatpush1.xpose.msra.mxu0 0.0
    %5663 = vmatprep.mubr.f32.mxu0 0.0
    %5664 = vmatmul.mubr.f32.gmra.mrb[0].mxu0 %v5594
    %v5665 = vpop.f32.mrb[0].mxu0
    %v5666 = vadd.f32 %v114, %v5665
    %v5667 = vpop.f32.mrb[0].mxu0
    %5668 = vmatprep.mubr.f32.mxu0 0.0
    %5669 = vmatmul.mubr.f32.gmra.mrb[0].mxu0 %v5597
    %v5670 = vpop.f32.mrb[0].mxu0
    %v5671 = vadd.f32 %v115, %v5670
    %v5672 = vpop.f32.mrb[0].mxu0
    %5673 = vdwg.mxu0
    %v5675 = vsel %vm157, %v5486, 0
    %v5678 = vsel %vm157, %v5487, 0
    %5680 = vmatprep.subr.mxu0 0.0
    %5681 = vmatpush1.xpose.msra.mxu0 %v5513
    %5682 = vmatprep.subr.mxu0 0.0
    %5683 = vmatpush1.xpose.msra.mxu0 %v5516
    %5684 = vmatprep.subr.mxu0 0.0
    %5685 = vmatpush1.xpose.msra.mxu0 0.0
    %5686 = vmatprep.subr.mxu0 0.0
    %5687 = vmatpush1.xpose.msra.mxu0 0.0
    %5688 = vmatprep.subr.mxu0 0.0
    %5689 = vmatpush1.xpose.msra.mxu0 0.0
    %5690 = vmatprep.subr.mxu0 0.0
    %5691 = vmatpush1.xpose.msra.mxu0 0.0
    %5692 = vmatprep.subr.mxu0 0.0
    %5693 = vmatpush1.xpose.msra.mxu0 0.0
    %5694 = vmatprep.subr.mxu0 0.0
    %5695 = vmatpush1.xpose.msra.mxu0 0.0
    %5696 = vmatprep.subr.mxu0 0.0
    %5697 = vmatpush1.xpose.msra.mxu0 0.0
    %5698 = vmatprep.subr.mxu0 0.0
    %5699 = vmatpush1.xpose.msra.mxu0 0.0
    %5700 = vmatprep.subr.mxu0 0.0
    %5701 = vmatpush1.xpose.msra.mxu0 0.0
    %5702 = vmatprep.subr.mxu0 0.0
    %5703 = vmatpush1.xpose.msra.mxu0 0.0
    %5704 = vmatprep.subr.mxu0 0.0
    %5705 = vmatpush1.xpose.msra.mxu0 0.0
    %5706 = vmatprep.subr.mxu0 0.0
    %5707 = vmatpush1.xpose.msra.mxu0 0.0
    %5708 = vmatprep.subr.mxu0 0.0
    %5709 = vmatpush1.xpose.msra.mxu0 0.0
    %5710 = vmatprep.subr.mxu0 0.0
    %5711 = vmatpush1.xpose.msra.mxu0 0.0
    %5712 = vmatprep.subr.mxu0 0.0
    %5713 = vmatpush1.xpose.msra.mxu0 0.0
    %5714 = vmatprep.subr.mxu0 0.0
    %5715 = vmatpush1.xpose.msra.mxu0 0.0
    %5716 = vmatprep.subr.mxu0 0.0
    %5717 = vmatpush1.xpose.msra.mxu0 0.0
    %5718 = vmatprep.subr.mxu0 0.0
    %5719 = vmatpush1.xpose.msra.mxu0 0.0
    %5720 = vmatprep.subr.mxu0 0.0
    %5721 = vmatpush1.xpose.msra.mxu0 0.0
    %5722 = vmatprep.subr.mxu0 0.0
    %5723 = vmatpush1.xpose.msra.mxu0 0.0
    %5724 = vmatprep.subr.mxu0 0.0
    %5725 = vmatpush1.xpose.msra.mxu0 0.0
    %5726 = vmatprep.subr.mxu0 0.0
    %5727 = vmatpush1.xpose.msra.mxu0 0.0
    %5728 = vmatprep.subr.mxu0 0.0
    %5729 = vmatpush1.xpose.msra.mxu0 0.0
    %5730 = vmatprep.subr.mxu0 0.0
    %5731 = vmatpush1.xpose.msra.mxu0 0.0
    %5732 = vmatprep.subr.mxu0 0.0
    %5733 = vmatpush1.xpose.msra.mxu0 0.0
    %5734 = vmatprep.subr.mxu0 0.0
    %5735 = vmatpush1.xpose.msra.mxu0 0.0
    %5736 = vmatprep.subr.mxu0 0.0
    %5737 = vmatpush1.xpose.msra.mxu0 0.0
    %5738 = vmatprep.subr.mxu0 0.0
    %5739 = vmatpush1.xpose.msra.mxu0 0.0
    %5740 = vmatprep.subr.mxu0 0.0
    %5741 = vmatpush1.xpose.msra.mxu0 0.0
    %5742 = vmatprep.subr.mxu0 0.0
    %5743 = vmatpush1.xpose.msra.mxu0 0.0
    %5744 = vmatprep.mubr.f32.mxu0 0.0
    %5745 = vmatmul.mubr.f32.gmra.mrb[0].mxu0 %v5675
    %v5746 = vpop.f32.mrb[0].mxu0
    %v5747 = vadd.f32 %v114, %v5746
    %v5748 = vpop.f32.mrb[0].mxu0
    %5749 = vmatprep.mubr.f32.mxu0 0.0
    %5750 = vmatmul.mubr.f32.gmra.mrb[0].mxu0 %v5678
    %v5751 = vpop.f32.mrb[0].mxu0
    %v5752 = vadd.f32 %v115, %v5751
    %v5753 = vpop.f32.mrb[0].mxu0
    %5754 = vdwg.mxu0
    %v5756 = vsel %vm157, %v5488, 0
    %v5759 = vsel %vm157, %v5489, 0
    %5761 = vmatprep.subr.mxu0 0.0
    %5762 = vmatpush1.xpose.msra.mxu0 %v5513
    %5763 = vmatprep.subr.mxu0 0.0
    %5764 = vmatpush1.xpose.msra.mxu0 %v5516
    %5765 = vmatprep.subr.mxu0 0.0
    %5766 = vmatpush1.xpose.msra.mxu0 0.0
    %5767 = vmatprep.subr.mxu0 0.0
    %5768 = vmatpush1.xpose.msra.mxu0 0.0
    %5769 = vmatprep.subr.mxu0 0.0
    %5770 = vmatpush1.xpose.msra.mxu0 0.0
    %5771 = vmatprep.subr.mxu0 0.0
    %5772 = vmatpush1.xpose.msra.mxu0 0.0
    %5773 = vmatprep.subr.mxu0 0.0
    %5774 = vmatpush1.xpose.msra.mxu0 0.0
    %5775 = vmatprep.subr.mxu0 0.0
    %5776 = vmatpush1.xpose.msra.mxu0 0.0
    %5777 = vmatprep.subr.mxu0 0.0
    %5778 = vmatpush1.xpose.msra.mxu0 0.0
    %5779 = vmatprep.subr.mxu0 0.0
    %5780 = vmatpush1.xpose.msra.mxu0 0.0
    %5781 = vmatprep.subr.mxu0 0.0
    %5782 = vmatpush1.xpose.msra.mxu0 0.0
    %5783 = vmatprep.subr.mxu0 0.0
    %5784 = vmatpush1.xpose.msra.mxu0 0.0
    %5785 = vmatprep.subr.mxu0 0.0
    %5786 = vmatpush1.xpose.msra.mxu0 0.0
    %5787 = vmatprep.subr.mxu0 0.0
    %5788 = vmatpush1.xpose.msra.mxu0 0.0
    %5789 = vmatprep.subr.mxu0 0.0
    %5790 = vmatpush1.xpose.msra.mxu0 0.0
    %5791 = vmatprep.subr.mxu0 0.0
    %5792 = vmatpush1.xpose.msra.mxu0 0.0
    %5793 = vmatprep.subr.mxu0 0.0
    %5794 = vmatpush1.xpose.msra.mxu0 0.0
    %5795 = vmatprep.subr.mxu0 0.0
    %5796 = vmatpush1.xpose.msra.mxu0 0.0
    %5797 = vmatprep.subr.mxu0 0.0
    %5798 = vmatpush1.xpose.msra.mxu0 0.0
    %5799 = vmatprep.subr.mxu0 0.0
    %5800 = vmatpush1.xpose.msra.mxu0 0.0
    %5801 = vmatprep.subr.mxu0 0.0
    %5802 = vmatpush1.xpose.msra.mxu0 0.0
    %5803 = vmatprep.subr.mxu0 0.0
    %5804 = vmatpush1.xpose.msra.mxu0 0.0
    %5805 = vmatprep.subr.mxu0 0.0
    %5806 = vmatpush1.xpose.msra.mxu0 0.0
    %5807 = vmatprep.subr.mxu0 0.0
    %5808 = vmatpush1.xpose.msra.mxu0 0.0
    %5809 = vmatprep.subr.mxu0 0.0
    %5810 = vmatpush1.xpose.msra.mxu0 0.0
    %5811 = vmatprep.subr.mxu0 0.0
    %5812 = vmatpush1.xpose.msra.mxu0 0.0
    %5813 = vmatprep.subr.mxu0 0.0
    %5814 = vmatpush1.xpose.msra.mxu0 0.0
    %5815 = vmatprep.subr.mxu0 0.0
    %5816 = vmatpush1.xpose.msra.mxu0 0.0
    %5817 = vmatprep.subr.mxu0 0.0
    %5818 = vmatpush1.xpose.msra.mxu0 0.0
    %5819 = vmatprep.subr.mxu0 0.0
    %5820 = vmatpush1.xpose.msra.mxu0 0.0
    %5821 = vmatprep.subr.mxu0 0.0
    %5822 = vmatpush1.xpose.msra.mxu0 0.0
    %5823 = vmatprep.subr.mxu0 0.0
    %5824 = vmatpush1.xpose.msra.mxu0 0.0
    %5825 = vmatprep.mubr.f32.mxu0 0.0
    %5826 = vmatmul.mubr.f32.gmra.mrb[0].mxu0 %v5756
    %v5827 = vpop.f32.mrb[0].mxu0
    %v5828 = vadd.f32 %v114, %v5827
    %v5829 = vpop.f32.mrb[0].mxu0
    %5830 = vmatprep.mubr.f32.mxu0 0.0
    %5831 = vmatmul.mubr.f32.gmra.mrb[0].mxu0 %v5759
    %v5832 = vpop.f32.mrb[0].mxu0
    %v5833 = vadd.f32 %v115, %v5832
    %v5834 = vpop.f32.mrb[0].mxu0
    %5835 = vdwg.mxu0
    %v5837 = vsel %vm157, %v5490, 0
    %v5840 = vsel %vm157, %v5491, 0
    %5842 = vmatprep.subr.mxu0 0.0
    %5843 = vmatpush1.xpose.msra.mxu0 %v5513
    %5844 = vmatprep.subr.mxu0 0.0
    %5845 = vmatpush1.xpose.msra.mxu0 %v5516
    %5846 = vmatprep.subr.mxu0 0.0
    %5847 = vmatpush1.xpose.msra.mxu0 0.0
    %5848 = vmatprep.subr.mxu0 0.0
    %5849 = vmatpush1.xpose.msra.mxu0 0.0
    %5850 = vmatprep.subr.mxu0 0.0
    %5851 = vmatpush1.xpose.msra.mxu0 0.0
    %5852 = vmatprep.subr.mxu0 0.0
    %5853 = vmatpush1.xpose.msra.mxu0 0.0
    %5854 = vmatprep.subr.mxu0 0.0
    %5855 = vmatpush1.xpose.msra.mxu0 0.0
    %5856 = vmatprep.subr.mxu0 0.0
    %5857 = vmatpush1.xpose.msra.mxu0 0.0
    %5858 = vmatprep.subr.mxu0 0.0
    %5859 = vmatpush1.xpose.msra.mxu0 0.0
    %5860 = vmatprep.subr.mxu0 0.0
    %5861 = vmatpush1.xpose.msra.mxu0 0.0
    %5862 = vmatprep.subr.mxu0 0.0
    %5863 = vmatpush1.xpose.msra.mxu0 0.0
    %5864 = vmatprep.subr.mxu0 0.0
    %5865 = vmatpush1.xpose.msra.mxu0 0.0
    %5866 = vmatprep.subr.mxu0 0.0
    %5867 = vmatpush1.xpose.msra.mxu0 0.0
    %5868 = vmatprep.subr.mxu0 0.0
    %5869 = vmatpush1.xpose.msra.mxu0 0.0
    %5870 = vmatprep.subr.mxu0 0.0
    %5871 = vmatpush1.xpose.msra.mxu0 0.0
    %5872 = vmatprep.subr.mxu0 0.0
    %5873 = vmatpush1.xpose.msra.mxu0 0.0
    %5874 = vmatprep.subr.mxu0 0.0
    %5875 = vmatpush1.xpose.msra.mxu0 0.0
    %5876 = vmatprep.subr.mxu0 0.0
    %5877 = vmatpush1.xpose.msra.mxu0 0.0
    %5878 = vmatprep.subr.mxu0 0.0
    %5879 = vmatpush1.xpose.msra.mxu0 0.0
    %5880 = vmatprep.subr.mxu0 0.0
    %5881 = vmatpush1.xpose.msra.mxu0 0.0
    %5882 = vmatprep.subr.mxu0 0.0
    %5883 = vmatpush1.xpose.msra.mxu0 0.0
    %5884 = vmatprep.subr.mxu0 0.0
    %5885 = vmatpush1.xpose.msra.mxu0 0.0
    %5886 = vmatprep.subr.mxu0 0.0
    %5887 = vmatpush1.xpose.msra.mxu0 0.0
    %5888 = vmatprep.subr.mxu0 0.0
    %5889 = vmatpush1.xpose.msra.mxu0 0.0
    %5890 = vmatprep.subr.mxu0 0.0
    %5891 = vmatpush1.xpose.msra.mxu0 0.0
    %5892 = vmatprep.subr.mxu0 0.0
    %5893 = vmatpush1.xpose.msra.mxu0 0.0
    %5894 = vmatprep.subr.mxu0 0.0
    %5895 = vmatpush1.xpose.msra.mxu0 0.0
    %5896 = vmatprep.subr.mxu0 0.0
    %5897 = vmatpush1.xpose.msra.mxu0 0.0
    %5898 = vmatprep.subr.mxu0 0.0
    %5899 = vmatpush1.xpose.msra.mxu0 0.0
    %5900 = vmatprep.subr.mxu0 0.0
    %5901 = vmatpush1.xpose.msra.mxu0 0.0
    %5902 = vmatprep.subr.mxu0 0.0
    %5903 = vmatpush1.xpose.msra.mxu0 0.0
    %5904 = vmatprep.subr.mxu0 0.0
    %5905 = vmatpush1.xpose.msra.mxu0 0.0
    %5906 = vmatprep.mubr.f32.mxu0 0.0
    %5907 = vmatmul.mubr.f32.gmra.mrb[0].mxu0 %v5837
    %v5908 = vpop.f32.mrb[0].mxu0
    %v5909 = vadd.f32 %v114, %v5908
    %v5910 = vpop.f32.mrb[0].mxu0
    %5911 = vmatprep.mubr.f32.mxu0 0.0
    %5912 = vmatmul.mubr.f32.gmra.mrb[0].mxu0 %v5840
    %v5913 = vpop.f32.mrb[0].mxu0
    %v5914 = vadd.f32 %v115, %v5913
    %v5915 = vpop.f32.mrb[0].mxu0
    %5916 = vdwg.mxu0
    %v5918 = vsel %vm157, %v5492, 0
    %v5921 = vsel %vm157, %v5493, 0
    %5923 = vmatprep.subr.mxu0 0.0
    %5924 = vmatpush1.xpose.msra.mxu0 %v5513
    %5925 = vmatprep.subr.mxu0 0.0
    %5926 = vmatpush1.xpose.msra.mxu0 %v5516
    %5927 = vmatprep.subr.mxu0 0.0
    %5928 = vmatpush1.xpose.msra.mxu0 0.0
    %5929 = vmatprep.subr.mxu0 0.0
    %5930 = vmatpush1.xpose.msra.mxu0 0.0
    %5931 = vmatprep.subr.mxu0 0.0
    %5932 = vmatpush1.xpose.msra.mxu0 0.0
    %5933 = vmatprep.subr.mxu0 0.0
    %5934 = vmatpush1.xpose.msra.mxu0 0.0
    %5935 = vmatprep.subr.mxu0 0.0
    %5936 = vmatpush1.xpose.msra.mxu0 0.0
    %5937 = vmatprep.subr.mxu0 0.0
    %5938 = vmatpush1.xpose.msra.mxu0 0.0
    %5939 = vmatprep.subr.mxu0 0.0
    %5940 = vmatpush1.xpose.msra.mxu0 0.0
    %5941 = vmatprep.subr.mxu0 0.0
    %5942 = vmatpush1.xpose.msra.mxu0 0.0
    %5943 = vmatprep.subr.mxu0 0.0
    %5944 = vmatpush1.xpose.msra.mxu0 0.0
    %5945 = vmatprep.subr.mxu0 0.0
    %5946 = vmatpush1.xpose.msra.mxu0 0.0
    %5947 = vmatprep.subr.mxu0 0.0
    %5948 = vmatpush1.xpose.msra.mxu0 0.0
    %5949 = vmatprep.subr.mxu0 0.0
    %5950 = vmatpush1.xpose.msra.mxu0 0.0
    %5951 = vmatprep.subr.mxu0 0.0
    %5952 = vmatpush1.xpose.msra.mxu0 0.0
    %5953 = vmatprep.subr.mxu0 0.0
    %5954 = vmatpush1.xpose.msra.mxu0 0.0
    %5955 = vmatprep.subr.mxu0 0.0
    %5956 = vmatpush1.xpose.msra.mxu0 0.0
    %5957 = vmatprep.subr.mxu0 0.0
    %5958 = vmatpush1.xpose.msra.mxu0 0.0
    %5959 = vmatprep.subr.mxu0 0.0
    %5960 = vmatpush1.xpose.msra.mxu0 0.0
    %5961 = vmatprep.subr.mxu0 0.0
    %5962 = vmatpush1.xpose.msra.mxu0 0.0
    %5963 = vmatprep.subr.mxu0 0.0
    %5964 = vmatpush1.xpose.msra.mxu0 0.0
    %5965 = vmatprep.subr.mxu0 0.0
    %5966 = vmatpush1.xpose.msra.mxu0 0.0
    %5967 = vmatprep.subr.mxu0 0.0
    %5968 = vmatpush1.xpose.msra.mxu0 0.0
    %5969 = vmatprep.subr.mxu0 0.0
    %5970 = vmatpush1.xpose.msra.mxu0 0.0
    %5971 = vmatprep.subr.mxu0 0.0
    %5972 = vmatpush1.xpose.msra.mxu0 0.0
    %5973 = vmatprep.subr.mxu0 0.0
    %5974 = vmatpush1.xpose.msra.mxu0 0.0
    %5975 = vmatprep.subr.mxu0 0.0
    %5976 = vmatpush1.xpose.msra.mxu0 0.0
    %5977 = vmatprep.subr.mxu0 0.0
    %5978 = vmatpush1.xpose.msra.mxu0 0.0
    %5979 = vmatprep.subr.mxu0 0.0
    %5980 = vmatpush1.xpose.msra.mxu0 0.0
    %5981 = vmatprep.subr.mxu0 0.0
    %5982 = vmatpush1.xpose.msra.mxu0 0.0
    %5983 = vmatprep.subr.mxu0 0.0
    %5984 = vmatpush1.xpose.msra.mxu0 0.0
    %5985 = vmatprep.subr.mxu0 0.0
    %5986 = vmatpush1.xpose.msra.mxu0 0.0
    %5987 = vmatprep.mubr.f32.mxu0 0.0
    %5988 = vmatmul.mubr.f32.gmra.mrb[0].mxu0 %v5918
    %v5989 = vpop.f32.mrb[0].mxu0
    %v5990 = vadd.f32 %v114, %v5989
    %v5991 = vpop.f32.mrb[0].mxu0
    %5992 = vmatprep.mubr.f32.mxu0 0.0
    %5993 = vmatmul.mubr.f32.gmra.mrb[0].mxu0 %v5921
    %v5994 = vpop.f32.mrb[0].mxu0
    %v5995 = vadd.f32 %v115, %v5994
    %v5996 = vpop.f32.mrb[0].mxu0
    %5997 = vdwg.mxu0
    %v5998 = vsel %vm911, %v5585, -inf
    %5999 = vmax.xlane.f32.xlu0 %v5998
    %v6000 = vpop.xlane.xlu0 %5999
    %v6001 = vsel %vm911, %v5590, -inf
    %6002 = vmax.xlane.f32.xlu0 %v6001
    %v6003 = vpop.xlane.xlu0 %6002
    %v6004 = vsel %vm911, %v5666, -inf
    %6005 = vmax.xlane.f32.xlu0 %v6004
    %v6006 = vpop.xlane.xlu0 %6005
    %v6007 = vsel %vm911, %v5671, -inf
    %6008 = vmax.xlane.f32.xlu0 %v6007
    %v6009 = vpop.xlane.xlu0 %6008
    %v6010 = vsel %vm911, %v5747, -inf
    %6011 = vmax.xlane.f32.xlu0 %v6010
    %v6012 = vpop.xlane.xlu0 %6011
    %v6013 = vsel %vm911, %v5752, -inf
    %6014 = vmax.xlane.f32.xlu0 %v6013
    %v6015 = vpop.xlane.xlu0 %6014
    %v6016 = vsel %vm911, %v5828, -inf
    %6017 = vmax.xlane.f32.xlu0 %v6016
    %v6018 = vpop.xlane.xlu0 %6017
    %v6019 = vsel %vm911, %v5833, -inf
    %6020 = vmax.xlane.f32.xlu0 %v6019
    %v6021 = vpop.xlane.xlu0 %6020
    %v6022 = vsel %vm911, %v5909, -inf
    %6023 = vmax.xlane.f32.xlu0 %v6022
    %v6024 = vpop.xlane.xlu0 %6023
    %v6025 = vsel %vm911, %v5914, -inf
    %6026 = vmax.xlane.f32.xlu0 %v6025
    %v6027 = vpop.xlane.xlu0 %6026
    %v6028 = vsel %vm911, %v5990, -inf
    %6029 = vmax.xlane.f32.xlu0 %v6028
    %v6030 = vpop.xlane.xlu0 %6029
    %v6031 = vsel %vm911, %v5995, -inf
    %6032 = vmax.xlane.f32.xlu0 %v6031
    %v6033 = vpop.xlane.xlu0 %6032
    %v6034 = vsub.f32 %v5585, %v6000
    %v6035 = vsub.f32 %v5590, %v6003
    %v6036 = vsub.f32 %v5666, %v6006
    %v6037 = vsub.f32 %v5671, %v6009
    %v6038 = vsub.f32 %v5747, %v6012
    %v6039 = vsub.f32 %v5752, %v6015
    %v6040 = vsub.f32 %v5828, %v6018
    %v6041 = vsub.f32 %v5833, %v6021
    %v6042 = vsub.f32 %v5909, %v6024
    %v6043 = vsub.f32 %v5914, %v6027
    %v6044 = vsub.f32 %v5990, %v6030
    %v6045 = vsub.f32 %v5995, %v6033
    %v6046 = vmul.f32 %v6034, 1.442695
    %v6047 = vpow.pop %v6046
    %v6048 = vmul.f32 %v6035, 1.442695
    %v6049 = vpow.pop %v6048
    %v6050 = vmul.f32 %v6036, 1.442695
    %v6051 = vpow.pop %v6050
    %v6052 = vmul.f32 %v6037, 1.442695
    %v6053 = vpow.pop %v6052
    %v6054 = vmul.f32 %v6038, 1.442695
    %v6055 = vpow.pop %v6054
    %v6056 = vmul.f32 %v6039, 1.442695
    %v6057 = vpow.pop %v6056
    %v6058 = vmul.f32 %v6040, 1.442695
    %v6059 = vpow.pop %v6058
    %v6060 = vmul.f32 %v6041, 1.442695
    %v6061 = vpow.pop %v6060
    %v6062 = vmul.f32 %v6042, 1.442695
    %v6063 = vpow.pop %v6062
    %v6064 = vmul.f32 %v6043, 1.442695
    %v6065 = vpow.pop %v6064
    %v6066 = vmul.f32 %v6044, 1.442695
    %v6067 = vpow.pop %v6066
    %v6068 = vmul.f32 %v6045, 1.442695
    %v6069 = vpow.pop %v6068
    %v6070 = vsel %vm911, %v6047, 0.0
    %6071 = vadd.xlane.f32.xlu0 %v6070
    %v6072 = vpop.xlane.xlu0 %6071
    %v6073 = vsel %vm911, %v6049, 0.0
    %6074 = vadd.xlane.f32.xlu0 %v6073
    %v6075 = vpop.xlane.xlu0 %6074
    %v6076 = vsel %vm911, %v6051, 0.0
    %6077 = vadd.xlane.f32.xlu0 %v6076
    %v6078 = vpop.xlane.xlu0 %6077
    %v6079 = vsel %vm911, %v6053, 0.0
    %6080 = vadd.xlane.f32.xlu0 %v6079
    %v6081 = vpop.xlane.xlu0 %6080
    %v6082 = vsel %vm911, %v6055, 0.0
    %6083 = vadd.xlane.f32.xlu0 %v6082
    %v6084 = vpop.xlane.xlu0 %6083
    %v6085 = vsel %vm911, %v6057, 0.0
    %6086 = vadd.xlane.f32.xlu0 %v6085
    %v6087 = vpop.xlane.xlu0 %6086
    %v6088 = vsel %vm911, %v6059, 0.0
    %6089 = vadd.xlane.f32.xlu0 %v6088
    %v6090 = vpop.xlane.xlu0 %6089
    %v6091 = vsel %vm911, %v6061, 0.0
    %6092 = vadd.xlane.f32.xlu0 %v6091
    %v6093 = vpop.xlane.xlu0 %6092
    %v6094 = vsel %vm911, %v6063, 0.0
    %6095 = vadd.xlane.f32.xlu0 %v6094
    %v6096 = vpop.xlane.xlu0 %6095
    %v6097 = vsel %vm911, %v6065, 0.0
    %6098 = vadd.xlane.f32.xlu0 %v6097
    %v6099 = vpop.xlane.xlu0 %6098
    %v6100 = vsel %vm911, %v6067, 0.0
    %6101 = vadd.xlane.f32.xlu0 %v6100
    %v6102 = vpop.xlane.xlu0 %6101
    %v6103 = vsel %vm911, %v6069, 0.0
    %6104 = vadd.xlane.f32.xlu0 %v6103
    %v6105 = vpop.xlane.xlu0 %6104
    %v6106 = vrcp.pop %v6072
    %v6107 = vrcp.pop %v6075
    %v6108 = vrcp.pop %v6078
    %v6109 = vrcp.pop %v6081
    %v6110 = vrcp.pop %v6084
    %v6111 = vrcp.pop %v6087
    %v6112 = vrcp.pop %v6090
    %v6113 = vrcp.pop %v6093
    %v6114 = vrcp.pop %v6096
    %v6115 = vrcp.pop %v6099
    %v6116 = vrcp.pop %v6102
    %v6117 = vrcp.pop %v6105
    %v6118 = vmul.f32 %v6047, %v6106
    %v6119 = vmul.f32 %v6049, %v6107
    %v6120 = vmul.f32 %v6051, %v6108
    %v6121 = vmul.f32 %v6053, %v6109
    %v6122 = vmul.f32 %v6055, %v6110
    %v6123 = vmul.f32 %v6057, %v6111
    %v6124 = vmul.f32 %v6059, %v6112
    %v6125 = vmul.f32 %v6061, %v6113
    %v6126 = vmul.f32 %v6063, %v6114
    %v6127 = vmul.f32 %v6065, %v6115
    %v6128 = vmul.f32 %v6067, %v6116
    %v6129 = vmul.f32 %v6069, %v6117
    %v6131 = vsel %vm911, %v6118, 0
    %v6134 = vsel %vm911, %v6119, 0
    %6136 = vmatprep.subr.mxu0 0.0
    %6137 = vmatpush1.msra.mxu0 %v5494
    %6138 = vmatprep.subr.mxu0 0.0
    %6139 = vmatpush1.msra.mxu0 %v5495
    %6140 = vmatprep.subr.mxu0 0.0
    %6141 = vmatpush1.msra.mxu0 0.0
    %6142 = vmatprep.subr.mxu0 0.0
    %6143 = vmatpush1.msra.mxu0 0.0
    %6144 = vmatprep.subr.mxu0 0.0
    %6145 = vmatpush1.msra.mxu0 0.0
    %6146 = vmatprep.subr.mxu0 0.0
    %6147 = vmatpush1.msra.mxu0 0.0
    %6148 = vmatprep.subr.mxu0 0.0
    %6149 = vmatpush1.msra.mxu0 0.0
    %6150 = vmatprep.subr.mxu0 0.0
    %6151 = vmatpush1.msra.mxu0 0.0
    %6152 = vmatprep.subr.mxu0 0.0
    %6153 = vmatpush1.msra.mxu0 0.0
    %6154 = vmatprep.subr.mxu0 0.0
    %6155 = vmatpush1.msra.mxu0 0.0
    %6156 = vmatprep.subr.mxu0 0.0
    %6157 = vmatpush1.msra.mxu0 0.0
    %6158 = vmatprep.subr.mxu0 0.0
    %6159 = vmatpush1.msra.mxu0 0.0
    %6160 = vmatprep.subr.mxu0 0.0
    %6161 = vmatpush1.msra.mxu0 0.0
    %6162 = vmatprep.subr.mxu0 0.0
    %6163 = vmatpush1.msra.mxu0 0.0
    %6164 = vmatprep.subr.mxu0 0.0
    %6165 = vmatpush1.msra.mxu0 0.0
    %6166 = vmatprep.subr.mxu0 0.0
    %6167 = vmatpush1.msra.mxu0 0.0
    %6168 = vmatprep.subr.mxu0 0.0
    %6169 = vmatpush1.msra.mxu0 0.0
    %6170 = vmatprep.subr.mxu0 0.0
    %6171 = vmatpush1.msra.mxu0 0.0
    %6172 = vmatprep.subr.mxu0 0.0
    %6173 = vmatpush1.msra.mxu0 0.0
    %6174 = vmatprep.subr.mxu0 0.0
    %6175 = vmatpush1.msra.mxu0 0.0
    %6176 = vmatprep.subr.mxu0 0.0
    %6177 = vmatpush1.msra.mxu0 0.0
    %6178 = vmatprep.subr.mxu0 0.0
    %6179 = vmatpush1.msra.mxu0 0.0
    %6180 = vmatprep.subr.mxu0 0.0
    %6181 = vmatpush1.msra.mxu0 0.0
    %6182 = vmatprep.subr.mxu0 0.0
    %6183 = vmatpush1.msra.mxu0 0.0
    %6184 = vmatprep.subr.mxu0 0.0
    %6185 = vmatpush1.msra.mxu0 0.0
    %6186 = vmatprep.subr.mxu0 0.0
    %6187 = vmatpush1.msra.mxu0 0.0
    %6188 = vmatprep.subr.mxu0 0.0
    %6189 = vmatpush1.msra.mxu0 0.0
    %6190 = vmatprep.subr.mxu0 0.0
    %6191 = vmatpush1.msra.mxu0 0.0
    %6192 = vmatprep.subr.mxu0 0.0
    %6193 = vmatpush1.msra.mxu0 0.0
    %6194 = vmatprep.subr.mxu0 0.0
    %6195 = vmatpush1.msra.mxu0 0.0
    %6196 = vmatprep.subr.mxu0 0.0
    %6197 = vmatpush1.msra.mxu0 0.0
    %6198 = vmatprep.subr.mxu0 0.0
    %6199 = vmatpush1.msra.mxu0 0.0
    %6200 = vmatprep.mubr.f32.mxu0 0.0
    %6201 = vmatmul.mubr.f32.gmra.mrb[0].mxu0 %v6131
    %v6202 = vpop.f32.mrb[0].mxu0
    %v6203 = vadd.f32 0.0, %v6202
    %v6204 = vpop.f32.mrb[0].mxu0
    %6205 = vmatprep.mubr.f32.mxu0 0.0
    %6206 = vmatmul.mubr.f32.gmra.mrb[0].mxu0 %v6134
    %v6207 = vpop.f32.mrb[0].mxu0
    %v6208 = vadd.f32 0.0, %v6207
    %v6209 = vpop.f32.mrb[0].mxu0
    %6210 = vdwg.mxu0
    %v6212 = vsel %vm911, %v6120, 0
    %v6215 = vsel %vm911, %v6121, 0
    %6217 = vmatprep.subr.mxu0 0.0
    %6218 = vmatpush1.msra.mxu0 %v5496
    %6219 = vmatprep.subr.mxu0 0.0
    %6220 = vmatpush1.msra.mxu0 %v5497
    %6221 = vmatprep.subr.mxu0 0.0
    %6222 = vmatpush1.msra.mxu0 0.0
    %6223 = vmatprep.subr.mxu0 0.0
    %6224 = vmatpush1.msra.mxu0 0.0
    %6225 = vmatprep.subr.mxu0 0.0
    %6226 = vmatpush1.msra.mxu0 0.0
    %6227 = vmatprep.subr.mxu0 0.0
    %6228 = vmatpush1.msra.mxu0 0.0
    %6229 = vmatprep.subr.mxu0 0.0
    %6230 = vmatpush1.msra.mxu0 0.0
    %6231 = vmatprep.subr.mxu0 0.0
    %6232 = vmatpush1.msra.mxu0 0.0
    %6233 = vmatprep.subr.mxu0 0.0
    %6234 = vmatpush1.msra.mxu0 0.0
    %6235 = vmatprep.subr.mxu0 0.0
    %6236 = vmatpush1.msra.mxu0 0.0
    %6237 = vmatprep.subr.mxu0 0.0
    %6238 = vmatpush1.msra.mxu0 0.0
    %6239 = vmatprep.subr.mxu0 0.0
    %6240 = vmatpush1.msra.mxu0 0.0
    %6241 = vmatprep.subr.mxu0 0.0
    %6242 = vmatpush1.msra.mxu0 0.0
    %6243 = vmatprep.subr.mxu0 0.0
    %6244 = vmatpush1.msra.mxu0 0.0
    %6245 = vmatprep.subr.mxu0 0.0
    %6246 = vmatpush1.msra.mxu0 0.0
    %6247 = vmatprep.subr.mxu0 0.0
    %6248 = vmatpush1.msra.mxu0 0.0
    %6249 = vmatprep.subr.mxu0 0.0
    %6250 = vmatpush1.msra.mxu0 0.0
    %6251 = vmatprep.subr.mxu0 0.0
    %6252 = vmatpush1.msra.mxu0 0.0
    %6253 = vmatprep.subr.mxu0 0.0
    %6254 = vmatpush1.msra.mxu0 0.0
    %6255 = vmatprep.subr.mxu0 0.0
    %6256 = vmatpush1.msra.mxu0 0.0
    %6257 = vmatprep.subr.mxu0 0.0
    %6258 = vmatpush1.msra.mxu0 0.0
    %6259 = vmatprep.subr.mxu0 0.0
    %6260 = vmatpush1.msra.mxu0 0.0
    %6261 = vmatprep.subr.mxu0 0.0
    %6262 = vmatpush1.msra.mxu0 0.0
    %6263 = vmatprep.subr.mxu0 0.0
    %6264 = vmatpush1.msra.mxu0 0.0
    %6265 = vmatprep.subr.mxu0 0.0
    %6266 = vmatpush1.msra.mxu0 0.0
    %6267 = vmatprep.subr.mxu0 0.0
    %6268 = vmatpush1.msra.mxu0 0.0
    %6269 = vmatprep.subr.mxu0 0.0
    %6270 = vmatpush1.msra.mxu0 0.0
    %6271 = vmatprep.subr.mxu0 0.0
    %6272 = vmatpush1.msra.mxu0 0.0
    %6273 = vmatprep.subr.mxu0 0.0
    %6274 = vmatpush1.msra.mxu0 0.0
    %6275 = vmatprep.subr.mxu0 0.0
    %6276 = vmatpush1.msra.mxu0 0.0
    %6277 = vmatprep.subr.mxu0 0.0
    %6278 = vmatpush1.msra.mxu0 0.0
    %6279 = vmatprep.subr.mxu0 0.0
    %6280 = vmatpush1.msra.mxu0 0.0
    %6281 = vmatprep.mubr.f32.mxu0 0.0
    %6282 = vmatmul.mubr.f32.gmra.mrb[0].mxu0 %v6212
    %v6283 = vpop.f32.mrb[0].mxu0
    %v6284 = vadd.f32 0.0, %v6283
    %v6285 = vpop.f32.mrb[0].mxu0
    %6286 = vmatprep.mubr.f32.mxu0 0.0
    %6287 = vmatmul.mubr.f32.gmra.mrb[0].mxu0 %v6215
    %v6288 = vpop.f32.mrb[0].mxu0
    %v6289 = vadd.f32 0.0, %v6288
    %v6290 = vpop.f32.mrb[0].mxu0
    %6291 = vdwg.mxu0
    %v6293 = vsel %vm911, %v6122, 0
    %v6296 = vsel %vm911, %v6123, 0
    %6298 = vmatprep.subr.mxu0 0.0
    %6299 = vmatpush1.msra.mxu0 %v5498
    %6300 = vmatprep.subr.mxu0 0.0
    %6301 = vmatpush1.msra.mxu0 %v5499
    %6302 = vmatprep.subr.mxu0 0.0
    %6303 = vmatpush1.msra.mxu0 0.0
    %6304 = vmatprep.subr.mxu0 0.0
    %6305 = vmatpush1.msra.mxu0 0.0
    %6306 = vmatprep.subr.mxu0 0.0
    %6307 = vmatpush1.msra.mxu0 0.0
    %6308 = vmatprep.subr.mxu0 0.0
    %6309 = vmatpush1.msra.mxu0 0.0
    %6310 = vmatprep.subr.mxu0 0.0
    %6311 = vmatpush1.msra.mxu0 0.0
    %6312 = vmatprep.subr.mxu0 0.0
    %6313 = vmatpush1.msra.mxu0 0.0
    %6314 = vmatprep.subr.mxu0 0.0
    %6315 = vmatpush1.msra.mxu0 0.0
    %6316 = vmatprep.subr.mxu0 0.0
    %6317 = vmatpush1.msra.mxu0 0.0
    %6318 = vmatprep.subr.mxu0 0.0
    %6319 = vmatpush1.msra.mxu0 0.0
    %6320 = vmatprep.subr.mxu0 0.0
    %6321 = vmatpush1.msra.mxu0 0.0
    %6322 = vmatprep.subr.mxu0 0.0
    %6323 = vmatpush1.msra.mxu0 0.0
    %6324 = vmatprep.subr.mxu0 0.0
    %6325 = vmatpush1.msra.mxu0 0.0
    %6326 = vmatprep.subr.mxu0 0.0
    %6327 = vmatpush1.msra.mxu0 0.0
    %6328 = vmatprep.subr.mxu0 0.0
    %6329 = vmatpush1.msra.mxu0 0.0
    %6330 = vmatprep.subr.mxu0 0.0
    %6331 = vmatpush1.msra.mxu0 0.0
    %6332 = vmatprep.subr.mxu0 0.0
    %6333 = vmatpush1.msra.mxu0 0.0
    %6334 = vmatprep.subr.mxu0 0.0
    %6335 = vmatpush1.msra.mxu0 0.0
    %6336 = vmatprep.subr.mxu0 0.0
    %6337 = vmatpush1.msra.mxu0 0.0
    %6338 = vmatprep.subr.mxu0 0.0
    %6339 = vmatpush1.msra.mxu0 0.0
    %6340 = vmatprep.subr.mxu0 0.0
    %6341 = vmatpush1.msra.mxu0 0.0
    %6342 = vmatprep.subr.mxu0 0.0
    %6343 = vmatpush1.msra.mxu0 0.0
    %6344 = vmatprep.subr.mxu0 0.0
    %6345 = vmatpush1.msra.mxu0 0.0
    %6346 = vmatprep.subr.mxu0 0.0
    %6347 = vmatpush1.msra.mxu0 0.0
    %6348 = vmatprep.subr.mxu0 0.0
    %6349 = vmatpush1.msra.mxu0 0.0
    %6350 = vmatprep.subr.mxu0 0.0
    %6351 = vmatpush1.msra.mxu0 0.0
    %6352 = vmatprep.subr.mxu0 0.0
    %6353 = vmatpush1.msra.mxu0 0.0
    %6354 = vmatprep.subr.mxu0 0.0
    %6355 = vmatpush1.msra.mxu0 0.0
    %6356 = vmatprep.subr.mxu0 0.0
    %6357 = vmatpush1.msra.mxu0 0.0
    %6358 = vmatprep.subr.mxu0 0.0
    %6359 = vmatpush1.msra.mxu0 0.0
    %6360 = vmatprep.subr.mxu0 0.0
    %6361 = vmatpush1.msra.mxu0 0.0
    %6362 = vmatprep.mubr.f32.mxu0 0.0
    %6363 = vmatmul.mubr.f32.gmra.mrb[0].mxu0 %v6293
    %v6364 = vpop.f32.mrb[0].mxu0
    %v6365 = vadd.f32 0.0, %v6364
    %v6366 = vpop.f32.mrb[0].mxu0
    %6367 = vmatprep.mubr.f32.mxu0 0.0
    %6368 = vmatmul.mubr.f32.gmra.mrb[0].mxu0 %v6296
    %v6369 = vpop.f32.mrb[0].mxu0
    %v6370 = vadd.f32 0.0, %v6369
    %v6371 = vpop.f32.mrb[0].mxu0
    %6372 = vdwg.mxu0
    %v6374 = vsel %vm911, %v6124, 0
    %v6377 = vsel %vm911, %v6125, 0
    %6379 = vmatprep.subr.mxu0 0.0
    %6380 = vmatpush1.msra.mxu0 %v5500
    %6381 = vmatprep.subr.mxu0 0.0
    %6382 = vmatpush1.msra.mxu0 %v5501
    %6383 = vmatprep.subr.mxu0 0.0
    %6384 = vmatpush1.msra.mxu0 0.0
    %6385 = vmatprep.subr.mxu0 0.0
    %6386 = vmatpush1.msra.mxu0 0.0
    %6387 = vmatprep.subr.mxu0 0.0
    %6388 = vmatpush1.msra.mxu0 0.0
    %6389 = vmatprep.subr.mxu0 0.0
    %6390 = vmatpush1.msra.mxu0 0.0
    %6391 = vmatprep.subr.mxu0 0.0
    %6392 = vmatpush1.msra.mxu0 0.0
    %6393 = vmatprep.subr.mxu0 0.0
    %6394 = vmatpush1.msra.mxu0 0.0
    %6395 = vmatprep.subr.mxu0 0.0
    %6396 = vmatpush1.msra.mxu0 0.0
    %6397 = vmatprep.subr.mxu0 0.0
    %6398 = vmatpush1.msra.mxu0 0.0
    %6399 = vmatprep.subr.mxu0 0.0
    %6400 = vmatpush1.msra.mxu0 0.0
    %6401 = vmatprep.subr.mxu0 0.0
    %6402 = vmatpush1.msra.mxu0 0.0
    %6403 = vmatprep.subr.mxu0 0.0
    %6404 = vmatpush1.msra.mxu0 0.0
    %6405 = vmatprep.subr.mxu0 0.0
    %6406 = vmatpush1.msra.mxu0 0.0
    %6407 = vmatprep.subr.mxu0 0.0
    %6408 = vmatpush1.msra.mxu0 0.0
    %6409 = vmatprep.subr.mxu0 0.0
    %6410 = vmatpush1.msra.mxu0 0.0
    %6411 = vmatprep.subr.mxu0 0.0
    %6412 = vmatpush1.msra.mxu0 0.0
    %6413 = vmatprep.subr.mxu0 0.0
    %6414 = vmatpush1.msra.mxu0 0.0
    %6415 = vmatprep.subr.mxu0 0.0
    %6416 = vmatpush1.msra.mxu0 0.0
    %6417 = vmatprep.subr.mxu0 0.0
    %6418 = vmatpush1.msra.mxu0 0.0
    %6419 = vmatprep.subr.mxu0 0.0
    %6420 = vmatpush1.msra.mxu0 0.0
    %6421 = vmatprep.subr.mxu0 0.0
    %6422 = vmatpush1.msra.mxu0 0.0
    %6423 = vmatprep.subr.mxu0 0.0
    %6424 = vmatpush1.msra.mxu0 0.0
    %6425 = vmatprep.subr.mxu0 0.0
    %6426 = vmatpush1.msra.mxu0 0.0
    %6427 = vmatprep.subr.mxu0 0.0
    %6428 = vmatpush1.msra.mxu0 0.0
    %6429 = vmatprep.subr.mxu0 0.0
    %6430 = vmatpush1.msra.mxu0 0.0
    %6431 = vmatprep.subr.mxu0 0.0
    %6432 = vmatpush1.msra.mxu0 0.0
    %6433 = vmatprep.subr.mxu0 0.0
    %6434 = vmatpush1.msra.mxu0 0.0
    %6435 = vmatprep.subr.mxu0 0.0
    %6436 = vmatpush1.msra.mxu0 0.0
    %6437 = vmatprep.subr.mxu0 0.0
    %6438 = vmatpush1.msra.mxu0 0.0
    %6439 = vmatprep.subr.mxu0 0.0
    %6440 = vmatpush1.msra.mxu0 0.0
    %6441 = vmatprep.subr.mxu0 0.0
    %6442 = vmatpush1.msra.mxu0 0.0
    %6443 = vmatprep.mubr.f32.mxu0 0.0
    %6444 = vmatmul.mubr.f32.gmra.mrb[0].mxu0 %v6374
    %v6445 = vpop.f32.mrb[0].mxu0
    %v6446 = vadd.f32 0.0, %v6445
    %v6447 = vpop.f32.mrb[0].mxu0
    %6448 = vmatprep.mubr.f32.mxu0 0.0
    %6449 = vmatmul.mubr.f32.gmra.mrb[0].mxu0 %v6377
    %v6450 = vpop.f32.mrb[0].mxu0
    %v6451 = vadd.f32 0.0, %v6450
    %v6452 = vpop.f32.mrb[0].mxu0
    %6453 = vdwg.mxu0
    %v6455 = vsel %vm911, %v6126, 0
    %v6458 = vsel %vm911, %v6127, 0
    %6460 = vmatprep.subr.mxu0 0.0
    %6461 = vmatpush1.msra.mxu0 %v5502
    %6462 = vmatprep.subr.mxu0 0.0
    %6463 = vmatpush1.msra.mxu0 %v5503
    %6464 = vmatprep.subr.mxu0 0.0
    %6465 = vmatpush1.msra.mxu0 0.0
    %6466 = vmatprep.subr.mxu0 0.0
    %6467 = vmatpush1.msra.mxu0 0.0
    %6468 = vmatprep.subr.mxu0 0.0
    %6469 = vmatpush1.msra.mxu0 0.0
    %6470 = vmatprep.subr.mxu0 0.0
    %6471 = vmatpush1.msra.mxu0 0.0
    %6472 = vmatprep.subr.mxu0 0.0
    %6473 = vmatpush1.msra.mxu0 0.0
    %6474 = vmatprep.subr.mxu0 0.0
    %6475 = vmatpush1.msra.mxu0 0.0
    %6476 = vmatprep.subr.mxu0 0.0
    %6477 = vmatpush1.msra.mxu0 0.0
    %6478 = vmatprep.subr.mxu0 0.0
    %6479 = vmatpush1.msra.mxu0 0.0
    %6480 = vmatprep.subr.mxu0 0.0
    %6481 = vmatpush1.msra.mxu0 0.0
    %6482 = vmatprep.subr.mxu0 0.0
    %6483 = vmatpush1.msra.mxu0 0.0
    %6484 = vmatprep.subr.mxu0 0.0
    %6485 = vmatpush1.msra.mxu0 0.0
    %6486 = vmatprep.subr.mxu0 0.0
    %6487 = vmatpush1.msra.mxu0 0.0
    %6488 = vmatprep.subr.mxu0 0.0
    %6489 = vmatpush1.msra.mxu0 0.0
    %6490 = vmatprep.subr.mxu0 0.0
    %6491 = vmatpush1.msra.mxu0 0.0
    %6492 = vmatprep.subr.mxu0 0.0
    %6493 = vmatpush1.msra.mxu0 0.0
    %6494 = vmatprep.subr.mxu0 0.0
    %6495 = vmatpush1.msra.mxu0 0.0
    %6496 = vmatprep.subr.mxu0 0.0
    %6497 = vmatpush1.msra.mxu0 0.0
    %6498 = vmatprep.subr.mxu0 0.0
    %6499 = vmatpush1.msra.mxu0 0.0
    %6500 = vmatprep.subr.mxu0 0.0
    %6501 = vmatpush1.msra.mxu0 0.0
    %6502 = vmatprep.subr.mxu0 0.0
    %6503 = vmatpush1.msra.mxu0 0.0
    %6504 = vmatprep.subr.mxu0 0.0
    %6505 = vmatpush1.msra.mxu0 0.0
    %6506 = vmatprep.subr.mxu0 0.0
    %6507 = vmatpush1.msra.mxu0 0.0
    %6508 = vmatprep.subr.mxu0 0.0
    %6509 = vmatpush1.msra.mxu0 0.0
    %6510 = vmatprep.subr.mxu0 0.0
    %6511 = vmatpush1.msra.mxu0 0.0
    %6512 = vmatprep.subr.mxu0 0.0
    %6513 = vmatpush1.msra.mxu0 0.0
    %6514 = vmatprep.subr.mxu0 0.0
    %6515 = vmatpush1.msra.mxu0 0.0
    %6516 = vmatprep.subr.mxu0 0.0
    %6517 = vmatpush1.msra.mxu0 0.0
    %6518 = vmatprep.subr.mxu0 0.0
    %6519 = vmatpush1.msra.mxu0 0.0
    %6520 = vmatprep.subr.mxu0 0.0
    %6521 = vmatpush1.msra.mxu0 0.0
    %6522 = vmatprep.subr.mxu0 0.0
    %6523 = vmatpush1.msra.mxu0 0.0
    %6524 = vmatprep.mubr.f32.mxu0 0.0
    %6525 = vmatmul.mubr.f32.gmra.mrb[0].mxu0 %v6455
    %v6526 = vpop.f32.mrb[0].mxu0
    %v6527 = vadd.f32 0.0, %v6526
    %v6528 = vpop.f32.mrb[0].mxu0
    %6529 = vmatprep.mubr.f32.mxu0 0.0
    %6530 = vmatmul.mubr.f32.gmra.mrb[0].mxu0 %v6458
    %v6531 = vpop.f32.mrb[0].mxu0
    %v6532 = vadd.f32 0.0, %v6531
    %v6533 = vpop.f32.mrb[0].mxu0
    %6534 = vdwg.mxu0
    %v6536 = vsel %vm911, %v6128, 0
    %v6539 = vsel %vm911, %v6129, 0
    %6541 = vmatprep.subr.mxu0 0.0
    %6542 = vmatpush1.msra.mxu0 %v5504
    %6543 = vmatprep.subr.mxu0 0.0
    %6544 = vmatpush1.msra.mxu0 %v5505
    %6545 = vmatprep.subr.mxu0 0.0
    %6546 = vmatpush1.msra.mxu0 0.0
    %6547 = vmatprep.subr.mxu0 0.0
    %6548 = vmatpush1.msra.mxu0 0.0
    %6549 = vmatprep.subr.mxu0 0.0
    %6550 = vmatpush1.msra.mxu0 0.0
    %6551 = vmatprep.subr.mxu0 0.0
    %6552 = vmatpush1.msra.mxu0 0.0
    %6553 = vmatprep.subr.mxu0 0.0
    %6554 = vmatpush1.msra.mxu0 0.0
    %6555 = vmatprep.subr.mxu0 0.0
    %6556 = vmatpush1.msra.mxu0 0.0
    %6557 = vmatprep.subr.mxu0 0.0
    %6558 = vmatpush1.msra.mxu0 0.0
    %6559 = vmatprep.subr.mxu0 0.0
    %6560 = vmatpush1.msra.mxu0 0.0
    %6561 = vmatprep.subr.mxu0 0.0
    %6562 = vmatpush1.msra.mxu0 0.0
    %6563 = vmatprep.subr.mxu0 0.0
    %6564 = vmatpush1.msra.mxu0 0.0
    %6565 = vmatprep.subr.mxu0 0.0
    %6566 = vmatpush1.msra.mxu0 0.0
    %6567 = vmatprep.subr.mxu0 0.0
    %6568 = vmatpush1.msra.mxu0 0.0
    %6569 = vmatprep.subr.mxu0 0.0
    %6570 = vmatpush1.msra.mxu0 0.0
    %6571 = vmatprep.subr.mxu0 0.0
    %6572 = vmatpush1.msra.mxu0 0.0
    %6573 = vmatprep.subr.mxu0 0.0
    %6574 = vmatpush1.msra.mxu0 0.0
    %6575 = vmatprep.subr.mxu0 0.0
    %6576 = vmatpush1.msra.mxu0 0.0
    %6577 = vmatprep.subr.mxu0 0.0
    %6578 = vmatpush1.msra.mxu0 0.0
    %6579 = vmatprep.subr.mxu0 0.0
    %6580 = vmatpush1.msra.mxu0 0.0
    %6581 = vmatprep.subr.mxu0 0.0
    %6582 = vmatpush1.msra.mxu0 0.0
    %6583 = vmatprep.subr.mxu0 0.0
    %6584 = vmatpush1.msra.mxu0 0.0
    %6585 = vmatprep.subr.mxu0 0.0
    %6586 = vmatpush1.msra.mxu0 0.0
    %6587 = vmatprep.subr.mxu0 0.0
    %6588 = vmatpush1.msra.mxu0 0.0
    %6589 = vmatprep.subr.mxu0 0.0
    %6590 = vmatpush1.msra.mxu0 0.0
    %6591 = vmatprep.subr.mxu0 0.0
    %6592 = vmatpush1.msra.mxu0 0.0
    %6593 = vmatprep.subr.mxu0 0.0
    %6594 = vmatpush1.msra.mxu0 0.0
    %6595 = vmatprep.subr.mxu0 0.0
    %6596 = vmatpush1.msra.mxu0 0.0
    %6597 = vmatprep.subr.mxu0 0.0
    %6598 = vmatpush1.msra.mxu0 0.0
    %6599 = vmatprep.subr.mxu0 0.0
    %6600 = vmatpush1.msra.mxu0 0.0
    %6601 = vmatprep.subr.mxu0 0.0
    %6602 = vmatpush1.msra.mxu0 0.0
    %6603 = vmatprep.subr.mxu0 0.0
    %6604 = vmatpush1.msra.mxu0 0.0
    %6605 = vmatprep.mubr.f32.mxu0 0.0
    %6606 = vmatmul.mubr.f32.gmra.mrb[0].mxu0 %v6536
    %v6607 = vpop.f32.mrb[0].mxu0
    %v6608 = vadd.f32 0.0, %v6607
    %v6609 = vpop.f32.mrb[0].mxu0
    %6610 = vmatprep.mubr.f32.mxu0 0.0
    %6611 = vmatmul.mubr.f32.gmra.mrb[0].mxu0 %v6539
    %v6612 = vpop.f32.mrb[0].mxu0
    %v6613 = vadd.f32 0.0, %v6612
    %v6614 = vpop.f32.mrb[0].mxu0
    %6615 = vdwg.mxu0
    %v6616 = vsel %vm157, %v6203, 0.0
    %v6617 = vsel %vm157, %v6284, 0.0
    %v6618 = vadd.f32 %v6616, %v6617
    %v6619 = vsel %vm157, %v6365, 0.0
    %v6620 = vadd.f32 %v6618, %v6619
    %v6621 = vsel %vm157, %v6446, 0.0
    %v6622 = vadd.f32 %v6620, %v6621
    %v6623 = vsel %vm157, %v6527, 0.0
    %v6624 = vadd.f32 %v6622, %v6623
    %v6625 = vsel %vm157, %v6608, 0.0
    %v6626 = vadd.f32 %v6624, %v6625
    %v6627 = vsel %vm157, %v6208, 0.0
    %v6628 = vsel %vm157, %v6289, 0.0
    %v6629 = vadd.f32 %v6627, %v6628
    %v6630 = vsel %vm157, %v6370, 0.0
    %v6631 = vadd.f32 %v6629, %v6630
    %v6632 = vsel %vm157, %v6451, 0.0
    %v6633 = vadd.f32 %v6631, %v6632
    %v6634 = vsel %vm157, %v6532, 0.0
    %v6635 = vadd.f32 %v6633, %v6634
    %v6636 = vsel %vm157, %v6613, 0.0
    %v6637 = vadd.f32 %v6635, %v6636
    %s6638 = scalar_lea.vmem %s7, 192
    %v6639 = vld [vmem:[%s6638] sm:$0xff]
    %v6640 = vld [vmem:[%s6638 + $0x8] sm:$0xff]
    %v6641 = vld [vmem:[%s6638 + $0x10] sm:$0xff]
    %v6642 = vld [vmem:[%s6638 + $0x18] sm:$0xff]
    %v6643 = vld [vmem:[%s6638 + $0x20] sm:$0xff]
    %v6644 = vld [vmem:[%s6638 + $0x28] sm:$0xff]
    %v6645 = vld [vmem:[%s6638 + $0x30] sm:$0xff]
    %v6646 = vld [vmem:[%s6638 + $0x38] sm:$0xff]
    %s6647 = scalar_lea.vmem %s8, 3
    %v6648 = vld [vmem:[%s6647] sm:$0x1]
    %v6650 = vlaneseq
    %v6651 = vshrl.u32 %v6650, 7
    %v6652 = vsub.s32 0, %v6651
    %v6653 = vrot.slane %v6648, %v6652
    %v6656 = vsel %vm157, %v6626, 0
    %v6659 = vsel %vm157, %v6637, 0
    %6661 = vmatprep.subr.mxu0 0.0
    %6662 = vmatpush1.msra.mxu0 %v6639
    %6663 = vmatprep.subr.mxu0 0.0
    %6664 = vmatpush1.msra.mxu0 %v6640
    %6665 = vmatprep.subr.mxu0 0.0
    %6666 = vmatpush1.msra.mxu0 %v6641
    %6667 = vmatprep.subr.mxu0 0.0
    %6668 = vmatpush1.msra.mxu0 %v6642
    %6669 = vmatprep.subr.mxu0 0.0
    %6670 = vmatpush1.msra.mxu0 %v6643
    %6671 = vmatprep.subr.mxu0 0.0
    %6672 = vmatpush1.msra.mxu0 %v6644
    %6673 = vmatprep.subr.mxu0 0.0
    %6674 = vmatpush1.msra.mxu0 %v6645
    %6675 = vmatprep.subr.mxu0 0.0
    %6676 = vmatpush1.msra.mxu0 %v6646
    %6677 = vmatprep.subr.mxu0 0.0
    %6678 = vmatpush1.msra.mxu0 0.0
    %6679 = vmatprep.subr.mxu0 0.0
    %6680 = vmatpush1.msra.mxu0 0.0
    %6681 = vmatprep.subr.mxu0 0.0
    %6682 = vmatpush1.msra.mxu0 0.0
    %6683 = vmatprep.subr.mxu0 0.0
    %6684 = vmatpush1.msra.mxu0 0.0
    %6685 = vmatprep.subr.mxu0 0.0
    %6686 = vmatpush1.msra.mxu0 0.0
    %6687 = vmatprep.subr.mxu0 0.0
    %6688 = vmatpush1.msra.mxu0 0.0
    %6689 = vmatprep.subr.mxu0 0.0
    %6690 = vmatpush1.msra.mxu0 0.0
    %6691 = vmatprep.subr.mxu0 0.0
    %6692 = vmatpush1.msra.mxu0 0.0
    %6693 = vmatprep.subr.mxu0 0.0
    %6694 = vmatpush1.msra.mxu0 0.0
    %6695 = vmatprep.subr.mxu0 0.0
    %6696 = vmatpush1.msra.mxu0 0.0
    %6697 = vmatprep.subr.mxu0 0.0
    %6698 = vmatpush1.msra.mxu0 0.0
    %6699 = vmatprep.subr.mxu0 0.0
    %6700 = vmatpush1.msra.mxu0 0.0
    %6701 = vmatprep.subr.mxu0 0.0
    %6702 = vmatpush1.msra.mxu0 0.0
    %6703 = vmatprep.subr.mxu0 0.0
    %6704 = vmatpush1.msra.mxu0 0.0
    %6705 = vmatprep.subr.mxu0 0.0
    %6706 = vmatpush1.msra.mxu0 0.0
    %6707 = vmatprep.subr.mxu0 0.0
    %6708 = vmatpush1.msra.mxu0 0.0
    %6709 = vmatprep.subr.mxu0 0.0
    %6710 = vmatpush1.msra.mxu0 0.0
    %6711 = vmatprep.subr.mxu0 0.0
    %6712 = vmatpush1.msra.mxu0 0.0
    %6713 = vmatprep.subr.mxu0 0.0
    %6714 = vmatpush1.msra.mxu0 0.0
    %6715 = vmatprep.subr.mxu0 0.0
    %6716 = vmatpush1.msra.mxu0 0.0
    %6717 = vmatprep.subr.mxu0 0.0
    %6718 = vmatpush1.msra.mxu0 0.0
    %6719 = vmatprep.subr.mxu0 0.0
    %6720 = vmatpush1.msra.mxu0 0.0
    %6721 = vmatprep.subr.mxu0 0.0
    %6722 = vmatpush1.msra.mxu0 0.0
    %6723 = vmatprep.subr.mxu0 0.0
    %6724 = vmatpush1.msra.mxu0 0.0
    %6725 = vmatprep.mubr.f32.mxu0 0.0
    %6726 = vmatmul.mubr.f32.gmra.mrb[0].mxu0 %v6656
    %v6727 = vpop.f32.mrb[0].mxu0
    %v6728 = vadd.f32 %v6653, %v6727
    %v6729 = vpop.f32.mrb[0].mxu0
    %6730 = vmatprep.mubr.f32.mxu0 0.0
    %6731 = vmatmul.mubr.f32.gmra.mrb[0].mxu0 %v6659
    %v6732 = vpop.f32.mrb[0].mxu0
    %v6733 = vadd.f32 %v6653, %v6732
    %v6734 = vpop.f32.mrb[0].mxu0
    %6735 = vdwg.mxu0
    %v6736 = vadd.f32 %v5199, %v6728
    %v6737 = vadd.f32 %v5200, %v6733
    %s6738 = scalar_lea.vmem %s10, 3
    %v6739 = vld [vmem:[%s6738] sm:$0x1]
    %s6740 = scalar_lea.vmem %s11, 3
    %v6741 = vld [vmem:[%s6740] sm:$0x1]
    %v6742 = vsel %vm157, %v6736, 0.0
    %6743 = vadd.xlane.f32.xlu0 %v6742
    %v6744 = vpop.xlane.xlu0 %6743
    %v6745 = vsel %vm157, %v6737, 0.0
    %6746 = vadd.xlane.f32.xlu0 %v6745
    %v6747 = vpop.xlane.xlu0 %6746
    %v6748 = vmul.f32 %v6744, %v1658
    %v6749 = vmul.f32 %v6747, %v1658
    %v6750 = vsub.f32 %v6736, %v6748
    %v6751 = vsub.f32 %v6737, %v6749
    %v6752 = vmul.f32 %v6750, %v6750
    %v6753 = vmul.f32 %v6751, %v6751
    %v6754 = vsel %vm157, %v6752, 0.0
    %6755 = vadd.xlane.f32.xlu0 %v6754
    %v6756 = vpop.xlane.xlu0 %6755
    %v6757 = vsel %vm157, %v6753, 0.0
    %6758 = vadd.xlane.f32.xlu0 %v6757
    %v6759 = vpop.xlane.xlu0 %6758
    %v6760 = vmul.f32 %v6756, %v1658
    %v6761 = vmul.f32 %v6759, %v1658
    %v6762 = vadd.f32 %v6760, 1e-05
    %v6763 = vadd.f32 %v6761, 1e-05
    %v6764 = vrsqrt.pop %v6762
    %v6765 = vrsqrt.pop %v6763
    %v6766 = vmul.f32 %v6750, %v6764
    %v6767 = vmul.f32 %v6751, %v6765
    %v6769 = vlaneseq
    %v6770 = vshrl.u32 %v6769, 7
    %v6771 = vsub.s32 0, %v6770
    %v6772 = vrot.slane %v6739, %v6771
    %v6774 = vmul.f32 %v6766, %v6772
    %v6775 = vmul.f32 %v6767, %v6772
    %v6777 = vlaneseq
    %v6778 = vshrl.u32 %v6777, 7
    %v6779 = vsub.s32 0, %v6778
    %v6780 = vrot.slane %v6741, %v6779
    %v6782 = vadd.f32 %v6774, %v6780
    %v6783 = vadd.f32 %v6775, %v6780
    %s6784 = scalar_lea.vmem %s12, 64
    %v6785 = vld [vmem:[%s6784] sm:$0xff]
    %v6786 = vld [vmem:[%s6784 + $0x8] sm:$0xff]
    %v6787 = vld [vmem:[%s6784 + $0x10] sm:$0xff]
    %v6788 = vld [vmem:[%s6784 + $0x18] sm:$0xff]
    %v6789 = vld [vmem:[%s6784 + $0x20] sm:$0xff]
    %v6790 = vld [vmem:[%s6784 + $0x28] sm:$0xff]
    %v6791 = vld [vmem:[%s6784 + $0x30] sm:$0xff]
    %v6792 = vld [vmem:[%s6784 + $0x38] sm:$0xff]
    %s6793 = scalar_lea.vmem %s13, 1
    %v6794 = vld [vmem:[%s6793] sm:$0x1]
    %v6796 = vlaneseq
    %v6797 = vshrl.u32 %v6796, 7
    %v6798 = vsub.s32 0, %v6797
    %v6799 = vrot.slane %v6794, %v6798
    %v6802 = vsel %vm157, %v6782, 0
    %v6805 = vsel %vm157, %v6783, 0
    %6807 = vmatprep.subr.mxu0 0.0
    %6808 = vmatpush1.msra.mxu0 %v6785
    %6809 = vmatprep.subr.mxu0 0.0
    %6810 = vmatpush1.msra.mxu0 %v6786
    %6811 = vmatprep.subr.mxu0 0.0
    %6812 = vmatpush1.msra.mxu0 %v6787
    %6813 = vmatprep.subr.mxu0 0.0
    %6814 = vmatpush1.msra.mxu0 %v6788
    %6815 = vmatprep.subr.mxu0 0.0
    %6816 = vmatpush1.msra.mxu0 %v6789
    %6817 = vmatprep.subr.mxu0 0.0
    %6818 = vmatpush1.msra.mxu0 %v6790
    %6819 = vmatprep.subr.mxu0 0.0
    %6820 = vmatpush1.msra.mxu0 %v6791
    %6821 = vmatprep.subr.mxu0 0.0
    %6822 = vmatpush1.msra.mxu0 %v6792
    %6823 = vmatprep.subr.mxu0 0.0
    %6824 = vmatpush1.msra.mxu0 0.0
    %6825 = vmatprep.subr.mxu0 0.0
    %6826 = vmatpush1.msra.mxu0 0.0
    %6827 = vmatprep.subr.mxu0 0.0
    %6828 = vmatpush1.msra.mxu0 0.0
    %6829 = vmatprep.subr.mxu0 0.0
    %6830 = vmatpush1.msra.mxu0 0.0
    %6831 = vmatprep.subr.mxu0 0.0
    %6832 = vmatpush1.msra.mxu0 0.0
    %6833 = vmatprep.subr.mxu0 0.0
    %6834 = vmatpush1.msra.mxu0 0.0
    %6835 = vmatprep.subr.mxu0 0.0
    %6836 = vmatpush1.msra.mxu0 0.0
    %6837 = vmatprep.subr.mxu0 0.0
    %6838 = vmatpush1.msra.mxu0 0.0
    %6839 = vmatprep.subr.mxu0 0.0
    %6840 = vmatpush1.msra.mxu0 0.0
    %6841 = vmatprep.subr.mxu0 0.0
    %6842 = vmatpush1.msra.mxu0 0.0
    %6843 = vmatprep.subr.mxu0 0.0
    %6844 = vmatpush1.msra.mxu0 0.0
    %6845 = vmatprep.subr.mxu0 0.0
    %6846 = vmatpush1.msra.mxu0 0.0
    %6847 = vmatprep.subr.mxu0 0.0
    %6848 = vmatpush1.msra.mxu0 0.0
    %6849 = vmatprep.subr.mxu0 0.0
    %6850 = vmatpush1.msra.mxu0 0.0
    %6851 = vmatprep.subr.mxu0 0.0
    %6852 = vmatpush1.msra.mxu0 0.0
    %6853 = vmatprep.subr.mxu0 0.0
    %6854 = vmatpush1.msra.mxu0 0.0
    %6855 = vmatprep.subr.mxu0 0.0
    %6856 = vmatpush1.msra.mxu0 0.0
    %6857 = vmatprep.subr.mxu0 0.0
    %6858 = vmatpush1.msra.mxu0 0.0
    %6859 = vmatprep.subr.mxu0 0.0
    %6860 = vmatpush1.msra.mxu0 0.0
    %6861 = vmatprep.subr.mxu0 0.0
    %6862 = vmatpush1.msra.mxu0 0.0
    %6863 = vmatprep.subr.mxu0 0.0
    %6864 = vmatpush1.msra.mxu0 0.0
    %6865 = vmatprep.subr.mxu0 0.0
    %6866 = vmatpush1.msra.mxu0 0.0
    %6867 = vmatprep.subr.mxu0 0.0
    %6868 = vmatpush1.msra.mxu0 0.0
    %6869 = vmatprep.subr.mxu0 0.0
    %6870 = vmatpush1.msra.mxu0 0.0
    %6871 = vmatprep.mubr.f32.mxu0 0.0
    %6872 = vmatmul.mubr.f32.gmra.mrb[0].mxu0 %v6802
    %v6873 = vpop.f32.mrb[0].mxu0
    %v6874 = vadd.f32 %v6799, %v6873
    %v6875 = vpop.f32.mrb[0].mxu0
    %6876 = vmatprep.mubr.f32.mxu0 0.0
    %6877 = vmatmul.mubr.f32.gmra.mrb[0].mxu0 %v6805
    %v6878 = vpop.f32.mrb[0].mxu0
    %v6879 = vadd.f32 %v6799, %v6878
    %v6880 = vpop.f32.mrb[0].mxu0
    %6881 = vdwg.mxu0
    %v6882 = vmul.f32 %v6874, 0.5
    %v6883 = vmul.f32 %v6879, 0.5
    %v6884 = vmul.f32 %v6874, 0.70710677
    %v6885 = vmul.f32 %v6879, 0.70710677
    %vm6886 = vcmp.ge.f32.partialorder %v6884, 0.0
    %vm6887 = vcmp.ge.f32.partialorder %v6885, 0.0
    %v6888 = vsel %vm6886, 1.0, -1.0
    %v6889 = vsel %vm6887, 1.0, -1.0
    %v6890 = vand.u32 2147483647, %v6884
    %v6891 = vand.u32 2147483647, %v6885
    %v6892 = vmul.f32 %v6890, 0.3275911
    %v6893 = vmul.f32 %v6891, 0.3275911
    %v6894 = vadd.f32 %v6892, 1.0
    %v6895 = vadd.f32 %v6893, 1.0
    %v6896 = vrcp.pop %v6894
    %v6897 = vmul.f32 1.0, %v6896
    %v6898 = vrcp.pop %v6895
    %v6899 = vmul.f32 1.0, %v6898
    %v6900 = vmul.f32 %v6897, 1.0614054
    %v6901 = vmul.f32 %v6899, 1.0614054
    %v6902 = vadd.f32 %v6900, -1.4531521
    %v6903 = vadd.f32 %v6901, -1.4531521
    %v6904 = vmul.f32 %v6902, %v6897
    %v6905 = vmul.f32 %v6903, %v6899
    %v6906 = vadd.f32 %v6904, 1.4214138
    %v6907 = vadd.f32 %v6905, 1.4214138
    %v6908 = vmul.f32 %v6906, %v6897
    %v6909 = vmul.f32 %v6907, %v6899
    %v6910 = vadd.f32 %v6908, -0.28449672
    %v6911 = vadd.f32 %v6909, -0.28449672
    %v6912 = vmul.f32 %v6910, %v6897
    %v6913 = vmul.f32 %v6911, %v6899
    %v6914 = vadd.f32 %v6912, 0.2548296
    %v6915 = vadd.f32 %v6913, 0.2548296
    %v6916 = vmul.f32 %v6914, %v6897
    %v6917 = vmul.f32 %v6915, %v6899
    %v6918 = vsub.f32 0.0, %v6890
    %v6919 = vsub.f32 0.0, %v6891
    %v6920 = vmul.f32 %v6918, %v6890
    %v6921 = vmul.f32 %v6919, %v6891
    %v6922 = vmul.f32 %v6920, 1.442695
    %v6923 = vpow.pop %v6922
    %v6924 = vmul.f32 %v6921, 1.442695
    %v6925 = vpow.pop %v6924
    %v6926 = vmul.f32 %v6916, %v6923
    %v6927 = vmul.f32 %v6917, %v6925
    %v6928 = vsub.f32 1.0, %v6926
    %v6929 = vsub.f32 1.0, %v6927
    %v6930 = vmul.f32 %v6888, %v6928
    %v6931 = vmul.f32 %v6889, %v6929
    %v6932 = vadd.f32 %v6930, 1.0
    %v6933 = vadd.f32 %v6931, 1.0
    %v6934 = vmul.f32 %v6882, %v6932
    %v6935 = vmul.f32 %v6883, %v6933
    %s6936 = scalar_lea.vmem %s14, 128
    %v6937 = vld [vmem:[%s6936] sm:$0xff]
    %v6938 = vld [vmem:[%s6936 + $0x8] sm:$0xff]
    %v6939 = vld [vmem:[%s6936 + $0x10] sm:$0xff]
    %v6940 = vld [vmem:[%s6936 + $0x18] sm:$0xff]
    %v6941 = vld [vmem:[%s6936 + $0x20] sm:$0xff]
    %v6942 = vld [vmem:[%s6936 + $0x28] sm:$0xff]
    %v6943 = vld [vmem:[%s6936 + $0x30] sm:$0xff]
    %v6944 = vld [vmem:[%s6936 + $0x38] sm:$0xff]
    %v6945 = vld [vmem:[%s6936 + $0x40] sm:$0xff]
    %v6946 = vld [vmem:[%s6936 + $0x48] sm:$0xff]
    %v6947 = vld [vmem:[%s6936 + $0x50] sm:$0xff]
    %v6948 = vld [vmem:[%s6936 + $0x58] sm:$0xff]
    %v6949 = vld [vmem:[%s6936 + $0x60] sm:$0xff]
    %v6950 = vld [vmem:[%s6936 + $0x68] sm:$0xff]
    %v6951 = vld [vmem:[%s6936 + $0x70] sm:$0xff]
    %v6952 = vld [vmem:[%s6936 + $0x78] sm:$0xff]
    %s6953 = scalar_lea.vmem %s15, 1
    %v6954 = vld [vmem:[%s6953] sm:$0x1]
    %v6956 = vlaneseq
    %v6957 = vshrl.u32 %v6956, 7
    %v6958 = vsub.s32 0, %v6957
    %v6959 = vrot.slane %v6954, %v6958
    %6961 = vmatprep.subr.mxu0 0.0
    %6962 = vmatpush1.msra.mxu0 %v6937
    %6963 = vmatprep.subr.mxu0 0.0
    %6964 = vmatpush1.msra.mxu0 %v6938
    %6965 = vmatprep.subr.mxu0 0.0
    %6966 = vmatpush1.msra.mxu0 %v6939
    %6967 = vmatprep.subr.mxu0 0.0
    %6968 = vmatpush1.msra.mxu0 %v6940
    %6969 = vmatprep.subr.mxu0 0.0
    %6970 = vmatpush1.msra.mxu0 %v6941
    %6971 = vmatprep.subr.mxu0 0.0
    %6972 = vmatpush1.msra.mxu0 %v6942
    %6973 = vmatprep.subr.mxu0 0.0
    %6974 = vmatpush1.msra.mxu0 %v6943
    %6975 = vmatprep.subr.mxu0 0.0
    %6976 = vmatpush1.msra.mxu0 %v6944
    %6977 = vmatprep.subr.mxu0 0.0
    %6978 = vmatpush1.msra.mxu0 %v6945
    %6979 = vmatprep.subr.mxu0 0.0
    %6980 = vmatpush1.msra.mxu0 %v6946
    %6981 = vmatprep.subr.mxu0 0.0
    %6982 = vmatpush1.msra.mxu0 %v6947
    %6983 = vmatprep.subr.mxu0 0.0
    %6984 = vmatpush1.msra.mxu0 %v6948
    %6985 = vmatprep.subr.mxu0 0.0
    %6986 = vmatpush1.msra.mxu0 %v6949
    %6987 = vmatprep.subr.mxu0 0.0
    %6988 = vmatpush1.msra.mxu0 %v6950
    %6989 = vmatprep.subr.mxu0 0.0
    %6990 = vmatpush1.msra.mxu0 %v6951
    %6991 = vmatprep.subr.mxu0 0.0
    %6992 = vmatpush1.msra.mxu0 %v6952
    %6993 = vmatprep.subr.mxu0 0.0
    %6994 = vmatpush1.msra.mxu0 0.0
    %6995 = vmatprep.subr.mxu0 0.0
    %6996 = vmatpush1.msra.mxu0 0.0
    %6997 = vmatprep.subr.mxu0 0.0
    %6998 = vmatpush1.msra.mxu0 0.0
    %6999 = vmatprep.subr.mxu0 0.0
    %7000 = vmatpush1.msra.mxu0 0.0
    %7001 = vmatprep.subr.mxu0 0.0
    %7002 = vmatpush1.msra.mxu0 0.0
    %7003 = vmatprep.subr.mxu0 0.0
    %7004 = vmatpush1.msra.mxu0 0.0
    %7005 = vmatprep.subr.mxu0 0.0
    %7006 = vmatpush1.msra.mxu0 0.0
    %7007 = vmatprep.subr.mxu0 0.0
    %7008 = vmatpush1.msra.mxu0 0.0
    %7009 = vmatprep.subr.mxu0 0.0
    %7010 = vmatpush1.msra.mxu0 0.0
    %7011 = vmatprep.subr.mxu0 0.0
    %7012 = vmatpush1.msra.mxu0 0.0
    %7013 = vmatprep.subr.mxu0 0.0
    %7014 = vmatpush1.msra.mxu0 0.0
    %7015 = vmatprep.subr.mxu0 0.0
    %7016 = vmatpush1.msra.mxu0 0.0
    %7017 = vmatprep.subr.mxu0 0.0
    %7018 = vmatpush1.msra.mxu0 0.0
    %7019 = vmatprep.subr.mxu0 0.0
    %7020 = vmatpush1.msra.mxu0 0.0
    %7021 = vmatprep.subr.mxu0 0.0
    %7022 = vmatpush1.msra.mxu0 0.0
    %7023 = vmatprep.subr.mxu0 0.0
    %7024 = vmatpush1.msra.mxu0 0.0
    %7025 = vmatprep.mubr.f32.mxu0 0.0
    %7026 = vmatmul.mubr.f32.gmra.mrb[0].mxu0 %v6934
    %v7027 = vpop.f32.mrb[0].mxu0
    %v7028 = vadd.f32 %v6959, %v7027
    %v7029 = vpop.f32.mrb[0].mxu0
    %7030 = vmatprep.mubr.f32.mxu0 0.0
    %7031 = vmatmul.mubr.f32.gmra.mrb[0].mxu0 %v6935
    %v7032 = vpop.f32.mrb[0].mxu0
    %v7033 = vadd.f32 %v6959, %v7032
    %v7034 = vpop.f32.mrb[0].mxu0
    %7035 = vdwg.mxu0
    %v7036 = vadd.f32 %v7028, %v6782
    %v7037 = vadd.f32 %v7033, %v6783
    %s7038 = scalar_lea.vmem %s16, 1
    %v7039 = vld [vmem:[%s7038] sm:$0x1]
    %s7040 = scalar_lea.vmem %s17, 1
    %v7041 = vld [vmem:[%s7040] sm:$0x1]
    %v7042 = vsel %vm157, %v7036, 0.0
    %7043 = vadd.xlane.f32.xlu0 %v7042
    %v7044 = vpop.xlane.xlu0 %7043
    %v7045 = vsel %vm157, %v7037, 0.0
    %7046 = vadd.xlane.f32.xlu0 %v7045
    %v7047 = vpop.xlane.xlu0 %7046
    %v7048 = vmul.f32 %v7044, %v1658
    %v7049 = vmul.f32 %v7047, %v1658
    %v7050 = vsub.f32 %v7036, %v7048
    %v7051 = vsub.f32 %v7037, %v7049
    %v7052 = vmul.f32 %v7050, %v7050
    %v7053 = vmul.f32 %v7051, %v7051
    %v7054 = vsel %vm157, %v7052, 0.0
    %7055 = vadd.xlane.f32.xlu0 %v7054
    %v7056 = vpop.xlane.xlu0 %7055
    %v7057 = vsel %vm157, %v7053, 0.0
    %7058 = vadd.xlane.f32.xlu0 %v7057
    %v7059 = vpop.xlane.xlu0 %7058
    %v7060 = vmul.f32 %v7056, %v1658
    %v7061 = vmul.f32 %v7059, %v1658
    %v7062 = vadd.f32 %v7060, 1e-05
    %v7063 = vadd.f32 %v7061, 1e-05
    %v7064 = vrsqrt.pop %v7062
    %v7065 = vrsqrt.pop %v7063
    %v7066 = vmul.f32 %v7050, %v7064
    %v7067 = vmul.f32 %v7051, %v7065
    %v7069 = vlaneseq
    %v7070 = vshrl.u32 %v7069, 7
    %v7071 = vsub.s32 0, %v7070
    %v7072 = vrot.slane %v7039, %v7071
    %v7074 = vmul.f32 %v7066, %v7072
    %v7075 = vmul.f32 %v7067, %v7072
    %v7077 = vlaneseq
    %v7078 = vshrl.u32 %v7077, 7
    %v7079 = vsub.s32 0, %v7078
    %v7080 = vrot.slane %v7041, %v7079
    %v7082 = vadd.f32 %v7074, %v7080
    %v7083 = vadd.f32 %v7075, %v7080
    %v7084 = vadd.f32 %v6782, %v7082
    %v7085 = vadd.f32 %v6783, %v7083
    %s7086 = scalar_lea.vmem %s18, 1
    %v7087 = vld [vmem:[%s7086] sm:$0x1]
    %s7088 = scalar_lea.vmem %s19, 1
    %v7089 = vld [vmem:[%s7088] sm:$0x1]
    %v7090 = vsel %vm157, %v7084, 0.0
    %7091 = vadd.xlane.f32.xlu0 %v7090
    %v7092 = vpop.xlane.xlu0 %7091
    %v7093 = vsel %vm157, %v7085, 0.0
    %7094 = vadd.xlane.f32.xlu0 %v7093
    %v7095 = vpop.xlane.xlu0 %7094
    %v7096 = vmul.f32 %v7092, %v1658
    %v7097 = vmul.f32 %v7095, %v1658
    %v7098 = vsub.f32 %v7084, %v7096
    %v7099 = vsub.f32 %v7085, %v7097
    %v7100 = vmul.f32 %v7098, %v7098
    %v7101 = vmul.f32 %v7099, %v7099
    %v7102 = vsel %vm157, %v7100, 0.0
    %7103 = vadd.xlane.f32.xlu0 %v7102
    %v7104 = vpop.xlane.xlu0 %7103
    %v7105 = vsel %vm157, %v7101, 0.0
    %7106 = vadd.xlane.f32.xlu0 %v7105
    %v7107 = vpop.xlane.xlu0 %7106
    %v7108 = vmul.f32 %v7104, %v1658
    %v7109 = vmul.f32 %v7107, %v1658
    %v7110 = vadd.f32 %v7108, 1e-05
    %v7111 = vadd.f32 %v7109, 1e-05
    %v7112 = vrsqrt.pop %v7110
    %v7113 = vrsqrt.pop %v7111
    %v7114 = vmul.f32 %v7098, %v7112
    %v7115 = vmul.f32 %v7099, %v7113
    %v7117 = vlaneseq
    %v7118 = vshrl.u32 %v7117, 7
    %v7119 = vsub.s32 0, %v7118
    %v7120 = vrot.slane %v7087, %v7119
    %v7122 = vmul.f32 %v7114, %v7120
    %v7123 = vmul.f32 %v7115, %v7120
    %v7125 = vlaneseq
    %v7126 = vshrl.u32 %v7125, 7
    %v7127 = vsub.s32 0, %v7126
    %v7128 = vrot.slane %v7089, %v7127
    %v7130 = vadd.f32 %v7122, %v7128
    %v7131 = vadd.f32 %v7123, %v7128
    %7132 = vst.msk [vmem:[#allocation5] sm:$0xff] %vm157, %v7130
    %7133 = vst.msk [vmem:[#allocation5 + $0x8] sm:$0xff] %vm157, %v7131
    // Predicated region
    $region86: #{tpu_custom_call.1} parent=1 // pred_check
      _
    $region87: #{tpu_custom_call.1} parent=1 // pred_check_branch
      %7135 = sbr.rel (0) target = $region89
    $region88: #{tpu_custom_call.1} parent=1 // pred_region
      %s7137 = ssub.s32 256, 256
      %7138 = vsyncadd [#allocation4], %s7137
      %s7139 = sshll.u32 [#allocation5], 4
      %s7140 = int_to_ptr.vmem [resolvable:$true] %s7139
      %7145 = dma.vmem_to_hbm [thread:$0]  %s7140, 256, %s20, [#allocation4], 128, 128, 8
    $region89: #{tpu_custom_call.1} parent=1 // pred_fallthru
      _
    // Predicated region
    $region90: #{tpu_custom_call.1} parent=1 // pred_check
      _
    $region91: #{tpu_custom_call.1} parent=1 // pred_check_branch
      %7147 = sbr.rel (0) target = $region93
    $region92: #{tpu_custom_call.1} parent=1 // pred_region
      %7148 = dma.done [#allocation4], 256
    $region93: #{tpu_custom_call.1} parent=1 // pred_fallthru
      _
    %7149 = vsyncpa [#allocation3], 1
    %7150 = vsyncpa [#allocation4], 1

</llo_original>
